<compile_context>
chip_gen: v7x
topology: tpu7x:2x2x1
jax: 0.10.0
libtpu: 0.0.40
codegen_flags: <defaults>
</compile_context>

<pallas_src>
import functools
import math

import jax
import jax.numpy as jnp
from jax.experimental import pallas as pl
from jax.experimental.pallas import tpu as pltpu

NUM_GROUPS = 32  # GroupNorm(32, in_channels), as in the PyTorch module


# ----------------------------------------------------------------------------
# In-kernel helpers (operate on values, stay VMEM/vreg resident)
# ----------------------------------------------------------------------------
def _pad1_bf16(act_hwc):
    """(H, W, C) -> (H+2, W+2, C) bf16 with a zero border of 1 (pad=1, stride=1)."""
    H, W, C = act_hwc.shape
    dt = act_hwc.dtype
    zc = jnp.zeros((H, 1, C), dt)
    body = jnp.concatenate([zc, act_hwc, zc], axis=1)
    zr = jnp.zeros((1, W + 2, C), dt)
    return jnp.concatenate([zr, body, zr], axis=0).astype(jnp.bfloat16)


def _conv3x3_mxu(xpad_bf16, w9):
    """3x3 conv as nine accumulated matmuls (no im2col buffer).

    xpad_bf16: (H+2, W+2, C) bf16;  w9: (9, C, Cout) bf16  ->  (H*W, Cout) f32.
    """
    Hp, Wp, C = xpad_bf16.shape
    H, W = Hp - 2, Wp - 2
    acc = None
    for tap in range(9):
        dy, dx = divmod(tap, 3)
        win = xpad_bf16[dy:dy + H, dx:dx + W, :].reshape(H * W, C)
        part = jnp.dot(win, w9[tap], preferred_element_type=jnp.float32)
        acc = part if acc is None else acc + part
    return acc


def _conv3x3_head_mxu(xpad_bf16, w9):
    """Head 3x3 conv, lane-dense output.

    xpad_bf16: (H+2, W+2, C) bf16;  w9: (9, Cout, C) bf16  ->  (Cout, H*W) f32.
    """
    Hp, Wp, C = xpad_bf16.shape
    H, W = Hp - 2, Wp - 2
    acc = None
    for tap in range(9):
        dy, dx = divmod(tap, 3)
        win = xpad_bf16[dy:dy + H, dx:dx + W, :].reshape(H * W, C)
        part = jax.lax.dot_general(w9[tap], win, (((1,), (1,)), ((), ())),
                                   preferred_element_type=jnp.float32)
        acc = part if acc is None else acc + part
    return acc


def _group_norm_fused(y, gamma, beta, groups, eps=1e-5):
    """GroupNorm with affine folded into one scale/shift on the big operand.

    y: (HW, C) f32; gamma/beta: (1, C) f32.  Stats are single-pass
    E[x^2]-E[x]^2 in f32 (fine at the 3e-2 tolerance used here).
    """
    HW, C = y.shape
    cpg = C // groups
    mean_c = jnp.mean(y, axis=0, keepdims=True)        # (1, C)
    msq_c = jnp.mean(y * y, axis=0, keepdims=True)     # (1, C)
    if cpg == 1:
        gmean, gmsq = mean_c, msq_c
    else:
        gm = jnp.mean(mean_c.reshape(groups, cpg), axis=1, keepdims=True)
        gq = jnp.mean(msq_c.reshape(groups, cpg), axis=1, keepdims=True)
        gmean = jnp.broadcast_to(gm, (groups, cpg)).reshape(1, C)
        gmsq = jnp.broadcast_to(gq, (groups, cpg)).reshape(1, C)
    var = gmsq - gmean * gmean
    inv = jax.lax.rsqrt(var + eps)
    a = gamma * inv                    # (1, C)   folded scale
    b = beta - gmean * a               # (1, C)   folded shift
    return y * a + b                   # single mul+add over (HW, C)


def _tower_layer(act_hwc, w9, bias, gamma, beta, groups):
    """conv3x3 (9 accumulated matmuls) + bias + GroupNorm + ReLU."""
    H, W = act_hwc.shape[0], act_hwc.shape[1]
    cout = w9.shape[-1]
    y = _conv3x3_mxu(_pad1_bf16(act_hwc), w9) + bias
    y = _group_norm_fused(y, gamma, beta, groups)
    return jnp.maximum(y, 0.0).reshape(H, W, cout)


# ----------------------------------------------------------------------------
# Fused per-level kernel: both towers + all three heads (one batch elem / step)
# ----------------------------------------------------------------------------
def _fcos_level_kernel(s_ref, x_ref, wt_ref, bt_ref, g_ref, be_ref,
                       wch_ref, bch_ref, wbh_ref, bbh_ref,
                       cls_o_ref, box_o_ref, *, num_convs, groups):
    H, W, C = x_ref.shape

    # Layer 0: shared input feature map, cls++bbox weights concatenated along
    # Cout -> one (HW, C) @ (C, 2C) matmul chain.  GroupNorm over 2*groups of
    # the concatenated channels is identical to per-branch GroupNorm.
    act2 = _tower_layer(x_ref[...].astype(jnp.float32), wt_ref[0], bt_ref[0],
                        g_ref[0], be_ref[0], 2 * groups)      # (H, W, 2C)
    act_c = act2[:, :, :C]
    act_b = act2[:, :, C:]

    # Remaining tower layers: activations differ per branch.
    for l in range(1, num_convs):
        w_l, b_l = wt_ref[l], bt_ref[l]
        g_l, e_l = g_ref[l], be_ref[l]
        act_c = _tower_layer(act_c, w_l[:, :, :C], b_l[:, :C],
                             g_l[:, :C], e_l[:, :C], groups)
        act_b = _tower_layer(act_b, w_l[:, :, C:], b_l[:, C:],
                             g_l[:, C:], e_l[:, C:], groups)

    # cls head: cls_logits ++ centerness, lane-dense (Cout, HW) output.
    cls_out = _conv3x3_head_mxu(_pad1_bf16(act_c), wch_ref[...]) + bch_ref[...]
    cls_o_ref[...] = cls_out.astype(cls_o_ref.dtype)

    # bbox head: bbox_pred + exp(scale * y).
    box = _conv3x3_head_mxu(_pad1_bf16(act_b), wbh_ref[...]) + bbh_ref[...]
    box_o_ref[...] = jnp.exp(box * s_ref[0, 0]).astype(box_o_ref.dtype)


# ----------------------------------------------------------------------------
# pallas_call wrapper: one fused call per FPN level
# ----------------------------------------------------------------------------
def _compiler_params():
    kind = ""
    try:
        kind = jax.devices()[0].device_kind.lower()
    except Exception:
        pass
    if "v7" in kind:
        vmem = 56 * 1024 * 1024       # v7x: 64 MiB physical, leave headroom
    elif "v5" in kind or "v6" in kind:
        vmem = 100 * 1024 * 1024      # v5e/v6e: 128 MiB physical
    else:
        vmem = None                   # unknown chip: keep compiler default
    return pltpu.CompilerParams(dimension_semantics=("parallel",),
                                vmem_limit_bytes=vmem)


def _fcos_level_call(x_nhwc, params, scale, *, groups):
    """Run the fused FCOS head for one FPN level.

    Returns (cls_out, box_out) with shapes (N, num_classes+1, H*W), (N, 4, H*W).
    """
    N, H, W, C = x_nhwc.shape
    tower = params["tower"]
    L = tower["w"].shape[0]
    nc1 = params["cls_head"]["w"].shape[1]      # num_classes + 1 (centerness row)

    inv = pl.Buffered(1)   # grid-invariant operands: single-buffer (save VMEM)
    s_spec = pl.BlockSpec(memory_space=pltpu.MemorySpace.SMEM)
    x_spec = pl.BlockSpec((None, H, W, C), lambda n: (n, 0, 0, 0))
    wt_spec = pl.BlockSpec((L, 9, C, 2 * C), lambda n: (0, 0, 0, 0),
                           pipeline_mode=inv)
    v_spec = pl.BlockSpec((L, 1, 2 * C), lambda n: (0, 0, 0), pipeline_mode=inv)
    wc_spec = pl.BlockSpec((9, nc1, C), lambda n: (0, 0, 0), pipeline_mode=inv)
    bc_spec = pl.BlockSpec((nc1, 1), lambda n: (0, 0), pipeline_mode=inv)
    wb_spec = pl.BlockSpec((9, 4, C), lambda n: (0, 0, 0), pipeline_mode=inv)
    bb_spec = pl.BlockSpec((4, 1), lambda n: (0, 0), pipeline_mode=inv)

    cls_o_spec = pl.BlockSpec((None, nc1, H * W), lambda n: (n, 0, 0))
    box_o_spec = pl.BlockSpec((None, 4, H * W), lambda n: (n, 0, 0))
    out_shape = (jax.ShapeDtypeStruct((N, nc1, H * W), jnp.float32),
                 jax.ShapeDtypeStruct((N, 4, H * W), jnp.float32))

    kernel = functools.partial(_fcos_level_kernel, num_convs=L, groups=groups)
    return pl.pallas_call(
        kernel, grid=(N,),
        in_specs=[s_spec, x_spec, wt_spec, v_spec, v_spec, v_spec,
                  wc_spec, bc_spec, wb_spec, bb_spec],
        out_specs=(cls_o_spec, box_o_spec),
        out_shape=out_shape,
        compiler_params=_compiler_params(),
    )(scale, x_nhwc, tower["w"], tower["b"], tower["gamma"], tower["beta"],
      params["cls_head"]["w"], params["cls_head"]["b"],
      params["bbox_head"]["w"], params["bbox_head"]["b"])


# ----------------------------------------------------------------------------
# FCOSHead: parameter init + forward
# ----------------------------------------------------------------------------
def init_fcos_head(key, num_classes, num_convs, prior_prob, in_channels):
    assert in_channels % NUM_GROUPS == 0
    C = in_channels
    keys = iter(jax.random.split(key, 2 * num_convs + 3))

    def conv_w():
        return 0.01 * jax.random.normal(next(keys), (9, C, C), jnp.float32)

    w_cls_tower = [conv_w() for _ in range(num_convs)]
    w_box_tower = [conv_w() for _ in range(num_convs)]
    w_all = jnp.stack([jnp.concatenate([wc, wb], axis=-1)
                       for wc, wb in zip(w_cls_tower, w_box_tower)])  # (L,9,C,2C)
    tower = {
        "w": w_all.astype(jnp.bfloat16),
        "b": jnp.zeros((num_convs, 1, 2 * C), jnp.float32),
        "gamma": jnp.ones((num_convs, 1, 2 * C), jnp.float32),
        "beta": jnp.zeros((num_convs, 1, 2 * C), jnp.float32),
    }

    bias_value = -math.log((1 - prior_prob) / prior_prob)
    w_cls = 0.01 * jax.random.normal(next(keys), (9, num_classes, C), jnp.float32)
    w_ctr = 0.01 * jax.random.normal(next(keys), (9, 1, C), jnp.float32)
    cls_head = {
        # rows [0:num_classes] = cls_logits, row [num_classes] = centerness
        "w": jnp.concatenate([w_cls, w_ctr], axis=1).astype(jnp.bfloat16),
        "b": jnp.concatenate(
            [jnp.full((num_classes, 1), bias_value, jnp.float32),
             jnp.zeros((1, 1), jnp.float32)], axis=0),
    }
    bbox_head = {
        "w": (0.01 * jax.random.normal(next(keys), (9, 4, C), jnp.float32)
              ).astype(jnp.bfloat16),
        "b": jnp.zeros((4, 1), jnp.float32),
    }
    scales = [jnp.ones((1, 1), jnp.float32) for _ in range(5)]  # Scale modules
    return {"num_classes": num_classes, "tower": tower,
            "cls_head": cls_head, "bbox_head": bbox_head, "scales": scales}


def fcos_head_forward(params, x_list):
    """x_list: list of NCHW feature maps.  Returns (logits, bbox_reg, centerness),
    each a list of NCHW arrays, matching the PyTorch module."""
    nc = params["num_classes"]
    logits, bbox_reg, centerness = [], [], []
    for l, feat in enumerate(x_list):
        f = jnp.transpose(feat, (0, 2, 3, 1))                # NCHW -> NHWC
        N, H, W, _ = f.shape
        cls_out, box_out = _fcos_level_call(f, params, params["scales"][l],
                                            groups=NUM_GROUPS)
        # Outputs are already channel-major; NCHW via free reshape.
        logits.append(cls_out[:, :nc, :].reshape(N, nc, H, W))
        centerness.append(cls_out[:, nc:nc + 1, :].reshape(N, 1, H, W))
        bbox_reg.append(box_out.reshape(N, 4, H, W))
    return logits, bbox_reg, centerness


# ----------------------------------------------------------------------------
# Pure-JAX reference (numerical sanity check in __main__)
# ----------------------------------------------------------------------------
def _ref_group_norm_nhwc(x, gamma, beta, groups, eps=1e-5):
    N, H, W, C = x.shape
    xg = x.reshape(N, H, W, groups, C // groups)
    mean = xg.mean(axis=(1, 2, 4), keepdims=True)
    var = ((xg - mean) ** 2).mean(axis=(1, 2, 4), keepdims=True)
    xg = (xg - mean) / jnp.sqrt(var + eps)
    return xg.reshape(N, H, W, C) * gamma.reshape(1, 1, 1, C) + beta.reshape(1, 1, 1, C)


def _ref_conv3x3(x_nhwc, w9, b_cout):
    """w9: (9, Cin, Cout) f32 with tap index = 3*ky + kx."""
    cin = w9.shape[1]
    w = w9.reshape(3, 3, cin, -1)
    y = jax.lax.conv_general_dilated(
        x_nhwc, w, window_strides=(1, 1), padding="SAME",
        dimension_numbers=("NHWC", "HWIO", "NHWC"),
        precision=jax.lax.Precision.HIGHEST)
    return y + b_cout.reshape(1, 1, 1, -1)


def _ref_forward(params, x_list):
    nc = params["num_classes"]
    tw = params["tower"]
    L, C = tw["w"].shape[0], tw["w"].shape[2]

    def tower(x, half):
        sl = slice(0, C) if half == 0 else slice(C, 2 * C)
        for l in range(L):
            w9 = tw["w"][l, :, :, sl].astype(jnp.float32)
            y = _ref_conv3x3(x, w9, tw["b"][l, 0, sl])
            y = _ref_group_norm_nhwc(y, tw["gamma"][l, 0, sl], tw["beta"][l, 0, sl],
                                     NUM_GROUPS)
            x = jnp.maximum(y, 0.0)
        return x

    logits, bbox, ctr = [], [], []
    for l, feat in enumerate(x_list):
        f = jnp.transpose(feat, (0, 2, 3, 1))
        ct = tower(f, 0)
        bt = tower(f, 1)
        wch = jnp.transpose(params["cls_head"]["w"].astype(jnp.float32), (0, 2, 1))
        head = _ref_conv3x3(ct, wch, params["cls_head"]["b"][:, 0])
        wbh = jnp.transpose(params["bbox_head"]["w"].astype(jnp.float32), (0, 2, 1))
        bb = _ref_conv3x3(bt, wbh, params["bbox_head"]["b"][:, 0])
        bb = jnp.exp(bb * params["scales"][l][0, 0])
        logits.append(jnp.transpose(head[..., :nc], (0, 3, 1, 2)))
        ctr.append(jnp.transpose(head[..., nc:nc + 1], (0, 3, 1, 2)))
        bbox.append(jnp.transpose(bb, (0, 3, 1, 2)))
    return logits, bbox, ctr


# ----------------------------------------------------------------------------
if __name__ == "__main__":
    key = jax.random.PRNGKey(0)
    k_param, k_data = jax.random.split(key)

    num_classes = 8
    num_convs = 2
    prior_prob = 0.01
    in_channels = 32   # must be divisible by 32 for GroupNorm(32, C)
    batch = 2
    spatial = [16, 8, 8, 4, 4]  # 5 FPN levels (module has 5 Scale modules)

    params = init_fcos_head(k_param, num_classes, num_convs, prior_prob, in_channels)

    feats = []
    for s, dk in zip(spatial, jax.random.split(k_data, len(spatial))):
        feats.append(jax.random.normal(dk, (batch, in_channels, s, s), jnp.float32))

    logits, bbox_reg, centerness = fcos_head_forward(params, feats)
    jax.block_until_ready((logits, bbox_reg, centerness))

    # shape / positivity checks + numerical check against a pure-JAX reference
    ref_logits, ref_bbox, ref_ctr = _ref_forward(params, feats)
    for l, s in enumerate(spatial):
        assert logits[l].shape == (batch, num_classes, s, s)
        assert bbox_reg[l].shape == (batch, 4, s, s)
        assert centerness[l].shape == (batch, 1, s, s)
        assert bool(jnp.all(bbox_reg[l] > 0))
        assert float(jnp.max(jnp.abs(logits[l] - ref_logits[l]))) < 3e-2
        assert float(jnp.max(jnp.abs(bbox_reg[l] - ref_bbox[l]))) < 3e-2
        assert float(jnp.max(jnp.abs(centerness[l] - ref_ctr[l]))) < 3e-2

    print("KERNEL_OK")
</pallas_src>

<mosaic_0001>
module attributes {stable_mosaic.version = 11 : i64} {
  func.func @_fcos_level_kernel(%arg0: i32, %arg1: memref<1x1xf32, #tpu.memory_space<smem>>, %arg2: memref<1x16x16x32xf32, #tpu.memory_space<vmem>>, %arg3: memref<2x9x32x64xbf16, #tpu.memory_space<vmem>>, %arg4: memref<2x1x64xf32, #tpu.memory_space<vmem>>, %arg5: memref<2x1x64xf32, #tpu.memory_space<vmem>>, %arg6: memref<2x1x64xf32, #tpu.memory_space<vmem>>, %arg7: memref<9x9x32xbf16, #tpu.memory_space<vmem>>, %arg8: memref<9x1xf32, #tpu.memory_space<vmem>>, %arg9: memref<9x4x32xbf16, #tpu.memory_space<vmem>>, %arg10: memref<4x1xf32, #tpu.memory_space<vmem>>, %arg11: memref<1x9x256xf32, #tpu.memory_space<vmem>>, %arg12: memref<1x4x256xf32, #tpu.memory_space<vmem>>) attributes {dimension_semantics = [#tpu.dimension_semantics<parallel>], iteration_bounds = array<i64: 2>, scalar_prefetch = 0 : i64, scratch_operands = 0 : i64, tpu.core_type = #tpu.core_type<tc>, window_params = [{transform_indices = @transform_0, window_bounds = array<i64: 1, 1>}, {transform_indices = @transform_1, window_bounds = array<i64: 1, 16, 16, 32>}, {pipeline_mode = #tpu.pipeline_mode<synchronous>, transform_indices = @transform_2, window_bounds = array<i64: 2, 9, 32, 64>}, {pipeline_mode = #tpu.pipeline_mode<synchronous>, transform_indices = @transform_3, window_bounds = array<i64: 2, 1, 64>}, {pipeline_mode = #tpu.pipeline_mode<synchronous>, transform_indices = @transform_4, window_bounds = array<i64: 2, 1, 64>}, {pipeline_mode = #tpu.pipeline_mode<synchronous>, transform_indices = @transform_5, window_bounds = array<i64: 2, 1, 64>}, {pipeline_mode = #tpu.pipeline_mode<synchronous>, transform_indices = @transform_6, window_bounds = array<i64: 9, 9, 32>}, {pipeline_mode = #tpu.pipeline_mode<synchronous>, transform_indices = @transform_7, window_bounds = array<i64: 9, 1>}, {pipeline_mode = #tpu.pipeline_mode<synchronous>, transform_indices = @transform_8, window_bounds = array<i64: 9, 4, 32>}, {pipeline_mode = #tpu.pipeline_mode<synchronous>, transform_indices = @transform_9, window_bounds = array<i64: 4, 1>}, {transform_indices = @transform_10, window_bounds = array<i64: 1, 9, 256>}, {transform_indices = @transform_11, window_bounds = array<i64: 1, 4, 256>}]} {
    %c0 = arith.constant 0 : index
    %c0_0 = arith.constant 0 : index
    %c0_1 = arith.constant 0 : index
    %c0_2 = arith.constant 0 : index
    %0 = vector.load %arg2[%c0, %c0_0, %c0_1, %c0_2] : memref<1x16x16x32xf32, #tpu.memory_space<vmem>>, vector<1x16x16x32xf32>
    %1 = vector.shape_cast %0 : vector<1x16x16x32xf32> to vector<16x16x32xf32>
    %c0_3 = arith.constant 0 : index
    %c0_4 = arith.constant 0 : index
    %c0_5 = arith.constant 0 : index
    %c0_6 = arith.constant 0 : index
    %2 = vector.load %arg3[%c0_3, %c0_4, %c0_5, %c0_6] : memref<2x9x32x64xbf16, #tpu.memory_space<vmem>>, vector<1x9x32x64xbf16>
    %3 = vector.shape_cast %2 : vector<1x9x32x64xbf16> to vector<9x32x64xbf16>
    %c0_7 = arith.constant 0 : index
    %c0_8 = arith.constant 0 : index
    %c0_9 = arith.constant 0 : index
    %4 = vector.load %arg4[%c0_7, %c0_8, %c0_9] : memref<2x1x64xf32, #tpu.memory_space<vmem>>, vector<1x1x64xf32>
    %5 = vector.shape_cast %4 : vector<1x1x64xf32> to vector<1x64xf32>
    %c0_10 = arith.constant 0 : index
    %c0_11 = arith.constant 0 : index
    %c0_12 = arith.constant 0 : index
    %6 = vector.load %arg5[%c0_10, %c0_11, %c0_12] : memref<2x1x64xf32, #tpu.memory_space<vmem>>, vector<1x1x64xf32>
    %7 = vector.shape_cast %6 : vector<1x1x64xf32> to vector<1x64xf32>
    %c0_13 = arith.constant 0 : index
    %c0_14 = arith.constant 0 : index
    %c0_15 = arith.constant 0 : index
    %8 = vector.load %arg6[%c0_13, %c0_14, %c0_15] : memref<2x1x64xf32, #tpu.memory_space<vmem>>, vector<1x1x64xf32>
    %9 = vector.shape_cast %8 : vector<1x1x64xf32> to vector<1x64xf32>
    %cst = arith.constant 0.000000e+00 : f32
    %10 = vector.broadcast %cst : f32 to vector<16x1x32xf32>
    %11 = tpu.concatenate %10, %1, %10 in 1 : vector<16x1x32xf32>, vector<16x16x32xf32>, vector<16x1x32xf32> -> vector<16x18x32xf32>
    %cst_16 = arith.constant 0.000000e+00 : f32
    %12 = vector.broadcast %cst_16 : f32 to vector<1x18x32xf32>
    %13 = tpu.concatenate %12, %11, %12 in 0 : vector<1x18x32xf32>, vector<16x18x32xf32>, vector<1x18x32xf32> -> vector<18x18x32xf32>
    %14 = arith.truncf %13 : vector<18x18x32xf32> to vector<18x18x32xbf16>
    %15 = vector.extract_strided_slice %14 {offsets = [0, 0, 0], sizes = [16, 16, 32], strides = [1, 1, 1]} : vector<18x18x32xbf16> to vector<16x16x32xbf16>
    %16 = vector.shape_cast %15 : vector<16x16x32xbf16> to vector<256x32xbf16>
    %17 = vector.extract_strided_slice %3 {offsets = [0, 0, 0], sizes = [1, 32, 64], strides = [1, 1, 1]} : vector<9x32x64xbf16> to vector<1x32x64xbf16>
    %18 = vector.shape_cast %17 : vector<1x32x64xbf16> to vector<32x64xbf16>
    %cst_17 = arith.constant dense<0.000000e+00> : vector<256x64xf32>
    %19 = tpu.matmul %16, %18, %cst_17 {dimension_numbers = #tpu.dot_dimension_numbers<[1], [0], [0], [1], [0, 0, 1, 1], [], []>} : vector<256x32xbf16>, vector<32x64xbf16>, vector<256x64xf32> -> vector<256x64xf32>
    %20 = vector.extract_strided_slice %14 {offsets = [0, 1, 0], sizes = [16, 16, 32], strides = [1, 1, 1]} : vector<18x18x32xbf16> to vector<16x16x32xbf16>
    %21 = vector.shape_cast %20 : vector<16x16x32xbf16> to vector<256x32xbf16>
    %22 = vector.extract_strided_slice %3 {offsets = [1, 0, 0], sizes = [1, 32, 64], strides = [1, 1, 1]} : vector<9x32x64xbf16> to vector<1x32x64xbf16>
    %23 = vector.shape_cast %22 : vector<1x32x64xbf16> to vector<32x64xbf16>
    %cst_18 = arith.constant dense<0.000000e+00> : vector<256x64xf32>
    %24 = tpu.matmul %21, %23, %cst_18 {dimension_numbers = #tpu.dot_dimension_numbers<[1], [0], [0], [1], [0, 0, 1, 1], [], []>} : vector<256x32xbf16>, vector<32x64xbf16>, vector<256x64xf32> -> vector<256x64xf32>
    %25 = arith.addf %19, %24 : vector<256x64xf32>
    %26 = vector.extract_strided_slice %14 {offsets = [0, 2, 0], sizes = [16, 16, 32], strides = [1, 1, 1]} : vector<18x18x32xbf16> to vector<16x16x32xbf16>
    %27 = vector.shape_cast %26 : vector<16x16x32xbf16> to vector<256x32xbf16>
    %28 = vector.extract_strided_slice %3 {offsets = [2, 0, 0], sizes = [1, 32, 64], strides = [1, 1, 1]} : vector<9x32x64xbf16> to vector<1x32x64xbf16>
    %29 = vector.shape_cast %28 : vector<1x32x64xbf16> to vector<32x64xbf16>
    %cst_19 = arith.constant dense<0.000000e+00> : vector<256x64xf32>
    %30 = tpu.matmul %27, %29, %cst_19 {dimension_numbers = #tpu.dot_dimension_numbers<[1], [0], [0], [1], [0, 0, 1, 1], [], []>} : vector<256x32xbf16>, vector<32x64xbf16>, vector<256x64xf32> -> vector<256x64xf32>
    %31 = arith.addf %25, %30 : vector<256x64xf32>
    %32 = vector.extract_strided_slice %14 {offsets = [1, 0, 0], sizes = [16, 16, 32], strides = [1, 1, 1]} : vector<18x18x32xbf16> to vector<16x16x32xbf16>
    %33 = vector.shape_cast %32 : vector<16x16x32xbf16> to vector<256x32xbf16>
    %34 = vector.extract_strided_slice %3 {offsets = [3, 0, 0], sizes = [1, 32, 64], strides = [1, 1, 1]} : vector<9x32x64xbf16> to vector<1x32x64xbf16>
    %35 = vector.shape_cast %34 : vector<1x32x64xbf16> to vector<32x64xbf16>
    %cst_20 = arith.constant dense<0.000000e+00> : vector<256x64xf32>
    %36 = tpu.matmul %33, %35, %cst_20 {dimension_numbers = #tpu.dot_dimension_numbers<[1], [0], [0], [1], [0, 0, 1, 1], [], []>} : vector<256x32xbf16>, vector<32x64xbf16>, vector<256x64xf32> -> vector<256x64xf32>
    %37 = arith.addf %31, %36 : vector<256x64xf32>
    %38 = vector.extract_strided_slice %14 {offsets = [1, 1, 0], sizes = [16, 16, 32], strides = [1, 1, 1]} : vector<18x18x32xbf16> to vector<16x16x32xbf16>
    %39 = vector.shape_cast %38 : vector<16x16x32xbf16> to vector<256x32xbf16>
    %40 = vector.extract_strided_slice %3 {offsets = [4, 0, 0], sizes = [1, 32, 64], strides = [1, 1, 1]} : vector<9x32x64xbf16> to vector<1x32x64xbf16>
    %41 = vector.shape_cast %40 : vector<1x32x64xbf16> to vector<32x64xbf16>
    %cst_21 = arith.constant dense<0.000000e+00> : vector<256x64xf32>
    %42 = tpu.matmul %39, %41, %cst_21 {dimension_numbers = #tpu.dot_dimension_numbers<[1], [0], [0], [1], [0, 0, 1, 1], [], []>} : vector<256x32xbf16>, vector<32x64xbf16>, vector<256x64xf32> -> vector<256x64xf32>
    %43 = arith.addf %37, %42 : vector<256x64xf32>
    %44 = vector.extract_strided_slice %14 {offsets = [1, 2, 0], sizes = [16, 16, 32], strides = [1, 1, 1]} : vector<18x18x32xbf16> to vector<16x16x32xbf16>
    %45 = vector.shape_cast %44 : vector<16x16x32xbf16> to vector<256x32xbf16>
    %46 = vector.extract_strided_slice %3 {offsets = [5, 0, 0], sizes = [1, 32, 64], strides = [1, 1, 1]} : vector<9x32x64xbf16> to vector<1x32x64xbf16>
    %47 = vector.shape_cast %46 : vector<1x32x64xbf16> to vector<32x64xbf16>
    %cst_22 = arith.constant dense<0.000000e+00> : vector<256x64xf32>
    %48 = tpu.matmul %45, %47, %cst_22 {dimension_numbers = #tpu.dot_dimension_numbers<[1], [0], [0], [1], [0, 0, 1, 1], [], []>} : vector<256x32xbf16>, vector<32x64xbf16>, vector<256x64xf32> -> vector<256x64xf32>
    %49 = arith.addf %43, %48 : vector<256x64xf32>
    %50 = vector.extract_strided_slice %14 {offsets = [2, 0, 0], sizes = [16, 16, 32], strides = [1, 1, 1]} : vector<18x18x32xbf16> to vector<16x16x32xbf16>
    %51 = vector.shape_cast %50 : vector<16x16x32xbf16> to vector<256x32xbf16>
    %52 = vector.extract_strided_slice %3 {offsets = [6, 0, 0], sizes = [1, 32, 64], strides = [1, 1, 1]} : vector<9x32x64xbf16> to vector<1x32x64xbf16>
    %53 = vector.shape_cast %52 : vector<1x32x64xbf16> to vector<32x64xbf16>
    %cst_23 = arith.constant dense<0.000000e+00> : vector<256x64xf32>
    %54 = tpu.matmul %51, %53, %cst_23 {dimension_numbers = #tpu.dot_dimension_numbers<[1], [0], [0], [1], [0, 0, 1, 1], [], []>} : vector<256x32xbf16>, vector<32x64xbf16>, vector<256x64xf32> -> vector<256x64xf32>
    %55 = arith.addf %49, %54 : vector<256x64xf32>
    %56 = vector.extract_strided_slice %14 {offsets = [2, 1, 0], sizes = [16, 16, 32], strides = [1, 1, 1]} : vector<18x18x32xbf16> to vector<16x16x32xbf16>
    %57 = vector.shape_cast %56 : vector<16x16x32xbf16> to vector<256x32xbf16>
    %58 = vector.extract_strided_slice %3 {offsets = [7, 0, 0], sizes = [1, 32, 64], strides = [1, 1, 1]} : vector<9x32x64xbf16> to vector<1x32x64xbf16>
    %59 = vector.shape_cast %58 : vector<1x32x64xbf16> to vector<32x64xbf16>
    %cst_24 = arith.constant dense<0.000000e+00> : vector<256x64xf32>
    %60 = tpu.matmul %57, %59, %cst_24 {dimension_numbers = #tpu.dot_dimension_numbers<[1], [0], [0], [1], [0, 0, 1, 1], [], []>} : vector<256x32xbf16>, vector<32x64xbf16>, vector<256x64xf32> -> vector<256x64xf32>
    %61 = arith.addf %55, %60 : vector<256x64xf32>
    %62 = vector.extract_strided_slice %14 {offsets = [2, 2, 0], sizes = [16, 16, 32], strides = [1, 1, 1]} : vector<18x18x32xbf16> to vector<16x16x32xbf16>
    %63 = vector.shape_cast %62 : vector<16x16x32xbf16> to vector<256x32xbf16>
    %64 = vector.extract_strided_slice %3 {offsets = [8, 0, 0], sizes = [1, 32, 64], strides = [1, 1, 1]} : vector<9x32x64xbf16> to vector<1x32x64xbf16>
    %65 = vector.shape_cast %64 : vector<1x32x64xbf16> to vector<32x64xbf16>
    %cst_25 = arith.constant dense<0.000000e+00> : vector<256x64xf32>
    %66 = tpu.matmul %63, %65, %cst_25 {dimension_numbers = #tpu.dot_dimension_numbers<[1], [0], [0], [1], [0, 0, 1, 1], [], []>} : vector<256x32xbf16>, vector<32x64xbf16>, vector<256x64xf32> -> vector<256x64xf32>
    %67 = arith.addf %61, %66 : vector<256x64xf32>
    %68 = vector.broadcast %5 : vector<1x64xf32> to vector<256x64xf32>
    %69 = arith.addf %67, %68 : vector<256x64xf32>
    %cst_26 = arith.constant dense<0.000000e+00> : vector<64xf32>
    %70 = vector.multi_reduction <add>, %69, %cst_26 [0] : vector<256x64xf32> to vector<64xf32>
    %71 = vector.shape_cast %70 : vector<64xf32> to vector<1x64xf32>
    %cst_27 = arith.constant 2.560000e+02 : f32
    %72 = vector.broadcast %cst_27 : f32 to vector<1x64xf32>
    %73 = arith.divf %71, %72 : vector<1x64xf32>
    %74 = arith.mulf %69, %69 : vector<256x64xf32>
    %cst_28 = arith.constant dense<0.000000e+00> : vector<64xf32>
    %75 = vector.multi_reduction <add>, %74, %cst_28 [0] : vector<256x64xf32> to vector<64xf32>
    %76 = vector.shape_cast %75 : vector<64xf32> to vector<1x64xf32>
    %cst_29 = arith.constant 2.560000e+02 : f32
    %77 = vector.broadcast %cst_29 : f32 to vector<1x64xf32>
    %78 = arith.divf %76, %77 : vector<1x64xf32>
    %79 = arith.mulf %73, %73 : vector<1x64xf32>
    %80 = arith.subf %78, %79 : vector<1x64xf32>
    %cst_30 = arith.constant 9.99999974E-6 : f32
    %81 = vector.broadcast %cst_30 : f32 to vector<1x64xf32>
    %82 = arith.addf %80, %81 : vector<1x64xf32>
    %83 = math.rsqrt %82 : vector<1x64xf32>
    %84 = arith.mulf %7, %83 : vector<1x64xf32>
    %85 = arith.mulf %73, %84 : vector<1x64xf32>
    %86 = arith.subf %9, %85 : vector<1x64xf32>
    %87 = vector.broadcast %84 : vector<1x64xf32> to vector<256x64xf32>
    %88 = arith.mulf %69, %87 : vector<256x64xf32>
    %89 = vector.broadcast %86 : vector<1x64xf32> to vector<256x64xf32>
    %90 = arith.addf %88, %89 : vector<256x64xf32>
    %cst_31 = arith.constant 0.000000e+00 : f32
    %91 = vector.broadcast %cst_31 : f32 to vector<256x64xf32>
    %92 = arith.maximumf %90, %91 : vector<256x64xf32>
    %93 = vector.shape_cast %92 : vector<256x64xf32> to vector<16x16x64xf32>
    %94 = vector.extract_strided_slice %93 {offsets = [0, 0, 0], sizes = [16, 16, 32], strides = [1, 1, 1]} : vector<16x16x64xf32> to vector<16x16x32xf32>
    %95 = vector.extract_strided_slice %93 {offsets = [0, 0, 32], sizes = [16, 16, 32], strides = [1, 1, 1]} : vector<16x16x64xf32> to vector<16x16x32xf32>
    %c1 = arith.constant 1 : index
    %c0_32 = arith.constant 0 : index
    %c0_33 = arith.constant 0 : index
    %c0_34 = arith.constant 0 : index
    %96 = vector.load %arg3[%c1, %c0_32, %c0_33, %c0_34] : memref<2x9x32x64xbf16, #tpu.memory_space<vmem>>, vector<1x9x32x64xbf16>
    %97 = vector.shape_cast %96 : vector<1x9x32x64xbf16> to vector<9x32x64xbf16>
    %c1_35 = arith.constant 1 : index
    %c0_36 = arith.constant 0 : index
    %c0_37 = arith.constant 0 : index
    %98 = vector.load %arg4[%c1_35, %c0_36, %c0_37] : memref<2x1x64xf32, #tpu.memory_space<vmem>>, vector<1x1x64xf32>
    %99 = vector.shape_cast %98 : vector<1x1x64xf32> to vector<1x64xf32>
    %c1_38 = arith.constant 1 : index
    %c0_39 = arith.constant 0 : index
    %c0_40 = arith.constant 0 : index
    %100 = vector.load %arg5[%c1_38, %c0_39, %c0_40] : memref<2x1x64xf32, #tpu.memory_space<vmem>>, vector<1x1x64xf32>
    %101 = vector.shape_cast %100 : vector<1x1x64xf32> to vector<1x64xf32>
    %c1_41 = arith.constant 1 : index
    %c0_42 = arith.constant 0 : index
    %c0_43 = arith.constant 0 : index
    %102 = vector.load %arg6[%c1_41, %c0_42, %c0_43] : memref<2x1x64xf32, #tpu.memory_space<vmem>>, vector<1x1x64xf32>
    %103 = vector.shape_cast %102 : vector<1x1x64xf32> to vector<1x64xf32>
    %104 = vector.extract_strided_slice %97 {offsets = [0, 0, 0], sizes = [9, 32, 32], strides = [1, 1, 1]} : vector<9x32x64xbf16> to vector<9x32x32xbf16>
    %105 = vector.extract_strided_slice %99 {offsets = [0, 0], sizes = [1, 32], strides = [1, 1]} : vector<1x64xf32> to vector<1x32xf32>
    %106 = vector.extract_strided_slice %101 {offsets = [0, 0], sizes = [1, 32], strides = [1, 1]} : vector<1x64xf32> to vector<1x32xf32>
    %107 = vector.extract_strided_slice %103 {offsets = [0, 0], sizes = [1, 32], strides = [1, 1]} : vector<1x64xf32> to vector<1x32xf32>
    %cst_44 = arith.constant 0.000000e+00 : f32
    %108 = vector.broadcast %cst_44 : f32 to vector<16x1x32xf32>
    %109 = tpu.concatenate %108, %94, %108 in 1 : vector<16x1x32xf32>, vector<16x16x32xf32>, vector<16x1x32xf32> -> vector<16x18x32xf32>
    %cst_45 = arith.constant 0.000000e+00 : f32
    %110 = vector.broadcast %cst_45 : f32 to vector<1x18x32xf32>
    %111 = tpu.concatenate %110, %109, %110 in 0 : vector<1x18x32xf32>, vector<16x18x32xf32>, vector<1x18x32xf32> -> vector<18x18x32xf32>
    %112 = arith.truncf %111 : vector<18x18x32xf32> to vector<18x18x32xbf16>
    %113 = vector.extract_strided_slice %112 {offsets = [0, 0, 0], sizes = [16, 16, 32], strides = [1, 1, 1]} : vector<18x18x32xbf16> to vector<16x16x32xbf16>
    %114 = vector.shape_cast %113 : vector<16x16x32xbf16> to vector<256x32xbf16>
    %115 = vector.extract_strided_slice %104 {offsets = [0, 0, 0], sizes = [1, 32, 32], strides = [1, 1, 1]} : vector<9x32x32xbf16> to vector<1x32x32xbf16>
    %116 = vector.shape_cast %115 : vector<1x32x32xbf16> to vector<32x32xbf16>
    %cst_46 = arith.constant dense<0.000000e+00> : vector<256x32xf32>
    %117 = tpu.matmul %114, %116, %cst_46 {dimension_numbers = #tpu.dot_dimension_numbers<[1], [0], [0], [1], [0, 0, 1, 1], [], []>} : vector<256x32xbf16>, vector<32x32xbf16>, vector<256x32xf32> -> vector<256x32xf32>
    %118 = vector.extract_strided_slice %112 {offsets = [0, 1, 0], sizes = [16, 16, 32], strides = [1, 1, 1]} : vector<18x18x32xbf16> to vector<16x16x32xbf16>
    %119 = vector.shape_cast %118 : vector<16x16x32xbf16> to vector<256x32xbf16>
    %120 = vector.extract_strided_slice %104 {offsets = [1, 0, 0], sizes = [1, 32, 32], strides = [1, 1, 1]} : vector<9x32x32xbf16> to vector<1x32x32xbf16>
    %121 = vector.shape_cast %120 : vector<1x32x32xbf16> to vector<32x32xbf16>
    %cst_47 = arith.constant dense<0.000000e+00> : vector<256x32xf32>
    %122 = tpu.matmul %119, %121, %cst_47 {dimension_numbers = #tpu.dot_dimension_numbers<[1], [0], [0], [1], [0, 0, 1, 1], [], []>} : vector<256x32xbf16>, vector<32x32xbf16>, vector<256x32xf32> -> vector<256x32xf32>
    %123 = arith.addf %117, %122 : vector<256x32xf32>
    %124 = vector.extract_strided_slice %112 {offsets = [0, 2, 0], sizes = [16, 16, 32], strides = [1, 1, 1]} : vector<18x18x32xbf16> to vector<16x16x32xbf16>
    %125 = vector.shape_cast %124 : vector<16x16x32xbf16> to vector<256x32xbf16>
    %126 = vector.extract_strided_slice %104 {offsets = [2, 0, 0], sizes = [1, 32, 32], strides = [1, 1, 1]} : vector<9x32x32xbf16> to vector<1x32x32xbf16>
    %127 = vector.shape_cast %126 : vector<1x32x32xbf16> to vector<32x32xbf16>
    %cst_48 = arith.constant dense<0.000000e+00> : vector<256x32xf32>
    %128 = tpu.matmul %125, %127, %cst_48 {dimension_numbers = #tpu.dot_dimension_numbers<[1], [0], [0], [1], [0, 0, 1, 1], [], []>} : vector<256x32xbf16>, vector<32x32xbf16>, vector<256x32xf32> -> vector<256x32xf32>
    %129 = arith.addf %123, %128 : vector<256x32xf32>
    %130 = vector.extract_strided_slice %112 {offsets = [1, 0, 0], sizes = [16, 16, 32], strides = [1, 1, 1]} : vector<18x18x32xbf16> to vector<16x16x32xbf16>
    %131 = vector.shape_cast %130 : vector<16x16x32xbf16> to vector<256x32xbf16>
    %132 = vector.extract_strided_slice %104 {offsets = [3, 0, 0], sizes = [1, 32, 32], strides = [1, 1, 1]} : vector<9x32x32xbf16> to vector<1x32x32xbf16>
    %133 = vector.shape_cast %132 : vector<1x32x32xbf16> to vector<32x32xbf16>
    %cst_49 = arith.constant dense<0.000000e+00> : vector<256x32xf32>
    %134 = tpu.matmul %131, %133, %cst_49 {dimension_numbers = #tpu.dot_dimension_numbers<[1], [0], [0], [1], [0, 0, 1, 1], [], []>} : vector<256x32xbf16>, vector<32x32xbf16>, vector<256x32xf32> -> vector<256x32xf32>
    %135 = arith.addf %129, %134 : vector<256x32xf32>
    %136 = vector.extract_strided_slice %112 {offsets = [1, 1, 0], sizes = [16, 16, 32], strides = [1, 1, 1]} : vector<18x18x32xbf16> to vector<16x16x32xbf16>
    %137 = vector.shape_cast %136 : vector<16x16x32xbf16> to vector<256x32xbf16>
    %138 = vector.extract_strided_slice %104 {offsets = [4, 0, 0], sizes = [1, 32, 32], strides = [1, 1, 1]} : vector<9x32x32xbf16> to vector<1x32x32xbf16>
    %139 = vector.shape_cast %138 : vector<1x32x32xbf16> to vector<32x32xbf16>
    %cst_50 = arith.constant dense<0.000000e+00> : vector<256x32xf32>
    %140 = tpu.matmul %137, %139, %cst_50 {dimension_numbers = #tpu.dot_dimension_numbers<[1], [0], [0], [1], [0, 0, 1, 1], [], []>} : vector<256x32xbf16>, vector<32x32xbf16>, vector<256x32xf32> -> vector<256x32xf32>
    %141 = arith.addf %135, %140 : vector<256x32xf32>
    %142 = vector.extract_strided_slice %112 {offsets = [1, 2, 0], sizes = [16, 16, 32], strides = [1, 1, 1]} : vector<18x18x32xbf16> to vector<16x16x32xbf16>
    %143 = vector.shape_cast %142 : vector<16x16x32xbf16> to vector<256x32xbf16>
    %144 = vector.extract_strided_slice %104 {offsets = [5, 0, 0], sizes = [1, 32, 32], strides = [1, 1, 1]} : vector<9x32x32xbf16> to vector<1x32x32xbf16>
    %145 = vector.shape_cast %144 : vector<1x32x32xbf16> to vector<32x32xbf16>
    %cst_51 = arith.constant dense<0.000000e+00> : vector<256x32xf32>
    %146 = tpu.matmul %143, %145, %cst_51 {dimension_numbers = #tpu.dot_dimension_numbers<[1], [0], [0], [1], [0, 0, 1, 1], [], []>} : vector<256x32xbf16>, vector<32x32xbf16>, vector<256x32xf32> -> vector<256x32xf32>
    %147 = arith.addf %141, %146 : vector<256x32xf32>
    %148 = vector.extract_strided_slice %112 {offsets = [2, 0, 0], sizes = [16, 16, 32], strides = [1, 1, 1]} : vector<18x18x32xbf16> to vector<16x16x32xbf16>
    %149 = vector.shape_cast %148 : vector<16x16x32xbf16> to vector<256x32xbf16>
    %150 = vector.extract_strided_slice %104 {offsets = [6, 0, 0], sizes = [1, 32, 32], strides = [1, 1, 1]} : vector<9x32x32xbf16> to vector<1x32x32xbf16>
    %151 = vector.shape_cast %150 : vector<1x32x32xbf16> to vector<32x32xbf16>
    %cst_52 = arith.constant dense<0.000000e+00> : vector<256x32xf32>
    %152 = tpu.matmul %149, %151, %cst_52 {dimension_numbers = #tpu.dot_dimension_numbers<[1], [0], [0], [1], [0, 0, 1, 1], [], []>} : vector<256x32xbf16>, vector<32x32xbf16>, vector<256x32xf32> -> vector<256x32xf32>
    %153 = arith.addf %147, %152 : vector<256x32xf32>
    %154 = vector.extract_strided_slice %112 {offsets = [2, 1, 0], sizes = [16, 16, 32], strides = [1, 1, 1]} : vector<18x18x32xbf16> to vector<16x16x32xbf16>
    %155 = vector.shape_cast %154 : vector<16x16x32xbf16> to vector<256x32xbf16>
    %156 = vector.extract_strided_slice %104 {offsets = [7, 0, 0], sizes = [1, 32, 32], strides = [1, 1, 1]} : vector<9x32x32xbf16> to vector<1x32x32xbf16>
    %157 = vector.shape_cast %156 : vector<1x32x32xbf16> to vector<32x32xbf16>
    %cst_53 = arith.constant dense<0.000000e+00> : vector<256x32xf32>
    %158 = tpu.matmul %155, %157, %cst_53 {dimension_numbers = #tpu.dot_dimension_numbers<[1], [0], [0], [1], [0, 0, 1, 1], [], []>} : vector<256x32xbf16>, vector<32x32xbf16>, vector<256x32xf32> -> vector<256x32xf32>
    %159 = arith.addf %153, %158 : vector<256x32xf32>
    %160 = vector.extract_strided_slice %112 {offsets = [2, 2, 0], sizes = [16, 16, 32], strides = [1, 1, 1]} : vector<18x18x32xbf16> to vector<16x16x32xbf16>
    %161 = vector.shape_cast %160 : vector<16x16x32xbf16> to vector<256x32xbf16>
    %162 = vector.extract_strided_slice %104 {offsets = [8, 0, 0], sizes = [1, 32, 32], strides = [1, 1, 1]} : vector<9x32x32xbf16> to vector<1x32x32xbf16>
    %163 = vector.shape_cast %162 : vector<1x32x32xbf16> to vector<32x32xbf16>
    %cst_54 = arith.constant dense<0.000000e+00> : vector<256x32xf32>
    %164 = tpu.matmul %161, %163, %cst_54 {dimension_numbers = #tpu.dot_dimension_numbers<[1], [0], [0], [1], [0, 0, 1, 1], [], []>} : vector<256x32xbf16>, vector<32x32xbf16>, vector<256x32xf32> -> vector<256x32xf32>
    %165 = arith.addf %159, %164 : vector<256x32xf32>
    %166 = vector.broadcast %105 : vector<1x32xf32> to vector<256x32xf32>
    %167 = arith.addf %165, %166 : vector<256x32xf32>
    %cst_55 = arith.constant dense<0.000000e+00> : vector<32xf32>
    %168 = vector.multi_reduction <add>, %167, %cst_55 [0] : vector<256x32xf32> to vector<32xf32>
    %169 = vector.shape_cast %168 : vector<32xf32> to vector<1x32xf32>
    %cst_56 = arith.constant 2.560000e+02 : f32
    %170 = vector.broadcast %cst_56 : f32 to vector<1x32xf32>
    %171 = arith.divf %169, %170 : vector<1x32xf32>
    %172 = arith.mulf %167, %167 : vector<256x32xf32>
    %cst_57 = arith.constant dense<0.000000e+00> : vector<32xf32>
    %173 = vector.multi_reduction <add>, %172, %cst_57 [0] : vector<256x32xf32> to vector<32xf32>
    %174 = vector.shape_cast %173 : vector<32xf32> to vector<1x32xf32>
    %cst_58 = arith.constant 2.560000e+02 : f32
    %175 = vector.broadcast %cst_58 : f32 to vector<1x32xf32>
    %176 = arith.divf %174, %175 : vector<1x32xf32>
    %177 = arith.mulf %171, %171 : vector<1x32xf32>
    %178 = arith.subf %176, %177 : vector<1x32xf32>
    %cst_59 = arith.constant 9.99999974E-6 : f32
    %179 = vector.broadcast %cst_59 : f32 to vector<1x32xf32>
    %180 = arith.addf %178, %179 : vector<1x32xf32>
    %181 = math.rsqrt %180 : vector<1x32xf32>
    %182 = arith.mulf %106, %181 : vector<1x32xf32>
    %183 = arith.mulf %171, %182 : vector<1x32xf32>
    %184 = arith.subf %107, %183 : vector<1x32xf32>
    %185 = vector.broadcast %182 : vector<1x32xf32> to vector<256x32xf32>
    %186 = arith.mulf %167, %185 : vector<256x32xf32>
    %187 = vector.broadcast %184 : vector<1x32xf32> to vector<256x32xf32>
    %188 = arith.addf %186, %187 : vector<256x32xf32>
    %cst_60 = arith.constant 0.000000e+00 : f32
    %189 = vector.broadcast %cst_60 : f32 to vector<256x32xf32>
    %190 = arith.maximumf %188, %189 : vector<256x32xf32>
    %191 = vector.shape_cast %190 : vector<256x32xf32> to vector<16x16x32xf32>
    %192 = vector.extract_strided_slice %97 {offsets = [0, 0, 32], sizes = [9, 32, 32], strides = [1, 1, 1]} : vector<9x32x64xbf16> to vector<9x32x32xbf16>
    %193 = vector.extract_strided_slice %99 {offsets = [0, 32], sizes = [1, 32], strides = [1, 1]} : vector<1x64xf32> to vector<1x32xf32>
    %194 = vector.extract_strided_slice %101 {offsets = [0, 32], sizes = [1, 32], strides = [1, 1]} : vector<1x64xf32> to vector<1x32xf32>
    %195 = vector.extract_strided_slice %103 {offsets = [0, 32], sizes = [1, 32], strides = [1, 1]} : vector<1x64xf32> to vector<1x32xf32>
    %cst_61 = arith.constant 0.000000e+00 : f32
    %196 = vector.broadcast %cst_61 : f32 to vector<16x1x32xf32>
    %197 = tpu.concatenate %196, %95, %196 in 1 : vector<16x1x32xf32>, vector<16x16x32xf32>, vector<16x1x32xf32> -> vector<16x18x32xf32>
    %cst_62 = arith.constant 0.000000e+00 : f32
    %198 = vector.broadcast %cst_62 : f32 to vector<1x18x32xf32>
    %199 = tpu.concatenate %198, %197, %198 in 0 : vector<1x18x32xf32>, vector<16x18x32xf32>, vector<1x18x32xf32> -> vector<18x18x32xf32>
    %200 = arith.truncf %199 : vector<18x18x32xf32> to vector<18x18x32xbf16>
    %201 = vector.extract_strided_slice %200 {offsets = [0, 0, 0], sizes = [16, 16, 32], strides = [1, 1, 1]} : vector<18x18x32xbf16> to vector<16x16x32xbf16>
    %202 = vector.shape_cast %201 : vector<16x16x32xbf16> to vector<256x32xbf16>
    %203 = vector.extract_strided_slice %192 {offsets = [0, 0, 0], sizes = [1, 32, 32], strides = [1, 1, 1]} : vector<9x32x32xbf16> to vector<1x32x32xbf16>
    %204 = vector.shape_cast %203 : vector<1x32x32xbf16> to vector<32x32xbf16>
    %cst_63 = arith.constant dense<0.000000e+00> : vector<256x32xf32>
    %205 = tpu.matmul %202, %204, %cst_63 {dimension_numbers = #tpu.dot_dimension_numbers<[1], [0], [0], [1], [0, 0, 1, 1], [], []>} : vector<256x32xbf16>, vector<32x32xbf16>, vector<256x32xf32> -> vector<256x32xf32>
    %206 = vector.extract_strided_slice %200 {offsets = [0, 1, 0], sizes = [16, 16, 32], strides = [1, 1, 1]} : vector<18x18x32xbf16> to vector<16x16x32xbf16>
    %207 = vector.shape_cast %206 : vector<16x16x32xbf16> to vector<256x32xbf16>
    %208 = vector.extract_strided_slice %192 {offsets = [1, 0, 0], sizes = [1, 32, 32], strides = [1, 1, 1]} : vector<9x32x32xbf16> to vector<1x32x32xbf16>
    %209 = vector.shape_cast %208 : vector<1x32x32xbf16> to vector<32x32xbf16>
    %cst_64 = arith.constant dense<0.000000e+00> : vector<256x32xf32>
    %210 = tpu.matmul %207, %209, %cst_64 {dimension_numbers = #tpu.dot_dimension_numbers<[1], [0], [0], [1], [0, 0, 1, 1], [], []>} : vector<256x32xbf16>, vector<32x32xbf16>, vector<256x32xf32> -> vector<256x32xf32>
    %211 = arith.addf %205, %210 : vector<256x32xf32>
    %212 = vector.extract_strided_slice %200 {offsets = [0, 2, 0], sizes = [16, 16, 32], strides = [1, 1, 1]} : vector<18x18x32xbf16> to vector<16x16x32xbf16>
    %213 = vector.shape_cast %212 : vector<16x16x32xbf16> to vector<256x32xbf16>
    %214 = vector.extract_strided_slice %192 {offsets = [2, 0, 0], sizes = [1, 32, 32], strides = [1, 1, 1]} : vector<9x32x32xbf16> to vector<1x32x32xbf16>
    %215 = vector.shape_cast %214 : vector<1x32x32xbf16> to vector<32x32xbf16>
    %cst_65 = arith.constant dense<0.000000e+00> : vector<256x32xf32>
    %216 = tpu.matmul %213, %215, %cst_65 {dimension_numbers = #tpu.dot_dimension_numbers<[1], [0], [0], [1], [0, 0, 1, 1], [], []>} : vector<256x32xbf16>, vector<32x32xbf16>, vector<256x32xf32> -> vector<256x32xf32>
    %217 = arith.addf %211, %216 : vector<256x32xf32>
    %218 = vector.extract_strided_slice %200 {offsets = [1, 0, 0], sizes = [16, 16, 32], strides = [1, 1, 1]} : vector<18x18x32xbf16> to vector<16x16x32xbf16>
    %219 = vector.shape_cast %218 : vector<16x16x32xbf16> to vector<256x32xbf16>
    %220 = vector.extract_strided_slice %192 {offsets = [3, 0, 0], sizes = [1, 32, 32], strides = [1, 1, 1]} : vector<9x32x32xbf16> to vector<1x32x32xbf16>
    %221 = vector.shape_cast %220 : vector<1x32x32xbf16> to vector<32x32xbf16>
    %cst_66 = arith.constant dense<0.000000e+00> : vector<256x32xf32>
    %222 = tpu.matmul %219, %221, %cst_66 {dimension_numbers = #tpu.dot_dimension_numbers<[1], [0], [0], [1], [0, 0, 1, 1], [], []>} : vector<256x32xbf16>, vector<32x32xbf16>, vector<256x32xf32> -> vector<256x32xf32>
    %223 = arith.addf %217, %222 : vector<256x32xf32>
    %224 = vector.extract_strided_slice %200 {offsets = [1, 1, 0], sizes = [16, 16, 32], strides = [1, 1, 1]} : vector<18x18x32xbf16> to vector<16x16x32xbf16>
    %225 = vector.shape_cast %224 : vector<16x16x32xbf16> to vector<256x32xbf16>
    %226 = vector.extract_strided_slice %192 {offsets = [4, 0, 0], sizes = [1, 32, 32], strides = [1, 1, 1]} : vector<9x32x32xbf16> to vector<1x32x32xbf16>
    %227 = vector.shape_cast %226 : vector<1x32x32xbf16> to vector<32x32xbf16>
    %cst_67 = arith.constant dense<0.000000e+00> : vector<256x32xf32>
    %228 = tpu.matmul %225, %227, %cst_67 {dimension_numbers = #tpu.dot_dimension_numbers<[1], [0], [0], [1], [0, 0, 1, 1], [], []>} : vector<256x32xbf16>, vector<32x32xbf16>, vector<256x32xf32> -> vector<256x32xf32>
    %229 = arith.addf %223, %228 : vector<256x32xf32>
    %230 = vector.extract_strided_slice %200 {offsets = [1, 2, 0], sizes = [16, 16, 32], strides = [1, 1, 1]} : vector<18x18x32xbf16> to vector<16x16x32xbf16>
    %231 = vector.shape_cast %230 : vector<16x16x32xbf16> to vector<256x32xbf16>
    %232 = vector.extract_strided_slice %192 {offsets = [5, 0, 0], sizes = [1, 32, 32], strides = [1, 1, 1]} : vector<9x32x32xbf16> to vector<1x32x32xbf16>
    %233 = vector.shape_cast %232 : vector<1x32x32xbf16> to vector<32x32xbf16>
    %cst_68 = arith.constant dense<0.000000e+00> : vector<256x32xf32>
    %234 = tpu.matmul %231, %233, %cst_68 {dimension_numbers = #tpu.dot_dimension_numbers<[1], [0], [0], [1], [0, 0, 1, 1], [], []>} : vector<256x32xbf16>, vector<32x32xbf16>, vector<256x32xf32> -> vector<256x32xf32>
    %235 = arith.addf %229, %234 : vector<256x32xf32>
    %236 = vector.extract_strided_slice %200 {offsets = [2, 0, 0], sizes = [16, 16, 32], strides = [1, 1, 1]} : vector<18x18x32xbf16> to vector<16x16x32xbf16>
    %237 = vector.shape_cast %236 : vector<16x16x32xbf16> to vector<256x32xbf16>
    %238 = vector.extract_strided_slice %192 {offsets = [6, 0, 0], sizes = [1, 32, 32], strides = [1, 1, 1]} : vector<9x32x32xbf16> to vector<1x32x32xbf16>
    %239 = vector.shape_cast %238 : vector<1x32x32xbf16> to vector<32x32xbf16>
    %cst_69 = arith.constant dense<0.000000e+00> : vector<256x32xf32>
    %240 = tpu.matmul %237, %239, %cst_69 {dimension_numbers = #tpu.dot_dimension_numbers<[1], [0], [0], [1], [0, 0, 1, 1], [], []>} : vector<256x32xbf16>, vector<32x32xbf16>, vector<256x32xf32> -> vector<256x32xf32>
    %241 = arith.addf %235, %240 : vector<256x32xf32>
    %242 = vector.extract_strided_slice %200 {offsets = [2, 1, 0], sizes = [16, 16, 32], strides = [1, 1, 1]} : vector<18x18x32xbf16> to vector<16x16x32xbf16>
    %243 = vector.shape_cast %242 : vector<16x16x32xbf16> to vector<256x32xbf16>
    %244 = vector.extract_strided_slice %192 {offsets = [7, 0, 0], sizes = [1, 32, 32], strides = [1, 1, 1]} : vector<9x32x32xbf16> to vector<1x32x32xbf16>
    %245 = vector.shape_cast %244 : vector<1x32x32xbf16> to vector<32x32xbf16>
    %cst_70 = arith.constant dense<0.000000e+00> : vector<256x32xf32>
    %246 = tpu.matmul %243, %245, %cst_70 {dimension_numbers = #tpu.dot_dimension_numbers<[1], [0], [0], [1], [0, 0, 1, 1], [], []>} : vector<256x32xbf16>, vector<32x32xbf16>, vector<256x32xf32> -> vector<256x32xf32>
    %247 = arith.addf %241, %246 : vector<256x32xf32>
    %248 = vector.extract_strided_slice %200 {offsets = [2, 2, 0], sizes = [16, 16, 32], strides = [1, 1, 1]} : vector<18x18x32xbf16> to vector<16x16x32xbf16>
    %249 = vector.shape_cast %248 : vector<16x16x32xbf16> to vector<256x32xbf16>
    %250 = vector.extract_strided_slice %192 {offsets = [8, 0, 0], sizes = [1, 32, 32], strides = [1, 1, 1]} : vector<9x32x32xbf16> to vector<1x32x32xbf16>
    %251 = vector.shape_cast %250 : vector<1x32x32xbf16> to vector<32x32xbf16>
    %cst_71 = arith.constant dense<0.000000e+00> : vector<256x32xf32>
    %252 = tpu.matmul %249, %251, %cst_71 {dimension_numbers = #tpu.dot_dimension_numbers<[1], [0], [0], [1], [0, 0, 1, 1], [], []>} : vector<256x32xbf16>, vector<32x32xbf16>, vector<256x32xf32> -> vector<256x32xf32>
    %253 = arith.addf %247, %252 : vector<256x32xf32>
    %254 = vector.broadcast %193 : vector<1x32xf32> to vector<256x32xf32>
    %255 = arith.addf %253, %254 : vector<256x32xf32>
    %cst_72 = arith.constant dense<0.000000e+00> : vector<32xf32>
    %256 = vector.multi_reduction <add>, %255, %cst_72 [0] : vector<256x32xf32> to vector<32xf32>
    %257 = vector.shape_cast %256 : vector<32xf32> to vector<1x32xf32>
    %cst_73 = arith.constant 2.560000e+02 : f32
    %258 = vector.broadcast %cst_73 : f32 to vector<1x32xf32>
    %259 = arith.divf %257, %258 : vector<1x32xf32>
    %260 = arith.mulf %255, %255 : vector<256x32xf32>
    %cst_74 = arith.constant dense<0.000000e+00> : vector<32xf32>
    %261 = vector.multi_reduction <add>, %260, %cst_74 [0] : vector<256x32xf32> to vector<32xf32>
    %262 = vector.shape_cast %261 : vector<32xf32> to vector<1x32xf32>
    %cst_75 = arith.constant 2.560000e+02 : f32
    %263 = vector.broadcast %cst_75 : f32 to vector<1x32xf32>
    %264 = arith.divf %262, %263 : vector<1x32xf32>
    %265 = arith.mulf %259, %259 : vector<1x32xf32>
    %266 = arith.subf %264, %265 : vector<1x32xf32>
    %cst_76 = arith.constant 9.99999974E-6 : f32
    %267 = vector.broadcast %cst_76 : f32 to vector<1x32xf32>
    %268 = arith.addf %266, %267 : vector<1x32xf32>
    %269 = math.rsqrt %268 : vector<1x32xf32>
    %270 = arith.mulf %194, %269 : vector<1x32xf32>
    %271 = arith.mulf %259, %270 : vector<1x32xf32>
    %272 = arith.subf %195, %271 : vector<1x32xf32>
    %273 = vector.broadcast %270 : vector<1x32xf32> to vector<256x32xf32>
    %274 = arith.mulf %255, %273 : vector<256x32xf32>
    %275 = vector.broadcast %272 : vector<1x32xf32> to vector<256x32xf32>
    %276 = arith.addf %274, %275 : vector<256x32xf32>
    %cst_77 = arith.constant 0.000000e+00 : f32
    %277 = vector.broadcast %cst_77 : f32 to vector<256x32xf32>
    %278 = arith.maximumf %276, %277 : vector<256x32xf32>
    %279 = vector.shape_cast %278 : vector<256x32xf32> to vector<16x16x32xf32>
    %cst_78 = arith.constant 0.000000e+00 : f32
    %280 = vector.broadcast %cst_78 : f32 to vector<16x1x32xf32>
    %281 = tpu.concatenate %280, %191, %280 in 1 : vector<16x1x32xf32>, vector<16x16x32xf32>, vector<16x1x32xf32> -> vector<16x18x32xf32>
    %cst_79 = arith.constant 0.000000e+00 : f32
    %282 = vector.broadcast %cst_79 : f32 to vector<1x18x32xf32>
    %283 = tpu.concatenate %282, %281, %282 in 0 : vector<1x18x32xf32>, vector<16x18x32xf32>, vector<1x18x32xf32> -> vector<18x18x32xf32>
    %284 = arith.truncf %283 : vector<18x18x32xf32> to vector<18x18x32xbf16>
    %c0_80 = arith.constant 0 : index
    %c0_81 = arith.constant 0 : index
    %c0_82 = arith.constant 0 : index
    %285 = vector.load %arg7[%c0_80, %c0_81, %c0_82] : memref<9x9x32xbf16, #tpu.memory_space<vmem>>, vector<9x9x32xbf16>
    %286 = vector.extract_strided_slice %284 {offsets = [0, 0, 0], sizes = [16, 16, 32], strides = [1, 1, 1]} : vector<18x18x32xbf16> to vector<16x16x32xbf16>
    %287 = vector.shape_cast %286 : vector<16x16x32xbf16> to vector<256x32xbf16>
    %288 = vector.extract_strided_slice %285 {offsets = [0, 0, 0], sizes = [1, 9, 32], strides = [1, 1, 1]} : vector<9x9x32xbf16> to vector<1x9x32xbf16>
    %289 = vector.shape_cast %288 : vector<1x9x32xbf16> to vector<9x32xbf16>
    %cst_83 = arith.constant dense<0.000000e+00> : vector<9x256xf32>
    %290 = tpu.matmul %289, %287, %cst_83 {dimension_numbers = #tpu.dot_dimension_numbers<[1], [1], [0], [0], [0, 0, 1, 0], [], []>} : vector<9x32xbf16>, vector<256x32xbf16>, vector<9x256xf32> -> vector<9x256xf32>
    %291 = vector.extract_strided_slice %284 {offsets = [0, 1, 0], sizes = [16, 16, 32], strides = [1, 1, 1]} : vector<18x18x32xbf16> to vector<16x16x32xbf16>
    %292 = vector.shape_cast %291 : vector<16x16x32xbf16> to vector<256x32xbf16>
    %293 = vector.extract_strided_slice %285 {offsets = [1, 0, 0], sizes = [1, 9, 32], strides = [1, 1, 1]} : vector<9x9x32xbf16> to vector<1x9x32xbf16>
    %294 = vector.shape_cast %293 : vector<1x9x32xbf16> to vector<9x32xbf16>
    %cst_84 = arith.constant dense<0.000000e+00> : vector<9x256xf32>
    %295 = tpu.matmul %294, %292, %cst_84 {dimension_numbers = #tpu.dot_dimension_numbers<[1], [1], [0], [0], [0, 0, 1, 0], [], []>} : vector<9x32xbf16>, vector<256x32xbf16>, vector<9x256xf32> -> vector<9x256xf32>
    %296 = arith.addf %290, %295 : vector<9x256xf32>
    %297 = vector.extract_strided_slice %284 {offsets = [0, 2, 0], sizes = [16, 16, 32], strides = [1, 1, 1]} : vector<18x18x32xbf16> to vector<16x16x32xbf16>
    %298 = vector.shape_cast %297 : vector<16x16x32xbf16> to vector<256x32xbf16>
    %299 = vector.extract_strided_slice %285 {offsets = [2, 0, 0], sizes = [1, 9, 32], strides = [1, 1, 1]} : vector<9x9x32xbf16> to vector<1x9x32xbf16>
    %300 = vector.shape_cast %299 : vector<1x9x32xbf16> to vector<9x32xbf16>
    %cst_85 = arith.constant dense<0.000000e+00> : vector<9x256xf32>
    %301 = tpu.matmul %300, %298, %cst_85 {dimension_numbers = #tpu.dot_dimension_numbers<[1], [1], [0], [0], [0, 0, 1, 0], [], []>} : vector<9x32xbf16>, vector<256x32xbf16>, vector<9x256xf32> -> vector<9x256xf32>
    %302 = arith.addf %296, %301 : vector<9x256xf32>
    %303 = vector.extract_strided_slice %284 {offsets = [1, 0, 0], sizes = [16, 16, 32], strides = [1, 1, 1]} : vector<18x18x32xbf16> to vector<16x16x32xbf16>
    %304 = vector.shape_cast %303 : vector<16x16x32xbf16> to vector<256x32xbf16>
    %305 = vector.extract_strided_slice %285 {offsets = [3, 0, 0], sizes = [1, 9, 32], strides = [1, 1, 1]} : vector<9x9x32xbf16> to vector<1x9x32xbf16>
    %306 = vector.shape_cast %305 : vector<1x9x32xbf16> to vector<9x32xbf16>
    %cst_86 = arith.constant dense<0.000000e+00> : vector<9x256xf32>
    %307 = tpu.matmul %306, %304, %cst_86 {dimension_numbers = #tpu.dot_dimension_numbers<[1], [1], [0], [0], [0, 0, 1, 0], [], []>} : vector<9x32xbf16>, vector<256x32xbf16>, vector<9x256xf32> -> vector<9x256xf32>
    %308 = arith.addf %302, %307 : vector<9x256xf32>
    %309 = vector.extract_strided_slice %284 {offsets = [1, 1, 0], sizes = [16, 16, 32], strides = [1, 1, 1]} : vector<18x18x32xbf16> to vector<16x16x32xbf16>
    %310 = vector.shape_cast %309 : vector<16x16x32xbf16> to vector<256x32xbf16>
    %311 = vector.extract_strided_slice %285 {offsets = [4, 0, 0], sizes = [1, 9, 32], strides = [1, 1, 1]} : vector<9x9x32xbf16> to vector<1x9x32xbf16>
    %312 = vector.shape_cast %311 : vector<1x9x32xbf16> to vector<9x32xbf16>
    %cst_87 = arith.constant dense<0.000000e+00> : vector<9x256xf32>
    %313 = tpu.matmul %312, %310, %cst_87 {dimension_numbers = #tpu.dot_dimension_numbers<[1], [1], [0], [0], [0, 0, 1, 0], [], []>} : vector<9x32xbf16>, vector<256x32xbf16>, vector<9x256xf32> -> vector<9x256xf32>
    %314 = arith.addf %308, %313 : vector<9x256xf32>
    %315 = vector.extract_strided_slice %284 {offsets = [1, 2, 0], sizes = [16, 16, 32], strides = [1, 1, 1]} : vector<18x18x32xbf16> to vector<16x16x32xbf16>
    %316 = vector.shape_cast %315 : vector<16x16x32xbf16> to vector<256x32xbf16>
    %317 = vector.extract_strided_slice %285 {offsets = [5, 0, 0], sizes = [1, 9, 32], strides = [1, 1, 1]} : vector<9x9x32xbf16> to vector<1x9x32xbf16>
    %318 = vector.shape_cast %317 : vector<1x9x32xbf16> to vector<9x32xbf16>
    %cst_88 = arith.constant dense<0.000000e+00> : vector<9x256xf32>
    %319 = tpu.matmul %318, %316, %cst_88 {dimension_numbers = #tpu.dot_dimension_numbers<[1], [1], [0], [0], [0, 0, 1, 0], [], []>} : vector<9x32xbf16>, vector<256x32xbf16>, vector<9x256xf32> -> vector<9x256xf32>
    %320 = arith.addf %314, %319 : vector<9x256xf32>
    %321 = vector.extract_strided_slice %284 {offsets = [2, 0, 0], sizes = [16, 16, 32], strides = [1, 1, 1]} : vector<18x18x32xbf16> to vector<16x16x32xbf16>
    %322 = vector.shape_cast %321 : vector<16x16x32xbf16> to vector<256x32xbf16>
    %323 = vector.extract_strided_slice %285 {offsets = [6, 0, 0], sizes = [1, 9, 32], strides = [1, 1, 1]} : vector<9x9x32xbf16> to vector<1x9x32xbf16>
    %324 = vector.shape_cast %323 : vector<1x9x32xbf16> to vector<9x32xbf16>
    %cst_89 = arith.constant dense<0.000000e+00> : vector<9x256xf32>
    %325 = tpu.matmul %324, %322, %cst_89 {dimension_numbers = #tpu.dot_dimension_numbers<[1], [1], [0], [0], [0, 0, 1, 0], [], []>} : vector<9x32xbf16>, vector<256x32xbf16>, vector<9x256xf32> -> vector<9x256xf32>
    %326 = arith.addf %320, %325 : vector<9x256xf32>
    %327 = vector.extract_strided_slice %284 {offsets = [2, 1, 0], sizes = [16, 16, 32], strides = [1, 1, 1]} : vector<18x18x32xbf16> to vector<16x16x32xbf16>
    %328 = vector.shape_cast %327 : vector<16x16x32xbf16> to vector<256x32xbf16>
    %329 = vector.extract_strided_slice %285 {offsets = [7, 0, 0], sizes = [1, 9, 32], strides = [1, 1, 1]} : vector<9x9x32xbf16> to vector<1x9x32xbf16>
    %330 = vector.shape_cast %329 : vector<1x9x32xbf16> to vector<9x32xbf16>
    %cst_90 = arith.constant dense<0.000000e+00> : vector<9x256xf32>
    %331 = tpu.matmul %330, %328, %cst_90 {dimension_numbers = #tpu.dot_dimension_numbers<[1], [1], [0], [0], [0, 0, 1, 0], [], []>} : vector<9x32xbf16>, vector<256x32xbf16>, vector<9x256xf32> -> vector<9x256xf32>
    %332 = arith.addf %326, %331 : vector<9x256xf32>
    %333 = vector.extract_strided_slice %284 {offsets = [2, 2, 0], sizes = [16, 16, 32], strides = [1, 1, 1]} : vector<18x18x32xbf16> to vector<16x16x32xbf16>
    %334 = vector.shape_cast %333 : vector<16x16x32xbf16> to vector<256x32xbf16>
    %335 = vector.extract_strided_slice %285 {offsets = [8, 0, 0], sizes = [1, 9, 32], strides = [1, 1, 1]} : vector<9x9x32xbf16> to vector<1x9x32xbf16>
    %336 = vector.shape_cast %335 : vector<1x9x32xbf16> to vector<9x32xbf16>
    %cst_91 = arith.constant dense<0.000000e+00> : vector<9x256xf32>
    %337 = tpu.matmul %336, %334, %cst_91 {dimension_numbers = #tpu.dot_dimension_numbers<[1], [1], [0], [0], [0, 0, 1, 0], [], []>} : vector<9x32xbf16>, vector<256x32xbf16>, vector<9x256xf32> -> vector<9x256xf32>
    %338 = arith.addf %332, %337 : vector<9x256xf32>
    %c0_92 = arith.constant 0 : index
    %c0_93 = arith.constant 0 : index
    %339 = vector.load %arg8[%c0_92, %c0_93] : memref<9x1xf32, #tpu.memory_space<vmem>>, vector<9x1xf32>
    %340 = vector.broadcast %339 : vector<9x1xf32> to vector<9x256xf32>
    %341 = arith.addf %338, %340 : vector<9x256xf32>
    %c0_94 = arith.constant 0 : index
    %c0_95 = arith.constant 0 : index
    %c0_96 = arith.constant 0 : index
    %342 = vector.load %arg11[%c0_94, %c0_95, %c0_96] : memref<1x9x256xf32, #tpu.memory_space<vmem>>, vector<1x9x256xf32>
    %343 = vector.shape_cast %342 : vector<1x9x256xf32> to vector<9x256xf32>
    %344 = vector.shape_cast %341 : vector<9x256xf32> to vector<1x9x256xf32>
    tpu.vector_store %arg11[%c0_94, %c0_95, %c0_96], %344 {strides = array<i32>} : memref<1x9x256xf32, #tpu.memory_space<vmem>>, vector<1x9x256xf32>,
    %cst_97 = arith.constant 0.000000e+00 : f32
    %345 = vector.broadcast %cst_97 : f32 to vector<16x1x32xf32>
    %346 = tpu.concatenate %345, %279, %345 in 1 : vector<16x1x32xf32>, vector<16x16x32xf32>, vector<16x1x32xf32> -> vector<16x18x32xf32>
    %cst_98 = arith.constant 0.000000e+00 : f32
    %347 = vector.broadcast %cst_98 : f32 to vector<1x18x32xf32>
    %348 = tpu.concatenate %347, %346, %347 in 0 : vector<1x18x32xf32>, vector<16x18x32xf32>, vector<1x18x32xf32> -> vector<18x18x32xf32>
    %349 = arith.truncf %348 : vector<18x18x32xf32> to vector<18x18x32xbf16>
    %c0_99 = arith.constant 0 : index
    %c0_100 = arith.constant 0 : index
    %c0_101 = arith.constant 0 : index
    %350 = vector.load %arg9[%c0_99, %c0_100, %c0_101] : memref<9x4x32xbf16, #tpu.memory_space<vmem>>, vector<9x4x32xbf16>
    %351 = vector.extract_strided_slice %349 {offsets = [0, 0, 0], sizes = [16, 16, 32], strides = [1, 1, 1]} : vector<18x18x32xbf16> to vector<16x16x32xbf16>
    %352 = vector.shape_cast %351 : vector<16x16x32xbf16> to vector<256x32xbf16>
    %353 = vector.extract_strided_slice %350 {offsets = [0, 0, 0], sizes = [1, 4, 32], strides = [1, 1, 1]} : vector<9x4x32xbf16> to vector<1x4x32xbf16>
    %354 = vector.shape_cast %353 : vector<1x4x32xbf16> to vector<4x32xbf16>
    %cst_102 = arith.constant dense<0.000000e+00> : vector<4x256xf32>
    %355 = tpu.matmul %354, %352, %cst_102 {dimension_numbers = #tpu.dot_dimension_numbers<[1], [1], [0], [0], [0, 0, 1, 0], [], []>} : vector<4x32xbf16>, vector<256x32xbf16>, vector<4x256xf32> -> vector<4x256xf32>
    %356 = vector.extract_strided_slice %349 {offsets = [0, 1, 0], sizes = [16, 16, 32], strides = [1, 1, 1]} : vector<18x18x32xbf16> to vector<16x16x32xbf16>
    %357 = vector.shape_cast %356 : vector<16x16x32xbf16> to vector<256x32xbf16>
    %358 = vector.extract_strided_slice %350 {offsets = [1, 0, 0], sizes = [1, 4, 32], strides = [1, 1, 1]} : vector<9x4x32xbf16> to vector<1x4x32xbf16>
    %359 = vector.shape_cast %358 : vector<1x4x32xbf16> to vector<4x32xbf16>
    %cst_103 = arith.constant dense<0.000000e+00> : vector<4x256xf32>
    %360 = tpu.matmul %359, %357, %cst_103 {dimension_numbers = #tpu.dot_dimension_numbers<[1], [1], [0], [0], [0, 0, 1, 0], [], []>} : vector<4x32xbf16>, vector<256x32xbf16>, vector<4x256xf32> -> vector<4x256xf32>
    %361 = arith.addf %355, %360 : vector<4x256xf32>
    %362 = vector.extract_strided_slice %349 {offsets = [0, 2, 0], sizes = [16, 16, 32], strides = [1, 1, 1]} : vector<18x18x32xbf16> to vector<16x16x32xbf16>
    %363 = vector.shape_cast %362 : vector<16x16x32xbf16> to vector<256x32xbf16>
    %364 = vector.extract_strided_slice %350 {offsets = [2, 0, 0], sizes = [1, 4, 32], strides = [1, 1, 1]} : vector<9x4x32xbf16> to vector<1x4x32xbf16>
    %365 = vector.shape_cast %364 : vector<1x4x32xbf16> to vector<4x32xbf16>
    %cst_104 = arith.constant dense<0.000000e+00> : vector<4x256xf32>
    %366 = tpu.matmul %365, %363, %cst_104 {dimension_numbers = #tpu.dot_dimension_numbers<[1], [1], [0], [0], [0, 0, 1, 0], [], []>} : vector<4x32xbf16>, vector<256x32xbf16>, vector<4x256xf32> -> vector<4x256xf32>
    %367 = arith.addf %361, %366 : vector<4x256xf32>
    %368 = vector.extract_strided_slice %349 {offsets = [1, 0, 0], sizes = [16, 16, 32], strides = [1, 1, 1]} : vector<18x18x32xbf16> to vector<16x16x32xbf16>
    %369 = vector.shape_cast %368 : vector<16x16x32xbf16> to vector<256x32xbf16>
    %370 = vector.extract_strided_slice %350 {offsets = [3, 0, 0], sizes = [1, 4, 32], strides = [1, 1, 1]} : vector<9x4x32xbf16> to vector<1x4x32xbf16>
    %371 = vector.shape_cast %370 : vector<1x4x32xbf16> to vector<4x32xbf16>
    %cst_105 = arith.constant dense<0.000000e+00> : vector<4x256xf32>
    %372 = tpu.matmul %371, %369, %cst_105 {dimension_numbers = #tpu.dot_dimension_numbers<[1], [1], [0], [0], [0, 0, 1, 0], [], []>} : vector<4x32xbf16>, vector<256x32xbf16>, vector<4x256xf32> -> vector<4x256xf32>
    %373 = arith.addf %367, %372 : vector<4x256xf32>
    %374 = vector.extract_strided_slice %349 {offsets = [1, 1, 0], sizes = [16, 16, 32], strides = [1, 1, 1]} : vector<18x18x32xbf16> to vector<16x16x32xbf16>
    %375 = vector.shape_cast %374 : vector<16x16x32xbf16> to vector<256x32xbf16>
    %376 = vector.extract_strided_slice %350 {offsets = [4, 0, 0], sizes = [1, 4, 32], strides = [1, 1, 1]} : vector<9x4x32xbf16> to vector<1x4x32xbf16>
    %377 = vector.shape_cast %376 : vector<1x4x32xbf16> to vector<4x32xbf16>
    %cst_106 = arith.constant dense<0.000000e+00> : vector<4x256xf32>
    %378 = tpu.matmul %377, %375, %cst_106 {dimension_numbers = #tpu.dot_dimension_numbers<[1], [1], [0], [0], [0, 0, 1, 0], [], []>} : vector<4x32xbf16>, vector<256x32xbf16>, vector<4x256xf32> -> vector<4x256xf32>
    %379 = arith.addf %373, %378 : vector<4x256xf32>
    %380 = vector.extract_strided_slice %349 {offsets = [1, 2, 0], sizes = [16, 16, 32], strides = [1, 1, 1]} : vector<18x18x32xbf16> to vector<16x16x32xbf16>
    %381 = vector.shape_cast %380 : vector<16x16x32xbf16> to vector<256x32xbf16>
    %382 = vector.extract_strided_slice %350 {offsets = [5, 0, 0], sizes = [1, 4, 32], strides = [1, 1, 1]} : vector<9x4x32xbf16> to vector<1x4x32xbf16>
    %383 = vector.shape_cast %382 : vector<1x4x32xbf16> to vector<4x32xbf16>
    %cst_107 = arith.constant dense<0.000000e+00> : vector<4x256xf32>
    %384 = tpu.matmul %383, %381, %cst_107 {dimension_numbers = #tpu.dot_dimension_numbers<[1], [1], [0], [0], [0, 0, 1, 0], [], []>} : vector<4x32xbf16>, vector<256x32xbf16>, vector<4x256xf32> -> vector<4x256xf32>
    %385 = arith.addf %379, %384 : vector<4x256xf32>
    %386 = vector.extract_strided_slice %349 {offsets = [2, 0, 0], sizes = [16, 16, 32], strides = [1, 1, 1]} : vector<18x18x32xbf16> to vector<16x16x32xbf16>
    %387 = vector.shape_cast %386 : vector<16x16x32xbf16> to vector<256x32xbf16>
    %388 = vector.extract_strided_slice %350 {offsets = [6, 0, 0], sizes = [1, 4, 32], strides = [1, 1, 1]} : vector<9x4x32xbf16> to vector<1x4x32xbf16>
    %389 = vector.shape_cast %388 : vector<1x4x32xbf16> to vector<4x32xbf16>
    %cst_108 = arith.constant dense<0.000000e+00> : vector<4x256xf32>
    %390 = tpu.matmul %389, %387, %cst_108 {dimension_numbers = #tpu.dot_dimension_numbers<[1], [1], [0], [0], [0, 0, 1, 0], [], []>} : vector<4x32xbf16>, vector<256x32xbf16>, vector<4x256xf32> -> vector<4x256xf32>
    %391 = arith.addf %385, %390 : vector<4x256xf32>
    %392 = vector.extract_strided_slice %349 {offsets = [2, 1, 0], sizes = [16, 16, 32], strides = [1, 1, 1]} : vector<18x18x32xbf16> to vector<16x16x32xbf16>
    %393 = vector.shape_cast %392 : vector<16x16x32xbf16> to vector<256x32xbf16>
    %394 = vector.extract_strided_slice %350 {offsets = [7, 0, 0], sizes = [1, 4, 32], strides = [1, 1, 1]} : vector<9x4x32xbf16> to vector<1x4x32xbf16>
    %395 = vector.shape_cast %394 : vector<1x4x32xbf16> to vector<4x32xbf16>
    %cst_109 = arith.constant dense<0.000000e+00> : vector<4x256xf32>
    %396 = tpu.matmul %395, %393, %cst_109 {dimension_numbers = #tpu.dot_dimension_numbers<[1], [1], [0], [0], [0, 0, 1, 0], [], []>} : vector<4x32xbf16>, vector<256x32xbf16>, vector<4x256xf32> -> vector<4x256xf32>
    %397 = arith.addf %391, %396 : vector<4x256xf32>
    %398 = vector.extract_strided_slice %349 {offsets = [2, 2, 0], sizes = [16, 16, 32], strides = [1, 1, 1]} : vector<18x18x32xbf16> to vector<16x16x32xbf16>
    %399 = vector.shape_cast %398 : vector<16x16x32xbf16> to vector<256x32xbf16>
    %400 = vector.extract_strided_slice %350 {offsets = [8, 0, 0], sizes = [1, 4, 32], strides = [1, 1, 1]} : vector<9x4x32xbf16> to vector<1x4x32xbf16>
    %401 = vector.shape_cast %400 : vector<1x4x32xbf16> to vector<4x32xbf16>
    %cst_110 = arith.constant dense<0.000000e+00> : vector<4x256xf32>
    %402 = tpu.matmul %401, %399, %cst_110 {dimension_numbers = #tpu.dot_dimension_numbers<[1], [1], [0], [0], [0, 0, 1, 0], [], []>} : vector<4x32xbf16>, vector<256x32xbf16>, vector<4x256xf32> -> vector<4x256xf32>
    %403 = arith.addf %397, %402 : vector<4x256xf32>
    %c0_111 = arith.constant 0 : index
    %c0_112 = arith.constant 0 : index
    %404 = vector.load %arg10[%c0_111, %c0_112] : memref<4x1xf32, #tpu.memory_space<vmem>>, vector<4x1xf32>
    %405 = vector.broadcast %404 : vector<4x1xf32> to vector<4x256xf32>
    %406 = arith.addf %403, %405 : vector<4x256xf32>
    %c0_113 = arith.constant 0 : index
    %c0_114 = arith.constant 0 : index
    %407 = memref.load %arg1[%c0_113, %c0_114] : memref<1x1xf32, #tpu.memory_space<smem>>
    %408 = vector.broadcast %407 : f32 to vector<4x256xf32>
    %409 = arith.mulf %406, %408 : vector<4x256xf32>
    %410 = math.exp %409 : vector<4x256xf32>
    %c0_115 = arith.constant 0 : index
    %c0_116 = arith.constant 0 : index
    %c0_117 = arith.constant 0 : index
    %411 = vector.load %arg12[%c0_115, %c0_116, %c0_117] : memref<1x4x256xf32, #tpu.memory_space<vmem>>, vector<1x4x256xf32>
    %412 = vector.shape_cast %411 : vector<1x4x256xf32> to vector<4x256xf32>
    %413 = vector.shape_cast %410 : vector<4x256xf32> to vector<1x4x256xf32>
    tpu.vector_store %arg12[%c0_115, %c0_116, %c0_117], %413 {strides = array<i32>} : memref<1x4x256xf32, #tpu.memory_space<vmem>>, vector<1x4x256xf32>,
    return
  }
  func.func @transform_0(%arg0: i32) -> (i32, i32) {
    %c0_i32 = arith.constant 0 : i32
    %c0_i32_0 = arith.constant 0 : i32
    %c0_i32_1 = arith.constant 0 : i32
    return %c0_i32, %c0_i32_0 : i32, i32
  }
  func.func @transform_1(%arg0: i32) -> (i32, i32, i32, i32) {
    %c0_i32 = arith.constant 0 : i32
    %c0_i32_0 = arith.constant 0 : i32
    %c0_i32_1 = arith.constant 0 : i32
    %c0_i32_2 = arith.constant 0 : i32
    return %arg0, %c0_i32, %c0_i32_0, %c0_i32_1 : i32, i32, i32, i32
  }
  func.func @transform_2(%arg0: i32) -> (i32, i32, i32, i32) {
    %c0_i32 = arith.constant 0 : i32
    %c0_i32_0 = arith.constant 0 : i32
    %c0_i32_1 = arith.constant 0 : i32
    %c0_i32_2 = arith.constant 0 : i32
    %c0_i32_3 = arith.constant 0 : i32
    return %c0_i32, %c0_i32_0, %c0_i32_1, %c0_i32_2 : i32, i32, i32, i32
  }
  func.func @transform_3(%arg0: i32) -> (i32, i32, i32) {
    %c0_i32 = arith.constant 0 : i32
    %c0_i32_0 = arith.constant 0 : i32
    %c0_i32_1 = arith.constant 0 : i32
    %c0_i32_2 = arith.constant 0 : i32
    return %c0_i32, %c0_i32_0, %c0_i32_1 : i32, i32, i32
  }
  func.func @transform_4(%arg0: i32) -> (i32, i32, i32) {
    %c0_i32 = arith.constant 0 : i32
    %c0_i32_0 = arith.constant 0 : i32
    %c0_i32_1 = arith.constant 0 : i32
    %c0_i32_2 = arith.constant 0 : i32
    return %c0_i32, %c0_i32_0, %c0_i32_1 : i32, i32, i32
  }
  func.func @transform_5(%arg0: i32) -> (i32, i32, i32) {
    %c0_i32 = arith.constant 0 : i32
    %c0_i32_0 = arith.constant 0 : i32
    %c0_i32_1 = arith.constant 0 : i32
    %c0_i32_2 = arith.constant 0 : i32
    return %c0_i32, %c0_i32_0, %c0_i32_1 : i32, i32, i32
  }
  func.func @transform_6(%arg0: i32) -> (i32, i32, i32) {
    %c0_i32 = arith.constant 0 : i32
    %c0_i32_0 = arith.constant 0 : i32
    %c0_i32_1 = arith.constant 0 : i32
    %c0_i32_2 = arith.constant 0 : i32
    return %c0_i32, %c0_i32_0, %c0_i32_1 : i32, i32, i32
  }
  func.func @transform_7(%arg0: i32) -> (i32, i32) {
    %c0_i32 = arith.constant 0 : i32
    %c0_i32_0 = arith.constant 0 : i32
    %c0_i32_1 = arith.constant 0 : i32
    return %c0_i32, %c0_i32_0 : i32, i32
  }
  func.func @transform_8(%arg0: i32) -> (i32, i32, i32) {
    %c0_i32 = arith.constant 0 : i32
    %c0_i32_0 = arith.constant 0 : i32
    %c0_i32_1 = arith.constant 0 : i32
    %c0_i32_2 = arith.constant 0 : i32
    return %c0_i32, %c0_i32_0, %c0_i32_1 : i32, i32, i32
  }
  func.func @transform_9(%arg0: i32) -> (i32, i32) {
    %c0_i32 = arith.constant 0 : i32
    %c0_i32_0 = arith.constant 0 : i32
    %c0_i32_1 = arith.constant 0 : i32
    return %c0_i32, %c0_i32_0 : i32, i32
  }
  func.func @transform_10(%arg0: i32) -> (i32, i32, i32) {
    %c0_i32 = arith.constant 0 : i32
    %c0_i32_0 = arith.constant 0 : i32
    %c0_i32_1 = arith.constant 0 : i32
    return %arg0, %c0_i32, %c0_i32_0 : i32, i32, i32
  }
  func.func @transform_11(%arg0: i32) -> (i32, i32, i32) {
    %c0_i32 = arith.constant 0 : i32
    %c0_i32_0 = arith.constant 0 : i32
    %c0_i32_1 = arith.constant 0 : i32
    return %arg0, %c0_i32, %c0_i32_0 : i32, i32, i32
  }
}

</mosaic_0001>

<llo_original>
// kernel: tpu_custom_call.1
$region0: #{tpu_custom_call.1}
  #allocation0 [shape = 'u32[]', space=smem, size = 0x4, offset = 0x4, fixed_abs, tag = 'smem constant byte address 0x4 - core index']
  #allocation1 [shape = 'u32[144,128]{1,0:T(1,128)}', space=vmem, size = 0x12000, scoped, tag = 'internal scratch']
  #allocation2 [shape = 'f32[1,1]{1,0:T(1,128)S(6)}', space=smem, size = 0x200, scoped, tag = 'scoped memory for tpu_custom_call.1']
  %s0 = inlined_call_operand.<no memory space> [shape: f32[1,1], index: 0, kind: input, shape index: {}]
  %s1 = inlined_call_operand.hbm [shape: f32[2,16,16,32], index: 1, kind: input, shape index: {}]
  %s2 = inlined_call_operand.hbm [shape: bf16[2,9,32,64], index: 2, kind: input, shape index: {}]
  %s3 = inlined_call_operand.vmem [shape: f32[2,1,64], index: 3, kind: input, shape index: {}]
  %s4 = inlined_call_operand.vmem [shape: f32[2,1,64], index: 4, kind: input, shape index: {}]
  %s5 = inlined_call_operand.vmem [shape: f32[2,1,64], index: 5, kind: input, shape index: {}]
  %s6 = inlined_call_operand.hbm [shape: bf16[9,9,32], index: 6, kind: input, shape index: {}]
  %s7 = inlined_call_operand.vmem [shape: f32[9,1], index: 7, kind: input, shape index: {}]
  %s8 = inlined_call_operand.vmem [shape: bf16[9,4,32], index: 8, kind: input, shape index: {}]
  %s9 = inlined_call_operand.vmem [shape: f32[4,1], index: 9, kind: input, shape index: {}]
  %s10 = inlined_call_operand.vmem [shape: f32[2,9,256], index: 10, kind: output, shape index: {0}]
  %s11 = inlined_call_operand.hbm [shape: f32[2,4,256], index: 11, kind: output, shape index: {1}]
  %12 = xla_tuple %s10, %s11
  %s13 = sld [smem:[#allocation0]]
  $region93: #{tpu_custom_call.1} parent=0
    _
  %s15 = ssub.s32 1, %s13
  %s16 = scalar_select 0, %s15, %s13
  %17 = sst [smem:[#allocation2]] %s0
  $region1: #{tpu_custom_call.1} parent=0
    #allocation3 [shape = 'u8[262144]{0}', space=vmem, size = 0x40000, scoped, tag = 'input window, operand 1']
    #allocation4 [shape = 's32[2]{0}', space=sflag, size = 0x8, scoped, tag = 'scoped memory for tpu_custom_call.1']
    #allocation5 [shape = 's32[2]{0}', space=sflag, size = 0x8, scoped, tag = 'scoped memory for tpu_custom_call.1']
    #allocation6 [shape = 'u8[147456]{0}', space=vmem, size = 0x24000, scoped, tag = 'input window, operand 2, single buffered']
    #allocation7 [shape = 's32[1]{0}', space=sflag, size = 0x4, scoped, tag = 'scoped memory for tpu_custom_call.1']
    #allocation8 [shape = 'u8[36864]{0}', space=vmem, size = 0x9000, scoped, tag = 'input window, operand 6, single buffered']
    #allocation9 [shape = 'u8[8192]{0}', space=vmem, size = 0x2000, scoped, tag = 'output window, operand 1']
    %18 = vsyncpa [#allocation4], 0
    %s19 = scalar_lea.sflag [#allocation4], 1
    %20 = vsyncpa %s19, 0
    %21 = vsyncpa [#allocation7], 0
    %22 = vsyncpa [#allocation5], 0
    %s23 = scalar_lea.sflag [#allocation5], 1
    %24 = vsyncpa %s23, 0
    loop: start=0, step=1, limit=4
    $region2: #{tpu_custom_call.1} parent=1 // loop_pre_header
      _
    $region3: #{tpu_custom_call.1} parent=1 // loop_header
      %s26 = sphi 0, %s30
      %p27 = scmp.ge.s32.totalorder %s26, 4
      %s34 = sphi 0, %s34
      %s36 = sphi 0, %s34
      %s37 = sphi 0, %s36
      %s51 = sphi 0, %s37
      %s57 = sphi 0, %s59
      %s60 = sphi 0, %s57
      %s61 = sphi 0, %s60
      %s77 = sphi 0, %s61
      %s81 = sphi 0, %s81
      %s83 = sphi 0, %s81
      %s84 = sphi 0, %s83
      %s98 = sphi 0, %s84
      %s102 = sphi 0, %s102
      %s104 = sphi 0, %s102
      %s105 = sphi 0, %s104
      %s119 = sphi 0, %s105
      %s123 = sphi 0, %s123
      %s125 = sphi 0, %s123
      %s126 = sphi 0, %s125
      %s140 = sphi 0, %s126
      %s144 = sphi 0, %s144
      %s146 = sphi 0, %s144
      %s147 = sphi 0, %s146
      %s161 = sphi 0, %s147
      %s165 = sphi 0, %s165
      %s167 = sphi 0, %s165
      %s168 = sphi 0, %s167
      %s182 = sphi 0, %s168
      %s186 = sphi 0, %s186
      %s188 = sphi 0, %s186
      %s189 = sphi 0, %s188
      %s203 = sphi 0, %s189
      %s207 = sphi 0, %s207
      %s209 = sphi 0, %s207
      %s210 = sphi 0, %s209
      %s224 = sphi 0, %s210
      %s228 = sphi 0, %s228
      %s230 = sphi 0, %s228
      %s231 = sphi 0, %s230
      %s245 = sphi 0, %s231
      %s251 = sphi 0, %s253
      %s254 = sphi 0, %s251
      %s255 = sphi 0, %s254
      %s271 = sphi 0, %s255
      %s277 = sphi 0, %s279
      %s280 = sphi 0, %s277
      %s281 = sphi 0, %s280
      %s297 = sphi 0, %s281
    $region4: #{tpu_custom_call.1} parent=1 // loop_header_branch
      %29 = sbr.rel (%p27) target = $region8
    $region5: #{tpu_custom_call.1} parent=1 // loop_body
      %s31 = ssub.s32 %s26, 1
      %s32 = ssub.s32 %s26, 2
      %s33 = sadd.s32 %s26, 1
      %s35 = sadd.s32 %s34, 1
      %p38 = scmp.eq.s32.totalorder %s26, 1
      %p39 = scmp.ne.s32.totalorder %s34, %s36
      %p40 = scmp.eq.s32.totalorder %s26, 0
      %p41 = por %p39, %p40
      %p42 = scmp.ne.s32.totalorder %s34, %s36
      %p43 = scmp.eq.s32.totalorder %s31, 1
      %p44 = por %p42, %p43
      %p45 = scmp.ne.s32.totalorder %s36, %s37
      %p46 = scmp.eq.s32.totalorder %s31, 0
      %p47 = por %p45, %p46
      %p48 = scmp.ne.s32.totalorder %s36, %s37
      %p49 = scmp.eq.s32.totalorder %s32, 1
      %p50 = por %p48, %p49
      %p52 = scmp.ne.s32.totalorder %s37, %s51
      %p53 = scmp.eq.s32.totalorder %s32, 0
      %p54 = por %p52, %p53
      %s55 = ssub.s32 %s26, %s33
      %p56 = scmp.eq.s32.totalorder %s55, 0
      %s58 = sadd.s32 %s57, 1
      %s59 = scalar_select %p56, %s57, %s58
      %p62 = pneg %p56
      %p63 = scmp.eq.s32.totalorder %s26, 1
      %p64 = por %p62, %p63
      %p65 = scmp.ne.s32.totalorder %s57, %s60
      %p66 = scmp.eq.s32.totalorder %s26, 0
      %p67 = por %p65, %p66
      %p68 = scmp.ne.s32.totalorder %s57, %s60
      %p69 = scmp.eq.s32.totalorder %s31, 1
      %p70 = por %p68, %p69
      %p71 = scmp.ne.s32.totalorder %s60, %s61
      %p72 = scmp.eq.s32.totalorder %s31, 0
      %p73 = por %p71, %p72
      %p74 = scmp.ne.s32.totalorder %s60, %s61
      %p75 = scmp.eq.s32.totalorder %s32, 1
      %p76 = por %p74, %p75
      %p78 = scmp.ne.s32.totalorder %s61, %s77
      %p79 = scmp.eq.s32.totalorder %s32, 0
      %p80 = por %p78, %p79
      %s82 = sadd.s32 %s81, 1
      %p85 = scmp.eq.s32.totalorder %s26, 1
      %p86 = scmp.ne.s32.totalorder %s81, %s83
      %p87 = scmp.eq.s32.totalorder %s26, 0
      %p88 = por %p86, %p87
      %p89 = scmp.ne.s32.totalorder %s81, %s83
      %p90 = scmp.eq.s32.totalorder %s31, 1
      %p91 = por %p89, %p90
      %p92 = scmp.ne.s32.totalorder %s83, %s84
      %p93 = scmp.eq.s32.totalorder %s31, 0
      %p94 = por %p92, %p93
      %p95 = scmp.ne.s32.totalorder %s83, %s84
      %p96 = scmp.eq.s32.totalorder %s32, 1
      %p97 = por %p95, %p96
      %p99 = scmp.ne.s32.totalorder %s84, %s98
      %p100 = scmp.eq.s32.totalorder %s32, 0
      %p101 = por %p99, %p100
      %s103 = sadd.s32 %s102, 1
      %p106 = scmp.eq.s32.totalorder %s26, 1
      %p107 = scmp.ne.s32.totalorder %s102, %s104
      %p108 = scmp.eq.s32.totalorder %s26, 0
      %p109 = por %p107, %p108
      %p110 = scmp.ne.s32.totalorder %s102, %s104
      %p111 = scmp.eq.s32.totalorder %s31, 1
      %p112 = por %p110, %p111
      %p113 = scmp.ne.s32.totalorder %s104, %s105
      %p114 = scmp.eq.s32.totalorder %s31, 0
      %p115 = por %p113, %p114
      %p116 = scmp.ne.s32.totalorder %s104, %s105
      %p117 = scmp.eq.s32.totalorder %s32, 1
      %p118 = por %p116, %p117
      %p120 = scmp.ne.s32.totalorder %s105, %s119
      %p121 = scmp.eq.s32.totalorder %s32, 0
      %p122 = por %p120, %p121
      %s124 = sadd.s32 %s123, 1
      %p127 = scmp.eq.s32.totalorder %s26, 1
      %p128 = scmp.ne.s32.totalorder %s123, %s125
      %p129 = scmp.eq.s32.totalorder %s26, 0
      %p130 = por %p128, %p129
      %p131 = scmp.ne.s32.totalorder %s123, %s125
      %p132 = scmp.eq.s32.totalorder %s31, 1
      %p133 = por %p131, %p132
      %p134 = scmp.ne.s32.totalorder %s125, %s126
      %p135 = scmp.eq.s32.totalorder %s31, 0
      %p136 = por %p134, %p135
      %p137 = scmp.ne.s32.totalorder %s125, %s126
      %p138 = scmp.eq.s32.totalorder %s32, 1
      %p139 = por %p137, %p138
      %p141 = scmp.ne.s32.totalorder %s126, %s140
      %p142 = scmp.eq.s32.totalorder %s32, 0
      %p143 = por %p141, %p142
      %s145 = sadd.s32 %s144, 1
      %p148 = scmp.eq.s32.totalorder %s26, 1
      %p149 = scmp.ne.s32.totalorder %s144, %s146
      %p150 = scmp.eq.s32.totalorder %s26, 0
      %p151 = por %p149, %p150
      %p152 = scmp.ne.s32.totalorder %s144, %s146
      %p153 = scmp.eq.s32.totalorder %s31, 1
      %p154 = por %p152, %p153
      %p155 = scmp.ne.s32.totalorder %s146, %s147
      %p156 = scmp.eq.s32.totalorder %s31, 0
      %p157 = por %p155, %p156
      %p158 = scmp.ne.s32.totalorder %s146, %s147
      %p159 = scmp.eq.s32.totalorder %s32, 1
      %p160 = por %p158, %p159
      %p162 = scmp.ne.s32.totalorder %s147, %s161
      %p163 = scmp.eq.s32.totalorder %s32, 0
      %p164 = por %p162, %p163
      %s166 = sadd.s32 %s165, 1
      %p169 = scmp.eq.s32.totalorder %s26, 1
      %p170 = scmp.ne.s32.totalorder %s165, %s167
      %p171 = scmp.eq.s32.totalorder %s26, 0
      %p172 = por %p170, %p171
      %p173 = scmp.ne.s32.totalorder %s165, %s167
      %p174 = scmp.eq.s32.totalorder %s31, 1
      %p175 = por %p173, %p174
      %p176 = scmp.ne.s32.totalorder %s167, %s168
      %p177 = scmp.eq.s32.totalorder %s31, 0
      %p178 = por %p176, %p177
      %p179 = scmp.ne.s32.totalorder %s167, %s168
      %p180 = scmp.eq.s32.totalorder %s32, 1
      %p181 = por %p179, %p180
      %p183 = scmp.ne.s32.totalorder %s168, %s182
      %p184 = scmp.eq.s32.totalorder %s32, 0
      %p185 = por %p183, %p184
      %s187 = sadd.s32 %s186, 1
      %p190 = scmp.eq.s32.totalorder %s26, 1
      %p191 = scmp.ne.s32.totalorder %s186, %s188
      %p192 = scmp.eq.s32.totalorder %s26, 0
      %p193 = por %p191, %p192
      %p194 = scmp.ne.s32.totalorder %s186, %s188
      %p195 = scmp.eq.s32.totalorder %s31, 1
      %p196 = por %p194, %p195
      %p197 = scmp.ne.s32.totalorder %s188, %s189
      %p198 = scmp.eq.s32.totalorder %s31, 0
      %p199 = por %p197, %p198
      %p200 = scmp.ne.s32.totalorder %s188, %s189
      %p201 = scmp.eq.s32.totalorder %s32, 1
      %p202 = por %p200, %p201
      %p204 = scmp.ne.s32.totalorder %s189, %s203
      %p205 = scmp.eq.s32.totalorder %s32, 0
      %p206 = por %p204, %p205
      %s208 = sadd.s32 %s207, 1
      %p211 = scmp.eq.s32.totalorder %s26, 1
      %p212 = scmp.ne.s32.totalorder %s207, %s209
      %p213 = scmp.eq.s32.totalorder %s26, 0
      %p214 = por %p212, %p213
      %p215 = scmp.ne.s32.totalorder %s207, %s209
      %p216 = scmp.eq.s32.totalorder %s31, 1
      %p217 = por %p215, %p216
      %p218 = scmp.ne.s32.totalorder %s209, %s210
      %p219 = scmp.eq.s32.totalorder %s31, 0
      %p220 = por %p218, %p219
      %p221 = scmp.ne.s32.totalorder %s209, %s210
      %p222 = scmp.eq.s32.totalorder %s32, 1
      %p223 = por %p221, %p222
      %p225 = scmp.ne.s32.totalorder %s210, %s224
      %p226 = scmp.eq.s32.totalorder %s32, 0
      %p227 = por %p225, %p226
      %s229 = sadd.s32 %s228, 1
      %p232 = scmp.eq.s32.totalorder %s26, 1
      %p233 = scmp.ne.s32.totalorder %s228, %s230
      %p234 = scmp.eq.s32.totalorder %s26, 0
      %p235 = por %p233, %p234
      %p236 = scmp.ne.s32.totalorder %s228, %s230
      %p237 = scmp.eq.s32.totalorder %s31, 1
      %p238 = por %p236, %p237
      %p239 = scmp.ne.s32.totalorder %s230, %s231
      %p240 = scmp.eq.s32.totalorder %s31, 0
      %p241 = por %p239, %p240
      %p242 = scmp.ne.s32.totalorder %s230, %s231
      %p243 = scmp.eq.s32.totalorder %s32, 1
      %p244 = por %p242, %p243
      %p246 = scmp.ne.s32.totalorder %s231, %s245
      %p247 = scmp.eq.s32.totalorder %s32, 0
      %p248 = por %p246, %p247
      %s249 = ssub.s32 %s26, %s33
      %p250 = scmp.eq.s32.totalorder %s249, 0
      %s252 = sadd.s32 %s251, 1
      %s253 = scalar_select %p250, %s251, %s252
      %p256 = pneg %p250
      %p257 = scmp.eq.s32.totalorder %s26, 1
      %p258 = por %p256, %p257
      %p259 = scmp.ne.s32.totalorder %s251, %s254
      %p260 = scmp.eq.s32.totalorder %s26, 0
      %p261 = por %p259, %p260
      %p262 = scmp.ne.s32.totalorder %s251, %s254
      %p263 = scmp.eq.s32.totalorder %s31, 1
      %p264 = por %p262, %p263
      %p265 = scmp.ne.s32.totalorder %s254, %s255
      %p266 = scmp.eq.s32.totalorder %s31, 0
      %p267 = por %p265, %p266
      %p268 = scmp.ne.s32.totalorder %s254, %s255
      %p269 = scmp.eq.s32.totalorder %s32, 1
      %p270 = por %p268, %p269
      %p272 = scmp.ne.s32.totalorder %s255, %s271
      %p273 = scmp.eq.s32.totalorder %s32, 0
      %p274 = por %p272, %p273
      %s275 = ssub.s32 %s26, %s33
      %p276 = scmp.eq.s32.totalorder %s275, 0
      %s278 = sadd.s32 %s277, 1
      %s279 = scalar_select %p276, %s277, %s278
      %p282 = pneg %p276
      %p283 = scmp.eq.s32.totalorder %s26, 1
      %p284 = por %p282, %p283
      %p285 = scmp.ne.s32.totalorder %s277, %s280
      %p286 = scmp.eq.s32.totalorder %s26, 0
      %p287 = por %p285, %p286
      %p288 = scmp.ne.s32.totalorder %s277, %s280
      %p289 = scmp.eq.s32.totalorder %s31, 1
      %p290 = por %p288, %p289
      %p291 = scmp.ne.s32.totalorder %s280, %s281
      %p292 = scmp.eq.s32.totalorder %s31, 0
      %p293 = por %p291, %p292
      %p294 = scmp.ne.s32.totalorder %s280, %s281
      %p295 = scmp.eq.s32.totalorder %s32, 1
      %p296 = por %p294, %p295
      %p298 = scmp.ne.s32.totalorder %s281, %s297
      %p299 = scmp.eq.s32.totalorder %s32, 0
      %p300 = por %p298, %p299
      %p301 = scmp.le.s32.totalorder 1, %s26
      %p302 = scmp.lt.s32.totalorder %s26, 3
      %p303 = pnand %p301, %p302
      %p304 = pneg %p303
      // Predicated region
      $region9: #{tpu_custom_call.1} parent=5 // pred_check
        _
      $region10: #{tpu_custom_call.1} parent=5 // pred_check_branch
        %306 = sbr.rel (%p303) target = $region12
      $region11: #{tpu_custom_call.1} parent=5 // pred_region
        %s307 = ssub.s32 %s26, 1
        // Predicated region
        $region13: #{tpu_custom_call.1} parent=11 // pred_check
          %p308 = pneg %p47
        $region14: #{tpu_custom_call.1} parent=11 // pred_check_branch
          %310 = sbr.rel (%p308) target = $region16
        $region15: #{tpu_custom_call.1} parent=11 // pred_region
          _
        $region16: #{tpu_custom_call.1} parent=11 // pred_fallthru
          _
        // Predicated region
        $region17: #{tpu_custom_call.1} parent=11 // pred_check
          %p311 = pneg %p94
        $region18: #{tpu_custom_call.1} parent=11 // pred_check_branch
          %313 = sbr.rel (%p311) target = $region20
        $region19: #{tpu_custom_call.1} parent=11 // pred_region
          %s315 = ssub.s32 4608, 4608
          %316 = vsyncadd [#allocation7], %s315
          %s317 = sshll.u32 [#allocation6], 4
          %s318 = int_to_ptr.vmem [resolvable:$true] %s317
          %323 = dma.hbm_to_vmem [thread:$0]  %s2, 4608, %s318, [#allocation7], 64, 64, 4
        $region20: #{tpu_custom_call.1} parent=11 // pred_fallthru
          _
        // Predicated region
        $region21: #{tpu_custom_call.1} parent=11 // pred_check
          %p324 = pneg %p115
        $region22: #{tpu_custom_call.1} parent=11 // pred_check_branch
          %326 = sbr.rel (%p324) target = $region24
        $region23: #{tpu_custom_call.1} parent=11 // pred_region
          _
        $region24: #{tpu_custom_call.1} parent=11 // pred_fallthru
          _
        // Predicated region
        $region25: #{tpu_custom_call.1} parent=11 // pred_check
          %p327 = pneg %p136
        $region26: #{tpu_custom_call.1} parent=11 // pred_check_branch
          %329 = sbr.rel (%p327) target = $region28
        $region27: #{tpu_custom_call.1} parent=11 // pred_region
          _
        $region28: #{tpu_custom_call.1} parent=11 // pred_fallthru
          _
        // Predicated region
        $region29: #{tpu_custom_call.1} parent=11 // pred_check
          %p330 = pneg %p157
        $region30: #{tpu_custom_call.1} parent=11 // pred_check_branch
          %332 = sbr.rel (%p330) target = $region32
        $region31: #{tpu_custom_call.1} parent=11 // pred_region
          _
        $region32: #{tpu_custom_call.1} parent=11 // pred_fallthru
          _
        // Predicated region
        $region33: #{tpu_custom_call.1} parent=11 // pred_check
          %p333 = pneg %p178
        $region34: #{tpu_custom_call.1} parent=11 // pred_check_branch
          %335 = sbr.rel (%p333) target = $region36
        $region35: #{tpu_custom_call.1} parent=11 // pred_region
          %s337 = ssub.s32 1152, 1152
          %338 = vsyncadd [#allocation7], %s337
          %s339 = sshll.u32 [#allocation8], 4
          %s340 = int_to_ptr.vmem [resolvable:$true] %s339
          %345 = dma.hbm_to_vmem [thread:$0]  %s6, 1152, %s340, [#allocation7], 64, 64, 4
        $region36: #{tpu_custom_call.1} parent=11 // pred_fallthru
          _
        // Predicated region
        $region37: #{tpu_custom_call.1} parent=11 // pred_check
          %p346 = pneg %p199
        $region38: #{tpu_custom_call.1} parent=11 // pred_check_branch
          %348 = sbr.rel (%p346) target = $region40
        $region39: #{tpu_custom_call.1} parent=11 // pred_region
          _
        $region40: #{tpu_custom_call.1} parent=11 // pred_fallthru
          _
        // Predicated region
        $region41: #{tpu_custom_call.1} parent=11 // pred_check
          %p349 = pneg %p220
        $region42: #{tpu_custom_call.1} parent=11 // pred_check_branch
          %351 = sbr.rel (%p349) target = $region44
        $region43: #{tpu_custom_call.1} parent=11 // pred_region
          _
        $region44: #{tpu_custom_call.1} parent=11 // pred_fallthru
          _
        // Predicated region
        $region45: #{tpu_custom_call.1} parent=11 // pred_check
          %p352 = pneg %p241
        $region46: #{tpu_custom_call.1} parent=11 // pred_check_branch
          %354 = sbr.rel (%p352) target = $region48
        $region47: #{tpu_custom_call.1} parent=11 // pred_region
          _
        $region48: #{tpu_custom_call.1} parent=11 // pred_fallthru
          _
      $region12: #{tpu_custom_call.1} parent=5 // pred_fallthru
        _
      %p355 = scmp.lt.s32.totalorder %s26, 2
      // Predicated region
      $region49: #{tpu_custom_call.1} parent=5 // pred_check
        %p356 = pneg %p355
      $region50: #{tpu_custom_call.1} parent=5 // pred_check_branch
        %358 = sbr.rel (%p356) target = $region52
      $region51: #{tpu_custom_call.1} parent=5 // pred_region
        // Predicated region
        $region53: #{tpu_custom_call.1} parent=51 // pred_check
          %p359 = pneg %p67
        $region54: #{tpu_custom_call.1} parent=51 // pred_check_branch
          %361 = sbr.rel (%p359) target = $region56
        $region55: #{tpu_custom_call.1} parent=51 // pred_region
          %s362 = sand.u32 %s57, 1
          %s363 = scalar_lea.sflag [#allocation4], %s362
          %s364 = sand.u32 %s57, 1
          %s365 = smul.addr %s364, 256
          %s366 = scalar_lea.vmem [#allocation3], %s365
          %s368 = ssub.s32 4096, 4096
          %369 = vsyncadd %s363, %s368
          %s370 = smul.addr %s26, 32
          %s371 = smul.addr %s370, 128
          %s372 = scalar_lea.hbm %s1, %s371
          %s373 = sshll.u32 %s366, 4
          %s374 = int_to_ptr.vmem [resolvable:$true] %s373
          %379 = dma.hbm_to_vmem [thread:$0]  %s372, 4096, %s374, %s363, 128, 128, 8
        $region56: #{tpu_custom_call.1} parent=51 // pred_fallthru
          _
      $region52: #{tpu_custom_call.1} parent=5 // pred_fallthru
        _
      %p380 = scmp.le.s32.totalorder 1, %s26
      %p381 = scmp.lt.s32.totalorder %s26, 3
      %p382 = pnand %p380, %p381
      %p383 = pneg %p382
      // Predicated region
      $region57: #{tpu_custom_call.1} parent=5 // pred_check
        _
      $region58: #{tpu_custom_call.1} parent=5 // pred_check_branch
        %385 = sbr.rel (%p382) target = $region60
      $region59: #{tpu_custom_call.1} parent=5 // pred_region
        %s386 = ssub.s32 %s26, 1
        %s387 = sand.u32 %s60, 1
        %s388 = scalar_lea.sflag [#allocation4], %s387
        %s389 = sand.u32 %s60, 1
        %s390 = smul.addr %s389, 256
        %s391 = scalar_lea.vmem [#allocation3], %s390
        // Predicated region
        $region61: #{tpu_custom_call.1} parent=59 // pred_check
          %p392 = pneg %p73
        $region62: #{tpu_custom_call.1} parent=59 // pred_check_branch
          %394 = sbr.rel (%p392) target = $region64
        $region63: #{tpu_custom_call.1} parent=59 // pred_region
          %395 = dma.done %s388, 4096
        $region64: #{tpu_custom_call.1} parent=59 // pred_fallthru
          _
        // Predicated region
        $region65: #{tpu_custom_call.1} parent=59 // pred_check
          %p396 = pneg %p94
        $region66: #{tpu_custom_call.1} parent=59 // pred_check_branch
          %398 = sbr.rel (%p396) target = $region68
        $region67: #{tpu_custom_call.1} parent=59 // pred_region
          %399 = dma.done [#allocation7], 4608
        $region68: #{tpu_custom_call.1} parent=59 // pred_fallthru
          _
        // Predicated region
        $region69: #{tpu_custom_call.1} parent=59 // pred_check
          %p400 = pneg %p178
        $region70: #{tpu_custom_call.1} parent=59 // pred_check_branch
          %402 = sbr.rel (%p400) target = $region72
        $region71: #{tpu_custom_call.1} parent=59 // pred_region
          %403 = dma.done [#allocation7], 1152
        $region72: #{tpu_custom_call.1} parent=59 // pred_fallthru
          _
        %p404 = pneg %p47
        %p405 = pneg %p44
        %s406 = sand.u32 %s60, 1
        %s407 = scalar_lea.sflag [#allocation4], %s406
        %s408 = sand.u32 %s60, 1
        %s409 = smul.addr %s408, 256
        %s410 = scalar_lea.vmem [#allocation3], %s409
        %p411 = pneg %p73
        %p412 = pneg %p70
        %p413 = pneg %p94
        %p414 = pneg %p91
        %p415 = pneg %p115
        %p416 = pneg %p112
        %p417 = pneg %p136
        %p418 = pneg %p133
        %p419 = pneg %p157
        %p420 = pneg %p154
        %p421 = pneg %p178
        %p422 = pneg %p175
        %p423 = pneg %p199
        %p424 = pneg %p196
        %p425 = pneg %p220
        %p426 = pneg %p217
        %p427 = pneg %p241
        %p428 = pneg %p238
        %p429 = pneg %p267
        %p430 = pneg %p264
        %p431 = scmp.lt.s32.totalorder %s31, 1
        %s432 = scalar_select %p431, %s31, 1
        %s433 = smul.addr %s432, 4
        %s434 = smul.addr %s433, 8
        %s435 = scalar_lea.vmem %s10, %s434
        %p436 = pneg %p293
        %p437 = pneg %p290
        %s438 = sand.u32 %s280, 1
        %s439 = scalar_lea.sflag [#allocation5], %s438
        %s440 = sand.u32 %s280, 1
        %s441 = smul.addr %s440, 8
        %s442 = scalar_lea.vmem [#allocation9], %s441
        %p443 = scmp.lt.s32.totalorder %s31, 1
        %s444 = scalar_select %p443, %s31, 1
        %s445 = smul.addr %s444, 4
        %s446 = smul.addr %s445, 8
        %s447 = scalar_lea.vmem %s10, %s446
        %v449 = vld [vmem:[%s391] sm:$0xff]
        %v450 = vld [vmem:[%s391 + $0x8] sm:$0xff]
        %v451 = vld [vmem:[%s391 + $0x10] sm:$0xff]
        %v452 = vld [vmem:[%s391 + $0x18] sm:$0xff]
        %v453 = vld [vmem:[%s391 + $0x20] sm:$0xff]
        %v454 = vld [vmem:[%s391 + $0x28] sm:$0xff]
        %v455 = vld [vmem:[%s391 + $0x30] sm:$0xff]
        %v456 = vld [vmem:[%s391 + $0x38] sm:$0xff]
        %v457 = vld [vmem:[%s391 + $0x40] sm:$0xff]
        %v458 = vld [vmem:[%s391 + $0x48] sm:$0xff]
        %v459 = vld [vmem:[%s391 + $0x50] sm:$0xff]
        %v460 = vld [vmem:[%s391 + $0x58] sm:$0xff]
        %v461 = vld [vmem:[%s391 + $0x60] sm:$0xff]
        %v462 = vld [vmem:[%s391 + $0x68] sm:$0xff]
        %v463 = vld [vmem:[%s391 + $0x70] sm:$0xff]
        %v464 = vld [vmem:[%s391 + $0x78] sm:$0xff]
        %v465 = vld [vmem:[%s391 + $0x80] sm:$0xff]
        %v466 = vld [vmem:[%s391 + $0x88] sm:$0xff]
        %v467 = vld [vmem:[%s391 + $0x90] sm:$0xff]
        %v468 = vld [vmem:[%s391 + $0x98] sm:$0xff]
        %v469 = vld [vmem:[%s391 + $0xa0] sm:$0xff]
        %v470 = vld [vmem:[%s391 + $0xa8] sm:$0xff]
        %v471 = vld [vmem:[%s391 + $0xb0] sm:$0xff]
        %v472 = vld [vmem:[%s391 + $0xb8] sm:$0xff]
        %v473 = vld [vmem:[%s391 + $0xc0] sm:$0xff]
        %v474 = vld [vmem:[%s391 + $0xc8] sm:$0xff]
        %v475 = vld [vmem:[%s391 + $0xd0] sm:$0xff]
        %v476 = vld [vmem:[%s391 + $0xd8] sm:$0xff]
        %v477 = vld [vmem:[%s391 + $0xe0] sm:$0xff]
        %v478 = vld [vmem:[%s391 + $0xe8] sm:$0xff]
        %v479 = vld [vmem:[%s391 + $0xf0] sm:$0xff]
        %v480 = vld [vmem:[%s391 + $0xf8] sm:$0xff]
        %v481 = vld [vmem:[#allocation6] sm:$0xf]
        %v482 = vld [vmem:[#allocation6 + $0x4] sm:$0xf]
        %v483 = vld [vmem:[#allocation6 + $0x8] sm:$0xf]
        %v484 = vld [vmem:[#allocation6 + $0xc] sm:$0xf]
        %v485 = vld [vmem:[#allocation6 + $0x10] sm:$0xf]
        %v486 = vld [vmem:[#allocation6 + $0x14] sm:$0xf]
        %v487 = vld [vmem:[#allocation6 + $0x18] sm:$0xf]
        %v488 = vld [vmem:[#allocation6 + $0x1c] sm:$0xf]
        %v489 = vld [vmem:[#allocation6 + $0x20] sm:$0xf]
        %v490 = vld [vmem:[#allocation6 + $0x24] sm:$0xf]
        %v491 = vld [vmem:[#allocation6 + $0x28] sm:$0xf]
        %v492 = vld [vmem:[#allocation6 + $0x2c] sm:$0xf]
        %v493 = vld [vmem:[#allocation6 + $0x30] sm:$0xf]
        %v494 = vld [vmem:[#allocation6 + $0x34] sm:$0xf]
        %v495 = vld [vmem:[#allocation6 + $0x38] sm:$0xf]
        %v496 = vld [vmem:[#allocation6 + $0x3c] sm:$0xf]
        %v497 = vld [vmem:[#allocation6 + $0x40] sm:$0xf]
        %v498 = vld [vmem:[#allocation6 + $0x44] sm:$0xf]
        %v499 = vld [vmem:[#allocation6 + $0x48] sm:$0xf]
        %v500 = vld [vmem:[#allocation6 + $0x4c] sm:$0xf]
        %v501 = vld [vmem:[#allocation6 + $0x50] sm:$0xf]
        %v502 = vld [vmem:[#allocation6 + $0x54] sm:$0xf]
        %v503 = vld [vmem:[#allocation6 + $0x58] sm:$0xf]
        %v504 = vld [vmem:[#allocation6 + $0x5c] sm:$0xf]
        %v505 = vld [vmem:[#allocation6 + $0x60] sm:$0xf]
        %v506 = vld [vmem:[#allocation6 + $0x64] sm:$0xf]
        %v507 = vld [vmem:[#allocation6 + $0x68] sm:$0xf]
        %v508 = vld [vmem:[#allocation6 + $0x6c] sm:$0xf]
        %v509 = vld [vmem:[#allocation6 + $0x70] sm:$0xf]
        %v510 = vld [vmem:[#allocation6 + $0x74] sm:$0xf]
        %v511 = vld [vmem:[#allocation6 + $0x78] sm:$0xf]
        %v512 = vld [vmem:[#allocation6 + $0x7c] sm:$0xf]
        %v513 = vld [vmem:[#allocation6 + $0x80] sm:$0xf]
        %v514 = vld [vmem:[#allocation6 + $0x84] sm:$0xf]
        %v515 = vld [vmem:[#allocation6 + $0x88] sm:$0xf]
        %v516 = vld [vmem:[#allocation6 + $0x8c] sm:$0xf]
        %v517 = vld [vmem:[%s3] sm:$0x1]
        %v518 = vld [vmem:[%s4] sm:$0x1]
        %v519 = vld [vmem:[%s5] sm:$0x1]
        %vm552 = vcmask 1040384
        %v553 = vrot.slane %v449, 7
        %v554 = vrot.slane %v450, 7
        %v555 = vsel %vm552, %v553, %v554
        %v556 = vrot.slane %v451, 7
        %v557 = vrot.slane %v452, 7
        %v558 = vsel %vm552, %v556, %v557
        %v559 = vrot.slane %v453, 7
        %v560 = vrot.slane %v454, 7
        %v561 = vsel %vm552, %v559, %v560
        %v562 = vrot.slane %v455, 7
        %v563 = vrot.slane %v456, 7
        %v564 = vsel %vm552, %v562, %v563
        %v565 = vrot.slane %v457, 7
        %v566 = vrot.slane %v458, 7
        %v567 = vsel %vm552, %v565, %v566
        %v568 = vrot.slane %v459, 7
        %v569 = vrot.slane %v460, 7
        %v570 = vsel %vm552, %v568, %v569
        %v571 = vrot.slane %v461, 7
        %v572 = vrot.slane %v462, 7
        %v573 = vsel %vm552, %v571, %v572
        %v574 = vrot.slane %v463, 7
        %v575 = vrot.slane %v464, 7
        %v576 = vsel %vm552, %v574, %v575
        %v577 = vrot.slane %v465, 7
        %v578 = vrot.slane %v466, 7
        %v579 = vsel %vm552, %v577, %v578
        %v580 = vrot.slane %v467, 7
        %v581 = vrot.slane %v468, 7
        %v582 = vsel %vm552, %v580, %v581
        %v583 = vrot.slane %v469, 7
        %v584 = vrot.slane %v470, 7
        %v585 = vsel %vm552, %v583, %v584
        %v586 = vrot.slane %v471, 7
        %v587 = vrot.slane %v472, 7
        %v588 = vsel %vm552, %v586, %v587
        %v589 = vrot.slane %v473, 7
        %v590 = vrot.slane %v474, 7
        %v591 = vsel %vm552, %v589, %v590
        %v592 = vrot.slane %v475, 7
        %v593 = vrot.slane %v476, 7
        %v594 = vsel %vm552, %v592, %v593
        %v595 = vrot.slane %v477, 7
        %v596 = vrot.slane %v478, 7
        %v597 = vsel %vm552, %v595, %v596
        %v598 = vrot.slane %v479, 7
        %v599 = vrot.slane %v480, 7
        %v600 = vsel %vm552, %v598, %v599
        %v649 = vsel %vm552, 0.0, %v553
        %v650 = vsel %vm552, 0.0, %v556
        %v651 = vsel %vm552, 0.0, %v559
        %v652 = vsel %vm552, 0.0, %v562
        %v653 = vsel %vm552, 0.0, %v565
        %v654 = vsel %vm552, 0.0, %v568
        %v655 = vsel %vm552, 0.0, %v571
        %v656 = vsel %vm552, 0.0, %v574
        %v657 = vsel %vm552, 0.0, %v577
        %v658 = vsel %vm552, 0.0, %v580
        %v659 = vsel %vm552, 0.0, %v583
        %v660 = vsel %vm552, 0.0, %v586
        %v661 = vsel %vm552, 0.0, %v589
        %v662 = vsel %vm552, 0.0, %v592
        %v663 = vsel %vm552, 0.0, %v595
        %v664 = vsel %vm552, 0.0, %v598
        %v665 = vsel %vm552, %v554, 0.0
        %v666 = vsel %vm552, %v557, 0.0
        %v667 = vsel %vm552, %v560, 0.0
        %v668 = vsel %vm552, %v563, 0.0
        %v669 = vsel %vm552, %v566, 0.0
        %v670 = vsel %vm552, %v569, 0.0
        %v671 = vsel %vm552, %v572, 0.0
        %v672 = vsel %vm552, %v575, 0.0
        %v673 = vsel %vm552, %v578, 0.0
        %v674 = vsel %vm552, %v581, 0.0
        %v675 = vsel %vm552, %v584, 0.0
        %v676 = vsel %vm552, %v587, 0.0
        %v677 = vsel %vm552, %v590, 0.0
        %v678 = vsel %vm552, %v593, 0.0
        %v679 = vsel %vm552, %v596, 0.0
        %v680 = vsel %vm552, %v599, 0.0
        %v681 = vpack.c.bf16 0.0, 0.0
        %v682 = vpack.c.bf16 %v555, %v649
        %v683 = vpack.c.bf16 %v665, %v665
        %v684 = vpack.c.bf16 %v558, %v650
        %v685 = vpack.c.bf16 %v666, %v666
        %v686 = vpack.c.bf16 %v561, %v651
        %v687 = vpack.c.bf16 %v667, %v667
        %v688 = vpack.c.bf16 %v564, %v652
        %v689 = vpack.c.bf16 %v668, %v668
        %v690 = vpack.c.bf16 %v567, %v653
        %v691 = vpack.c.bf16 %v669, %v669
        %v692 = vpack.c.bf16 %v570, %v654
        %v693 = vpack.c.bf16 %v670, %v670
        %v694 = vpack.c.bf16 %v573, %v655
        %v695 = vpack.c.bf16 %v671, %v671
        %v696 = vpack.c.bf16 %v576, %v656
        %v697 = vpack.c.bf16 %v672, %v672
        %v698 = vpack.c.bf16 %v579, %v657
        %v699 = vpack.c.bf16 %v673, %v673
        %v700 = vpack.c.bf16 %v582, %v658
        %v701 = vpack.c.bf16 %v674, %v674
        %v702 = vpack.c.bf16 %v585, %v659
        %v703 = vpack.c.bf16 %v675, %v675
        %v704 = vpack.c.bf16 %v588, %v660
        %v705 = vpack.c.bf16 %v676, %v676
        %v706 = vpack.c.bf16 %v591, %v661
        %v707 = vpack.c.bf16 %v677, %v677
        %v708 = vpack.c.bf16 %v594, %v662
        %v709 = vpack.c.bf16 %v678, %v678
        %v710 = vpack.c.bf16 %v597, %v663
        %v711 = vpack.c.bf16 %v679, %v679
        %v712 = vpack.c.bf16 %v600, %v664
        %v713 = vpack.c.bf16 %v680, %v680
        %vm714 = vsmask.f32 7424
        %v716 = vshrl.u32 %v681, 16
        %v718 = vshll.u32 %v681, 16
        %v720 = vrot.slane %v718, 1
        %v721 = vor.u32 %v716, %v720
        %v722 = vsel %vm714, %v721, %v720
        %v724 = vshrl.u32 %v682, 16
        %v726 = vshll.u32 %v682, 16
        %v728 = vrot.slane %v726, 1
        %v729 = vor.u32 %v724, %v728
        %v731 = vshll.u32 %v683, 16
        %v733 = vrot.slane %v731, 1
        %v734 = vsel %vm714, %v729, %v733
        %v736 = vshrl.u32 %v684, 16
        %v738 = vshll.u32 %v684, 16
        %v740 = vrot.slane %v738, 1
        %v741 = vor.u32 %v736, %v740
        %v743 = vshll.u32 %v685, 16
        %v745 = vrot.slane %v743, 1
        %v746 = vsel %vm714, %v741, %v745
        %v748 = vshrl.u32 %v686, 16
        %v750 = vshll.u32 %v686, 16
        %v752 = vrot.slane %v750, 1
        %v753 = vor.u32 %v748, %v752
        %v755 = vshll.u32 %v687, 16
        %v757 = vrot.slane %v755, 1
        %v758 = vsel %vm714, %v753, %v757
        %v760 = vshrl.u32 %v688, 16
        %v762 = vshll.u32 %v688, 16
        %v764 = vrot.slane %v762, 1
        %v765 = vor.u32 %v760, %v764
        %v767 = vshll.u32 %v689, 16
        %v769 = vrot.slane %v767, 1
        %v770 = vsel %vm714, %v765, %v769
        %v772 = vshrl.u32 %v690, 16
        %v774 = vshll.u32 %v690, 16
        %v776 = vrot.slane %v774, 1
        %v777 = vor.u32 %v772, %v776
        %v779 = vshll.u32 %v691, 16
        %v781 = vrot.slane %v779, 1
        %v782 = vsel %vm714, %v777, %v781
        %v784 = vshrl.u32 %v692, 16
        %v786 = vshll.u32 %v692, 16
        %v788 = vrot.slane %v786, 1
        %v789 = vor.u32 %v784, %v788
        %v791 = vshll.u32 %v693, 16
        %v793 = vrot.slane %v791, 1
        %v794 = vsel %vm714, %v789, %v793
        %v796 = vshrl.u32 %v694, 16
        %v798 = vshll.u32 %v694, 16
        %v800 = vrot.slane %v798, 1
        %v801 = vor.u32 %v796, %v800
        %v803 = vshll.u32 %v695, 16
        %v805 = vrot.slane %v803, 1
        %v806 = vsel %vm714, %v801, %v805
        %v808 = vshrl.u32 %v696, 16
        %v810 = vshll.u32 %v696, 16
        %v812 = vrot.slane %v810, 1
        %v813 = vor.u32 %v808, %v812
        %v815 = vshll.u32 %v697, 16
        %v817 = vrot.slane %v815, 1
        %v818 = vsel %vm714, %v813, %v817
        %v820 = vshrl.u32 %v698, 16
        %v822 = vshll.u32 %v698, 16
        %v824 = vrot.slane %v822, 1
        %v825 = vor.u32 %v820, %v824
        %v827 = vshll.u32 %v699, 16
        %v829 = vrot.slane %v827, 1
        %v830 = vsel %vm714, %v825, %v829
        %v832 = vshrl.u32 %v700, 16
        %v834 = vshll.u32 %v700, 16
        %v836 = vrot.slane %v834, 1
        %v837 = vor.u32 %v832, %v836
        %v839 = vshll.u32 %v701, 16
        %v841 = vrot.slane %v839, 1
        %v842 = vsel %vm714, %v837, %v841
        %v844 = vshrl.u32 %v702, 16
        %v846 = vshll.u32 %v702, 16
        %v848 = vrot.slane %v846, 1
        %v849 = vor.u32 %v844, %v848
        %v851 = vshll.u32 %v703, 16
        %v853 = vrot.slane %v851, 1
        %v854 = vsel %vm714, %v849, %v853
        %v856 = vshrl.u32 %v704, 16
        %v858 = vshll.u32 %v704, 16
        %v860 = vrot.slane %v858, 1
        %v861 = vor.u32 %v856, %v860
        %v863 = vshll.u32 %v705, 16
        %v865 = vrot.slane %v863, 1
        %v866 = vsel %vm714, %v861, %v865
        %v868 = vshrl.u32 %v706, 16
        %v870 = vshll.u32 %v706, 16
        %v872 = vrot.slane %v870, 1
        %v873 = vor.u32 %v868, %v872
        %v875 = vshll.u32 %v707, 16
        %v877 = vrot.slane %v875, 1
        %v878 = vsel %vm714, %v873, %v877
        %v880 = vshrl.u32 %v708, 16
        %v882 = vshll.u32 %v708, 16
        %v884 = vrot.slane %v882, 1
        %v885 = vor.u32 %v880, %v884
        %v887 = vshll.u32 %v709, 16
        %v889 = vrot.slane %v887, 1
        %v890 = vsel %vm714, %v885, %v889
        %v892 = vshrl.u32 %v710, 16
        %v894 = vshll.u32 %v710, 16
        %v896 = vrot.slane %v894, 1
        %v897 = vor.u32 %v892, %v896
        %v899 = vshll.u32 %v711, 16
        %v901 = vrot.slane %v899, 1
        %v902 = vsel %vm714, %v897, %v901
        %v907 = vunpack.c.l.b16 %v485
        %v908 = vunpack.c.l.b16 %v486
        %v909 = vunpack.c.l.b16 %v487
        %v910 = vunpack.c.l.b16 %v488
        %v911 = vpack.c.b16 %v908, %v907
        %v912 = vpack.c.b16 %v910, %v909
        %vm915 = vcmask 261120
        %v917 = vsel %vm915, %v722, 0
        %v920 = vsel %vm915, %v734, 0
        %v923 = vsel %vm915, %v746, 0
        %v926 = vsel %vm915, %v758, 0
        %v929 = vsel %vm915, %v770, 0
        %v932 = vsel %vm915, %v782, 0
        %v935 = vsel %vm915, %v794, 0
        %v938 = vsel %vm915, %v806, 0
        %v941 = vsel %vm915, %v818, 0
        %v944 = vsel %vm915, %v830, 0
        %v947 = vsel %vm915, %v842, 0
        %v950 = vsel %vm915, %v854, 0
        %v953 = vsel %vm915, %v866, 0
        %v956 = vsel %vm915, %v878, 0
        %v959 = vsel %vm915, %v890, 0
        %v962 = vsel %vm915, %v902, 0
        %964 = vmatprep.subr.bf16.mxu0 0
        %965 = vmatpush1.bf16.msra.mxu0 %v911
        %966 = vmatprep.subr.bf16.mxu0 0
        %967 = vmatpush1.bf16.msra.mxu0 %v912
        %968 = vmatprep.subr.bf16.mxu0 0
        %969 = vmatpush1.bf16.msra.mxu0 0
        %970 = vmatprep.subr.bf16.mxu0 0
        %971 = vmatpush1.bf16.msra.mxu0 0
        %972 = vmatprep.subr.bf16.mxu0 0
        %973 = vmatpush1.bf16.msra.mxu0 0
        %974 = vmatprep.subr.bf16.mxu0 0
        %975 = vmatpush1.bf16.msra.mxu0 0
        %976 = vmatprep.subr.bf16.mxu0 0
        %977 = vmatpush1.bf16.msra.mxu0 0
        %978 = vmatprep.subr.bf16.mxu0 0
        %979 = vmatpush1.bf16.msra.mxu0 0
        %980 = vmatprep.subr.bf16.mxu0 0
        %981 = vmatpush1.bf16.msra.mxu0 0
        %982 = vmatprep.subr.bf16.mxu0 0
        %983 = vmatpush1.bf16.msra.mxu0 0
        %984 = vmatprep.subr.bf16.mxu0 0
        %985 = vmatpush1.bf16.msra.mxu0 0
        %986 = vmatprep.subr.bf16.mxu0 0
        %987 = vmatpush1.bf16.msra.mxu0 0
        %988 = vmatprep.subr.bf16.mxu0 0
        %989 = vmatpush1.bf16.msra.mxu0 0
        %990 = vmatprep.subr.bf16.mxu0 0
        %991 = vmatpush1.bf16.msra.mxu0 0
        %992 = vmatprep.subr.bf16.mxu0 0
        %993 = vmatpush1.bf16.msra.mxu0 0
        %994 = vmatprep.subr.bf16.mxu0 0
        %995 = vmatpush1.bf16.msra.mxu0 0
        %996 = vmatprep.mubr.bf16.mxu0 0
        %997 = vmatmul.mubr.bf16.gmra.mrb[0].mxu0 %v917
        %v998 = vpop.f32.mrb[0].mxu0
        %v999 = vadd.f32 0.0, %v998
        %v1000 = vpop.f32.mrb[0].mxu0
        %v1001 = vpop.f32.mrb[0].mxu0
        %v1002 = vadd.f32 0.0, %v1001
        %v1003 = vpop.f32.mrb[0].mxu0
        %1004 = vmatprep.mubr.bf16.mxu0 0
        %1005 = vmatmul.mubr.bf16.gmra.mrb[0].mxu0 %v920
        %v1006 = vpop.f32.mrb[0].mxu0
        %v1007 = vadd.f32 0.0, %v1006
        %v1008 = vpop.f32.mrb[0].mxu0
        %v1009 = vpop.f32.mrb[0].mxu0
        %v1010 = vadd.f32 0.0, %v1009
        %v1011 = vpop.f32.mrb[0].mxu0
        %1012 = vmatprep.mubr.bf16.mxu0 0
        %1013 = vmatmul.mubr.bf16.gmra.mrb[0].mxu0 %v923
        %v1014 = vpop.f32.mrb[0].mxu0
        %v1015 = vadd.f32 0.0, %v1014
        %v1016 = vpop.f32.mrb[0].mxu0
        %v1017 = vpop.f32.mrb[0].mxu0
        %v1018 = vadd.f32 0.0, %v1017
        %v1019 = vpop.f32.mrb[0].mxu0
        %1020 = vmatprep.mubr.bf16.mxu0 0
        %1021 = vmatmul.mubr.bf16.gmra.mrb[0].mxu0 %v926
        %v1022 = vpop.f32.mrb[0].mxu0
        %v1023 = vadd.f32 0.0, %v1022
        %v1024 = vpop.f32.mrb[0].mxu0
        %v1025 = vpop.f32.mrb[0].mxu0
        %v1026 = vadd.f32 0.0, %v1025
        %v1027 = vpop.f32.mrb[0].mxu0
        %1028 = vmatprep.mubr.bf16.mxu0 0
        %1029 = vmatmul.mubr.bf16.gmra.mrb[0].mxu0 %v929
        %v1030 = vpop.f32.mrb[0].mxu0
        %v1031 = vadd.f32 0.0, %v1030
        %v1032 = vpop.f32.mrb[0].mxu0
        %v1033 = vpop.f32.mrb[0].mxu0
        %v1034 = vadd.f32 0.0, %v1033
        %v1035 = vpop.f32.mrb[0].mxu0
        %1036 = vmatprep.mubr.bf16.mxu0 0
        %1037 = vmatmul.mubr.bf16.gmra.mrb[0].mxu0 %v932
        %v1038 = vpop.f32.mrb[0].mxu0
        %v1039 = vadd.f32 0.0, %v1038
        %v1040 = vpop.f32.mrb[0].mxu0
        %v1041 = vpop.f32.mrb[0].mxu0
        %v1042 = vadd.f32 0.0, %v1041
        %v1043 = vpop.f32.mrb[0].mxu0
        %1044 = vmatprep.mubr.bf16.mxu0 0
        %1045 = vmatmul.mubr.bf16.gmra.mrb[0].mxu0 %v935
        %v1046 = vpop.f32.mrb[0].mxu0
        %v1047 = vadd.f32 0.0, %v1046
        %v1048 = vpop.f32.mrb[0].mxu0
        %v1049 = vpop.f32.mrb[0].mxu0
        %v1050 = vadd.f32 0.0, %v1049
        %v1051 = vpop.f32.mrb[0].mxu0
        %1052 = vmatprep.mubr.bf16.mxu0 0
        %1053 = vmatmul.mubr.bf16.gmra.mrb[0].mxu0 %v938
        %v1054 = vpop.f32.mrb[0].mxu0
        %v1055 = vadd.f32 0.0, %v1054
        %v1056 = vpop.f32.mrb[0].mxu0
        %v1057 = vpop.f32.mrb[0].mxu0
        %v1058 = vadd.f32 0.0, %v1057
        %v1059 = vpop.f32.mrb[0].mxu0
        %1060 = vmatprep.mubr.bf16.mxu0 0
        %1061 = vmatmul.mubr.bf16.gmra.mrb[0].mxu0 %v941
        %v1062 = vpop.f32.mrb[0].mxu0
        %v1063 = vadd.f32 0.0, %v1062
        %v1064 = vpop.f32.mrb[0].mxu0
        %v1065 = vpop.f32.mrb[0].mxu0
        %v1066 = vadd.f32 0.0, %v1065
        %v1067 = vpop.f32.mrb[0].mxu0
        %1068 = vmatprep.mubr.bf16.mxu0 0
        %1069 = vmatmul.mubr.bf16.gmra.mrb[0].mxu0 %v944
        %v1070 = vpop.f32.mrb[0].mxu0
        %v1071 = vadd.f32 0.0, %v1070
        %v1072 = vpop.f32.mrb[0].mxu0
        %v1073 = vpop.f32.mrb[0].mxu0
        %v1074 = vadd.f32 0.0, %v1073
        %v1075 = vpop.f32.mrb[0].mxu0
        %1076 = vmatprep.mubr.bf16.mxu0 0
        %1077 = vmatmul.mubr.bf16.gmra.mrb[0].mxu0 %v947
        %v1078 = vpop.f32.mrb[0].mxu0
        %v1079 = vadd.f32 0.0, %v1078
        %v1080 = vpop.f32.mrb[0].mxu0
        %v1081 = vpop.f32.mrb[0].mxu0
        %v1082 = vadd.f32 0.0, %v1081
        %v1083 = vpop.f32.mrb[0].mxu0
        %1084 = vmatprep.mubr.bf16.mxu0 0
        %1085 = vmatmul.mubr.bf16.gmra.mrb[0].mxu0 %v950
        %v1086 = vpop.f32.mrb[0].mxu0
        %v1087 = vadd.f32 0.0, %v1086
        %v1088 = vpop.f32.mrb[0].mxu0
        %v1089 = vpop.f32.mrb[0].mxu0
        %v1090 = vadd.f32 0.0, %v1089
        %v1091 = vpop.f32.mrb[0].mxu0
        %1092 = vmatprep.mubr.bf16.mxu0 0
        %1093 = vmatmul.mubr.bf16.gmra.mrb[0].mxu0 %v953
        %v1094 = vpop.f32.mrb[0].mxu0
        %v1095 = vadd.f32 0.0, %v1094
        %v1096 = vpop.f32.mrb[0].mxu0
        %v1097 = vpop.f32.mrb[0].mxu0
        %v1098 = vadd.f32 0.0, %v1097
        %v1099 = vpop.f32.mrb[0].mxu0
        %1100 = vmatprep.mubr.bf16.mxu0 0
        %1101 = vmatmul.mubr.bf16.gmra.mrb[0].mxu0 %v956
        %v1102 = vpop.f32.mrb[0].mxu0
        %v1103 = vadd.f32 0.0, %v1102
        %v1104 = vpop.f32.mrb[0].mxu0
        %v1105 = vpop.f32.mrb[0].mxu0
        %v1106 = vadd.f32 0.0, %v1105
        %v1107 = vpop.f32.mrb[0].mxu0
        %1108 = vmatprep.mubr.bf16.mxu0 0
        %1109 = vmatmul.mubr.bf16.gmra.mrb[0].mxu0 %v959
        %v1110 = vpop.f32.mrb[0].mxu0
        %v1111 = vadd.f32 0.0, %v1110
        %v1112 = vpop.f32.mrb[0].mxu0
        %v1113 = vpop.f32.mrb[0].mxu0
        %v1114 = vadd.f32 0.0, %v1113
        %v1115 = vpop.f32.mrb[0].mxu0
        %1116 = vmatprep.mubr.bf16.mxu0 0
        %1117 = vmatmul.mubr.bf16.gmra.mrb[0].mxu0 %v962
        %v1118 = vpop.f32.mrb[0].mxu0
        %v1119 = vadd.f32 0.0, %v1118
        %v1120 = vpop.f32.mrb[0].mxu0
        %v1121 = vpop.f32.mrb[0].mxu0
        %v1122 = vadd.f32 0.0, %v1121
        %v1123 = vpop.f32.mrb[0].mxu0
        %1124 = vdwg.mxu0
        %v1129 = vunpack.c.l.b16 %v481
        %v1130 = vunpack.c.l.b16 %v482
        %v1131 = vunpack.c.l.b16 %v483
        %v1132 = vunpack.c.l.b16 %v484
        %v1133 = vpack.c.b16 %v1130, %v1129
        %v1134 = vpack.c.b16 %v1132, %v1131
        %v1137 = vsel %vm915, %v681, 0
        %v1139 = vsel %vm915, %v682, 0
        %v1141 = vsel %vm915, %v684, 0
        %v1143 = vsel %vm915, %v686, 0
        %v1145 = vsel %vm915, %v688, 0
        %v1147 = vsel %vm915, %v690, 0
        %v1149 = vsel %vm915, %v692, 0
        %v1151 = vsel %vm915, %v694, 0
        %v1153 = vsel %vm915, %v696, 0
        %v1155 = vsel %vm915, %v698, 0
        %v1157 = vsel %vm915, %v700, 0
        %v1159 = vsel %vm915, %v702, 0
        %v1161 = vsel %vm915, %v704, 0
        %v1163 = vsel %vm915, %v706, 0
        %v1165 = vsel %vm915, %v708, 0
        %v1167 = vsel %vm915, %v710, 0
        %1169 = vmatprep.subr.bf16.mxu0 0
        %1170 = vmatpush1.bf16.msra.mxu0 %v1133
        %1171 = vmatprep.subr.bf16.mxu0 0
        %1172 = vmatpush1.bf16.msra.mxu0 %v1134
        %1173 = vmatprep.subr.bf16.mxu0 0
        %1174 = vmatpush1.bf16.msra.mxu0 0
        %1175 = vmatprep.subr.bf16.mxu0 0
        %1176 = vmatpush1.bf16.msra.mxu0 0
        %1177 = vmatprep.subr.bf16.mxu0 0
        %1178 = vmatpush1.bf16.msra.mxu0 0
        %1179 = vmatprep.subr.bf16.mxu0 0
        %1180 = vmatpush1.bf16.msra.mxu0 0
        %1181 = vmatprep.subr.bf16.mxu0 0
        %1182 = vmatpush1.bf16.msra.mxu0 0
        %1183 = vmatprep.subr.bf16.mxu0 0
        %1184 = vmatpush1.bf16.msra.mxu0 0
        %1185 = vmatprep.subr.bf16.mxu0 0
        %1186 = vmatpush1.bf16.msra.mxu0 0
        %1187 = vmatprep.subr.bf16.mxu0 0
        %1188 = vmatpush1.bf16.msra.mxu0 0
        %1189 = vmatprep.subr.bf16.mxu0 0
        %1190 = vmatpush1.bf16.msra.mxu0 0
        %1191 = vmatprep.subr.bf16.mxu0 0
        %1192 = vmatpush1.bf16.msra.mxu0 0
        %1193 = vmatprep.subr.bf16.mxu0 0
        %1194 = vmatpush1.bf16.msra.mxu0 0
        %1195 = vmatprep.subr.bf16.mxu0 0
        %1196 = vmatpush1.bf16.msra.mxu0 0
        %1197 = vmatprep.subr.bf16.mxu0 0
        %1198 = vmatpush1.bf16.msra.mxu0 0
        %1199 = vmatprep.subr.bf16.mxu0 0
        %1200 = vmatpush1.bf16.msra.mxu0 0
        %1201 = vmatprep.mubr.bf16.mxu0 0
        %1202 = vmatmul.mubr.bf16.gmra.mrb[0].mxu0 %v1137
        %v1203 = vpop.f32.mrb[0].mxu0
        %v1204 = vadd.f32 %v999, %v1203
        %v1205 = vpop.f32.mrb[0].mxu0
        %v1206 = vpop.f32.mrb[0].mxu0
        %v1207 = vadd.f32 %v1002, %v1206
        %v1208 = vpop.f32.mrb[0].mxu0
        %1209 = vmatprep.mubr.bf16.mxu0 0
        %1210 = vmatmul.mubr.bf16.gmra.mrb[0].mxu0 %v1139
        %v1211 = vpop.f32.mrb[0].mxu0
        %v1212 = vadd.f32 %v1007, %v1211
        %v1213 = vpop.f32.mrb[0].mxu0
        %v1214 = vpop.f32.mrb[0].mxu0
        %v1215 = vadd.f32 %v1010, %v1214
        %v1216 = vpop.f32.mrb[0].mxu0
        %1217 = vmatprep.mubr.bf16.mxu0 0
        %1218 = vmatmul.mubr.bf16.gmra.mrb[0].mxu0 %v1141
        %v1219 = vpop.f32.mrb[0].mxu0
        %v1220 = vadd.f32 %v1015, %v1219
        %v1221 = vpop.f32.mrb[0].mxu0
        %v1222 = vpop.f32.mrb[0].mxu0
        %v1223 = vadd.f32 %v1018, %v1222
        %v1224 = vpop.f32.mrb[0].mxu0
        %1225 = vmatprep.mubr.bf16.mxu0 0
        %1226 = vmatmul.mubr.bf16.gmra.mrb[0].mxu0 %v1143
        %v1227 = vpop.f32.mrb[0].mxu0
        %v1228 = vadd.f32 %v1023, %v1227
        %v1229 = vpop.f32.mrb[0].mxu0
        %v1230 = vpop.f32.mrb[0].mxu0
        %v1231 = vadd.f32 %v1026, %v1230
        %v1232 = vpop.f32.mrb[0].mxu0
        %1233 = vmatprep.mubr.bf16.mxu0 0
        %1234 = vmatmul.mubr.bf16.gmra.mrb[0].mxu0 %v1145
        %v1235 = vpop.f32.mrb[0].mxu0
        %v1236 = vadd.f32 %v1031, %v1235
        %v1237 = vpop.f32.mrb[0].mxu0
        %v1238 = vpop.f32.mrb[0].mxu0
        %v1239 = vadd.f32 %v1034, %v1238
        %v1240 = vpop.f32.mrb[0].mxu0
        %1241 = vmatprep.mubr.bf16.mxu0 0
        %1242 = vmatmul.mubr.bf16.gmra.mrb[0].mxu0 %v1147
        %v1243 = vpop.f32.mrb[0].mxu0
        %v1244 = vadd.f32 %v1039, %v1243
        %v1245 = vpop.f32.mrb[0].mxu0
        %v1246 = vpop.f32.mrb[0].mxu0
        %v1247 = vadd.f32 %v1042, %v1246
        %v1248 = vpop.f32.mrb[0].mxu0
        %1249 = vmatprep.mubr.bf16.mxu0 0
        %1250 = vmatmul.mubr.bf16.gmra.mrb[0].mxu0 %v1149
        %v1251 = vpop.f32.mrb[0].mxu0
        %v1252 = vadd.f32 %v1047, %v1251
        %v1253 = vpop.f32.mrb[0].mxu0
        %v1254 = vpop.f32.mrb[0].mxu0
        %v1255 = vadd.f32 %v1050, %v1254
        %v1256 = vpop.f32.mrb[0].mxu0
        %1257 = vmatprep.mubr.bf16.mxu0 0
        %1258 = vmatmul.mubr.bf16.gmra.mrb[0].mxu0 %v1151
        %v1259 = vpop.f32.mrb[0].mxu0
        %v1260 = vadd.f32 %v1055, %v1259
        %v1261 = vpop.f32.mrb[0].mxu0
        %v1262 = vpop.f32.mrb[0].mxu0
        %v1263 = vadd.f32 %v1058, %v1262
        %v1264 = vpop.f32.mrb[0].mxu0
        %1265 = vmatprep.mubr.bf16.mxu0 0
        %1266 = vmatmul.mubr.bf16.gmra.mrb[0].mxu0 %v1153
        %v1267 = vpop.f32.mrb[0].mxu0
        %v1268 = vadd.f32 %v1063, %v1267
        %v1269 = vpop.f32.mrb[0].mxu0
        %v1270 = vpop.f32.mrb[0].mxu0
        %v1271 = vadd.f32 %v1066, %v1270
        %v1272 = vpop.f32.mrb[0].mxu0
        %1273 = vmatprep.mubr.bf16.mxu0 0
        %1274 = vmatmul.mubr.bf16.gmra.mrb[0].mxu0 %v1155
        %v1275 = vpop.f32.mrb[0].mxu0
        %v1276 = vadd.f32 %v1071, %v1275
        %v1277 = vpop.f32.mrb[0].mxu0
        %v1278 = vpop.f32.mrb[0].mxu0
        %v1279 = vadd.f32 %v1074, %v1278
        %v1280 = vpop.f32.mrb[0].mxu0
        %1281 = vmatprep.mubr.bf16.mxu0 0
        %1282 = vmatmul.mubr.bf16.gmra.mrb[0].mxu0 %v1157
        %v1283 = vpop.f32.mrb[0].mxu0
        %v1284 = vadd.f32 %v1079, %v1283
        %v1285 = vpop.f32.mrb[0].mxu0
        %v1286 = vpop.f32.mrb[0].mxu0
        %v1287 = vadd.f32 %v1082, %v1286
        %v1288 = vpop.f32.mrb[0].mxu0
        %1289 = vmatprep.mubr.bf16.mxu0 0
        %1290 = vmatmul.mubr.bf16.gmra.mrb[0].mxu0 %v1159
        %v1291 = vpop.f32.mrb[0].mxu0
        %v1292 = vadd.f32 %v1087, %v1291
        %v1293 = vpop.f32.mrb[0].mxu0
        %v1294 = vpop.f32.mrb[0].mxu0
        %v1295 = vadd.f32 %v1090, %v1294
        %v1296 = vpop.f32.mrb[0].mxu0
        %1297 = vmatprep.mubr.bf16.mxu0 0
        %1298 = vmatmul.mubr.bf16.gmra.mrb[0].mxu0 %v1161
        %v1299 = vpop.f32.mrb[0].mxu0
        %v1300 = vadd.f32 %v1095, %v1299
        %v1301 = vpop.f32.mrb[0].mxu0
        %v1302 = vpop.f32.mrb[0].mxu0
        %v1303 = vadd.f32 %v1098, %v1302
        %v1304 = vpop.f32.mrb[0].mxu0
        %1305 = vmatprep.mubr.bf16.mxu0 0
        %1306 = vmatmul.mubr.bf16.gmra.mrb[0].mxu0 %v1163
        %v1307 = vpop.f32.mrb[0].mxu0
        %v1308 = vadd.f32 %v1103, %v1307
        %v1309 = vpop.f32.mrb[0].mxu0
        %v1310 = vpop.f32.mrb[0].mxu0
        %v1311 = vadd.f32 %v1106, %v1310
        %v1312 = vpop.f32.mrb[0].mxu0
        %1313 = vmatprep.mubr.bf16.mxu0 0
        %1314 = vmatmul.mubr.bf16.gmra.mrb[0].mxu0 %v1165
        %v1315 = vpop.f32.mrb[0].mxu0
        %v1316 = vadd.f32 %v1111, %v1315
        %v1317 = vpop.f32.mrb[0].mxu0
        %v1318 = vpop.f32.mrb[0].mxu0
        %v1319 = vadd.f32 %v1114, %v1318
        %v1320 = vpop.f32.mrb[0].mxu0
        %1321 = vmatprep.mubr.bf16.mxu0 0
        %1322 = vmatmul.mubr.bf16.gmra.mrb[0].mxu0 %v1167
        %v1323 = vpop.f32.mrb[0].mxu0
        %v1324 = vadd.f32 %v1119, %v1323
        %v1325 = vpop.f32.mrb[0].mxu0
        %v1326 = vpop.f32.mrb[0].mxu0
        %v1327 = vadd.f32 %v1122, %v1326
        %v1328 = vpop.f32.mrb[0].mxu0
        %1329 = vdwg.mxu0
        %vm1361 = vcmask 1046528
        %v1362 = vrot.slane %v681, 1
        %v1363 = vsel %vm1361, %v1362, %v1362
        %v1364 = vrot.slane %v682, 1
        %v1365 = vrot.slane %v683, 1
        %v1366 = vsel %vm1361, %v1364, %v1365
        %v1367 = vrot.slane %v684, 1
        %v1368 = vrot.slane %v685, 1
        %v1369 = vsel %vm1361, %v1367, %v1368
        %v1370 = vrot.slane %v686, 1
        %v1371 = vrot.slane %v687, 1
        %v1372 = vsel %vm1361, %v1370, %v1371
        %v1373 = vrot.slane %v688, 1
        %v1374 = vrot.slane %v689, 1
        %v1375 = vsel %vm1361, %v1373, %v1374
        %v1376 = vrot.slane %v690, 1
        %v1377 = vrot.slane %v691, 1
        %v1378 = vsel %vm1361, %v1376, %v1377
        %v1379 = vrot.slane %v692, 1
        %v1380 = vrot.slane %v693, 1
        %v1381 = vsel %vm1361, %v1379, %v1380
        %v1382 = vrot.slane %v694, 1
        %v1383 = vrot.slane %v695, 1
        %v1384 = vsel %vm1361, %v1382, %v1383
        %v1385 = vrot.slane %v696, 1
        %v1386 = vrot.slane %v697, 1
        %v1387 = vsel %vm1361, %v1385, %v1386
        %v1388 = vrot.slane %v698, 1
        %v1389 = vrot.slane %v699, 1
        %v1390 = vsel %vm1361, %v1388, %v1389
        %v1391 = vrot.slane %v700, 1
        %v1392 = vrot.slane %v701, 1
        %v1393 = vsel %vm1361, %v1391, %v1392
        %v1394 = vrot.slane %v702, 1
        %v1395 = vrot.slane %v703, 1
        %v1396 = vsel %vm1361, %v1394, %v1395
        %v1397 = vrot.slane %v704, 1
        %v1398 = vrot.slane %v705, 1
        %v1399 = vsel %vm1361, %v1397, %v1398
        %v1400 = vrot.slane %v706, 1
        %v1401 = vrot.slane %v707, 1
        %v1402 = vsel %vm1361, %v1400, %v1401
        %v1403 = vrot.slane %v708, 1
        %v1404 = vrot.slane %v709, 1
        %v1405 = vsel %vm1361, %v1403, %v1404
        %v1406 = vrot.slane %v710, 1
        %v1407 = vrot.slane %v711, 1
        %v1408 = vsel %vm1361, %v1406, %v1407
        %v1413 = vunpack.c.l.b16 %v489
        %v1414 = vunpack.c.l.b16 %v490
        %v1415 = vunpack.c.l.b16 %v491
        %v1416 = vunpack.c.l.b16 %v492
        %v1417 = vpack.c.b16 %v1414, %v1413
        %v1418 = vpack.c.b16 %v1416, %v1415
        %v1422 = vsel %vm915, %v1363, 0
        %v1425 = vsel %vm915, %v1366, 0
        %v1428 = vsel %vm915, %v1369, 0
        %v1431 = vsel %vm915, %v1372, 0
        %v1434 = vsel %vm915, %v1375, 0
        %v1437 = vsel %vm915, %v1378, 0
        %v1440 = vsel %vm915, %v1381, 0
        %v1443 = vsel %vm915, %v1384, 0
        %v1446 = vsel %vm915, %v1387, 0
        %v1449 = vsel %vm915, %v1390, 0
        %v1452 = vsel %vm915, %v1393, 0
        %v1455 = vsel %vm915, %v1396, 0
        %v1458 = vsel %vm915, %v1399, 0
        %v1461 = vsel %vm915, %v1402, 0
        %v1464 = vsel %vm915, %v1405, 0
        %v1467 = vsel %vm915, %v1408, 0
        %1469 = vmatprep.subr.bf16.mxu0 0
        %1470 = vmatpush1.bf16.msra.mxu0 %v1417
        %1471 = vmatprep.subr.bf16.mxu0 0
        %1472 = vmatpush1.bf16.msra.mxu0 %v1418
        %1473 = vmatprep.subr.bf16.mxu0 0
        %1474 = vmatpush1.bf16.msra.mxu0 0
        %1475 = vmatprep.subr.bf16.mxu0 0
        %1476 = vmatpush1.bf16.msra.mxu0 0
        %1477 = vmatprep.subr.bf16.mxu0 0
        %1478 = vmatpush1.bf16.msra.mxu0 0
        %1479 = vmatprep.subr.bf16.mxu0 0
        %1480 = vmatpush1.bf16.msra.mxu0 0
        %1481 = vmatprep.subr.bf16.mxu0 0
        %1482 = vmatpush1.bf16.msra.mxu0 0
        %1483 = vmatprep.subr.bf16.mxu0 0
        %1484 = vmatpush1.bf16.msra.mxu0 0
        %1485 = vmatprep.subr.bf16.mxu0 0
        %1486 = vmatpush1.bf16.msra.mxu0 0
        %1487 = vmatprep.subr.bf16.mxu0 0
        %1488 = vmatpush1.bf16.msra.mxu0 0
        %1489 = vmatprep.subr.bf16.mxu0 0
        %1490 = vmatpush1.bf16.msra.mxu0 0
        %1491 = vmatprep.subr.bf16.mxu0 0
        %1492 = vmatpush1.bf16.msra.mxu0 0
        %1493 = vmatprep.subr.bf16.mxu0 0
        %1494 = vmatpush1.bf16.msra.mxu0 0
        %1495 = vmatprep.subr.bf16.mxu0 0
        %1496 = vmatpush1.bf16.msra.mxu0 0
        %1497 = vmatprep.subr.bf16.mxu0 0
        %1498 = vmatpush1.bf16.msra.mxu0 0
        %1499 = vmatprep.subr.bf16.mxu0 0
        %1500 = vmatpush1.bf16.msra.mxu0 0
        %1501 = vmatprep.mubr.bf16.mxu0 0
        %1502 = vmatmul.mubr.bf16.gmra.mrb[0].mxu0 %v1422
        %v1503 = vpop.f32.mrb[0].mxu0
        %v1504 = vadd.f32 0.0, %v1503
        %v1505 = vpop.f32.mrb[0].mxu0
        %v1506 = vpop.f32.mrb[0].mxu0
        %v1507 = vadd.f32 0.0, %v1506
        %v1508 = vpop.f32.mrb[0].mxu0
        %1509 = vmatprep.mubr.bf16.mxu0 0
        %1510 = vmatmul.mubr.bf16.gmra.mrb[0].mxu0 %v1425
        %v1511 = vpop.f32.mrb[0].mxu0
        %v1512 = vadd.f32 0.0, %v1511
        %v1513 = vpop.f32.mrb[0].mxu0
        %v1514 = vpop.f32.mrb[0].mxu0
        %v1515 = vadd.f32 0.0, %v1514
        %v1516 = vpop.f32.mrb[0].mxu0
        %1517 = vmatprep.mubr.bf16.mxu0 0
        %1518 = vmatmul.mubr.bf16.gmra.mrb[0].mxu0 %v1428
        %v1519 = vpop.f32.mrb[0].mxu0
        %v1520 = vadd.f32 0.0, %v1519
        %v1521 = vpop.f32.mrb[0].mxu0
        %v1522 = vpop.f32.mrb[0].mxu0
        %v1523 = vadd.f32 0.0, %v1522
        %v1524 = vpop.f32.mrb[0].mxu0
        %1525 = vmatprep.mubr.bf16.mxu0 0
        %1526 = vmatmul.mubr.bf16.gmra.mrb[0].mxu0 %v1431
        %v1527 = vpop.f32.mrb[0].mxu0
        %v1528 = vadd.f32 0.0, %v1527
        %v1529 = vpop.f32.mrb[0].mxu0
        %v1530 = vpop.f32.mrb[0].mxu0
        %v1531 = vadd.f32 0.0, %v1530
        %v1532 = vpop.f32.mrb[0].mxu0
        %1533 = vmatprep.mubr.bf16.mxu0 0
        %1534 = vmatmul.mubr.bf16.gmra.mrb[0].mxu0 %v1434
        %v1535 = vpop.f32.mrb[0].mxu0
        %v1536 = vadd.f32 0.0, %v1535
        %v1537 = vpop.f32.mrb[0].mxu0
        %v1538 = vpop.f32.mrb[0].mxu0
        %v1539 = vadd.f32 0.0, %v1538
        %v1540 = vpop.f32.mrb[0].mxu0
        %1541 = vmatprep.mubr.bf16.mxu0 0
        %1542 = vmatmul.mubr.bf16.gmra.mrb[0].mxu0 %v1437
        %v1543 = vpop.f32.mrb[0].mxu0
        %v1544 = vadd.f32 0.0, %v1543
        %v1545 = vpop.f32.mrb[0].mxu0
        %v1546 = vpop.f32.mrb[0].mxu0
        %v1547 = vadd.f32 0.0, %v1546
        %v1548 = vpop.f32.mrb[0].mxu0
        %1549 = vmatprep.mubr.bf16.mxu0 0
        %1550 = vmatmul.mubr.bf16.gmra.mrb[0].mxu0 %v1440
        %v1551 = vpop.f32.mrb[0].mxu0
        %v1552 = vadd.f32 0.0, %v1551
        %v1553 = vpop.f32.mrb[0].mxu0
        %v1554 = vpop.f32.mrb[0].mxu0
        %v1555 = vadd.f32 0.0, %v1554
        %v1556 = vpop.f32.mrb[0].mxu0
        %1557 = vmatprep.mubr.bf16.mxu0 0
        %1558 = vmatmul.mubr.bf16.gmra.mrb[0].mxu0 %v1443
        %v1559 = vpop.f32.mrb[0].mxu0
        %v1560 = vadd.f32 0.0, %v1559
        %v1561 = vpop.f32.mrb[0].mxu0
        %v1562 = vpop.f32.mrb[0].mxu0
        %v1563 = vadd.f32 0.0, %v1562
        %v1564 = vpop.f32.mrb[0].mxu0
        %1565 = vmatprep.mubr.bf16.mxu0 0
        %1566 = vmatmul.mubr.bf16.gmra.mrb[0].mxu0 %v1446
        %v1567 = vpop.f32.mrb[0].mxu0
        %v1568 = vadd.f32 0.0, %v1567
        %v1569 = vpop.f32.mrb[0].mxu0
        %v1570 = vpop.f32.mrb[0].mxu0
        %v1571 = vadd.f32 0.0, %v1570
        %v1572 = vpop.f32.mrb[0].mxu0
        %1573 = vmatprep.mubr.bf16.mxu0 0
        %1574 = vmatmul.mubr.bf16.gmra.mrb[0].mxu0 %v1449
        %v1575 = vpop.f32.mrb[0].mxu0
        %v1576 = vadd.f32 0.0, %v1575
        %v1577 = vpop.f32.mrb[0].mxu0
        %v1578 = vpop.f32.mrb[0].mxu0
        %v1579 = vadd.f32 0.0, %v1578
        %v1580 = vpop.f32.mrb[0].mxu0
        %1581 = vmatprep.mubr.bf16.mxu0 0
        %1582 = vmatmul.mubr.bf16.gmra.mrb[0].mxu0 %v1452
        %v1583 = vpop.f32.mrb[0].mxu0
        %v1584 = vadd.f32 0.0, %v1583
        %v1585 = vpop.f32.mrb[0].mxu0
        %v1586 = vpop.f32.mrb[0].mxu0
        %v1587 = vadd.f32 0.0, %v1586
        %v1588 = vpop.f32.mrb[0].mxu0
        %1589 = vmatprep.mubr.bf16.mxu0 0
        %1590 = vmatmul.mubr.bf16.gmra.mrb[0].mxu0 %v1455
        %v1591 = vpop.f32.mrb[0].mxu0
        %v1592 = vadd.f32 0.0, %v1591
        %v1593 = vpop.f32.mrb[0].mxu0
        %v1594 = vpop.f32.mrb[0].mxu0
        %v1595 = vadd.f32 0.0, %v1594
        %v1596 = vpop.f32.mrb[0].mxu0
        %1597 = vmatprep.mubr.bf16.mxu0 0
        %1598 = vmatmul.mubr.bf16.gmra.mrb[0].mxu0 %v1458
        %v1599 = vpop.f32.mrb[0].mxu0
        %v1600 = vadd.f32 0.0, %v1599
        %v1601 = vpop.f32.mrb[0].mxu0
        %v1602 = vpop.f32.mrb[0].mxu0
        %v1603 = vadd.f32 0.0, %v1602
        %v1604 = vpop.f32.mrb[0].mxu0
        %1605 = vmatprep.mubr.bf16.mxu0 0
        %1606 = vmatmul.mubr.bf16.gmra.mrb[0].mxu0 %v1461
        %v1607 = vpop.f32.mrb[0].mxu0
        %v1608 = vadd.f32 0.0, %v1607
        %v1609 = vpop.f32.mrb[0].mxu0
        %v1610 = vpop.f32.mrb[0].mxu0
        %v1611 = vadd.f32 0.0, %v1610
        %v1612 = vpop.f32.mrb[0].mxu0
        %1613 = vmatprep.mubr.bf16.mxu0 0
        %1614 = vmatmul.mubr.bf16.gmra.mrb[0].mxu0 %v1464
        %v1615 = vpop.f32.mrb[0].mxu0
        %v1616 = vadd.f32 0.0, %v1615
        %v1617 = vpop.f32.mrb[0].mxu0
        %v1618 = vpop.f32.mrb[0].mxu0
        %v1619 = vadd.f32 0.0, %v1618
        %v1620 = vpop.f32.mrb[0].mxu0
        %1621 = vmatprep.mubr.bf16.mxu0 0
        %1622 = vmatmul.mubr.bf16.gmra.mrb[0].mxu0 %v1467
        %v1623 = vpop.f32.mrb[0].mxu0
        %v1624 = vadd.f32 0.0, %v1623
        %v1625 = vpop.f32.mrb[0].mxu0
        %v1626 = vpop.f32.mrb[0].mxu0
        %v1627 = vadd.f32 0.0, %v1626
        %v1628 = vpop.f32.mrb[0].mxu0
        %1629 = vdwg.mxu0
        %v1630 = vadd.f32 %v1204, %v1504
        %v1631 = vadd.f32 %v1207, %v1507
        %v1632 = vadd.f32 %v1212, %v1512
        %v1633 = vadd.f32 %v1215, %v1515
        %v1634 = vadd.f32 %v1220, %v1520
        %v1635 = vadd.f32 %v1223, %v1523
        %v1636 = vadd.f32 %v1228, %v1528
        %v1637 = vadd.f32 %v1231, %v1531
        %v1638 = vadd.f32 %v1236, %v1536
        %v1639 = vadd.f32 %v1239, %v1539
        %v1640 = vadd.f32 %v1244, %v1544
        %v1641 = vadd.f32 %v1247, %v1547
        %v1642 = vadd.f32 %v1252, %v1552
        %v1643 = vadd.f32 %v1255, %v1555
        %v1644 = vadd.f32 %v1260, %v1560
        %v1645 = vadd.f32 %v1263, %v1563
        %v1646 = vadd.f32 %v1268, %v1568
        %v1647 = vadd.f32 %v1271, %v1571
        %v1648 = vadd.f32 %v1276, %v1576
        %v1649 = vadd.f32 %v1279, %v1579
        %v1650 = vadd.f32 %v1284, %v1584
        %v1651 = vadd.f32 %v1287, %v1587
        %v1652 = vadd.f32 %v1292, %v1592
        %v1653 = vadd.f32 %v1295, %v1595
        %v1654 = vadd.f32 %v1300, %v1600
        %v1655 = vadd.f32 %v1303, %v1603
        %v1656 = vadd.f32 %v1308, %v1608
        %v1657 = vadd.f32 %v1311, %v1611
        %v1658 = vadd.f32 %v1316, %v1616
        %v1659 = vadd.f32 %v1319, %v1619
        %v1660 = vadd.f32 %v1324, %v1624
        %v1661 = vadd.f32 %v1327, %v1627
        %v1666 = vunpack.c.l.b16 %v493
        %v1667 = vunpack.c.l.b16 %v494
        %v1668 = vunpack.c.l.b16 %v495
        %v1669 = vunpack.c.l.b16 %v496
        %v1670 = vpack.c.b16 %v1667, %v1666
        %v1671 = vpack.c.b16 %v1669, %v1668
        %v1675 = vsel %vm915, %v712, 0
        %1677 = vmatprep.subr.bf16.mxu0 0
        %1678 = vmatpush1.bf16.msra.mxu0 %v1670
        %1679 = vmatprep.subr.bf16.mxu0 0
        %1680 = vmatpush1.bf16.msra.mxu0 %v1671
        %1681 = vmatprep.subr.bf16.mxu0 0
        %1682 = vmatpush1.bf16.msra.mxu0 0
        %1683 = vmatprep.subr.bf16.mxu0 0
        %1684 = vmatpush1.bf16.msra.mxu0 0
        %1685 = vmatprep.subr.bf16.mxu0 0
        %1686 = vmatpush1.bf16.msra.mxu0 0
        %1687 = vmatprep.subr.bf16.mxu0 0
        %1688 = vmatpush1.bf16.msra.mxu0 0
        %1689 = vmatprep.subr.bf16.mxu0 0
        %1690 = vmatpush1.bf16.msra.mxu0 0
        %1691 = vmatprep.subr.bf16.mxu0 0
        %1692 = vmatpush1.bf16.msra.mxu0 0
        %1693 = vmatprep.subr.bf16.mxu0 0
        %1694 = vmatpush1.bf16.msra.mxu0 0
        %1695 = vmatprep.subr.bf16.mxu0 0
        %1696 = vmatpush1.bf16.msra.mxu0 0
        %1697 = vmatprep.subr.bf16.mxu0 0
        %1698 = vmatpush1.bf16.msra.mxu0 0
        %1699 = vmatprep.subr.bf16.mxu0 0
        %1700 = vmatpush1.bf16.msra.mxu0 0
        %1701 = vmatprep.subr.bf16.mxu0 0
        %1702 = vmatpush1.bf16.msra.mxu0 0
        %1703 = vmatprep.subr.bf16.mxu0 0
        %1704 = vmatpush1.bf16.msra.mxu0 0
        %1705 = vmatprep.subr.bf16.mxu0 0
        %1706 = vmatpush1.bf16.msra.mxu0 0
        %1707 = vmatprep.subr.bf16.mxu0 0
        %1708 = vmatpush1.bf16.msra.mxu0 0
        %1709 = vmatprep.mubr.bf16.mxu0 0
        %1710 = vmatmul.mubr.bf16.gmra.mrb[0].mxu0 %v1139
        %v1711 = vpop.f32.mrb[0].mxu0
        %v1712 = vadd.f32 0.0, %v1711
        %v1713 = vpop.f32.mrb[0].mxu0
        %v1714 = vpop.f32.mrb[0].mxu0
        %v1715 = vadd.f32 0.0, %v1714
        %v1716 = vpop.f32.mrb[0].mxu0
        %1717 = vmatprep.mubr.bf16.mxu0 0
        %1718 = vmatmul.mubr.bf16.gmra.mrb[0].mxu0 %v1141
        %v1719 = vpop.f32.mrb[0].mxu0
        %v1720 = vadd.f32 0.0, %v1719
        %v1721 = vpop.f32.mrb[0].mxu0
        %v1722 = vpop.f32.mrb[0].mxu0
        %v1723 = vadd.f32 0.0, %v1722
        %v1724 = vpop.f32.mrb[0].mxu0
        %1725 = vmatprep.mubr.bf16.mxu0 0
        %1726 = vmatmul.mubr.bf16.gmra.mrb[0].mxu0 %v1143
        %v1727 = vpop.f32.mrb[0].mxu0
        %v1728 = vadd.f32 0.0, %v1727
        %v1729 = vpop.f32.mrb[0].mxu0
        %v1730 = vpop.f32.mrb[0].mxu0
        %v1731 = vadd.f32 0.0, %v1730
        %v1732 = vpop.f32.mrb[0].mxu0
        %1733 = vmatprep.mubr.bf16.mxu0 0
        %1734 = vmatmul.mubr.bf16.gmra.mrb[0].mxu0 %v1145
        %v1735 = vpop.f32.mrb[0].mxu0
        %v1736 = vadd.f32 0.0, %v1735
        %v1737 = vpop.f32.mrb[0].mxu0
        %v1738 = vpop.f32.mrb[0].mxu0
        %v1739 = vadd.f32 0.0, %v1738
        %v1740 = vpop.f32.mrb[0].mxu0
        %1741 = vmatprep.mubr.bf16.mxu0 0
        %1742 = vmatmul.mubr.bf16.gmra.mrb[0].mxu0 %v1147
        %v1743 = vpop.f32.mrb[0].mxu0
        %v1744 = vadd.f32 0.0, %v1743
        %v1745 = vpop.f32.mrb[0].mxu0
        %v1746 = vpop.f32.mrb[0].mxu0
        %v1747 = vadd.f32 0.0, %v1746
        %v1748 = vpop.f32.mrb[0].mxu0
        %1749 = vmatprep.mubr.bf16.mxu0 0
        %1750 = vmatmul.mubr.bf16.gmra.mrb[0].mxu0 %v1149
        %v1751 = vpop.f32.mrb[0].mxu0
        %v1752 = vadd.f32 0.0, %v1751
        %v1753 = vpop.f32.mrb[0].mxu0
        %v1754 = vpop.f32.mrb[0].mxu0
        %v1755 = vadd.f32 0.0, %v1754
        %v1756 = vpop.f32.mrb[0].mxu0
        %1757 = vmatprep.mubr.bf16.mxu0 0
        %1758 = vmatmul.mubr.bf16.gmra.mrb[0].mxu0 %v1151
        %v1759 = vpop.f32.mrb[0].mxu0
        %v1760 = vadd.f32 0.0, %v1759
        %v1761 = vpop.f32.mrb[0].mxu0
        %v1762 = vpop.f32.mrb[0].mxu0
        %v1763 = vadd.f32 0.0, %v1762
        %v1764 = vpop.f32.mrb[0].mxu0
        %1765 = vmatprep.mubr.bf16.mxu0 0
        %1766 = vmatmul.mubr.bf16.gmra.mrb[0].mxu0 %v1153
        %v1767 = vpop.f32.mrb[0].mxu0
        %v1768 = vadd.f32 0.0, %v1767
        %v1769 = vpop.f32.mrb[0].mxu0
        %v1770 = vpop.f32.mrb[0].mxu0
        %v1771 = vadd.f32 0.0, %v1770
        %v1772 = vpop.f32.mrb[0].mxu0
        %1773 = vmatprep.mubr.bf16.mxu0 0
        %1774 = vmatmul.mubr.bf16.gmra.mrb[0].mxu0 %v1155
        %v1775 = vpop.f32.mrb[0].mxu0
        %v1776 = vadd.f32 0.0, %v1775
        %v1777 = vpop.f32.mrb[0].mxu0
        %v1778 = vpop.f32.mrb[0].mxu0
        %v1779 = vadd.f32 0.0, %v1778
        %v1780 = vpop.f32.mrb[0].mxu0
        %1781 = vmatprep.mubr.bf16.mxu0 0
        %1782 = vmatmul.mubr.bf16.gmra.mrb[0].mxu0 %v1157
        %v1783 = vpop.f32.mrb[0].mxu0
        %v1784 = vadd.f32 0.0, %v1783
        %v1785 = vpop.f32.mrb[0].mxu0
        %v1786 = vpop.f32.mrb[0].mxu0
        %v1787 = vadd.f32 0.0, %v1786
        %v1788 = vpop.f32.mrb[0].mxu0
        %1789 = vmatprep.mubr.bf16.mxu0 0
        %1790 = vmatmul.mubr.bf16.gmra.mrb[0].mxu0 %v1159
        %v1791 = vpop.f32.mrb[0].mxu0
        %v1792 = vadd.f32 0.0, %v1791
        %v1793 = vpop.f32.mrb[0].mxu0
        %v1794 = vpop.f32.mrb[0].mxu0
        %v1795 = vadd.f32 0.0, %v1794
        %v1796 = vpop.f32.mrb[0].mxu0
        %1797 = vmatprep.mubr.bf16.mxu0 0
        %1798 = vmatmul.mubr.bf16.gmra.mrb[0].mxu0 %v1161
        %v1799 = vpop.f32.mrb[0].mxu0
        %v1800 = vadd.f32 0.0, %v1799
        %v1801 = vpop.f32.mrb[0].mxu0
        %v1802 = vpop.f32.mrb[0].mxu0
        %v1803 = vadd.f32 0.0, %v1802
        %v1804 = vpop.f32.mrb[0].mxu0
        %1805 = vmatprep.mubr.bf16.mxu0 0
        %1806 = vmatmul.mubr.bf16.gmra.mrb[0].mxu0 %v1163
        %v1807 = vpop.f32.mrb[0].mxu0
        %v1808 = vadd.f32 0.0, %v1807
        %v1809 = vpop.f32.mrb[0].mxu0
        %v1810 = vpop.f32.mrb[0].mxu0
        %v1811 = vadd.f32 0.0, %v1810
        %v1812 = vpop.f32.mrb[0].mxu0
        %1813 = vmatprep.mubr.bf16.mxu0 0
        %1814 = vmatmul.mubr.bf16.gmra.mrb[0].mxu0 %v1165
        %v1815 = vpop.f32.mrb[0].mxu0
        %v1816 = vadd.f32 0.0, %v1815
        %v1817 = vpop.f32.mrb[0].mxu0
        %v1818 = vpop.f32.mrb[0].mxu0
        %v1819 = vadd.f32 0.0, %v1818
        %v1820 = vpop.f32.mrb[0].mxu0
        %1821 = vmatprep.mubr.bf16.mxu0 0
        %1822 = vmatmul.mubr.bf16.gmra.mrb[0].mxu0 %v1167
        %v1823 = vpop.f32.mrb[0].mxu0
        %v1824 = vadd.f32 0.0, %v1823
        %v1825 = vpop.f32.mrb[0].mxu0
        %v1826 = vpop.f32.mrb[0].mxu0
        %v1827 = vadd.f32 0.0, %v1826
        %v1828 = vpop.f32.mrb[0].mxu0
        %1829 = vmatprep.mubr.bf16.mxu0 0
        %1830 = vmatmul.mubr.bf16.gmra.mrb[0].mxu0 %v1675
        %v1831 = vpop.f32.mrb[0].mxu0
        %v1832 = vadd.f32 0.0, %v1831
        %v1833 = vpop.f32.mrb[0].mxu0
        %v1834 = vpop.f32.mrb[0].mxu0
        %v1835 = vadd.f32 0.0, %v1834
        %v1836 = vpop.f32.mrb[0].mxu0
        %1837 = vdwg.mxu0
        %v1838 = vadd.f32 %v1630, %v1712
        %v1839 = vadd.f32 %v1631, %v1715
        %v1840 = vadd.f32 %v1632, %v1720
        %v1841 = vadd.f32 %v1633, %v1723
        %v1842 = vadd.f32 %v1634, %v1728
        %v1843 = vadd.f32 %v1635, %v1731
        %v1844 = vadd.f32 %v1636, %v1736
        %v1845 = vadd.f32 %v1637, %v1739
        %v1846 = vadd.f32 %v1638, %v1744
        %v1847 = vadd.f32 %v1639, %v1747
        %v1848 = vadd.f32 %v1640, %v1752
        %v1849 = vadd.f32 %v1641, %v1755
        %v1850 = vadd.f32 %v1642, %v1760
        %v1851 = vadd.f32 %v1643, %v1763
        %v1852 = vadd.f32 %v1644, %v1768
        %v1853 = vadd.f32 %v1645, %v1771
        %v1854 = vadd.f32 %v1646, %v1776
        %v1855 = vadd.f32 %v1647, %v1779
        %v1856 = vadd.f32 %v1648, %v1784
        %v1857 = vadd.f32 %v1649, %v1787
        %v1858 = vadd.f32 %v1650, %v1792
        %v1859 = vadd.f32 %v1651, %v1795
        %v1860 = vadd.f32 %v1652, %v1800
        %v1861 = vadd.f32 %v1653, %v1803
        %v1862 = vadd.f32 %v1654, %v1808
        %v1863 = vadd.f32 %v1655, %v1811
        %v1864 = vadd.f32 %v1656, %v1816
        %v1865 = vadd.f32 %v1657, %v1819
        %v1866 = vadd.f32 %v1658, %v1824
        %v1867 = vadd.f32 %v1659, %v1827
        %v1868 = vadd.f32 %v1660, %v1832
        %v1869 = vadd.f32 %v1661, %v1835
        %v1870 = vshrl.u32 %v712, 16
        %v1872 = vshll.u32 %v712, 16
        %v1874 = vrot.slane %v1872, 1
        %v1875 = vor.u32 %v1870, %v1874
        %v1877 = vshll.u32 %v713, 16
        %v1879 = vrot.slane %v1877, 1
        %v1880 = vsel %vm714, %v1875, %v1879
        %v1885 = vunpack.c.l.b16 %v497
        %v1886 = vunpack.c.l.b16 %v498
        %v1887 = vunpack.c.l.b16 %v499
        %v1888 = vunpack.c.l.b16 %v500
        %v1889 = vpack.c.b16 %v1886, %v1885
        %v1890 = vpack.c.b16 %v1888, %v1887
        %v1894 = vsel %vm915, %v1880, 0
        %1896 = vmatprep.subr.bf16.mxu0 0
        %1897 = vmatpush1.bf16.msra.mxu0 %v1889
        %1898 = vmatprep.subr.bf16.mxu0 0
        %1899 = vmatpush1.bf16.msra.mxu0 %v1890
        %1900 = vmatprep.subr.bf16.mxu0 0
        %1901 = vmatpush1.bf16.msra.mxu0 0
        %1902 = vmatprep.subr.bf16.mxu0 0
        %1903 = vmatpush1.bf16.msra.mxu0 0
        %1904 = vmatprep.subr.bf16.mxu0 0
        %1905 = vmatpush1.bf16.msra.mxu0 0
        %1906 = vmatprep.subr.bf16.mxu0 0
        %1907 = vmatpush1.bf16.msra.mxu0 0
        %1908 = vmatprep.subr.bf16.mxu0 0
        %1909 = vmatpush1.bf16.msra.mxu0 0
        %1910 = vmatprep.subr.bf16.mxu0 0
        %1911 = vmatpush1.bf16.msra.mxu0 0
        %1912 = vmatprep.subr.bf16.mxu0 0
        %1913 = vmatpush1.bf16.msra.mxu0 0
        %1914 = vmatprep.subr.bf16.mxu0 0
        %1915 = vmatpush1.bf16.msra.mxu0 0
        %1916 = vmatprep.subr.bf16.mxu0 0
        %1917 = vmatpush1.bf16.msra.mxu0 0
        %1918 = vmatprep.subr.bf16.mxu0 0
        %1919 = vmatpush1.bf16.msra.mxu0 0
        %1920 = vmatprep.subr.bf16.mxu0 0
        %1921 = vmatpush1.bf16.msra.mxu0 0
        %1922 = vmatprep.subr.bf16.mxu0 0
        %1923 = vmatpush1.bf16.msra.mxu0 0
        %1924 = vmatprep.subr.bf16.mxu0 0
        %1925 = vmatpush1.bf16.msra.mxu0 0
        %1926 = vmatprep.subr.bf16.mxu0 0
        %1927 = vmatpush1.bf16.msra.mxu0 0
        %1928 = vmatprep.mubr.bf16.mxu0 0
        %1929 = vmatmul.mubr.bf16.gmra.mrb[0].mxu0 %v920
        %v1930 = vpop.f32.mrb[0].mxu0
        %v1931 = vadd.f32 0.0, %v1930
        %v1932 = vpop.f32.mrb[0].mxu0
        %v1933 = vpop.f32.mrb[0].mxu0
        %v1934 = vadd.f32 0.0, %v1933
        %v1935 = vpop.f32.mrb[0].mxu0
        %1936 = vmatprep.mubr.bf16.mxu0 0
        %1937 = vmatmul.mubr.bf16.gmra.mrb[0].mxu0 %v923
        %v1938 = vpop.f32.mrb[0].mxu0
        %v1939 = vadd.f32 0.0, %v1938
        %v1940 = vpop.f32.mrb[0].mxu0
        %v1941 = vpop.f32.mrb[0].mxu0
        %v1942 = vadd.f32 0.0, %v1941
        %v1943 = vpop.f32.mrb[0].mxu0
        %1944 = vmatprep.mubr.bf16.mxu0 0
        %1945 = vmatmul.mubr.bf16.gmra.mrb[0].mxu0 %v926
        %v1946 = vpop.f32.mrb[0].mxu0
        %v1947 = vadd.f32 0.0, %v1946
        %v1948 = vpop.f32.mrb[0].mxu0
        %v1949 = vpop.f32.mrb[0].mxu0
        %v1950 = vadd.f32 0.0, %v1949
        %v1951 = vpop.f32.mrb[0].mxu0
        %1952 = vmatprep.mubr.bf16.mxu0 0
        %1953 = vmatmul.mubr.bf16.gmra.mrb[0].mxu0 %v929
        %v1954 = vpop.f32.mrb[0].mxu0
        %v1955 = vadd.f32 0.0, %v1954
        %v1956 = vpop.f32.mrb[0].mxu0
        %v1957 = vpop.f32.mrb[0].mxu0
        %v1958 = vadd.f32 0.0, %v1957
        %v1959 = vpop.f32.mrb[0].mxu0
        %1960 = vmatprep.mubr.bf16.mxu0 0
        %1961 = vmatmul.mubr.bf16.gmra.mrb[0].mxu0 %v932
        %v1962 = vpop.f32.mrb[0].mxu0
        %v1963 = vadd.f32 0.0, %v1962
        %v1964 = vpop.f32.mrb[0].mxu0
        %v1965 = vpop.f32.mrb[0].mxu0
        %v1966 = vadd.f32 0.0, %v1965
        %v1967 = vpop.f32.mrb[0].mxu0
        %1968 = vmatprep.mubr.bf16.mxu0 0
        %1969 = vmatmul.mubr.bf16.gmra.mrb[0].mxu0 %v935
        %v1970 = vpop.f32.mrb[0].mxu0
        %v1971 = vadd.f32 0.0, %v1970
        %v1972 = vpop.f32.mrb[0].mxu0
        %v1973 = vpop.f32.mrb[0].mxu0
        %v1974 = vadd.f32 0.0, %v1973
        %v1975 = vpop.f32.mrb[0].mxu0
        %1976 = vmatprep.mubr.bf16.mxu0 0
        %1977 = vmatmul.mubr.bf16.gmra.mrb[0].mxu0 %v938
        %v1978 = vpop.f32.mrb[0].mxu0
        %v1979 = vadd.f32 0.0, %v1978
        %v1980 = vpop.f32.mrb[0].mxu0
        %v1981 = vpop.f32.mrb[0].mxu0
        %v1982 = vadd.f32 0.0, %v1981
        %v1983 = vpop.f32.mrb[0].mxu0
        %1984 = vmatprep.mubr.bf16.mxu0 0
        %1985 = vmatmul.mubr.bf16.gmra.mrb[0].mxu0 %v941
        %v1986 = vpop.f32.mrb[0].mxu0
        %v1987 = vadd.f32 0.0, %v1986
        %v1988 = vpop.f32.mrb[0].mxu0
        %v1989 = vpop.f32.mrb[0].mxu0
        %v1990 = vadd.f32 0.0, %v1989
        %v1991 = vpop.f32.mrb[0].mxu0
        %1992 = vmatprep.mubr.bf16.mxu0 0
        %1993 = vmatmul.mubr.bf16.gmra.mrb[0].mxu0 %v944
        %v1994 = vpop.f32.mrb[0].mxu0
        %v1995 = vadd.f32 0.0, %v1994
        %v1996 = vpop.f32.mrb[0].mxu0
        %v1997 = vpop.f32.mrb[0].mxu0
        %v1998 = vadd.f32 0.0, %v1997
        %v1999 = vpop.f32.mrb[0].mxu0
        %2000 = vmatprep.mubr.bf16.mxu0 0
        %2001 = vmatmul.mubr.bf16.gmra.mrb[0].mxu0 %v947
        %v2002 = vpop.f32.mrb[0].mxu0
        %v2003 = vadd.f32 0.0, %v2002
        %v2004 = vpop.f32.mrb[0].mxu0
        %v2005 = vpop.f32.mrb[0].mxu0
        %v2006 = vadd.f32 0.0, %v2005
        %v2007 = vpop.f32.mrb[0].mxu0
        %2008 = vmatprep.mubr.bf16.mxu0 0
        %2009 = vmatmul.mubr.bf16.gmra.mrb[0].mxu0 %v950
        %v2010 = vpop.f32.mrb[0].mxu0
        %v2011 = vadd.f32 0.0, %v2010
        %v2012 = vpop.f32.mrb[0].mxu0
        %v2013 = vpop.f32.mrb[0].mxu0
        %v2014 = vadd.f32 0.0, %v2013
        %v2015 = vpop.f32.mrb[0].mxu0
        %2016 = vmatprep.mubr.bf16.mxu0 0
        %2017 = vmatmul.mubr.bf16.gmra.mrb[0].mxu0 %v953
        %v2018 = vpop.f32.mrb[0].mxu0
        %v2019 = vadd.f32 0.0, %v2018
        %v2020 = vpop.f32.mrb[0].mxu0
        %v2021 = vpop.f32.mrb[0].mxu0
        %v2022 = vadd.f32 0.0, %v2021
        %v2023 = vpop.f32.mrb[0].mxu0
        %2024 = vmatprep.mubr.bf16.mxu0 0
        %2025 = vmatmul.mubr.bf16.gmra.mrb[0].mxu0 %v956
        %v2026 = vpop.f32.mrb[0].mxu0
        %v2027 = vadd.f32 0.0, %v2026
        %v2028 = vpop.f32.mrb[0].mxu0
        %v2029 = vpop.f32.mrb[0].mxu0
        %v2030 = vadd.f32 0.0, %v2029
        %v2031 = vpop.f32.mrb[0].mxu0
        %2032 = vmatprep.mubr.bf16.mxu0 0
        %2033 = vmatmul.mubr.bf16.gmra.mrb[0].mxu0 %v959
        %v2034 = vpop.f32.mrb[0].mxu0
        %v2035 = vadd.f32 0.0, %v2034
        %v2036 = vpop.f32.mrb[0].mxu0
        %v2037 = vpop.f32.mrb[0].mxu0
        %v2038 = vadd.f32 0.0, %v2037
        %v2039 = vpop.f32.mrb[0].mxu0
        %2040 = vmatprep.mubr.bf16.mxu0 0
        %2041 = vmatmul.mubr.bf16.gmra.mrb[0].mxu0 %v962
        %v2042 = vpop.f32.mrb[0].mxu0
        %v2043 = vadd.f32 0.0, %v2042
        %v2044 = vpop.f32.mrb[0].mxu0
        %v2045 = vpop.f32.mrb[0].mxu0
        %v2046 = vadd.f32 0.0, %v2045
        %v2047 = vpop.f32.mrb[0].mxu0
        %2048 = vmatprep.mubr.bf16.mxu0 0
        %2049 = vmatmul.mubr.bf16.gmra.mrb[0].mxu0 %v1894
        %v2050 = vpop.f32.mrb[0].mxu0
        %v2051 = vadd.f32 0.0, %v2050
        %v2052 = vpop.f32.mrb[0].mxu0
        %v2053 = vpop.f32.mrb[0].mxu0
        %v2054 = vadd.f32 0.0, %v2053
        %v2055 = vpop.f32.mrb[0].mxu0
        %2056 = vdwg.mxu0
        %v2057 = vadd.f32 %v1838, %v1931
        %v2058 = vadd.f32 %v1839, %v1934
        %v2059 = vadd.f32 %v1840, %v1939
        %v2060 = vadd.f32 %v1841, %v1942
        %v2061 = vadd.f32 %v1842, %v1947
        %v2062 = vadd.f32 %v1843, %v1950
        %v2063 = vadd.f32 %v1844, %v1955
        %v2064 = vadd.f32 %v1845, %v1958
        %v2065 = vadd.f32 %v1846, %v1963
        %v2066 = vadd.f32 %v1847, %v1966
        %v2067 = vadd.f32 %v1848, %v1971
        %v2068 = vadd.f32 %v1849, %v1974
        %v2069 = vadd.f32 %v1850, %v1979
        %v2070 = vadd.f32 %v1851, %v1982
        %v2071 = vadd.f32 %v1852, %v1987
        %v2072 = vadd.f32 %v1853, %v1990
        %v2073 = vadd.f32 %v1854, %v1995
        %v2074 = vadd.f32 %v1855, %v1998
        %v2075 = vadd.f32 %v1856, %v2003
        %v2076 = vadd.f32 %v1857, %v2006
        %v2077 = vadd.f32 %v1858, %v2011
        %v2078 = vadd.f32 %v1859, %v2014
        %v2079 = vadd.f32 %v1860, %v2019
        %v2080 = vadd.f32 %v1861, %v2022
        %v2081 = vadd.f32 %v1862, %v2027
        %v2082 = vadd.f32 %v1863, %v2030
        %v2083 = vadd.f32 %v1864, %v2035
        %v2084 = vadd.f32 %v1865, %v2038
        %v2085 = vadd.f32 %v1866, %v2043
        %v2086 = vadd.f32 %v1867, %v2046
        %v2087 = vadd.f32 %v1868, %v2051
        %v2088 = vadd.f32 %v1869, %v2054
        %v2091 = vrot.slane %v712, 1
        %v2092 = vrot.slane %v713, 1
        %v2093 = vsel %vm1361, %v2091, %v2092
        %v2098 = vunpack.c.l.b16 %v501
        %v2099 = vunpack.c.l.b16 %v502
        %v2100 = vunpack.c.l.b16 %v503
        %v2101 = vunpack.c.l.b16 %v504
        %v2102 = vpack.c.b16 %v2099, %v2098
        %v2103 = vpack.c.b16 %v2101, %v2100
        %v2107 = vsel %vm915, %v2093, 0
        %2109 = vmatprep.subr.bf16.mxu0 0
        %2110 = vmatpush1.bf16.msra.mxu0 %v2102
        %2111 = vmatprep.subr.bf16.mxu0 0
        %2112 = vmatpush1.bf16.msra.mxu0 %v2103
        %2113 = vmatprep.subr.bf16.mxu0 0
        %2114 = vmatpush1.bf16.msra.mxu0 0
        %2115 = vmatprep.subr.bf16.mxu0 0
        %2116 = vmatpush1.bf16.msra.mxu0 0
        %2117 = vmatprep.subr.bf16.mxu0 0
        %2118 = vmatpush1.bf16.msra.mxu0 0
        %2119 = vmatprep.subr.bf16.mxu0 0
        %2120 = vmatpush1.bf16.msra.mxu0 0
        %2121 = vmatprep.subr.bf16.mxu0 0
        %2122 = vmatpush1.bf16.msra.mxu0 0
        %2123 = vmatprep.subr.bf16.mxu0 0
        %2124 = vmatpush1.bf16.msra.mxu0 0
        %2125 = vmatprep.subr.bf16.mxu0 0
        %2126 = vmatpush1.bf16.msra.mxu0 0
        %2127 = vmatprep.subr.bf16.mxu0 0
        %2128 = vmatpush1.bf16.msra.mxu0 0
        %2129 = vmatprep.subr.bf16.mxu0 0
        %2130 = vmatpush1.bf16.msra.mxu0 0
        %2131 = vmatprep.subr.bf16.mxu0 0
        %2132 = vmatpush1.bf16.msra.mxu0 0
        %2133 = vmatprep.subr.bf16.mxu0 0
        %2134 = vmatpush1.bf16.msra.mxu0 0
        %2135 = vmatprep.subr.bf16.mxu0 0
        %2136 = vmatpush1.bf16.msra.mxu0 0
        %2137 = vmatprep.subr.bf16.mxu0 0
        %2138 = vmatpush1.bf16.msra.mxu0 0
        %2139 = vmatprep.subr.bf16.mxu0 0
        %2140 = vmatpush1.bf16.msra.mxu0 0
        %2141 = vmatprep.mubr.bf16.mxu0 0
        %2142 = vmatmul.mubr.bf16.gmra.mrb[0].mxu0 %v1425
        %v2143 = vpop.f32.mrb[0].mxu0
        %v2144 = vadd.f32 0.0, %v2143
        %v2145 = vpop.f32.mrb[0].mxu0
        %v2146 = vpop.f32.mrb[0].mxu0
        %v2147 = vadd.f32 0.0, %v2146
        %v2148 = vpop.f32.mrb[0].mxu0
        %2149 = vmatprep.mubr.bf16.mxu0 0
        %2150 = vmatmul.mubr.bf16.gmra.mrb[0].mxu0 %v1428
        %v2151 = vpop.f32.mrb[0].mxu0
        %v2152 = vadd.f32 0.0, %v2151
        %v2153 = vpop.f32.mrb[0].mxu0
        %v2154 = vpop.f32.mrb[0].mxu0
        %v2155 = vadd.f32 0.0, %v2154
        %v2156 = vpop.f32.mrb[0].mxu0
        %2157 = vmatprep.mubr.bf16.mxu0 0
        %2158 = vmatmul.mubr.bf16.gmra.mrb[0].mxu0 %v1431
        %v2159 = vpop.f32.mrb[0].mxu0
        %v2160 = vadd.f32 0.0, %v2159
        %v2161 = vpop.f32.mrb[0].mxu0
        %v2162 = vpop.f32.mrb[0].mxu0
        %v2163 = vadd.f32 0.0, %v2162
        %v2164 = vpop.f32.mrb[0].mxu0
        %2165 = vmatprep.mubr.bf16.mxu0 0
        %2166 = vmatmul.mubr.bf16.gmra.mrb[0].mxu0 %v1434
        %v2167 = vpop.f32.mrb[0].mxu0
        %v2168 = vadd.f32 0.0, %v2167
        %v2169 = vpop.f32.mrb[0].mxu0
        %v2170 = vpop.f32.mrb[0].mxu0
        %v2171 = vadd.f32 0.0, %v2170
        %v2172 = vpop.f32.mrb[0].mxu0
        %2173 = vmatprep.mubr.bf16.mxu0 0
        %2174 = vmatmul.mubr.bf16.gmra.mrb[0].mxu0 %v1437
        %v2175 = vpop.f32.mrb[0].mxu0
        %v2176 = vadd.f32 0.0, %v2175
        %v2177 = vpop.f32.mrb[0].mxu0
        %v2178 = vpop.f32.mrb[0].mxu0
        %v2179 = vadd.f32 0.0, %v2178
        %v2180 = vpop.f32.mrb[0].mxu0
        %2181 = vmatprep.mubr.bf16.mxu0 0
        %2182 = vmatmul.mubr.bf16.gmra.mrb[0].mxu0 %v1440
        %v2183 = vpop.f32.mrb[0].mxu0
        %v2184 = vadd.f32 0.0, %v2183
        %v2185 = vpop.f32.mrb[0].mxu0
        %v2186 = vpop.f32.mrb[0].mxu0
        %v2187 = vadd.f32 0.0, %v2186
        %v2188 = vpop.f32.mrb[0].mxu0
        %2189 = vmatprep.mubr.bf16.mxu0 0
        %2190 = vmatmul.mubr.bf16.gmra.mrb[0].mxu0 %v1443
        %v2191 = vpop.f32.mrb[0].mxu0
        %v2192 = vadd.f32 0.0, %v2191
        %v2193 = vpop.f32.mrb[0].mxu0
        %v2194 = vpop.f32.mrb[0].mxu0
        %v2195 = vadd.f32 0.0, %v2194
        %v2196 = vpop.f32.mrb[0].mxu0
        %2197 = vmatprep.mubr.bf16.mxu0 0
        %2198 = vmatmul.mubr.bf16.gmra.mrb[0].mxu0 %v1446
        %v2199 = vpop.f32.mrb[0].mxu0
        %v2200 = vadd.f32 0.0, %v2199
        %v2201 = vpop.f32.mrb[0].mxu0
        %v2202 = vpop.f32.mrb[0].mxu0
        %v2203 = vadd.f32 0.0, %v2202
        %v2204 = vpop.f32.mrb[0].mxu0
        %2205 = vmatprep.mubr.bf16.mxu0 0
        %2206 = vmatmul.mubr.bf16.gmra.mrb[0].mxu0 %v1449
        %v2207 = vpop.f32.mrb[0].mxu0
        %v2208 = vadd.f32 0.0, %v2207
        %v2209 = vpop.f32.mrb[0].mxu0
        %v2210 = vpop.f32.mrb[0].mxu0
        %v2211 = vadd.f32 0.0, %v2210
        %v2212 = vpop.f32.mrb[0].mxu0
        %2213 = vmatprep.mubr.bf16.mxu0 0
        %2214 = vmatmul.mubr.bf16.gmra.mrb[0].mxu0 %v1452
        %v2215 = vpop.f32.mrb[0].mxu0
        %v2216 = vadd.f32 0.0, %v2215
        %v2217 = vpop.f32.mrb[0].mxu0
        %v2218 = vpop.f32.mrb[0].mxu0
        %v2219 = vadd.f32 0.0, %v2218
        %v2220 = vpop.f32.mrb[0].mxu0
        %2221 = vmatprep.mubr.bf16.mxu0 0
        %2222 = vmatmul.mubr.bf16.gmra.mrb[0].mxu0 %v1455
        %v2223 = vpop.f32.mrb[0].mxu0
        %v2224 = vadd.f32 0.0, %v2223
        %v2225 = vpop.f32.mrb[0].mxu0
        %v2226 = vpop.f32.mrb[0].mxu0
        %v2227 = vadd.f32 0.0, %v2226
        %v2228 = vpop.f32.mrb[0].mxu0
        %2229 = vmatprep.mubr.bf16.mxu0 0
        %2230 = vmatmul.mubr.bf16.gmra.mrb[0].mxu0 %v1458
        %v2231 = vpop.f32.mrb[0].mxu0
        %v2232 = vadd.f32 0.0, %v2231
        %v2233 = vpop.f32.mrb[0].mxu0
        %v2234 = vpop.f32.mrb[0].mxu0
        %v2235 = vadd.f32 0.0, %v2234
        %v2236 = vpop.f32.mrb[0].mxu0
        %2237 = vmatprep.mubr.bf16.mxu0 0
        %2238 = vmatmul.mubr.bf16.gmra.mrb[0].mxu0 %v1461
        %v2239 = vpop.f32.mrb[0].mxu0
        %v2240 = vadd.f32 0.0, %v2239
        %v2241 = vpop.f32.mrb[0].mxu0
        %v2242 = vpop.f32.mrb[0].mxu0
        %v2243 = vadd.f32 0.0, %v2242
        %v2244 = vpop.f32.mrb[0].mxu0
        %2245 = vmatprep.mubr.bf16.mxu0 0
        %2246 = vmatmul.mubr.bf16.gmra.mrb[0].mxu0 %v1464
        %v2247 = vpop.f32.mrb[0].mxu0
        %v2248 = vadd.f32 0.0, %v2247
        %v2249 = vpop.f32.mrb[0].mxu0
        %v2250 = vpop.f32.mrb[0].mxu0
        %v2251 = vadd.f32 0.0, %v2250
        %v2252 = vpop.f32.mrb[0].mxu0
        %2253 = vmatprep.mubr.bf16.mxu0 0
        %2254 = vmatmul.mubr.bf16.gmra.mrb[0].mxu0 %v1467
        %v2255 = vpop.f32.mrb[0].mxu0
        %v2256 = vadd.f32 0.0, %v2255
        %v2257 = vpop.f32.mrb[0].mxu0
        %v2258 = vpop.f32.mrb[0].mxu0
        %v2259 = vadd.f32 0.0, %v2258
        %v2260 = vpop.f32.mrb[0].mxu0
        %2261 = vmatprep.mubr.bf16.mxu0 0
        %2262 = vmatmul.mubr.bf16.gmra.mrb[0].mxu0 %v2107
        %v2263 = vpop.f32.mrb[0].mxu0
        %v2264 = vadd.f32 0.0, %v2263
        %v2265 = vpop.f32.mrb[0].mxu0
        %v2266 = vpop.f32.mrb[0].mxu0
        %v2267 = vadd.f32 0.0, %v2266
        %v2268 = vpop.f32.mrb[0].mxu0
        %2269 = vdwg.mxu0
        %v2270 = vadd.f32 %v2057, %v2144
        %v2271 = vadd.f32 %v2058, %v2147
        %v2272 = vadd.f32 %v2059, %v2152
        %v2273 = vadd.f32 %v2060, %v2155
        %v2274 = vadd.f32 %v2061, %v2160
        %v2275 = vadd.f32 %v2062, %v2163
        %v2276 = vadd.f32 %v2063, %v2168
        %v2277 = vadd.f32 %v2064, %v2171
        %v2278 = vadd.f32 %v2065, %v2176
        %v2279 = vadd.f32 %v2066, %v2179
        %v2280 = vadd.f32 %v2067, %v2184
        %v2281 = vadd.f32 %v2068, %v2187
        %v2282 = vadd.f32 %v2069, %v2192
        %v2283 = vadd.f32 %v2070, %v2195
        %v2284 = vadd.f32 %v2071, %v2200
        %v2285 = vadd.f32 %v2072, %v2203
        %v2286 = vadd.f32 %v2073, %v2208
        %v2287 = vadd.f32 %v2074, %v2211
        %v2288 = vadd.f32 %v2075, %v2216
        %v2289 = vadd.f32 %v2076, %v2219
        %v2290 = vadd.f32 %v2077, %v2224
        %v2291 = vadd.f32 %v2078, %v2227
        %v2292 = vadd.f32 %v2079, %v2232
        %v2293 = vadd.f32 %v2080, %v2235
        %v2294 = vadd.f32 %v2081, %v2240
        %v2295 = vadd.f32 %v2082, %v2243
        %v2296 = vadd.f32 %v2083, %v2248
        %v2297 = vadd.f32 %v2084, %v2251
        %v2298 = vadd.f32 %v2085, %v2256
        %v2299 = vadd.f32 %v2086, %v2259
        %v2300 = vadd.f32 %v2087, %v2264
        %v2301 = vadd.f32 %v2088, %v2267
        %v2306 = vunpack.c.l.b16 %v505
        %v2307 = vunpack.c.l.b16 %v506
        %v2308 = vunpack.c.l.b16 %v507
        %v2309 = vunpack.c.l.b16 %v508
        %v2310 = vpack.c.b16 %v2307, %v2306
        %v2311 = vpack.c.b16 %v2309, %v2308
        %2314 = vmatprep.subr.bf16.mxu0 0
        %2315 = vmatpush1.bf16.msra.mxu0 %v2310
        %2316 = vmatprep.subr.bf16.mxu0 0
        %2317 = vmatpush1.bf16.msra.mxu0 %v2311
        %2318 = vmatprep.subr.bf16.mxu0 0
        %2319 = vmatpush1.bf16.msra.mxu0 0
        %2320 = vmatprep.subr.bf16.mxu0 0
        %2321 = vmatpush1.bf16.msra.mxu0 0
        %2322 = vmatprep.subr.bf16.mxu0 0
        %2323 = vmatpush1.bf16.msra.mxu0 0
        %2324 = vmatprep.subr.bf16.mxu0 0
        %2325 = vmatpush1.bf16.msra.mxu0 0
        %2326 = vmatprep.subr.bf16.mxu0 0
        %2327 = vmatpush1.bf16.msra.mxu0 0
        %2328 = vmatprep.subr.bf16.mxu0 0
        %2329 = vmatpush1.bf16.msra.mxu0 0
        %2330 = vmatprep.subr.bf16.mxu0 0
        %2331 = vmatpush1.bf16.msra.mxu0 0
        %2332 = vmatprep.subr.bf16.mxu0 0
        %2333 = vmatpush1.bf16.msra.mxu0 0
        %2334 = vmatprep.subr.bf16.mxu0 0
        %2335 = vmatpush1.bf16.msra.mxu0 0
        %2336 = vmatprep.subr.bf16.mxu0 0
        %2337 = vmatpush1.bf16.msra.mxu0 0
        %2338 = vmatprep.subr.bf16.mxu0 0
        %2339 = vmatpush1.bf16.msra.mxu0 0
        %2340 = vmatprep.subr.bf16.mxu0 0
        %2341 = vmatpush1.bf16.msra.mxu0 0
        %2342 = vmatprep.subr.bf16.mxu0 0
        %2343 = vmatpush1.bf16.msra.mxu0 0
        %2344 = vmatprep.subr.bf16.mxu0 0
        %2345 = vmatpush1.bf16.msra.mxu0 0
        %2346 = vmatprep.mubr.bf16.mxu0 0
        %2347 = vmatmul.mubr.bf16.gmra.mrb[0].mxu0 %v1141
        %v2348 = vpop.f32.mrb[0].mxu0
        %v2349 = vadd.f32 0.0, %v2348
        %v2350 = vpop.f32.mrb[0].mxu0
        %v2351 = vpop.f32.mrb[0].mxu0
        %v2352 = vadd.f32 0.0, %v2351
        %v2353 = vpop.f32.mrb[0].mxu0
        %2354 = vmatprep.mubr.bf16.mxu0 0
        %2355 = vmatmul.mubr.bf16.gmra.mrb[0].mxu0 %v1143
        %v2356 = vpop.f32.mrb[0].mxu0
        %v2357 = vadd.f32 0.0, %v2356
        %v2358 = vpop.f32.mrb[0].mxu0
        %v2359 = vpop.f32.mrb[0].mxu0
        %v2360 = vadd.f32 0.0, %v2359
        %v2361 = vpop.f32.mrb[0].mxu0
        %2362 = vmatprep.mubr.bf16.mxu0 0
        %2363 = vmatmul.mubr.bf16.gmra.mrb[0].mxu0 %v1145
        %v2364 = vpop.f32.mrb[0].mxu0
        %v2365 = vadd.f32 0.0, %v2364
        %v2366 = vpop.f32.mrb[0].mxu0
        %v2367 = vpop.f32.mrb[0].mxu0
        %v2368 = vadd.f32 0.0, %v2367
        %v2369 = vpop.f32.mrb[0].mxu0
        %2370 = vmatprep.mubr.bf16.mxu0 0
        %2371 = vmatmul.mubr.bf16.gmra.mrb[0].mxu0 %v1147
        %v2372 = vpop.f32.mrb[0].mxu0
        %v2373 = vadd.f32 0.0, %v2372
        %v2374 = vpop.f32.mrb[0].mxu0
        %v2375 = vpop.f32.mrb[0].mxu0
        %v2376 = vadd.f32 0.0, %v2375
        %v2377 = vpop.f32.mrb[0].mxu0
        %2378 = vmatprep.mubr.bf16.mxu0 0
        %2379 = vmatmul.mubr.bf16.gmra.mrb[0].mxu0 %v1149
        %v2380 = vpop.f32.mrb[0].mxu0
        %v2381 = vadd.f32 0.0, %v2380
        %v2382 = vpop.f32.mrb[0].mxu0
        %v2383 = vpop.f32.mrb[0].mxu0
        %v2384 = vadd.f32 0.0, %v2383
        %v2385 = vpop.f32.mrb[0].mxu0
        %2386 = vmatprep.mubr.bf16.mxu0 0
        %2387 = vmatmul.mubr.bf16.gmra.mrb[0].mxu0 %v1151
        %v2388 = vpop.f32.mrb[0].mxu0
        %v2389 = vadd.f32 0.0, %v2388
        %v2390 = vpop.f32.mrb[0].mxu0
        %v2391 = vpop.f32.mrb[0].mxu0
        %v2392 = vadd.f32 0.0, %v2391
        %v2393 = vpop.f32.mrb[0].mxu0
        %2394 = vmatprep.mubr.bf16.mxu0 0
        %2395 = vmatmul.mubr.bf16.gmra.mrb[0].mxu0 %v1153
        %v2396 = vpop.f32.mrb[0].mxu0
        %v2397 = vadd.f32 0.0, %v2396
        %v2398 = vpop.f32.mrb[0].mxu0
        %v2399 = vpop.f32.mrb[0].mxu0
        %v2400 = vadd.f32 0.0, %v2399
        %v2401 = vpop.f32.mrb[0].mxu0
        %2402 = vmatprep.mubr.bf16.mxu0 0
        %2403 = vmatmul.mubr.bf16.gmra.mrb[0].mxu0 %v1155
        %v2404 = vpop.f32.mrb[0].mxu0
        %v2405 = vadd.f32 0.0, %v2404
        %v2406 = vpop.f32.mrb[0].mxu0
        %v2407 = vpop.f32.mrb[0].mxu0
        %v2408 = vadd.f32 0.0, %v2407
        %v2409 = vpop.f32.mrb[0].mxu0
        %2410 = vmatprep.mubr.bf16.mxu0 0
        %2411 = vmatmul.mubr.bf16.gmra.mrb[0].mxu0 %v1157
        %v2412 = vpop.f32.mrb[0].mxu0
        %v2413 = vadd.f32 0.0, %v2412
        %v2414 = vpop.f32.mrb[0].mxu0
        %v2415 = vpop.f32.mrb[0].mxu0
        %v2416 = vadd.f32 0.0, %v2415
        %v2417 = vpop.f32.mrb[0].mxu0
        %2418 = vmatprep.mubr.bf16.mxu0 0
        %2419 = vmatmul.mubr.bf16.gmra.mrb[0].mxu0 %v1159
        %v2420 = vpop.f32.mrb[0].mxu0
        %v2421 = vadd.f32 0.0, %v2420
        %v2422 = vpop.f32.mrb[0].mxu0
        %v2423 = vpop.f32.mrb[0].mxu0
        %v2424 = vadd.f32 0.0, %v2423
        %v2425 = vpop.f32.mrb[0].mxu0
        %2426 = vmatprep.mubr.bf16.mxu0 0
        %2427 = vmatmul.mubr.bf16.gmra.mrb[0].mxu0 %v1161
        %v2428 = vpop.f32.mrb[0].mxu0
        %v2429 = vadd.f32 0.0, %v2428
        %v2430 = vpop.f32.mrb[0].mxu0
        %v2431 = vpop.f32.mrb[0].mxu0
        %v2432 = vadd.f32 0.0, %v2431
        %v2433 = vpop.f32.mrb[0].mxu0
        %2434 = vmatprep.mubr.bf16.mxu0 0
        %2435 = vmatmul.mubr.bf16.gmra.mrb[0].mxu0 %v1163
        %v2436 = vpop.f32.mrb[0].mxu0
        %v2437 = vadd.f32 0.0, %v2436
        %v2438 = vpop.f32.mrb[0].mxu0
        %v2439 = vpop.f32.mrb[0].mxu0
        %v2440 = vadd.f32 0.0, %v2439
        %v2441 = vpop.f32.mrb[0].mxu0
        %2442 = vmatprep.mubr.bf16.mxu0 0
        %2443 = vmatmul.mubr.bf16.gmra.mrb[0].mxu0 %v1165
        %v2444 = vpop.f32.mrb[0].mxu0
        %v2445 = vadd.f32 0.0, %v2444
        %v2446 = vpop.f32.mrb[0].mxu0
        %v2447 = vpop.f32.mrb[0].mxu0
        %v2448 = vadd.f32 0.0, %v2447
        %v2449 = vpop.f32.mrb[0].mxu0
        %2450 = vmatprep.mubr.bf16.mxu0 0
        %2451 = vmatmul.mubr.bf16.gmra.mrb[0].mxu0 %v1167
        %v2452 = vpop.f32.mrb[0].mxu0
        %v2453 = vadd.f32 0.0, %v2452
        %v2454 = vpop.f32.mrb[0].mxu0
        %v2455 = vpop.f32.mrb[0].mxu0
        %v2456 = vadd.f32 0.0, %v2455
        %v2457 = vpop.f32.mrb[0].mxu0
        %2458 = vmatprep.mubr.bf16.mxu0 0
        %2459 = vmatmul.mubr.bf16.gmra.mrb[0].mxu0 %v1675
        %v2460 = vpop.f32.mrb[0].mxu0
        %v2461 = vadd.f32 0.0, %v2460
        %v2462 = vpop.f32.mrb[0].mxu0
        %v2463 = vpop.f32.mrb[0].mxu0
        %v2464 = vadd.f32 0.0, %v2463
        %v2465 = vpop.f32.mrb[0].mxu0
        %2466 = vmatprep.mubr.bf16.mxu0 0
        %2467 = vmatmul.mubr.bf16.gmra.mrb[0].mxu0 %v1137
        %v2468 = vpop.f32.mrb[0].mxu0
        %v2469 = vadd.f32 0.0, %v2468
        %v2470 = vpop.f32.mrb[0].mxu0
        %v2471 = vpop.f32.mrb[0].mxu0
        %v2472 = vadd.f32 0.0, %v2471
        %v2473 = vpop.f32.mrb[0].mxu0
        %2474 = vdwg.mxu0
        %v2475 = vadd.f32 %v2270, %v2349
        %v2476 = vadd.f32 %v2271, %v2352
        %v2477 = vadd.f32 %v2272, %v2357
        %v2478 = vadd.f32 %v2273, %v2360
        %v2479 = vadd.f32 %v2274, %v2365
        %v2480 = vadd.f32 %v2275, %v2368
        %v2481 = vadd.f32 %v2276, %v2373
        %v2482 = vadd.f32 %v2277, %v2376
        %v2483 = vadd.f32 %v2278, %v2381
        %v2484 = vadd.f32 %v2279, %v2384
        %v2485 = vadd.f32 %v2280, %v2389
        %v2486 = vadd.f32 %v2281, %v2392
        %v2487 = vadd.f32 %v2282, %v2397
        %v2488 = vadd.f32 %v2283, %v2400
        %v2489 = vadd.f32 %v2284, %v2405
        %v2490 = vadd.f32 %v2285, %v2408
        %v2491 = vadd.f32 %v2286, %v2413
        %v2492 = vadd.f32 %v2287, %v2416
        %v2493 = vadd.f32 %v2288, %v2421
        %v2494 = vadd.f32 %v2289, %v2424
        %v2495 = vadd.f32 %v2290, %v2429
        %v2496 = vadd.f32 %v2291, %v2432
        %v2497 = vadd.f32 %v2292, %v2437
        %v2498 = vadd.f32 %v2293, %v2440
        %v2499 = vadd.f32 %v2294, %v2445
        %v2500 = vadd.f32 %v2295, %v2448
        %v2501 = vadd.f32 %v2296, %v2453
        %v2502 = vadd.f32 %v2297, %v2456
        %v2503 = vadd.f32 %v2298, %v2461
        %v2504 = vadd.f32 %v2299, %v2464
        %v2505 = vadd.f32 %v2300, %v2469
        %v2506 = vadd.f32 %v2301, %v2472
        %v2511 = vunpack.c.l.b16 %v509
        %v2512 = vunpack.c.l.b16 %v510
        %v2513 = vunpack.c.l.b16 %v511
        %v2514 = vunpack.c.l.b16 %v512
        %v2515 = vpack.c.b16 %v2512, %v2511
        %v2516 = vpack.c.b16 %v2514, %v2513
        %2519 = vmatprep.subr.bf16.mxu0 0
        %2520 = vmatpush1.bf16.msra.mxu0 %v2515
        %2521 = vmatprep.subr.bf16.mxu0 0
        %2522 = vmatpush1.bf16.msra.mxu0 %v2516
        %2523 = vmatprep.subr.bf16.mxu0 0
        %2524 = vmatpush1.bf16.msra.mxu0 0
        %2525 = vmatprep.subr.bf16.mxu0 0
        %2526 = vmatpush1.bf16.msra.mxu0 0
        %2527 = vmatprep.subr.bf16.mxu0 0
        %2528 = vmatpush1.bf16.msra.mxu0 0
        %2529 = vmatprep.subr.bf16.mxu0 0
        %2530 = vmatpush1.bf16.msra.mxu0 0
        %2531 = vmatprep.subr.bf16.mxu0 0
        %2532 = vmatpush1.bf16.msra.mxu0 0
        %2533 = vmatprep.subr.bf16.mxu0 0
        %2534 = vmatpush1.bf16.msra.mxu0 0
        %2535 = vmatprep.subr.bf16.mxu0 0
        %2536 = vmatpush1.bf16.msra.mxu0 0
        %2537 = vmatprep.subr.bf16.mxu0 0
        %2538 = vmatpush1.bf16.msra.mxu0 0
        %2539 = vmatprep.subr.bf16.mxu0 0
        %2540 = vmatpush1.bf16.msra.mxu0 0
        %2541 = vmatprep.subr.bf16.mxu0 0
        %2542 = vmatpush1.bf16.msra.mxu0 0
        %2543 = vmatprep.subr.bf16.mxu0 0
        %2544 = vmatpush1.bf16.msra.mxu0 0
        %2545 = vmatprep.subr.bf16.mxu0 0
        %2546 = vmatpush1.bf16.msra.mxu0 0
        %2547 = vmatprep.subr.bf16.mxu0 0
        %2548 = vmatpush1.bf16.msra.mxu0 0
        %2549 = vmatprep.subr.bf16.mxu0 0
        %2550 = vmatpush1.bf16.msra.mxu0 0
        %2551 = vmatprep.mubr.bf16.mxu0 0
        %2552 = vmatmul.mubr.bf16.gmra.mrb[0].mxu0 %v923
        %v2553 = vpop.f32.mrb[0].mxu0
        %v2554 = vadd.f32 0.0, %v2553
        %v2555 = vpop.f32.mrb[0].mxu0
        %v2556 = vpop.f32.mrb[0].mxu0
        %v2557 = vadd.f32 0.0, %v2556
        %v2558 = vpop.f32.mrb[0].mxu0
        %2559 = vmatprep.mubr.bf16.mxu0 0
        %2560 = vmatmul.mubr.bf16.gmra.mrb[0].mxu0 %v926
        %v2561 = vpop.f32.mrb[0].mxu0
        %v2562 = vadd.f32 0.0, %v2561
        %v2563 = vpop.f32.mrb[0].mxu0
        %v2564 = vpop.f32.mrb[0].mxu0
        %v2565 = vadd.f32 0.0, %v2564
        %v2566 = vpop.f32.mrb[0].mxu0
        %2567 = vmatprep.mubr.bf16.mxu0 0
        %2568 = vmatmul.mubr.bf16.gmra.mrb[0].mxu0 %v929
        %v2569 = vpop.f32.mrb[0].mxu0
        %v2570 = vadd.f32 0.0, %v2569
        %v2571 = vpop.f32.mrb[0].mxu0
        %v2572 = vpop.f32.mrb[0].mxu0
        %v2573 = vadd.f32 0.0, %v2572
        %v2574 = vpop.f32.mrb[0].mxu0
        %2575 = vmatprep.mubr.bf16.mxu0 0
        %2576 = vmatmul.mubr.bf16.gmra.mrb[0].mxu0 %v932
        %v2577 = vpop.f32.mrb[0].mxu0
        %v2578 = vadd.f32 0.0, %v2577
        %v2579 = vpop.f32.mrb[0].mxu0
        %v2580 = vpop.f32.mrb[0].mxu0
        %v2581 = vadd.f32 0.0, %v2580
        %v2582 = vpop.f32.mrb[0].mxu0
        %2583 = vmatprep.mubr.bf16.mxu0 0
        %2584 = vmatmul.mubr.bf16.gmra.mrb[0].mxu0 %v935
        %v2585 = vpop.f32.mrb[0].mxu0
        %v2586 = vadd.f32 0.0, %v2585
        %v2587 = vpop.f32.mrb[0].mxu0
        %v2588 = vpop.f32.mrb[0].mxu0
        %v2589 = vadd.f32 0.0, %v2588
        %v2590 = vpop.f32.mrb[0].mxu0
        %2591 = vmatprep.mubr.bf16.mxu0 0
        %2592 = vmatmul.mubr.bf16.gmra.mrb[0].mxu0 %v938
        %v2593 = vpop.f32.mrb[0].mxu0
        %v2594 = vadd.f32 0.0, %v2593
        %v2595 = vpop.f32.mrb[0].mxu0
        %v2596 = vpop.f32.mrb[0].mxu0
        %v2597 = vadd.f32 0.0, %v2596
        %v2598 = vpop.f32.mrb[0].mxu0
        %2599 = vmatprep.mubr.bf16.mxu0 0
        %2600 = vmatmul.mubr.bf16.gmra.mrb[0].mxu0 %v941
        %v2601 = vpop.f32.mrb[0].mxu0
        %v2602 = vadd.f32 0.0, %v2601
        %v2603 = vpop.f32.mrb[0].mxu0
        %v2604 = vpop.f32.mrb[0].mxu0
        %v2605 = vadd.f32 0.0, %v2604
        %v2606 = vpop.f32.mrb[0].mxu0
        %2607 = vmatprep.mubr.bf16.mxu0 0
        %2608 = vmatmul.mubr.bf16.gmra.mrb[0].mxu0 %v944
        %v2609 = vpop.f32.mrb[0].mxu0
        %v2610 = vadd.f32 0.0, %v2609
        %v2611 = vpop.f32.mrb[0].mxu0
        %v2612 = vpop.f32.mrb[0].mxu0
        %v2613 = vadd.f32 0.0, %v2612
        %v2614 = vpop.f32.mrb[0].mxu0
        %2615 = vmatprep.mubr.bf16.mxu0 0
        %2616 = vmatmul.mubr.bf16.gmra.mrb[0].mxu0 %v947
        %v2617 = vpop.f32.mrb[0].mxu0
        %v2618 = vadd.f32 0.0, %v2617
        %v2619 = vpop.f32.mrb[0].mxu0
        %v2620 = vpop.f32.mrb[0].mxu0
        %v2621 = vadd.f32 0.0, %v2620
        %v2622 = vpop.f32.mrb[0].mxu0
        %2623 = vmatprep.mubr.bf16.mxu0 0
        %2624 = vmatmul.mubr.bf16.gmra.mrb[0].mxu0 %v950
        %v2625 = vpop.f32.mrb[0].mxu0
        %v2626 = vadd.f32 0.0, %v2625
        %v2627 = vpop.f32.mrb[0].mxu0
        %v2628 = vpop.f32.mrb[0].mxu0
        %v2629 = vadd.f32 0.0, %v2628
        %v2630 = vpop.f32.mrb[0].mxu0
        %2631 = vmatprep.mubr.bf16.mxu0 0
        %2632 = vmatmul.mubr.bf16.gmra.mrb[0].mxu0 %v953
        %v2633 = vpop.f32.mrb[0].mxu0
        %v2634 = vadd.f32 0.0, %v2633
        %v2635 = vpop.f32.mrb[0].mxu0
        %v2636 = vpop.f32.mrb[0].mxu0
        %v2637 = vadd.f32 0.0, %v2636
        %v2638 = vpop.f32.mrb[0].mxu0
        %2639 = vmatprep.mubr.bf16.mxu0 0
        %2640 = vmatmul.mubr.bf16.gmra.mrb[0].mxu0 %v956
        %v2641 = vpop.f32.mrb[0].mxu0
        %v2642 = vadd.f32 0.0, %v2641
        %v2643 = vpop.f32.mrb[0].mxu0
        %v2644 = vpop.f32.mrb[0].mxu0
        %v2645 = vadd.f32 0.0, %v2644
        %v2646 = vpop.f32.mrb[0].mxu0
        %2647 = vmatprep.mubr.bf16.mxu0 0
        %2648 = vmatmul.mubr.bf16.gmra.mrb[0].mxu0 %v959
        %v2649 = vpop.f32.mrb[0].mxu0
        %v2650 = vadd.f32 0.0, %v2649
        %v2651 = vpop.f32.mrb[0].mxu0
        %v2652 = vpop.f32.mrb[0].mxu0
        %v2653 = vadd.f32 0.0, %v2652
        %v2654 = vpop.f32.mrb[0].mxu0
        %2655 = vmatprep.mubr.bf16.mxu0 0
        %2656 = vmatmul.mubr.bf16.gmra.mrb[0].mxu0 %v962
        %v2657 = vpop.f32.mrb[0].mxu0
        %v2658 = vadd.f32 0.0, %v2657
        %v2659 = vpop.f32.mrb[0].mxu0
        %v2660 = vpop.f32.mrb[0].mxu0
        %v2661 = vadd.f32 0.0, %v2660
        %v2662 = vpop.f32.mrb[0].mxu0
        %2663 = vmatprep.mubr.bf16.mxu0 0
        %2664 = vmatmul.mubr.bf16.gmra.mrb[0].mxu0 %v1894
        %v2665 = vpop.f32.mrb[0].mxu0
        %v2666 = vadd.f32 0.0, %v2665
        %v2667 = vpop.f32.mrb[0].mxu0
        %v2668 = vpop.f32.mrb[0].mxu0
        %v2669 = vadd.f32 0.0, %v2668
        %v2670 = vpop.f32.mrb[0].mxu0
        %2671 = vmatprep.mubr.bf16.mxu0 0
        %2672 = vmatmul.mubr.bf16.gmra.mrb[0].mxu0 %v917
        %v2673 = vpop.f32.mrb[0].mxu0
        %v2674 = vadd.f32 0.0, %v2673
        %v2675 = vpop.f32.mrb[0].mxu0
        %v2676 = vpop.f32.mrb[0].mxu0
        %v2677 = vadd.f32 0.0, %v2676
        %v2678 = vpop.f32.mrb[0].mxu0
        %2679 = vdwg.mxu0
        %v2680 = vadd.f32 %v2475, %v2554
        %v2681 = vadd.f32 %v2476, %v2557
        %v2682 = vadd.f32 %v2477, %v2562
        %v2683 = vadd.f32 %v2478, %v2565
        %v2684 = vadd.f32 %v2479, %v2570
        %v2685 = vadd.f32 %v2480, %v2573
        %v2686 = vadd.f32 %v2481, %v2578
        %v2687 = vadd.f32 %v2482, %v2581
        %v2688 = vadd.f32 %v2483, %v2586
        %v2689 = vadd.f32 %v2484, %v2589
        %v2690 = vadd.f32 %v2485, %v2594
        %v2691 = vadd.f32 %v2486, %v2597
        %v2692 = vadd.f32 %v2487, %v2602
        %v2693 = vadd.f32 %v2488, %v2605
        %v2694 = vadd.f32 %v2489, %v2610
        %v2695 = vadd.f32 %v2490, %v2613
        %v2696 = vadd.f32 %v2491, %v2618
        %v2697 = vadd.f32 %v2492, %v2621
        %v2698 = vadd.f32 %v2493, %v2626
        %v2699 = vadd.f32 %v2494, %v2629
        %v2700 = vadd.f32 %v2495, %v2634
        %v2701 = vadd.f32 %v2496, %v2637
        %v2702 = vadd.f32 %v2497, %v2642
        %v2703 = vadd.f32 %v2498, %v2645
        %v2704 = vadd.f32 %v2499, %v2650
        %v2705 = vadd.f32 %v2500, %v2653
        %v2706 = vadd.f32 %v2501, %v2658
        %v2707 = vadd.f32 %v2502, %v2661
        %v2708 = vadd.f32 %v2503, %v2666
        %v2709 = vadd.f32 %v2504, %v2669
        %v2710 = vadd.f32 %v2505, %v2674
        %v2711 = vadd.f32 %v2506, %v2677
        %v2716 = vunpack.c.l.b16 %v513
        %v2717 = vunpack.c.l.b16 %v514
        %v2718 = vunpack.c.l.b16 %v515
        %v2719 = vunpack.c.l.b16 %v516
        %v2720 = vpack.c.b16 %v2717, %v2716
        %v2721 = vpack.c.b16 %v2719, %v2718
        %2724 = vmatprep.subr.bf16.mxu0 0
        %2725 = vmatpush1.bf16.msra.mxu0 %v2720
        %2726 = vmatprep.subr.bf16.mxu0 0
        %2727 = vmatpush1.bf16.msra.mxu0 %v2721
        %2728 = vmatprep.subr.bf16.mxu0 0
        %2729 = vmatpush1.bf16.msra.mxu0 0
        %2730 = vmatprep.subr.bf16.mxu0 0
        %2731 = vmatpush1.bf16.msra.mxu0 0
        %2732 = vmatprep.subr.bf16.mxu0 0
        %2733 = vmatpush1.bf16.msra.mxu0 0
        %2734 = vmatprep.subr.bf16.mxu0 0
        %2735 = vmatpush1.bf16.msra.mxu0 0
        %2736 = vmatprep.subr.bf16.mxu0 0
        %2737 = vmatpush1.bf16.msra.mxu0 0
        %2738 = vmatprep.subr.bf16.mxu0 0
        %2739 = vmatpush1.bf16.msra.mxu0 0
        %2740 = vmatprep.subr.bf16.mxu0 0
        %2741 = vmatpush1.bf16.msra.mxu0 0
        %2742 = vmatprep.subr.bf16.mxu0 0
        %2743 = vmatpush1.bf16.msra.mxu0 0
        %2744 = vmatprep.subr.bf16.mxu0 0
        %2745 = vmatpush1.bf16.msra.mxu0 0
        %2746 = vmatprep.subr.bf16.mxu0 0
        %2747 = vmatpush1.bf16.msra.mxu0 0
        %2748 = vmatprep.subr.bf16.mxu0 0
        %2749 = vmatpush1.bf16.msra.mxu0 0
        %2750 = vmatprep.subr.bf16.mxu0 0
        %2751 = vmatpush1.bf16.msra.mxu0 0
        %2752 = vmatprep.subr.bf16.mxu0 0
        %2753 = vmatpush1.bf16.msra.mxu0 0
        %2754 = vmatprep.subr.bf16.mxu0 0
        %2755 = vmatpush1.bf16.msra.mxu0 0
        %2756 = vmatprep.mubr.bf16.mxu0 0
        %2757 = vmatmul.mubr.bf16.gmra.mrb[0].mxu0 %v1428
        %v2758 = vpop.f32.mrb[0].mxu0
        %v2759 = vadd.f32 0.0, %v2758
        %v2760 = vpop.f32.mrb[0].mxu0
        %v2761 = vpop.f32.mrb[0].mxu0
        %v2762 = vadd.f32 0.0, %v2761
        %v2763 = vpop.f32.mrb[0].mxu0
        %2764 = vmatprep.mubr.bf16.mxu0 0
        %2765 = vmatmul.mubr.bf16.gmra.mrb[0].mxu0 %v1431
        %v2766 = vpop.f32.mrb[0].mxu0
        %v2767 = vadd.f32 0.0, %v2766
        %v2768 = vpop.f32.mrb[0].mxu0
        %v2769 = vpop.f32.mrb[0].mxu0
        %v2770 = vadd.f32 0.0, %v2769
        %v2771 = vpop.f32.mrb[0].mxu0
        %2772 = vmatprep.mubr.bf16.mxu0 0
        %2773 = vmatmul.mubr.bf16.gmra.mrb[0].mxu0 %v1434
        %v2774 = vpop.f32.mrb[0].mxu0
        %v2775 = vadd.f32 0.0, %v2774
        %v2776 = vpop.f32.mrb[0].mxu0
        %v2777 = vpop.f32.mrb[0].mxu0
        %v2778 = vadd.f32 0.0, %v2777
        %v2779 = vpop.f32.mrb[0].mxu0
        %2780 = vmatprep.mubr.bf16.mxu0 0
        %2781 = vmatmul.mubr.bf16.gmra.mrb[0].mxu0 %v1437
        %v2782 = vpop.f32.mrb[0].mxu0
        %v2783 = vadd.f32 0.0, %v2782
        %v2784 = vpop.f32.mrb[0].mxu0
        %v2785 = vpop.f32.mrb[0].mxu0
        %v2786 = vadd.f32 0.0, %v2785
        %v2787 = vpop.f32.mrb[0].mxu0
        %2788 = vmatprep.mubr.bf16.mxu0 0
        %2789 = vmatmul.mubr.bf16.gmra.mrb[0].mxu0 %v1440
        %v2790 = vpop.f32.mrb[0].mxu0
        %v2791 = vadd.f32 0.0, %v2790
        %v2792 = vpop.f32.mrb[0].mxu0
        %v2793 = vpop.f32.mrb[0].mxu0
        %v2794 = vadd.f32 0.0, %v2793
        %v2795 = vpop.f32.mrb[0].mxu0
        %2796 = vmatprep.mubr.bf16.mxu0 0
        %2797 = vmatmul.mubr.bf16.gmra.mrb[0].mxu0 %v1443
        %v2798 = vpop.f32.mrb[0].mxu0
        %v2799 = vadd.f32 0.0, %v2798
        %v2800 = vpop.f32.mrb[0].mxu0
        %v2801 = vpop.f32.mrb[0].mxu0
        %v2802 = vadd.f32 0.0, %v2801
        %v2803 = vpop.f32.mrb[0].mxu0
        %2804 = vmatprep.mubr.bf16.mxu0 0
        %2805 = vmatmul.mubr.bf16.gmra.mrb[0].mxu0 %v1446
        %v2806 = vpop.f32.mrb[0].mxu0
        %v2807 = vadd.f32 0.0, %v2806
        %v2808 = vpop.f32.mrb[0].mxu0
        %v2809 = vpop.f32.mrb[0].mxu0
        %v2810 = vadd.f32 0.0, %v2809
        %v2811 = vpop.f32.mrb[0].mxu0
        %2812 = vmatprep.mubr.bf16.mxu0 0
        %2813 = vmatmul.mubr.bf16.gmra.mrb[0].mxu0 %v1449
        %v2814 = vpop.f32.mrb[0].mxu0
        %v2815 = vadd.f32 0.0, %v2814
        %v2816 = vpop.f32.mrb[0].mxu0
        %v2817 = vpop.f32.mrb[0].mxu0
        %v2818 = vadd.f32 0.0, %v2817
        %v2819 = vpop.f32.mrb[0].mxu0
        %2820 = vmatprep.mubr.bf16.mxu0 0
        %2821 = vmatmul.mubr.bf16.gmra.mrb[0].mxu0 %v1452
        %v2822 = vpop.f32.mrb[0].mxu0
        %v2823 = vadd.f32 0.0, %v2822
        %v2824 = vpop.f32.mrb[0].mxu0
        %v2825 = vpop.f32.mrb[0].mxu0
        %v2826 = vadd.f32 0.0, %v2825
        %v2827 = vpop.f32.mrb[0].mxu0
        %2828 = vmatprep.mubr.bf16.mxu0 0
        %2829 = vmatmul.mubr.bf16.gmra.mrb[0].mxu0 %v1455
        %v2830 = vpop.f32.mrb[0].mxu0
        %v2831 = vadd.f32 0.0, %v2830
        %v2832 = vpop.f32.mrb[0].mxu0
        %v2833 = vpop.f32.mrb[0].mxu0
        %v2834 = vadd.f32 0.0, %v2833
        %v2835 = vpop.f32.mrb[0].mxu0
        %2836 = vmatprep.mubr.bf16.mxu0 0
        %2837 = vmatmul.mubr.bf16.gmra.mrb[0].mxu0 %v1458
        %v2838 = vpop.f32.mrb[0].mxu0
        %v2839 = vadd.f32 0.0, %v2838
        %v2840 = vpop.f32.mrb[0].mxu0
        %v2841 = vpop.f32.mrb[0].mxu0
        %v2842 = vadd.f32 0.0, %v2841
        %v2843 = vpop.f32.mrb[0].mxu0
        %2844 = vmatprep.mubr.bf16.mxu0 0
        %2845 = vmatmul.mubr.bf16.gmra.mrb[0].mxu0 %v1461
        %v2846 = vpop.f32.mrb[0].mxu0
        %v2847 = vadd.f32 0.0, %v2846
        %v2848 = vpop.f32.mrb[0].mxu0
        %v2849 = vpop.f32.mrb[0].mxu0
        %v2850 = vadd.f32 0.0, %v2849
        %v2851 = vpop.f32.mrb[0].mxu0
        %2852 = vmatprep.mubr.bf16.mxu0 0
        %2853 = vmatmul.mubr.bf16.gmra.mrb[0].mxu0 %v1464
        %v2854 = vpop.f32.mrb[0].mxu0
        %v2855 = vadd.f32 0.0, %v2854
        %v2856 = vpop.f32.mrb[0].mxu0
        %v2857 = vpop.f32.mrb[0].mxu0
        %v2858 = vadd.f32 0.0, %v2857
        %v2859 = vpop.f32.mrb[0].mxu0
        %2860 = vmatprep.mubr.bf16.mxu0 0
        %2861 = vmatmul.mubr.bf16.gmra.mrb[0].mxu0 %v1467
        %v2862 = vpop.f32.mrb[0].mxu0
        %v2863 = vadd.f32 0.0, %v2862
        %v2864 = vpop.f32.mrb[0].mxu0
        %v2865 = vpop.f32.mrb[0].mxu0
        %v2866 = vadd.f32 0.0, %v2865
        %v2867 = vpop.f32.mrb[0].mxu0
        %2868 = vmatprep.mubr.bf16.mxu0 0
        %2869 = vmatmul.mubr.bf16.gmra.mrb[0].mxu0 %v2107
        %v2870 = vpop.f32.mrb[0].mxu0
        %v2871 = vadd.f32 0.0, %v2870
        %v2872 = vpop.f32.mrb[0].mxu0
        %v2873 = vpop.f32.mrb[0].mxu0
        %v2874 = vadd.f32 0.0, %v2873
        %v2875 = vpop.f32.mrb[0].mxu0
        %2876 = vmatprep.mubr.bf16.mxu0 0
        %2877 = vmatmul.mubr.bf16.gmra.mrb[0].mxu0 %v1422
        %v2878 = vpop.f32.mrb[0].mxu0
        %v2879 = vadd.f32 0.0, %v2878
        %v2880 = vpop.f32.mrb[0].mxu0
        %v2881 = vpop.f32.mrb[0].mxu0
        %v2882 = vadd.f32 0.0, %v2881
        %v2883 = vpop.f32.mrb[0].mxu0
        %2884 = vdwg.mxu0
        %v2885 = vadd.f32 %v2680, %v2759
        %v2886 = vadd.f32 %v2681, %v2762
        %v2887 = vadd.f32 %v2682, %v2767
        %v2888 = vadd.f32 %v2683, %v2770
        %v2889 = vadd.f32 %v2684, %v2775
        %v2890 = vadd.f32 %v2685, %v2778
        %v2891 = vadd.f32 %v2686, %v2783
        %v2892 = vadd.f32 %v2687, %v2786
        %v2893 = vadd.f32 %v2688, %v2791
        %v2894 = vadd.f32 %v2689, %v2794
        %v2895 = vadd.f32 %v2690, %v2799
        %v2896 = vadd.f32 %v2691, %v2802
        %v2897 = vadd.f32 %v2692, %v2807
        %v2898 = vadd.f32 %v2693, %v2810
        %v2899 = vadd.f32 %v2694, %v2815
        %v2900 = vadd.f32 %v2695, %v2818
        %v2901 = vadd.f32 %v2696, %v2823
        %v2902 = vadd.f32 %v2697, %v2826
        %v2903 = vadd.f32 %v2698, %v2831
        %v2904 = vadd.f32 %v2699, %v2834
        %v2905 = vadd.f32 %v2700, %v2839
        %v2906 = vadd.f32 %v2701, %v2842
        %v2907 = vadd.f32 %v2702, %v2847
        %v2908 = vadd.f32 %v2703, %v2850
        %v2909 = vadd.f32 %v2704, %v2855
        %v2910 = vadd.f32 %v2705, %v2858
        %v2911 = vadd.f32 %v2706, %v2863
        %v2912 = vadd.f32 %v2707, %v2866
        %v2913 = vadd.f32 %v2708, %v2871
        %v2914 = vadd.f32 %v2709, %v2874
        %v2915 = vadd.f32 %v2710, %v2879
        %v2916 = vadd.f32 %v2711, %v2882
        %v2918 = vlaneseq
        %v2919 = vshrl.u32 %v2918, 7
        %v2920 = vsub.s32 0, %v2919
        %v2921 = vrot.slane %v517, %v2920
        %v2923 = vadd.f32 %v2885, %v2921
        %v2924 = vadd.f32 %v2886, %v2921
        %v2925 = vadd.f32 %v2887, %v2921
        %v2926 = vadd.f32 %v2888, %v2921
        %v2927 = vadd.f32 %v2889, %v2921
        %v2928 = vadd.f32 %v2890, %v2921
        %v2929 = vadd.f32 %v2891, %v2921
        %v2930 = vadd.f32 %v2892, %v2921
        %v2931 = vadd.f32 %v2893, %v2921
        %v2932 = vadd.f32 %v2894, %v2921
        %v2933 = vadd.f32 %v2895, %v2921
        %v2934 = vadd.f32 %v2896, %v2921
        %v2935 = vadd.f32 %v2897, %v2921
        %v2936 = vadd.f32 %v2898, %v2921
        %v2937 = vadd.f32 %v2899, %v2921
        %v2938 = vadd.f32 %v2900, %v2921
        %v2939 = vadd.f32 %v2901, %v2921
        %v2940 = vadd.f32 %v2902, %v2921
        %v2941 = vadd.f32 %v2903, %v2921
        %v2942 = vadd.f32 %v2904, %v2921
        %v2943 = vadd.f32 %v2905, %v2921
        %v2944 = vadd.f32 %v2906, %v2921
        %v2945 = vadd.f32 %v2907, %v2921
        %v2946 = vadd.f32 %v2908, %v2921
        %v2947 = vadd.f32 %v2909, %v2921
        %v2948 = vadd.f32 %v2910, %v2921
        %v2949 = vadd.f32 %v2911, %v2921
        %v2950 = vadd.f32 %v2912, %v2921
        %v2951 = vadd.f32 %v2913, %v2921
        %v2952 = vadd.f32 %v2914, %v2921
        %v2953 = vadd.f32 %v2915, %v2921
        %v2954 = vadd.f32 %v2916, %v2921
        %vm2955 = vcmask 523264
        %v2956 = vsel %vm2955, %v2923, 0.0
        %v2957 = vsel %vm2955, %v2924, 0.0
        %v2958 = vadd.f32 %v2956, %v2957
        %v2959 = vsel %vm2955, %v2925, 0.0
        %v2960 = vadd.f32 %v2958, %v2959
        %v2961 = vsel %vm2955, %v2926, 0.0
        %v2962 = vadd.f32 %v2960, %v2961
        %v2963 = vsel %vm2955, %v2927, 0.0
        %v2964 = vadd.f32 %v2962, %v2963
        %v2965 = vsel %vm2955, %v2928, 0.0
        %v2966 = vadd.f32 %v2964, %v2965
        %v2967 = vsel %vm2955, %v2929, 0.0
        %v2968 = vadd.f32 %v2966, %v2967
        %v2969 = vsel %vm2955, %v2930, 0.0
        %v2970 = vadd.f32 %v2968, %v2969
        %v2971 = vsel %vm2955, %v2931, 0.0
        %v2972 = vadd.f32 %v2970, %v2971
        %v2973 = vsel %vm2955, %v2932, 0.0
        %v2974 = vadd.f32 %v2972, %v2973
        %v2975 = vsel %vm2955, %v2933, 0.0
        %v2976 = vadd.f32 %v2974, %v2975
        %v2977 = vsel %vm2955, %v2934, 0.0
        %v2978 = vadd.f32 %v2976, %v2977
        %v2979 = vsel %vm2955, %v2935, 0.0
        %v2980 = vadd.f32 %v2978, %v2979
        %v2981 = vsel %vm2955, %v2936, 0.0
        %v2982 = vadd.f32 %v2980, %v2981
        %v2983 = vsel %vm2955, %v2937, 0.0
        %v2984 = vadd.f32 %v2982, %v2983
        %v2985 = vsel %vm2955, %v2938, 0.0
        %v2986 = vadd.f32 %v2984, %v2985
        %v2987 = vsel %vm2955, %v2939, 0.0
        %v2988 = vadd.f32 %v2986, %v2987
        %v2989 = vsel %vm2955, %v2940, 0.0
        %v2990 = vadd.f32 %v2988, %v2989
        %v2991 = vsel %vm2955, %v2941, 0.0
        %v2992 = vadd.f32 %v2990, %v2991
        %v2993 = vsel %vm2955, %v2942, 0.0
        %v2994 = vadd.f32 %v2992, %v2993
        %v2995 = vsel %vm2955, %v2943, 0.0
        %v2996 = vadd.f32 %v2994, %v2995
        %v2997 = vsel %vm2955, %v2944, 0.0
        %v2998 = vadd.f32 %v2996, %v2997
        %v2999 = vsel %vm2955, %v2945, 0.0
        %v3000 = vadd.f32 %v2998, %v2999
        %v3001 = vsel %vm2955, %v2946, 0.0
        %v3002 = vadd.f32 %v3000, %v3001
        %v3003 = vsel %vm2955, %v2947, 0.0
        %v3004 = vadd.f32 %v3002, %v3003
        %v3005 = vsel %vm2955, %v2948, 0.0
        %v3006 = vadd.f32 %v3004, %v3005
        %v3007 = vsel %vm2955, %v2949, 0.0
        %v3008 = vadd.f32 %v3006, %v3007
        %v3009 = vsel %vm2955, %v2950, 0.0
        %v3010 = vadd.f32 %v3008, %v3009
        %v3011 = vsel %vm2955, %v2951, 0.0
        %v3012 = vadd.f32 %v3010, %v3011
        %v3013 = vsel %vm2955, %v2952, 0.0
        %v3014 = vadd.f32 %v3012, %v3013
        %v3015 = vsel %vm2955, %v2953, 0.0
        %v3016 = vadd.f32 %v3014, %v3015
        %v3017 = vsel %vm2955, %v2954, 0.0
        %v3018 = vadd.f32 %v3016, %v3017
        %v3019 = vrot.slane %v3018, 4
        %v3020 = vadd.f32 %v3018, %v3019
        %v3021 = vrot.slane %v3020, 2
        %v3022 = vadd.f32 %v3020, %v3021
        %v3023 = vrot.slane %v3022, 1
        %v3024 = vadd.f32 %v3022, %v3023
        %v3025 = vrcp.pop 256.0
        %v3026 = vmul.f32 %v3024, %v3025
        %v3027 = vmul.f32 %v2923, %v2923
        %v3028 = vmul.f32 %v2924, %v2924
        %v3029 = vmul.f32 %v2925, %v2925
        %v3030 = vmul.f32 %v2926, %v2926
        %v3031 = vmul.f32 %v2927, %v2927
        %v3032 = vmul.f32 %v2928, %v2928
        %v3033 = vmul.f32 %v2929, %v2929
        %v3034 = vmul.f32 %v2930, %v2930
        %v3035 = vmul.f32 %v2931, %v2931
        %v3036 = vmul.f32 %v2932, %v2932
        %v3037 = vmul.f32 %v2933, %v2933
        %v3038 = vmul.f32 %v2934, %v2934
        %v3039 = vmul.f32 %v2935, %v2935
        %v3040 = vmul.f32 %v2936, %v2936
        %v3041 = vmul.f32 %v2937, %v2937
        %v3042 = vmul.f32 %v2938, %v2938
        %v3043 = vmul.f32 %v2939, %v2939
        %v3044 = vmul.f32 %v2940, %v2940
        %v3045 = vmul.f32 %v2941, %v2941
        %v3046 = vmul.f32 %v2942, %v2942
        %v3047 = vmul.f32 %v2943, %v2943
        %v3048 = vmul.f32 %v2944, %v2944
        %v3049 = vmul.f32 %v2945, %v2945
        %v3050 = vmul.f32 %v2946, %v2946
        %v3051 = vmul.f32 %v2947, %v2947
        %v3052 = vmul.f32 %v2948, %v2948
        %v3053 = vmul.f32 %v2949, %v2949
        %v3054 = vmul.f32 %v2950, %v2950
        %v3055 = vmul.f32 %v2951, %v2951
        %v3056 = vmul.f32 %v2952, %v2952
        %v3057 = vmul.f32 %v2953, %v2953
        %v3058 = vmul.f32 %v2954, %v2954
        %v3059 = vsel %vm2955, %v3027, 0.0
        %v3060 = vsel %vm2955, %v3028, 0.0
        %v3061 = vadd.f32 %v3059, %v3060
        %v3062 = vsel %vm2955, %v3029, 0.0
        %v3063 = vadd.f32 %v3061, %v3062
        %v3064 = vsel %vm2955, %v3030, 0.0
        %v3065 = vadd.f32 %v3063, %v3064
        %v3066 = vsel %vm2955, %v3031, 0.0
        %v3067 = vadd.f32 %v3065, %v3066
        %v3068 = vsel %vm2955, %v3032, 0.0
        %v3069 = vadd.f32 %v3067, %v3068
        %v3070 = vsel %vm2955, %v3033, 0.0
        %v3071 = vadd.f32 %v3069, %v3070
        %v3072 = vsel %vm2955, %v3034, 0.0
        %v3073 = vadd.f32 %v3071, %v3072
        %v3074 = vsel %vm2955, %v3035, 0.0
        %v3075 = vadd.f32 %v3073, %v3074
        %v3076 = vsel %vm2955, %v3036, 0.0
        %v3077 = vadd.f32 %v3075, %v3076
        %v3078 = vsel %vm2955, %v3037, 0.0
        %v3079 = vadd.f32 %v3077, %v3078
        %v3080 = vsel %vm2955, %v3038, 0.0
        %v3081 = vadd.f32 %v3079, %v3080
        %v3082 = vsel %vm2955, %v3039, 0.0
        %v3083 = vadd.f32 %v3081, %v3082
        %v3084 = vsel %vm2955, %v3040, 0.0
        %v3085 = vadd.f32 %v3083, %v3084
        %v3086 = vsel %vm2955, %v3041, 0.0
        %v3087 = vadd.f32 %v3085, %v3086
        %v3088 = vsel %vm2955, %v3042, 0.0
        %v3089 = vadd.f32 %v3087, %v3088
        %v3090 = vsel %vm2955, %v3043, 0.0
        %v3091 = vadd.f32 %v3089, %v3090
        %v3092 = vsel %vm2955, %v3044, 0.0
        %v3093 = vadd.f32 %v3091, %v3092
        %v3094 = vsel %vm2955, %v3045, 0.0
        %v3095 = vadd.f32 %v3093, %v3094
        %v3096 = vsel %vm2955, %v3046, 0.0
        %v3097 = vadd.f32 %v3095, %v3096
        %v3098 = vsel %vm2955, %v3047, 0.0
        %v3099 = vadd.f32 %v3097, %v3098
        %v3100 = vsel %vm2955, %v3048, 0.0
        %v3101 = vadd.f32 %v3099, %v3100
        %v3102 = vsel %vm2955, %v3049, 0.0
        %v3103 = vadd.f32 %v3101, %v3102
        %v3104 = vsel %vm2955, %v3050, 0.0
        %v3105 = vadd.f32 %v3103, %v3104
        %v3106 = vsel %vm2955, %v3051, 0.0
        %v3107 = vadd.f32 %v3105, %v3106
        %v3108 = vsel %vm2955, %v3052, 0.0
        %v3109 = vadd.f32 %v3107, %v3108
        %v3110 = vsel %vm2955, %v3053, 0.0
        %v3111 = vadd.f32 %v3109, %v3110
        %v3112 = vsel %vm2955, %v3054, 0.0
        %v3113 = vadd.f32 %v3111, %v3112
        %v3114 = vsel %vm2955, %v3055, 0.0
        %v3115 = vadd.f32 %v3113, %v3114
        %v3116 = vsel %vm2955, %v3056, 0.0
        %v3117 = vadd.f32 %v3115, %v3116
        %v3118 = vsel %vm2955, %v3057, 0.0
        %v3119 = vadd.f32 %v3117, %v3118
        %v3120 = vsel %vm2955, %v3058, 0.0
        %v3121 = vadd.f32 %v3119, %v3120
        %v3122 = vrot.slane %v3121, 4
        %v3123 = vadd.f32 %v3121, %v3122
        %v3124 = vrot.slane %v3123, 2
        %v3125 = vadd.f32 %v3123, %v3124
        %v3126 = vrot.slane %v3125, 1
        %v3127 = vadd.f32 %v3125, %v3126
        %v3128 = vmul.f32 %v3127, %v3025
        %v3129 = vmul.f32 %v3026, %v3026
        %v3130 = vsub.f32 %v3128, %v3129
        %v3131 = vadd.f32 %v3130, 1e-05
        %v3132 = vrsqrt.pop %v3131
        %v3133 = vmul.f32 %v518, %v3132
        %v3134 = vmul.f32 %v3026, %v3133
        %v3135 = vsub.f32 %v519, %v3134
        %v3137 = vlaneseq
        %v3138 = vshrl.u32 %v3137, 7
        %v3139 = vsub.s32 0, %v3138
        %v3140 = vrot.slane %v3133, %v3139
        %v3142 = vmul.f32 %v2923, %v3140
        %v3143 = vmul.f32 %v2924, %v3140
        %v3144 = vmul.f32 %v2925, %v3140
        %v3145 = vmul.f32 %v2926, %v3140
        %v3146 = vmul.f32 %v2927, %v3140
        %v3147 = vmul.f32 %v2928, %v3140
        %v3148 = vmul.f32 %v2929, %v3140
        %v3149 = vmul.f32 %v2930, %v3140
        %v3150 = vmul.f32 %v2931, %v3140
        %v3151 = vmul.f32 %v2932, %v3140
        %v3152 = vmul.f32 %v2933, %v3140
        %v3153 = vmul.f32 %v2934, %v3140
        %v3154 = vmul.f32 %v2935, %v3140
        %v3155 = vmul.f32 %v2936, %v3140
        %v3156 = vmul.f32 %v2937, %v3140
        %v3157 = vmul.f32 %v2938, %v3140
        %v3158 = vmul.f32 %v2939, %v3140
        %v3159 = vmul.f32 %v2940, %v3140
        %v3160 = vmul.f32 %v2941, %v3140
        %v3161 = vmul.f32 %v2942, %v3140
        %v3162 = vmul.f32 %v2943, %v3140
        %v3163 = vmul.f32 %v2944, %v3140
        %v3164 = vmul.f32 %v2945, %v3140
        %v3165 = vmul.f32 %v2946, %v3140
        %v3166 = vmul.f32 %v2947, %v3140
        %v3167 = vmul.f32 %v2948, %v3140
        %v3168 = vmul.f32 %v2949, %v3140
        %v3169 = vmul.f32 %v2950, %v3140
        %v3170 = vmul.f32 %v2951, %v3140
        %v3171 = vmul.f32 %v2952, %v3140
        %v3172 = vmul.f32 %v2953, %v3140
        %v3173 = vmul.f32 %v2954, %v3140
        %v3175 = vlaneseq
        %v3176 = vshrl.u32 %v3175, 7
        %v3177 = vsub.s32 0, %v3176
        %v3178 = vrot.slane %v3135, %v3177
        %v3180 = vadd.f32 %v3142, %v3178
        %v3181 = vadd.f32 %v3143, %v3178
        %v3182 = vadd.f32 %v3144, %v3178
        %v3183 = vadd.f32 %v3145, %v3178
        %v3184 = vadd.f32 %v3146, %v3178
        %v3185 = vadd.f32 %v3147, %v3178
        %v3186 = vadd.f32 %v3148, %v3178
        %v3187 = vadd.f32 %v3149, %v3178
        %v3188 = vadd.f32 %v3150, %v3178
        %v3189 = vadd.f32 %v3151, %v3178
        %v3190 = vadd.f32 %v3152, %v3178
        %v3191 = vadd.f32 %v3153, %v3178
        %v3192 = vadd.f32 %v3154, %v3178
        %v3193 = vadd.f32 %v3155, %v3178
        %v3194 = vadd.f32 %v3156, %v3178
        %v3195 = vadd.f32 %v3157, %v3178
        %v3196 = vadd.f32 %v3158, %v3178
        %v3197 = vadd.f32 %v3159, %v3178
        %v3198 = vadd.f32 %v3160, %v3178
        %v3199 = vadd.f32 %v3161, %v3178
        %v3200 = vadd.f32 %v3162, %v3178
        %v3201 = vadd.f32 %v3163, %v3178
        %v3202 = vadd.f32 %v3164, %v3178
        %v3203 = vadd.f32 %v3165, %v3178
        %v3204 = vadd.f32 %v3166, %v3178
        %v3205 = vadd.f32 %v3167, %v3178
        %v3206 = vadd.f32 %v3168, %v3178
        %v3207 = vadd.f32 %v3169, %v3178
        %v3208 = vadd.f32 %v3170, %v3178
        %v3209 = vadd.f32 %v3171, %v3178
        %v3210 = vadd.f32 %v3172, %v3178
        %v3211 = vadd.f32 %v3173, %v3178
        %v3212 = vmax.f32 %v3180, 0.0
        %v3213 = vmax.f32 %v3181, 0.0
        %v3214 = vmax.f32 %v3182, 0.0
        %v3215 = vmax.f32 %v3183, 0.0
        %v3216 = vmax.f32 %v3184, 0.0
        %v3217 = vmax.f32 %v3185, 0.0
        %v3218 = vmax.f32 %v3186, 0.0
        %v3219 = vmax.f32 %v3187, 0.0
        %v3220 = vmax.f32 %v3188, 0.0
        %v3221 = vmax.f32 %v3189, 0.0
        %v3222 = vmax.f32 %v3190, 0.0
        %v3223 = vmax.f32 %v3191, 0.0
        %v3224 = vmax.f32 %v3192, 0.0
        %v3225 = vmax.f32 %v3193, 0.0
        %v3226 = vmax.f32 %v3194, 0.0
        %v3227 = vmax.f32 %v3195, 0.0
        %v3228 = vmax.f32 %v3196, 0.0
        %v3229 = vmax.f32 %v3197, 0.0
        %v3230 = vmax.f32 %v3198, 0.0
        %v3231 = vmax.f32 %v3199, 0.0
        %v3232 = vmax.f32 %v3200, 0.0
        %v3233 = vmax.f32 %v3201, 0.0
        %v3234 = vmax.f32 %v3202, 0.0
        %v3235 = vmax.f32 %v3203, 0.0
        %v3236 = vmax.f32 %v3204, 0.0
        %v3237 = vmax.f32 %v3205, 0.0
        %v3238 = vmax.f32 %v3206, 0.0
        %v3239 = vmax.f32 %v3207, 0.0
        %v3240 = vmax.f32 %v3208, 0.0
        %v3241 = vmax.f32 %v3209, 0.0
        %v3242 = vmax.f32 %v3210, 0.0
        %v3243 = vmax.f32 %v3211, 0.0
        %s3244 = scalar_lea.vmem [#allocation6], 144
        %v3245 = vld [vmem:[%s3244] sm:$0xf]
        %v3246 = vld [vmem:[%s3244 + $0x4] sm:$0xf]
        %v3247 = vld [vmem:[%s3244 + $0x8] sm:$0xf]
        %v3248 = vld [vmem:[%s3244 + $0xc] sm:$0xf]
        %v3249 = vld [vmem:[%s3244 + $0x10] sm:$0xf]
        %v3250 = vld [vmem:[%s3244 + $0x14] sm:$0xf]
        %v3251 = vld [vmem:[%s3244 + $0x18] sm:$0xf]
        %v3252 = vld [vmem:[%s3244 + $0x1c] sm:$0xf]
        %v3253 = vld [vmem:[%s3244 + $0x20] sm:$0xf]
        %v3254 = vld [vmem:[%s3244 + $0x24] sm:$0xf]
        %v3255 = vld [vmem:[%s3244 + $0x28] sm:$0xf]
        %v3256 = vld [vmem:[%s3244 + $0x2c] sm:$0xf]
        %v3257 = vld [vmem:[%s3244 + $0x30] sm:$0xf]
        %v3258 = vld [vmem:[%s3244 + $0x34] sm:$0xf]
        %v3259 = vld [vmem:[%s3244 + $0x38] sm:$0xf]
        %v3260 = vld [vmem:[%s3244 + $0x3c] sm:$0xf]
        %v3261 = vld [vmem:[%s3244 + $0x40] sm:$0xf]
        %v3262 = vld [vmem:[%s3244 + $0x44] sm:$0xf]
        %v3263 = vld [vmem:[%s3244 + $0x48] sm:$0xf]
        %v3264 = vld [vmem:[%s3244 + $0x4c] sm:$0xf]
        %v3265 = vld [vmem:[%s3244 + $0x50] sm:$0xf]
        %v3266 = vld [vmem:[%s3244 + $0x54] sm:$0xf]
        %v3267 = vld [vmem:[%s3244 + $0x58] sm:$0xf]
        %v3268 = vld [vmem:[%s3244 + $0x5c] sm:$0xf]
        %v3269 = vld [vmem:[%s3244 + $0x60] sm:$0xf]
        %v3270 = vld [vmem:[%s3244 + $0x64] sm:$0xf]
        %v3271 = vld [vmem:[%s3244 + $0x68] sm:$0xf]
        %v3272 = vld [vmem:[%s3244 + $0x6c] sm:$0xf]
        %v3273 = vld [vmem:[%s3244 + $0x70] sm:$0xf]
        %v3274 = vld [vmem:[%s3244 + $0x74] sm:$0xf]
        %v3275 = vld [vmem:[%s3244 + $0x78] sm:$0xf]
        %v3276 = vld [vmem:[%s3244 + $0x7c] sm:$0xf]
        %v3277 = vld [vmem:[%s3244 + $0x80] sm:$0xf]
        %v3278 = vld [vmem:[%s3244 + $0x84] sm:$0xf]
        %v3279 = vld [vmem:[%s3244 + $0x88] sm:$0xf]
        %v3280 = vld [vmem:[%s3244 + $0x8c] sm:$0xf]
        %s3281 = scalar_lea.vmem %s3, 1
        %v3282 = vld [vmem:[%s3281] sm:$0x1]
        %s3283 = scalar_lea.vmem %s4, 1
        %v3284 = vld [vmem:[%s3283] sm:$0x1]
        %s3285 = scalar_lea.vmem %s5, 1
        %v3286 = vld [vmem:[%s3285] sm:$0x1]
        %v3319 = vrot.slane %v3212, 7
        %v3320 = vrot.slane %v3213, 7
        %v3321 = vsel %vm552, %v3319, %v3320
        %v3322 = vrot.slane %v3214, 7
        %v3323 = vrot.slane %v3215, 7
        %v3324 = vsel %vm552, %v3322, %v3323
        %v3325 = vrot.slane %v3216, 7
        %v3326 = vrot.slane %v3217, 7
        %v3327 = vsel %vm552, %v3325, %v3326
        %v3328 = vrot.slane %v3218, 7
        %v3329 = vrot.slane %v3219, 7
        %v3330 = vsel %vm552, %v3328, %v3329
        %v3331 = vrot.slane %v3220, 7
        %v3332 = vrot.slane %v3221, 7
        %v3333 = vsel %vm552, %v3331, %v3332
        %v3334 = vrot.slane %v3222, 7
        %v3335 = vrot.slane %v3223, 7
        %v3336 = vsel %vm552, %v3334, %v3335
        %v3337 = vrot.slane %v3224, 7
        %v3338 = vrot.slane %v3225, 7
        %v3339 = vsel %vm552, %v3337, %v3338
        %v3340 = vrot.slane %v3226, 7
        %v3341 = vrot.slane %v3227, 7
        %v3342 = vsel %vm552, %v3340, %v3341
        %v3343 = vrot.slane %v3228, 7
        %v3344 = vrot.slane %v3229, 7
        %v3345 = vsel %vm552, %v3343, %v3344
        %v3346 = vrot.slane %v3230, 7
        %v3347 = vrot.slane %v3231, 7
        %v3348 = vsel %vm552, %v3346, %v3347
        %v3349 = vrot.slane %v3232, 7
        %v3350 = vrot.slane %v3233, 7
        %v3351 = vsel %vm552, %v3349, %v3350
        %v3352 = vrot.slane %v3234, 7
        %v3353 = vrot.slane %v3235, 7
        %v3354 = vsel %vm552, %v3352, %v3353
        %v3355 = vrot.slane %v3236, 7
        %v3356 = vrot.slane %v3237, 7
        %v3357 = vsel %vm552, %v3355, %v3356
        %v3358 = vrot.slane %v3238, 7
        %v3359 = vrot.slane %v3239, 7
        %v3360 = vsel %vm552, %v3358, %v3359
        %v3361 = vrot.slane %v3240, 7
        %v3362 = vrot.slane %v3241, 7
        %v3363 = vsel %vm552, %v3361, %v3362
        %v3364 = vrot.slane %v3242, 7
        %v3365 = vrot.slane %v3243, 7
        %v3366 = vsel %vm552, %v3364, %v3365
        %v3415 = vsel %vm552, 0.0, %v3319
        %v3416 = vsel %vm552, 0.0, %v3322
        %v3417 = vsel %vm552, 0.0, %v3325
        %v3418 = vsel %vm552, 0.0, %v3328
        %v3419 = vsel %vm552, 0.0, %v3331
        %v3420 = vsel %vm552, 0.0, %v3334
        %v3421 = vsel %vm552, 0.0, %v3337
        %v3422 = vsel %vm552, 0.0, %v3340
        %v3423 = vsel %vm552, 0.0, %v3343
        %v3424 = vsel %vm552, 0.0, %v3346
        %v3425 = vsel %vm552, 0.0, %v3349
        %v3426 = vsel %vm552, 0.0, %v3352
        %v3427 = vsel %vm552, 0.0, %v3355
        %v3428 = vsel %vm552, 0.0, %v3358
        %v3429 = vsel %vm552, 0.0, %v3361
        %v3430 = vsel %vm552, 0.0, %v3364
        %v3431 = vsel %vm552, %v3320, 0.0
        %v3432 = vsel %vm552, %v3323, 0.0
        %v3433 = vsel %vm552, %v3326, 0.0
        %v3434 = vsel %vm552, %v3329, 0.0
        %v3435 = vsel %vm552, %v3332, 0.0
        %v3436 = vsel %vm552, %v3335, 0.0
        %v3437 = vsel %vm552, %v3338, 0.0
        %v3438 = vsel %vm552, %v3341, 0.0
        %v3439 = vsel %vm552, %v3344, 0.0
        %v3440 = vsel %vm552, %v3347, 0.0
        %v3441 = vsel %vm552, %v3350, 0.0
        %v3442 = vsel %vm552, %v3353, 0.0
        %v3443 = vsel %vm552, %v3356, 0.0
        %v3444 = vsel %vm552, %v3359, 0.0
        %v3445 = vsel %vm552, %v3362, 0.0
        %v3446 = vsel %vm552, %v3365, 0.0
        %v3447 = vpack.c.bf16 %v3321, %v3415
        %v3448 = vpack.c.bf16 %v3431, %v3431
        %v3449 = vpack.c.bf16 %v3324, %v3416
        %v3450 = vpack.c.bf16 %v3432, %v3432
        %v3451 = vpack.c.bf16 %v3327, %v3417
        %v3452 = vpack.c.bf16 %v3433, %v3433
        %v3453 = vpack.c.bf16 %v3330, %v3418
        %v3454 = vpack.c.bf16 %v3434, %v3434
        %v3455 = vpack.c.bf16 %v3333, %v3419
        %v3456 = vpack.c.bf16 %v3435, %v3435
        %v3457 = vpack.c.bf16 %v3336, %v3420
        %v3458 = vpack.c.bf16 %v3436, %v3436
        %v3459 = vpack.c.bf16 %v3339, %v3421
        %v3460 = vpack.c.bf16 %v3437, %v3437
        %v3461 = vpack.c.bf16 %v3342, %v3422
        %v3462 = vpack.c.bf16 %v3438, %v3438
        %v3463 = vpack.c.bf16 %v3345, %v3423
        %v3464 = vpack.c.bf16 %v3439, %v3439
        %v3465 = vpack.c.bf16 %v3348, %v3424
        %v3466 = vpack.c.bf16 %v3440, %v3440
        %v3467 = vpack.c.bf16 %v3351, %v3425
        %v3468 = vpack.c.bf16 %v3441, %v3441
        %v3469 = vpack.c.bf16 %v3354, %v3426
        %v3470 = vpack.c.bf16 %v3442, %v3442
        %v3471 = vpack.c.bf16 %v3357, %v3427
        %v3472 = vpack.c.bf16 %v3443, %v3443
        %v3473 = vpack.c.bf16 %v3360, %v3428
        %v3474 = vpack.c.bf16 %v3444, %v3444
        %v3475 = vpack.c.bf16 %v3363, %v3429
        %v3476 = vpack.c.bf16 %v3445, %v3445
        %v3477 = vpack.c.bf16 %v3366, %v3430
        %v3478 = vpack.c.bf16 %v3446, %v3446
        %v3480 = vshrl.u32 %v3447, 16
        %v3482 = vshll.u32 %v3447, 16
        %v3484 = vrot.slane %v3482, 1
        %v3485 = vor.u32 %v3480, %v3484
        %v3487 = vshll.u32 %v3448, 16
        %v3489 = vrot.slane %v3487, 1
        %v3490 = vsel %vm714, %v3485, %v3489
        %v3492 = vshrl.u32 %v3449, 16
        %v3494 = vshll.u32 %v3449, 16
        %v3496 = vrot.slane %v3494, 1
        %v3497 = vor.u32 %v3492, %v3496
        %v3499 = vshll.u32 %v3450, 16
        %v3501 = vrot.slane %v3499, 1
        %v3502 = vsel %vm714, %v3497, %v3501
        %v3504 = vshrl.u32 %v3451, 16
        %v3506 = vshll.u32 %v3451, 16
        %v3508 = vrot.slane %v3506, 1
        %v3509 = vor.u32 %v3504, %v3508
        %v3511 = vshll.u32 %v3452, 16
        %v3513 = vrot.slane %v3511, 1
        %v3514 = vsel %vm714, %v3509, %v3513
        %v3516 = vshrl.u32 %v3453, 16
        %v3518 = vshll.u32 %v3453, 16
        %v3520 = vrot.slane %v3518, 1
        %v3521 = vor.u32 %v3516, %v3520
        %v3523 = vshll.u32 %v3454, 16
        %v3525 = vrot.slane %v3523, 1
        %v3526 = vsel %vm714, %v3521, %v3525
        %v3528 = vshrl.u32 %v3455, 16
        %v3530 = vshll.u32 %v3455, 16
        %v3532 = vrot.slane %v3530, 1
        %v3533 = vor.u32 %v3528, %v3532
        %v3535 = vshll.u32 %v3456, 16
        %v3537 = vrot.slane %v3535, 1
        %v3538 = vsel %vm714, %v3533, %v3537
        %v3540 = vshrl.u32 %v3457, 16
        %v3542 = vshll.u32 %v3457, 16
        %v3544 = vrot.slane %v3542, 1
        %v3545 = vor.u32 %v3540, %v3544
        %v3547 = vshll.u32 %v3458, 16
        %v3549 = vrot.slane %v3547, 1
        %v3550 = vsel %vm714, %v3545, %v3549
        %v3552 = vshrl.u32 %v3459, 16
        %v3554 = vshll.u32 %v3459, 16
        %v3556 = vrot.slane %v3554, 1
        %v3557 = vor.u32 %v3552, %v3556
        %v3559 = vshll.u32 %v3460, 16
        %v3561 = vrot.slane %v3559, 1
        %v3562 = vsel %vm714, %v3557, %v3561
        %v3564 = vshrl.u32 %v3461, 16
        %v3566 = vshll.u32 %v3461, 16
        %v3568 = vrot.slane %v3566, 1
        %v3569 = vor.u32 %v3564, %v3568
        %v3571 = vshll.u32 %v3462, 16
        %v3573 = vrot.slane %v3571, 1
        %v3574 = vsel %vm714, %v3569, %v3573
        %v3576 = vshrl.u32 %v3463, 16
        %v3578 = vshll.u32 %v3463, 16
        %v3580 = vrot.slane %v3578, 1
        %v3581 = vor.u32 %v3576, %v3580
        %v3583 = vshll.u32 %v3464, 16
        %v3585 = vrot.slane %v3583, 1
        %v3586 = vsel %vm714, %v3581, %v3585
        %v3588 = vshrl.u32 %v3465, 16
        %v3590 = vshll.u32 %v3465, 16
        %v3592 = vrot.slane %v3590, 1
        %v3593 = vor.u32 %v3588, %v3592
        %v3595 = vshll.u32 %v3466, 16
        %v3597 = vrot.slane %v3595, 1
        %v3598 = vsel %vm714, %v3593, %v3597
        %v3600 = vshrl.u32 %v3467, 16
        %v3602 = vshll.u32 %v3467, 16
        %v3604 = vrot.slane %v3602, 1
        %v3605 = vor.u32 %v3600, %v3604
        %v3607 = vshll.u32 %v3468, 16
        %v3609 = vrot.slane %v3607, 1
        %v3610 = vsel %vm714, %v3605, %v3609
        %v3612 = vshrl.u32 %v3469, 16
        %v3614 = vshll.u32 %v3469, 16
        %v3616 = vrot.slane %v3614, 1
        %v3617 = vor.u32 %v3612, %v3616
        %v3619 = vshll.u32 %v3470, 16
        %v3621 = vrot.slane %v3619, 1
        %v3622 = vsel %vm714, %v3617, %v3621
        %v3624 = vshrl.u32 %v3471, 16
        %v3626 = vshll.u32 %v3471, 16
        %v3628 = vrot.slane %v3626, 1
        %v3629 = vor.u32 %v3624, %v3628
        %v3631 = vshll.u32 %v3472, 16
        %v3633 = vrot.slane %v3631, 1
        %v3634 = vsel %vm714, %v3629, %v3633
        %v3636 = vshrl.u32 %v3473, 16
        %v3638 = vshll.u32 %v3473, 16
        %v3640 = vrot.slane %v3638, 1
        %v3641 = vor.u32 %v3636, %v3640
        %v3643 = vshll.u32 %v3474, 16
        %v3645 = vrot.slane %v3643, 1
        %v3646 = vsel %vm714, %v3641, %v3645
        %v3648 = vshrl.u32 %v3475, 16
        %v3650 = vshll.u32 %v3475, 16
        %v3652 = vrot.slane %v3650, 1
        %v3653 = vor.u32 %v3648, %v3652
        %v3655 = vshll.u32 %v3476, 16
        %v3657 = vrot.slane %v3655, 1
        %v3658 = vsel %vm714, %v3653, %v3657
        %v3663 = vunpack.c.l.b16 %v3249
        %v3664 = vunpack.c.l.b16 %v3250
        %v3665 = vunpack.c.l.b16 %v3251
        %v3666 = vunpack.c.l.b16 %v3252
        %v3667 = vpack.c.b16 %v3664, %v3663
        %v3668 = vpack.c.b16 %v3666, %v3665
        %v3672 = vsel %vm915, %v3490, 0
        %v3675 = vsel %vm915, %v3502, 0
        %v3678 = vsel %vm915, %v3514, 0
        %v3681 = vsel %vm915, %v3526, 0
        %v3684 = vsel %vm915, %v3538, 0
        %v3687 = vsel %vm915, %v3550, 0
        %v3690 = vsel %vm915, %v3562, 0
        %v3693 = vsel %vm915, %v3574, 0
        %v3696 = vsel %vm915, %v3586, 0
        %v3699 = vsel %vm915, %v3598, 0
        %v3702 = vsel %vm915, %v3610, 0
        %v3705 = vsel %vm915, %v3622, 0
        %v3708 = vsel %vm915, %v3634, 0
        %v3711 = vsel %vm915, %v3646, 0
        %v3714 = vsel %vm915, %v3658, 0
        %3716 = vmatprep.subr.bf16.mxu0 0
        %3717 = vmatpush1.bf16.msra.mxu0 %v3667
        %3718 = vmatprep.subr.bf16.mxu0 0
        %3719 = vmatpush1.bf16.msra.mxu0 %v3668
        %3720 = vmatprep.subr.bf16.mxu0 0
        %3721 = vmatpush1.bf16.msra.mxu0 0
        %3722 = vmatprep.subr.bf16.mxu0 0
        %3723 = vmatpush1.bf16.msra.mxu0 0
        %3724 = vmatprep.subr.bf16.mxu0 0
        %3725 = vmatpush1.bf16.msra.mxu0 0
        %3726 = vmatprep.subr.bf16.mxu0 0
        %3727 = vmatpush1.bf16.msra.mxu0 0
        %3728 = vmatprep.subr.bf16.mxu0 0
        %3729 = vmatpush1.bf16.msra.mxu0 0
        %3730 = vmatprep.subr.bf16.mxu0 0
        %3731 = vmatpush1.bf16.msra.mxu0 0
        %3732 = vmatprep.subr.bf16.mxu0 0
        %3733 = vmatpush1.bf16.msra.mxu0 0
        %3734 = vmatprep.subr.bf16.mxu0 0
        %3735 = vmatpush1.bf16.msra.mxu0 0
        %3736 = vmatprep.subr.bf16.mxu0 0
        %3737 = vmatpush1.bf16.msra.mxu0 0
        %3738 = vmatprep.subr.bf16.mxu0 0
        %3739 = vmatpush1.bf16.msra.mxu0 0
        %3740 = vmatprep.subr.bf16.mxu0 0
        %3741 = vmatpush1.bf16.msra.mxu0 0
        %3742 = vmatprep.subr.bf16.mxu0 0
        %3743 = vmatpush1.bf16.msra.mxu0 0
        %3744 = vmatprep.subr.bf16.mxu0 0
        %3745 = vmatpush1.bf16.msra.mxu0 0
        %3746 = vmatprep.subr.bf16.mxu0 0
        %3747 = vmatpush1.bf16.msra.mxu0 0
        %3748 = vmatprep.mubr.bf16.mxu0 0
        %3749 = vmatmul.mubr.bf16.gmra.mrb[0].mxu0 %v917
        %v3750 = vpop.f32.mrb[0].mxu0
        %v3751 = vadd.f32 0.0, %v3750
        %v3752 = vpop.f32.mrb[0].mxu0
        %v3753 = vpop.f32.mrb[0].mxu0
        %v3754 = vadd.f32 0.0, %v3753
        %v3755 = vpop.f32.mrb[0].mxu0
        %3756 = vmatprep.mubr.bf16.mxu0 0
        %3757 = vmatmul.mubr.bf16.gmra.mrb[0].mxu0 %v3672
        %v3758 = vpop.f32.mrb[0].mxu0
        %v3759 = vadd.f32 0.0, %v3758
        %v3760 = vpop.f32.mrb[0].mxu0
        %v3761 = vpop.f32.mrb[0].mxu0
        %v3762 = vadd.f32 0.0, %v3761
        %v3763 = vpop.f32.mrb[0].mxu0
        %3764 = vmatprep.mubr.bf16.mxu0 0
        %3765 = vmatmul.mubr.bf16.gmra.mrb[0].mxu0 %v3675
        %v3766 = vpop.f32.mrb[0].mxu0
        %v3767 = vadd.f32 0.0, %v3766
        %v3768 = vpop.f32.mrb[0].mxu0
        %v3769 = vpop.f32.mrb[0].mxu0
        %v3770 = vadd.f32 0.0, %v3769
        %v3771 = vpop.f32.mrb[0].mxu0
        %3772 = vmatprep.mubr.bf16.mxu0 0
        %3773 = vmatmul.mubr.bf16.gmra.mrb[0].mxu0 %v3678
        %v3774 = vpop.f32.mrb[0].mxu0
        %v3775 = vadd.f32 0.0, %v3774
        %v3776 = vpop.f32.mrb[0].mxu0
        %v3777 = vpop.f32.mrb[0].mxu0
        %v3778 = vadd.f32 0.0, %v3777
        %v3779 = vpop.f32.mrb[0].mxu0
        %3780 = vmatprep.mubr.bf16.mxu0 0
        %3781 = vmatmul.mubr.bf16.gmra.mrb[0].mxu0 %v3681
        %v3782 = vpop.f32.mrb[0].mxu0
        %v3783 = vadd.f32 0.0, %v3782
        %v3784 = vpop.f32.mrb[0].mxu0
        %v3785 = vpop.f32.mrb[0].mxu0
        %v3786 = vadd.f32 0.0, %v3785
        %v3787 = vpop.f32.mrb[0].mxu0
        %3788 = vmatprep.mubr.bf16.mxu0 0
        %3789 = vmatmul.mubr.bf16.gmra.mrb[0].mxu0 %v3684
        %v3790 = vpop.f32.mrb[0].mxu0
        %v3791 = vadd.f32 0.0, %v3790
        %v3792 = vpop.f32.mrb[0].mxu0
        %v3793 = vpop.f32.mrb[0].mxu0
        %v3794 = vadd.f32 0.0, %v3793
        %v3795 = vpop.f32.mrb[0].mxu0
        %3796 = vmatprep.mubr.bf16.mxu0 0
        %3797 = vmatmul.mubr.bf16.gmra.mrb[0].mxu0 %v3687
        %v3798 = vpop.f32.mrb[0].mxu0
        %v3799 = vadd.f32 0.0, %v3798
        %v3800 = vpop.f32.mrb[0].mxu0
        %v3801 = vpop.f32.mrb[0].mxu0
        %v3802 = vadd.f32 0.0, %v3801
        %v3803 = vpop.f32.mrb[0].mxu0
        %3804 = vmatprep.mubr.bf16.mxu0 0
        %3805 = vmatmul.mubr.bf16.gmra.mrb[0].mxu0 %v3690
        %v3806 = vpop.f32.mrb[0].mxu0
        %v3807 = vadd.f32 0.0, %v3806
        %v3808 = vpop.f32.mrb[0].mxu0
        %v3809 = vpop.f32.mrb[0].mxu0
        %v3810 = vadd.f32 0.0, %v3809
        %v3811 = vpop.f32.mrb[0].mxu0
        %3812 = vmatprep.mubr.bf16.mxu0 0
        %3813 = vmatmul.mubr.bf16.gmra.mrb[0].mxu0 %v3693
        %v3814 = vpop.f32.mrb[0].mxu0
        %v3815 = vadd.f32 0.0, %v3814
        %v3816 = vpop.f32.mrb[0].mxu0
        %v3817 = vpop.f32.mrb[0].mxu0
        %v3818 = vadd.f32 0.0, %v3817
        %v3819 = vpop.f32.mrb[0].mxu0
        %3820 = vmatprep.mubr.bf16.mxu0 0
        %3821 = vmatmul.mubr.bf16.gmra.mrb[0].mxu0 %v3696
        %v3822 = vpop.f32.mrb[0].mxu0
        %v3823 = vadd.f32 0.0, %v3822
        %v3824 = vpop.f32.mrb[0].mxu0
        %v3825 = vpop.f32.mrb[0].mxu0
        %v3826 = vadd.f32 0.0, %v3825
        %v3827 = vpop.f32.mrb[0].mxu0
        %3828 = vmatprep.mubr.bf16.mxu0 0
        %3829 = vmatmul.mubr.bf16.gmra.mrb[0].mxu0 %v3699
        %v3830 = vpop.f32.mrb[0].mxu0
        %v3831 = vadd.f32 0.0, %v3830
        %v3832 = vpop.f32.mrb[0].mxu0
        %v3833 = vpop.f32.mrb[0].mxu0
        %v3834 = vadd.f32 0.0, %v3833
        %v3835 = vpop.f32.mrb[0].mxu0
        %3836 = vmatprep.mubr.bf16.mxu0 0
        %3837 = vmatmul.mubr.bf16.gmra.mrb[0].mxu0 %v3702
        %v3838 = vpop.f32.mrb[0].mxu0
        %v3839 = vadd.f32 0.0, %v3838
        %v3840 = vpop.f32.mrb[0].mxu0
        %v3841 = vpop.f32.mrb[0].mxu0
        %v3842 = vadd.f32 0.0, %v3841
        %v3843 = vpop.f32.mrb[0].mxu0
        %3844 = vmatprep.mubr.bf16.mxu0 0
        %3845 = vmatmul.mubr.bf16.gmra.mrb[0].mxu0 %v3705
        %v3846 = vpop.f32.mrb[0].mxu0
        %v3847 = vadd.f32 0.0, %v3846
        %v3848 = vpop.f32.mrb[0].mxu0
        %v3849 = vpop.f32.mrb[0].mxu0
        %v3850 = vadd.f32 0.0, %v3849
        %v3851 = vpop.f32.mrb[0].mxu0
        %3852 = vmatprep.mubr.bf16.mxu0 0
        %3853 = vmatmul.mubr.bf16.gmra.mrb[0].mxu0 %v3708
        %v3854 = vpop.f32.mrb[0].mxu0
        %v3855 = vadd.f32 0.0, %v3854
        %v3856 = vpop.f32.mrb[0].mxu0
        %v3857 = vpop.f32.mrb[0].mxu0
        %v3858 = vadd.f32 0.0, %v3857
        %v3859 = vpop.f32.mrb[0].mxu0
        %3860 = vmatprep.mubr.bf16.mxu0 0
        %3861 = vmatmul.mubr.bf16.gmra.mrb[0].mxu0 %v3711
        %v3862 = vpop.f32.mrb[0].mxu0
        %v3863 = vadd.f32 0.0, %v3862
        %v3864 = vpop.f32.mrb[0].mxu0
        %v3865 = vpop.f32.mrb[0].mxu0
        %v3866 = vadd.f32 0.0, %v3865
        %v3867 = vpop.f32.mrb[0].mxu0
        %3868 = vmatprep.mubr.bf16.mxu0 0
        %3869 = vmatmul.mubr.bf16.gmra.mrb[0].mxu0 %v3714
        %v3870 = vpop.f32.mrb[0].mxu0
        %v3871 = vadd.f32 0.0, %v3870
        %v3872 = vpop.f32.mrb[0].mxu0
        %v3873 = vpop.f32.mrb[0].mxu0
        %v3874 = vadd.f32 0.0, %v3873
        %v3875 = vpop.f32.mrb[0].mxu0
        %3876 = vdwg.mxu0
        %v3881 = vunpack.c.l.b16 %v3245
        %v3882 = vunpack.c.l.b16 %v3246
        %v3883 = vunpack.c.l.b16 %v3247
        %v3884 = vunpack.c.l.b16 %v3248
        %v3885 = vpack.c.b16 %v3882, %v3881
        %v3886 = vpack.c.b16 %v3884, %v3883
        %v3889 = vsel %vm915, %v3447, 0
        %v3891 = vsel %vm915, %v3449, 0
        %v3893 = vsel %vm915, %v3451, 0
        %v3895 = vsel %vm915, %v3453, 0
        %v3897 = vsel %vm915, %v3455, 0
        %v3899 = vsel %vm915, %v3457, 0
        %v3901 = vsel %vm915, %v3459, 0
        %v3903 = vsel %vm915, %v3461, 0
        %v3905 = vsel %vm915, %v3463, 0
        %v3907 = vsel %vm915, %v3465, 0
        %v3909 = vsel %vm915, %v3467, 0
        %v3911 = vsel %vm915, %v3469, 0
        %v3913 = vsel %vm915, %v3471, 0
        %v3915 = vsel %vm915, %v3473, 0
        %v3917 = vsel %vm915, %v3475, 0
        %3919 = vmatprep.subr.bf16.mxu0 0
        %3920 = vmatpush1.bf16.msra.mxu0 %v3885
        %3921 = vmatprep.subr.bf16.mxu0 0
        %3922 = vmatpush1.bf16.msra.mxu0 %v3886
        %3923 = vmatprep.subr.bf16.mxu0 0
        %3924 = vmatpush1.bf16.msra.mxu0 0
        %3925 = vmatprep.subr.bf16.mxu0 0
        %3926 = vmatpush1.bf16.msra.mxu0 0
        %3927 = vmatprep.subr.bf16.mxu0 0
        %3928 = vmatpush1.bf16.msra.mxu0 0
        %3929 = vmatprep.subr.bf16.mxu0 0
        %3930 = vmatpush1.bf16.msra.mxu0 0
        %3931 = vmatprep.subr.bf16.mxu0 0
        %3932 = vmatpush1.bf16.msra.mxu0 0
        %3933 = vmatprep.subr.bf16.mxu0 0
        %3934 = vmatpush1.bf16.msra.mxu0 0
        %3935 = vmatprep.subr.bf16.mxu0 0
        %3936 = vmatpush1.bf16.msra.mxu0 0
        %3937 = vmatprep.subr.bf16.mxu0 0
        %3938 = vmatpush1.bf16.msra.mxu0 0
        %3939 = vmatprep.subr.bf16.mxu0 0
        %3940 = vmatpush1.bf16.msra.mxu0 0
        %3941 = vmatprep.subr.bf16.mxu0 0
        %3942 = vmatpush1.bf16.msra.mxu0 0
        %3943 = vmatprep.subr.bf16.mxu0 0
        %3944 = vmatpush1.bf16.msra.mxu0 0
        %3945 = vmatprep.subr.bf16.mxu0 0
        %3946 = vmatpush1.bf16.msra.mxu0 0
        %3947 = vmatprep.subr.bf16.mxu0 0
        %3948 = vmatpush1.bf16.msra.mxu0 0
        %3949 = vmatprep.subr.bf16.mxu0 0
        %3950 = vmatpush1.bf16.msra.mxu0 0
        %3951 = vmatprep.mubr.bf16.mxu0 0
        %3952 = vmatmul.mubr.bf16.gmra.mrb[0].mxu0 %v1137
        %v3953 = vpop.f32.mrb[0].mxu0
        %v3954 = vadd.f32 %v3751, %v3953
        %v3955 = vpop.f32.mrb[0].mxu0
        %v3956 = vpop.f32.mrb[0].mxu0
        %v3957 = vadd.f32 %v3754, %v3956
        %v3958 = vpop.f32.mrb[0].mxu0
        %3959 = vmatprep.mubr.bf16.mxu0 0
        %3960 = vmatmul.mubr.bf16.gmra.mrb[0].mxu0 %v3889
        %v3961 = vpop.f32.mrb[0].mxu0
        %v3962 = vadd.f32 %v3759, %v3961
        %v3963 = vpop.f32.mrb[0].mxu0
        %v3964 = vpop.f32.mrb[0].mxu0
        %v3965 = vadd.f32 %v3762, %v3964
        %v3966 = vpop.f32.mrb[0].mxu0
        %3967 = vmatprep.mubr.bf16.mxu0 0
        %3968 = vmatmul.mubr.bf16.gmra.mrb[0].mxu0 %v3891
        %v3969 = vpop.f32.mrb[0].mxu0
        %v3970 = vadd.f32 %v3767, %v3969
        %v3971 = vpop.f32.mrb[0].mxu0
        %v3972 = vpop.f32.mrb[0].mxu0
        %v3973 = vadd.f32 %v3770, %v3972
        %v3974 = vpop.f32.mrb[0].mxu0
        %3975 = vmatprep.mubr.bf16.mxu0 0
        %3976 = vmatmul.mubr.bf16.gmra.mrb[0].mxu0 %v3893
        %v3977 = vpop.f32.mrb[0].mxu0
        %v3978 = vadd.f32 %v3775, %v3977
        %v3979 = vpop.f32.mrb[0].mxu0
        %v3980 = vpop.f32.mrb[0].mxu0
        %v3981 = vadd.f32 %v3778, %v3980
        %v3982 = vpop.f32.mrb[0].mxu0
        %3983 = vmatprep.mubr.bf16.mxu0 0
        %3984 = vmatmul.mubr.bf16.gmra.mrb[0].mxu0 %v3895
        %v3985 = vpop.f32.mrb[0].mxu0
        %v3986 = vadd.f32 %v3783, %v3985
        %v3987 = vpop.f32.mrb[0].mxu0
        %v3988 = vpop.f32.mrb[0].mxu0
        %v3989 = vadd.f32 %v3786, %v3988
        %v3990 = vpop.f32.mrb[0].mxu0
        %3991 = vmatprep.mubr.bf16.mxu0 0
        %3992 = vmatmul.mubr.bf16.gmra.mrb[0].mxu0 %v3897
        %v3993 = vpop.f32.mrb[0].mxu0
        %v3994 = vadd.f32 %v3791, %v3993
        %v3995 = vpop.f32.mrb[0].mxu0
        %v3996 = vpop.f32.mrb[0].mxu0
        %v3997 = vadd.f32 %v3794, %v3996
        %v3998 = vpop.f32.mrb[0].mxu0
        %3999 = vmatprep.mubr.bf16.mxu0 0
        %4000 = vmatmul.mubr.bf16.gmra.mrb[0].mxu0 %v3899
        %v4001 = vpop.f32.mrb[0].mxu0
        %v4002 = vadd.f32 %v3799, %v4001
        %v4003 = vpop.f32.mrb[0].mxu0
        %v4004 = vpop.f32.mrb[0].mxu0
        %v4005 = vadd.f32 %v3802, %v4004
        %v4006 = vpop.f32.mrb[0].mxu0
        %4007 = vmatprep.mubr.bf16.mxu0 0
        %4008 = vmatmul.mubr.bf16.gmra.mrb[0].mxu0 %v3901
        %v4009 = vpop.f32.mrb[0].mxu0
        %v4010 = vadd.f32 %v3807, %v4009
        %v4011 = vpop.f32.mrb[0].mxu0
        %v4012 = vpop.f32.mrb[0].mxu0
        %v4013 = vadd.f32 %v3810, %v4012
        %v4014 = vpop.f32.mrb[0].mxu0
        %4015 = vmatprep.mubr.bf16.mxu0 0
        %4016 = vmatmul.mubr.bf16.gmra.mrb[0].mxu0 %v3903
        %v4017 = vpop.f32.mrb[0].mxu0
        %v4018 = vadd.f32 %v3815, %v4017
        %v4019 = vpop.f32.mrb[0].mxu0
        %v4020 = vpop.f32.mrb[0].mxu0
        %v4021 = vadd.f32 %v3818, %v4020
        %v4022 = vpop.f32.mrb[0].mxu0
        %4023 = vmatprep.mubr.bf16.mxu0 0
        %4024 = vmatmul.mubr.bf16.gmra.mrb[0].mxu0 %v3905
        %v4025 = vpop.f32.mrb[0].mxu0
        %v4026 = vadd.f32 %v3823, %v4025
        %v4027 = vpop.f32.mrb[0].mxu0
        %v4028 = vpop.f32.mrb[0].mxu0
        %v4029 = vadd.f32 %v3826, %v4028
        %v4030 = vpop.f32.mrb[0].mxu0
        %4031 = vmatprep.mubr.bf16.mxu0 0
        %4032 = vmatmul.mubr.bf16.gmra.mrb[0].mxu0 %v3907
        %v4033 = vpop.f32.mrb[0].mxu0
        %v4034 = vadd.f32 %v3831, %v4033
        %v4035 = vpop.f32.mrb[0].mxu0
        %v4036 = vpop.f32.mrb[0].mxu0
        %v4037 = vadd.f32 %v3834, %v4036
        %v4038 = vpop.f32.mrb[0].mxu0
        %4039 = vmatprep.mubr.bf16.mxu0 0
        %4040 = vmatmul.mubr.bf16.gmra.mrb[0].mxu0 %v3909
        %v4041 = vpop.f32.mrb[0].mxu0
        %v4042 = vadd.f32 %v3839, %v4041
        %v4043 = vpop.f32.mrb[0].mxu0
        %v4044 = vpop.f32.mrb[0].mxu0
        %v4045 = vadd.f32 %v3842, %v4044
        %v4046 = vpop.f32.mrb[0].mxu0
        %4047 = vmatprep.mubr.bf16.mxu0 0
        %4048 = vmatmul.mubr.bf16.gmra.mrb[0].mxu0 %v3911
        %v4049 = vpop.f32.mrb[0].mxu0
        %v4050 = vadd.f32 %v3847, %v4049
        %v4051 = vpop.f32.mrb[0].mxu0
        %v4052 = vpop.f32.mrb[0].mxu0
        %v4053 = vadd.f32 %v3850, %v4052
        %v4054 = vpop.f32.mrb[0].mxu0
        %4055 = vmatprep.mubr.bf16.mxu0 0
        %4056 = vmatmul.mubr.bf16.gmra.mrb[0].mxu0 %v3913
        %v4057 = vpop.f32.mrb[0].mxu0
        %v4058 = vadd.f32 %v3855, %v4057
        %v4059 = vpop.f32.mrb[0].mxu0
        %v4060 = vpop.f32.mrb[0].mxu0
        %v4061 = vadd.f32 %v3858, %v4060
        %v4062 = vpop.f32.mrb[0].mxu0
        %4063 = vmatprep.mubr.bf16.mxu0 0
        %4064 = vmatmul.mubr.bf16.gmra.mrb[0].mxu0 %v3915
        %v4065 = vpop.f32.mrb[0].mxu0
        %v4066 = vadd.f32 %v3863, %v4065
        %v4067 = vpop.f32.mrb[0].mxu0
        %v4068 = vpop.f32.mrb[0].mxu0
        %v4069 = vadd.f32 %v3866, %v4068
        %v4070 = vpop.f32.mrb[0].mxu0
        %4071 = vmatprep.mubr.bf16.mxu0 0
        %4072 = vmatmul.mubr.bf16.gmra.mrb[0].mxu0 %v3917
        %v4073 = vpop.f32.mrb[0].mxu0
        %v4074 = vadd.f32 %v3871, %v4073
        %v4075 = vpop.f32.mrb[0].mxu0
        %v4076 = vpop.f32.mrb[0].mxu0
        %v4077 = vadd.f32 %v3874, %v4076
        %v4078 = vpop.f32.mrb[0].mxu0
        %4079 = vdwg.mxu0
        %v4110 = vrot.slane %v3447, 1
        %v4111 = vrot.slane %v3448, 1
        %v4112 = vsel %vm1361, %v4110, %v4111
        %v4113 = vrot.slane %v3449, 1
        %v4114 = vrot.slane %v3450, 1
        %v4115 = vsel %vm1361, %v4113, %v4114
        %v4116 = vrot.slane %v3451, 1
        %v4117 = vrot.slane %v3452, 1
        %v4118 = vsel %vm1361, %v4116, %v4117
        %v4119 = vrot.slane %v3453, 1
        %v4120 = vrot.slane %v3454, 1
        %v4121 = vsel %vm1361, %v4119, %v4120
        %v4122 = vrot.slane %v3455, 1
        %v4123 = vrot.slane %v3456, 1
        %v4124 = vsel %vm1361, %v4122, %v4123
        %v4125 = vrot.slane %v3457, 1
        %v4126 = vrot.slane %v3458, 1
        %v4127 = vsel %vm1361, %v4125, %v4126
        %v4128 = vrot.slane %v3459, 1
        %v4129 = vrot.slane %v3460, 1
        %v4130 = vsel %vm1361, %v4128, %v4129
        %v4131 = vrot.slane %v3461, 1
        %v4132 = vrot.slane %v3462, 1
        %v4133 = vsel %vm1361, %v4131, %v4132
        %v4134 = vrot.slane %v3463, 1
        %v4135 = vrot.slane %v3464, 1
        %v4136 = vsel %vm1361, %v4134, %v4135
        %v4137 = vrot.slane %v3465, 1
        %v4138 = vrot.slane %v3466, 1
        %v4139 = vsel %vm1361, %v4137, %v4138
        %v4140 = vrot.slane %v3467, 1
        %v4141 = vrot.slane %v3468, 1
        %v4142 = vsel %vm1361, %v4140, %v4141
        %v4143 = vrot.slane %v3469, 1
        %v4144 = vrot.slane %v3470, 1
        %v4145 = vsel %vm1361, %v4143, %v4144
        %v4146 = vrot.slane %v3471, 1
        %v4147 = vrot.slane %v3472, 1
        %v4148 = vsel %vm1361, %v4146, %v4147
        %v4149 = vrot.slane %v3473, 1
        %v4150 = vrot.slane %v3474, 1
        %v4151 = vsel %vm1361, %v4149, %v4150
        %v4152 = vrot.slane %v3475, 1
        %v4153 = vrot.slane %v3476, 1
        %v4154 = vsel %vm1361, %v4152, %v4153
        %v4159 = vunpack.c.l.b16 %v3253
        %v4160 = vunpack.c.l.b16 %v3254
        %v4161 = vunpack.c.l.b16 %v3255
        %v4162 = vunpack.c.l.b16 %v3256
        %v4163 = vpack.c.b16 %v4160, %v4159
        %v4164 = vpack.c.b16 %v4162, %v4161
        %v4168 = vsel %vm915, %v4112, 0
        %v4171 = vsel %vm915, %v4115, 0
        %v4174 = vsel %vm915, %v4118, 0
        %v4177 = vsel %vm915, %v4121, 0
        %v4180 = vsel %vm915, %v4124, 0
        %v4183 = vsel %vm915, %v4127, 0
        %v4186 = vsel %vm915, %v4130, 0
        %v4189 = vsel %vm915, %v4133, 0
        %v4192 = vsel %vm915, %v4136, 0
        %v4195 = vsel %vm915, %v4139, 0
        %v4198 = vsel %vm915, %v4142, 0
        %v4201 = vsel %vm915, %v4145, 0
        %v4204 = vsel %vm915, %v4148, 0
        %v4207 = vsel %vm915, %v4151, 0
        %v4210 = vsel %vm915, %v4154, 0
        %4212 = vmatprep.subr.bf16.mxu0 0
        %4213 = vmatpush1.bf16.msra.mxu0 %v4163
        %4214 = vmatprep.subr.bf16.mxu0 0
        %4215 = vmatpush1.bf16.msra.mxu0 %v4164
        %4216 = vmatprep.subr.bf16.mxu0 0
        %4217 = vmatpush1.bf16.msra.mxu0 0
        %4218 = vmatprep.subr.bf16.mxu0 0
        %4219 = vmatpush1.bf16.msra.mxu0 0
        %4220 = vmatprep.subr.bf16.mxu0 0
        %4221 = vmatpush1.bf16.msra.mxu0 0
        %4222 = vmatprep.subr.bf16.mxu0 0
        %4223 = vmatpush1.bf16.msra.mxu0 0
        %4224 = vmatprep.subr.bf16.mxu0 0
        %4225 = vmatpush1.bf16.msra.mxu0 0
        %4226 = vmatprep.subr.bf16.mxu0 0
        %4227 = vmatpush1.bf16.msra.mxu0 0
        %4228 = vmatprep.subr.bf16.mxu0 0
        %4229 = vmatpush1.bf16.msra.mxu0 0
        %4230 = vmatprep.subr.bf16.mxu0 0
        %4231 = vmatpush1.bf16.msra.mxu0 0
        %4232 = vmatprep.subr.bf16.mxu0 0
        %4233 = vmatpush1.bf16.msra.mxu0 0
        %4234 = vmatprep.subr.bf16.mxu0 0
        %4235 = vmatpush1.bf16.msra.mxu0 0
        %4236 = vmatprep.subr.bf16.mxu0 0
        %4237 = vmatpush1.bf16.msra.mxu0 0
        %4238 = vmatprep.subr.bf16.mxu0 0
        %4239 = vmatpush1.bf16.msra.mxu0 0
        %4240 = vmatprep.subr.bf16.mxu0 0
        %4241 = vmatpush1.bf16.msra.mxu0 0
        %4242 = vmatprep.subr.bf16.mxu0 0
        %4243 = vmatpush1.bf16.msra.mxu0 0
        %4244 = vmatprep.mubr.bf16.mxu0 0
        %4245 = vmatmul.mubr.bf16.gmra.mrb[0].mxu0 %v1422
        %v4246 = vpop.f32.mrb[0].mxu0
        %v4247 = vadd.f32 0.0, %v4246
        %v4248 = vpop.f32.mrb[0].mxu0
        %v4249 = vpop.f32.mrb[0].mxu0
        %v4250 = vadd.f32 0.0, %v4249
        %v4251 = vpop.f32.mrb[0].mxu0
        %4252 = vmatprep.mubr.bf16.mxu0 0
        %4253 = vmatmul.mubr.bf16.gmra.mrb[0].mxu0 %v4168
        %v4254 = vpop.f32.mrb[0].mxu0
        %v4255 = vadd.f32 0.0, %v4254
        %v4256 = vpop.f32.mrb[0].mxu0
        %v4257 = vpop.f32.mrb[0].mxu0
        %v4258 = vadd.f32 0.0, %v4257
        %v4259 = vpop.f32.mrb[0].mxu0
        %4260 = vmatprep.mubr.bf16.mxu0 0
        %4261 = vmatmul.mubr.bf16.gmra.mrb[0].mxu0 %v4171
        %v4262 = vpop.f32.mrb[0].mxu0
        %v4263 = vadd.f32 0.0, %v4262
        %v4264 = vpop.f32.mrb[0].mxu0
        %v4265 = vpop.f32.mrb[0].mxu0
        %v4266 = vadd.f32 0.0, %v4265
        %v4267 = vpop.f32.mrb[0].mxu0
        %4268 = vmatprep.mubr.bf16.mxu0 0
        %4269 = vmatmul.mubr.bf16.gmra.mrb[0].mxu0 %v4174
        %v4270 = vpop.f32.mrb[0].mxu0
        %v4271 = vadd.f32 0.0, %v4270
        %v4272 = vpop.f32.mrb[0].mxu0
        %v4273 = vpop.f32.mrb[0].mxu0
        %v4274 = vadd.f32 0.0, %v4273
        %v4275 = vpop.f32.mrb[0].mxu0
        %4276 = vmatprep.mubr.bf16.mxu0 0
        %4277 = vmatmul.mubr.bf16.gmra.mrb[0].mxu0 %v4177
        %v4278 = vpop.f32.mrb[0].mxu0
        %v4279 = vadd.f32 0.0, %v4278
        %v4280 = vpop.f32.mrb[0].mxu0
        %v4281 = vpop.f32.mrb[0].mxu0
        %v4282 = vadd.f32 0.0, %v4281
        %v4283 = vpop.f32.mrb[0].mxu0
        %4284 = vmatprep.mubr.bf16.mxu0 0
        %4285 = vmatmul.mubr.bf16.gmra.mrb[0].mxu0 %v4180
        %v4286 = vpop.f32.mrb[0].mxu0
        %v4287 = vadd.f32 0.0, %v4286
        %v4288 = vpop.f32.mrb[0].mxu0
        %v4289 = vpop.f32.mrb[0].mxu0
        %v4290 = vadd.f32 0.0, %v4289
        %v4291 = vpop.f32.mrb[0].mxu0
        %4292 = vmatprep.mubr.bf16.mxu0 0
        %4293 = vmatmul.mubr.bf16.gmra.mrb[0].mxu0 %v4183
        %v4294 = vpop.f32.mrb[0].mxu0
        %v4295 = vadd.f32 0.0, %v4294
        %v4296 = vpop.f32.mrb[0].mxu0
        %v4297 = vpop.f32.mrb[0].mxu0
        %v4298 = vadd.f32 0.0, %v4297
        %v4299 = vpop.f32.mrb[0].mxu0
        %4300 = vmatprep.mubr.bf16.mxu0 0
        %4301 = vmatmul.mubr.bf16.gmra.mrb[0].mxu0 %v4186
        %v4302 = vpop.f32.mrb[0].mxu0
        %v4303 = vadd.f32 0.0, %v4302
        %v4304 = vpop.f32.mrb[0].mxu0
        %v4305 = vpop.f32.mrb[0].mxu0
        %v4306 = vadd.f32 0.0, %v4305
        %v4307 = vpop.f32.mrb[0].mxu0
        %4308 = vmatprep.mubr.bf16.mxu0 0
        %4309 = vmatmul.mubr.bf16.gmra.mrb[0].mxu0 %v4189
        %v4310 = vpop.f32.mrb[0].mxu0
        %v4311 = vadd.f32 0.0, %v4310
        %v4312 = vpop.f32.mrb[0].mxu0
        %v4313 = vpop.f32.mrb[0].mxu0
        %v4314 = vadd.f32 0.0, %v4313
        %v4315 = vpop.f32.mrb[0].mxu0
        %4316 = vmatprep.mubr.bf16.mxu0 0
        %4317 = vmatmul.mubr.bf16.gmra.mrb[0].mxu0 %v4192
        %v4318 = vpop.f32.mrb[0].mxu0
        %v4319 = vadd.f32 0.0, %v4318
        %v4320 = vpop.f32.mrb[0].mxu0
        %v4321 = vpop.f32.mrb[0].mxu0
        %v4322 = vadd.f32 0.0, %v4321
        %v4323 = vpop.f32.mrb[0].mxu0
        %4324 = vmatprep.mubr.bf16.mxu0 0
        %4325 = vmatmul.mubr.bf16.gmra.mrb[0].mxu0 %v4195
        %v4326 = vpop.f32.mrb[0].mxu0
        %v4327 = vadd.f32 0.0, %v4326
        %v4328 = vpop.f32.mrb[0].mxu0
        %v4329 = vpop.f32.mrb[0].mxu0
        %v4330 = vadd.f32 0.0, %v4329
        %v4331 = vpop.f32.mrb[0].mxu0
        %4332 = vmatprep.mubr.bf16.mxu0 0
        %4333 = vmatmul.mubr.bf16.gmra.mrb[0].mxu0 %v4198
        %v4334 = vpop.f32.mrb[0].mxu0
        %v4335 = vadd.f32 0.0, %v4334
        %v4336 = vpop.f32.mrb[0].mxu0
        %v4337 = vpop.f32.mrb[0].mxu0
        %v4338 = vadd.f32 0.0, %v4337
        %v4339 = vpop.f32.mrb[0].mxu0
        %4340 = vmatprep.mubr.bf16.mxu0 0
        %4341 = vmatmul.mubr.bf16.gmra.mrb[0].mxu0 %v4201
        %v4342 = vpop.f32.mrb[0].mxu0
        %v4343 = vadd.f32 0.0, %v4342
        %v4344 = vpop.f32.mrb[0].mxu0
        %v4345 = vpop.f32.mrb[0].mxu0
        %v4346 = vadd.f32 0.0, %v4345
        %v4347 = vpop.f32.mrb[0].mxu0
        %4348 = vmatprep.mubr.bf16.mxu0 0
        %4349 = vmatmul.mubr.bf16.gmra.mrb[0].mxu0 %v4204
        %v4350 = vpop.f32.mrb[0].mxu0
        %v4351 = vadd.f32 0.0, %v4350
        %v4352 = vpop.f32.mrb[0].mxu0
        %v4353 = vpop.f32.mrb[0].mxu0
        %v4354 = vadd.f32 0.0, %v4353
        %v4355 = vpop.f32.mrb[0].mxu0
        %4356 = vmatprep.mubr.bf16.mxu0 0
        %4357 = vmatmul.mubr.bf16.gmra.mrb[0].mxu0 %v4207
        %v4358 = vpop.f32.mrb[0].mxu0
        %v4359 = vadd.f32 0.0, %v4358
        %v4360 = vpop.f32.mrb[0].mxu0
        %v4361 = vpop.f32.mrb[0].mxu0
        %v4362 = vadd.f32 0.0, %v4361
        %v4363 = vpop.f32.mrb[0].mxu0
        %4364 = vmatprep.mubr.bf16.mxu0 0
        %4365 = vmatmul.mubr.bf16.gmra.mrb[0].mxu0 %v4210
        %v4366 = vpop.f32.mrb[0].mxu0
        %v4367 = vadd.f32 0.0, %v4366
        %v4368 = vpop.f32.mrb[0].mxu0
        %v4369 = vpop.f32.mrb[0].mxu0
        %v4370 = vadd.f32 0.0, %v4369
        %v4371 = vpop.f32.mrb[0].mxu0
        %4372 = vdwg.mxu0
        %v4373 = vadd.f32 %v3954, %v4247
        %v4374 = vadd.f32 %v3957, %v4250
        %v4375 = vadd.f32 %v3962, %v4255
        %v4376 = vadd.f32 %v3965, %v4258
        %v4377 = vadd.f32 %v3970, %v4263
        %v4378 = vadd.f32 %v3973, %v4266
        %v4379 = vadd.f32 %v3978, %v4271
        %v4380 = vadd.f32 %v3981, %v4274
        %v4381 = vadd.f32 %v3986, %v4279
        %v4382 = vadd.f32 %v3989, %v4282
        %v4383 = vadd.f32 %v3994, %v4287
        %v4384 = vadd.f32 %v3997, %v4290
        %v4385 = vadd.f32 %v4002, %v4295
        %v4386 = vadd.f32 %v4005, %v4298
        %v4387 = vadd.f32 %v4010, %v4303
        %v4388 = vadd.f32 %v4013, %v4306
        %v4389 = vadd.f32 %v4018, %v4311
        %v4390 = vadd.f32 %v4021, %v4314
        %v4391 = vadd.f32 %v4026, %v4319
        %v4392 = vadd.f32 %v4029, %v4322
        %v4393 = vadd.f32 %v4034, %v4327
        %v4394 = vadd.f32 %v4037, %v4330
        %v4395 = vadd.f32 %v4042, %v4335
        %v4396 = vadd.f32 %v4045, %v4338
        %v4397 = vadd.f32 %v4050, %v4343
        %v4398 = vadd.f32 %v4053, %v4346
        %v4399 = vadd.f32 %v4058, %v4351
        %v4400 = vadd.f32 %v4061, %v4354
        %v4401 = vadd.f32 %v4066, %v4359
        %v4402 = vadd.f32 %v4069, %v4362
        %v4403 = vadd.f32 %v4074, %v4367
        %v4404 = vadd.f32 %v4077, %v4370
        %v4409 = vunpack.c.l.b16 %v3257
        %v4410 = vunpack.c.l.b16 %v3258
        %v4411 = vunpack.c.l.b16 %v3259
        %v4412 = vunpack.c.l.b16 %v3260
        %v4413 = vpack.c.b16 %v4410, %v4409
        %v4414 = vpack.c.b16 %v4412, %v4411
        %v4418 = vsel %vm915, %v3477, 0
        %4420 = vmatprep.subr.bf16.mxu0 0
        %4421 = vmatpush1.bf16.msra.mxu0 %v4413
        %4422 = vmatprep.subr.bf16.mxu0 0
        %4423 = vmatpush1.bf16.msra.mxu0 %v4414
        %4424 = vmatprep.subr.bf16.mxu0 0
        %4425 = vmatpush1.bf16.msra.mxu0 0
        %4426 = vmatprep.subr.bf16.mxu0 0
        %4427 = vmatpush1.bf16.msra.mxu0 0
        %4428 = vmatprep.subr.bf16.mxu0 0
        %4429 = vmatpush1.bf16.msra.mxu0 0
        %4430 = vmatprep.subr.bf16.mxu0 0
        %4431 = vmatpush1.bf16.msra.mxu0 0
        %4432 = vmatprep.subr.bf16.mxu0 0
        %4433 = vmatpush1.bf16.msra.mxu0 0
        %4434 = vmatprep.subr.bf16.mxu0 0
        %4435 = vmatpush1.bf16.msra.mxu0 0
        %4436 = vmatprep.subr.bf16.mxu0 0
        %4437 = vmatpush1.bf16.msra.mxu0 0
        %4438 = vmatprep.subr.bf16.mxu0 0
        %4439 = vmatpush1.bf16.msra.mxu0 0
        %4440 = vmatprep.subr.bf16.mxu0 0
        %4441 = vmatpush1.bf16.msra.mxu0 0
        %4442 = vmatprep.subr.bf16.mxu0 0
        %4443 = vmatpush1.bf16.msra.mxu0 0
        %4444 = vmatprep.subr.bf16.mxu0 0
        %4445 = vmatpush1.bf16.msra.mxu0 0
        %4446 = vmatprep.subr.bf16.mxu0 0
        %4447 = vmatpush1.bf16.msra.mxu0 0
        %4448 = vmatprep.subr.bf16.mxu0 0
        %4449 = vmatpush1.bf16.msra.mxu0 0
        %4450 = vmatprep.subr.bf16.mxu0 0
        %4451 = vmatpush1.bf16.msra.mxu0 0
        %4452 = vmatprep.mubr.bf16.mxu0 0
        %4453 = vmatmul.mubr.bf16.gmra.mrb[0].mxu0 %v3889
        %v4454 = vpop.f32.mrb[0].mxu0
        %v4455 = vadd.f32 0.0, %v4454
        %v4456 = vpop.f32.mrb[0].mxu0
        %v4457 = vpop.f32.mrb[0].mxu0
        %v4458 = vadd.f32 0.0, %v4457
        %v4459 = vpop.f32.mrb[0].mxu0
        %4460 = vmatprep.mubr.bf16.mxu0 0
        %4461 = vmatmul.mubr.bf16.gmra.mrb[0].mxu0 %v3891
        %v4462 = vpop.f32.mrb[0].mxu0
        %v4463 = vadd.f32 0.0, %v4462
        %v4464 = vpop.f32.mrb[0].mxu0
        %v4465 = vpop.f32.mrb[0].mxu0
        %v4466 = vadd.f32 0.0, %v4465
        %v4467 = vpop.f32.mrb[0].mxu0
        %4468 = vmatprep.mubr.bf16.mxu0 0
        %4469 = vmatmul.mubr.bf16.gmra.mrb[0].mxu0 %v3893
        %v4470 = vpop.f32.mrb[0].mxu0
        %v4471 = vadd.f32 0.0, %v4470
        %v4472 = vpop.f32.mrb[0].mxu0
        %v4473 = vpop.f32.mrb[0].mxu0
        %v4474 = vadd.f32 0.0, %v4473
        %v4475 = vpop.f32.mrb[0].mxu0
        %4476 = vmatprep.mubr.bf16.mxu0 0
        %4477 = vmatmul.mubr.bf16.gmra.mrb[0].mxu0 %v3895
        %v4478 = vpop.f32.mrb[0].mxu0
        %v4479 = vadd.f32 0.0, %v4478
        %v4480 = vpop.f32.mrb[0].mxu0
        %v4481 = vpop.f32.mrb[0].mxu0
        %v4482 = vadd.f32 0.0, %v4481
        %v4483 = vpop.f32.mrb[0].mxu0
        %4484 = vmatprep.mubr.bf16.mxu0 0
        %4485 = vmatmul.mubr.bf16.gmra.mrb[0].mxu0 %v3897
        %v4486 = vpop.f32.mrb[0].mxu0
        %v4487 = vadd.f32 0.0, %v4486
        %v4488 = vpop.f32.mrb[0].mxu0
        %v4489 = vpop.f32.mrb[0].mxu0
        %v4490 = vadd.f32 0.0, %v4489
        %v4491 = vpop.f32.mrb[0].mxu0
        %4492 = vmatprep.mubr.bf16.mxu0 0
        %4493 = vmatmul.mubr.bf16.gmra.mrb[0].mxu0 %v3899
        %v4494 = vpop.f32.mrb[0].mxu0
        %v4495 = vadd.f32 0.0, %v4494
        %v4496 = vpop.f32.mrb[0].mxu0
        %v4497 = vpop.f32.mrb[0].mxu0
        %v4498 = vadd.f32 0.0, %v4497
        %v4499 = vpop.f32.mrb[0].mxu0
        %4500 = vmatprep.mubr.bf16.mxu0 0
        %4501 = vmatmul.mubr.bf16.gmra.mrb[0].mxu0 %v3901
        %v4502 = vpop.f32.mrb[0].mxu0
        %v4503 = vadd.f32 0.0, %v4502
        %v4504 = vpop.f32.mrb[0].mxu0
        %v4505 = vpop.f32.mrb[0].mxu0
        %v4506 = vadd.f32 0.0, %v4505
        %v4507 = vpop.f32.mrb[0].mxu0
        %4508 = vmatprep.mubr.bf16.mxu0 0
        %4509 = vmatmul.mubr.bf16.gmra.mrb[0].mxu0 %v3903
        %v4510 = vpop.f32.mrb[0].mxu0
        %v4511 = vadd.f32 0.0, %v4510
        %v4512 = vpop.f32.mrb[0].mxu0
        %v4513 = vpop.f32.mrb[0].mxu0
        %v4514 = vadd.f32 0.0, %v4513
        %v4515 = vpop.f32.mrb[0].mxu0
        %4516 = vmatprep.mubr.bf16.mxu0 0
        %4517 = vmatmul.mubr.bf16.gmra.mrb[0].mxu0 %v3905
        %v4518 = vpop.f32.mrb[0].mxu0
        %v4519 = vadd.f32 0.0, %v4518
        %v4520 = vpop.f32.mrb[0].mxu0
        %v4521 = vpop.f32.mrb[0].mxu0
        %v4522 = vadd.f32 0.0, %v4521
        %v4523 = vpop.f32.mrb[0].mxu0
        %4524 = vmatprep.mubr.bf16.mxu0 0
        %4525 = vmatmul.mubr.bf16.gmra.mrb[0].mxu0 %v3907
        %v4526 = vpop.f32.mrb[0].mxu0
        %v4527 = vadd.f32 0.0, %v4526
        %v4528 = vpop.f32.mrb[0].mxu0
        %v4529 = vpop.f32.mrb[0].mxu0
        %v4530 = vadd.f32 0.0, %v4529
        %v4531 = vpop.f32.mrb[0].mxu0
        %4532 = vmatprep.mubr.bf16.mxu0 0
        %4533 = vmatmul.mubr.bf16.gmra.mrb[0].mxu0 %v3909
        %v4534 = vpop.f32.mrb[0].mxu0
        %v4535 = vadd.f32 0.0, %v4534
        %v4536 = vpop.f32.mrb[0].mxu0
        %v4537 = vpop.f32.mrb[0].mxu0
        %v4538 = vadd.f32 0.0, %v4537
        %v4539 = vpop.f32.mrb[0].mxu0
        %4540 = vmatprep.mubr.bf16.mxu0 0
        %4541 = vmatmul.mubr.bf16.gmra.mrb[0].mxu0 %v3911
        %v4542 = vpop.f32.mrb[0].mxu0
        %v4543 = vadd.f32 0.0, %v4542
        %v4544 = vpop.f32.mrb[0].mxu0
        %v4545 = vpop.f32.mrb[0].mxu0
        %v4546 = vadd.f32 0.0, %v4545
        %v4547 = vpop.f32.mrb[0].mxu0
        %4548 = vmatprep.mubr.bf16.mxu0 0
        %4549 = vmatmul.mubr.bf16.gmra.mrb[0].mxu0 %v3913
        %v4550 = vpop.f32.mrb[0].mxu0
        %v4551 = vadd.f32 0.0, %v4550
        %v4552 = vpop.f32.mrb[0].mxu0
        %v4553 = vpop.f32.mrb[0].mxu0
        %v4554 = vadd.f32 0.0, %v4553
        %v4555 = vpop.f32.mrb[0].mxu0
        %4556 = vmatprep.mubr.bf16.mxu0 0
        %4557 = vmatmul.mubr.bf16.gmra.mrb[0].mxu0 %v3915
        %v4558 = vpop.f32.mrb[0].mxu0
        %v4559 = vadd.f32 0.0, %v4558
        %v4560 = vpop.f32.mrb[0].mxu0
        %v4561 = vpop.f32.mrb[0].mxu0
        %v4562 = vadd.f32 0.0, %v4561
        %v4563 = vpop.f32.mrb[0].mxu0
        %4564 = vmatprep.mubr.bf16.mxu0 0
        %4565 = vmatmul.mubr.bf16.gmra.mrb[0].mxu0 %v3917
        %v4566 = vpop.f32.mrb[0].mxu0
        %v4567 = vadd.f32 0.0, %v4566
        %v4568 = vpop.f32.mrb[0].mxu0
        %v4569 = vpop.f32.mrb[0].mxu0
        %v4570 = vadd.f32 0.0, %v4569
        %v4571 = vpop.f32.mrb[0].mxu0
        %4572 = vmatprep.mubr.bf16.mxu0 0
        %4573 = vmatmul.mubr.bf16.gmra.mrb[0].mxu0 %v4418
        %v4574 = vpop.f32.mrb[0].mxu0
        %v4575 = vadd.f32 0.0, %v4574
        %v4576 = vpop.f32.mrb[0].mxu0
        %v4577 = vpop.f32.mrb[0].mxu0
        %v4578 = vadd.f32 0.0, %v4577
        %v4579 = vpop.f32.mrb[0].mxu0
        %4580 = vdwg.mxu0
        %v4581 = vadd.f32 %v4373, %v4455
        %v4582 = vadd.f32 %v4374, %v4458
        %v4583 = vadd.f32 %v4375, %v4463
        %v4584 = vadd.f32 %v4376, %v4466
        %v4585 = vadd.f32 %v4377, %v4471
        %v4586 = vadd.f32 %v4378, %v4474
        %v4587 = vadd.f32 %v4379, %v4479
        %v4588 = vadd.f32 %v4380, %v4482
        %v4589 = vadd.f32 %v4381, %v4487
        %v4590 = vadd.f32 %v4382, %v4490
        %v4591 = vadd.f32 %v4383, %v4495
        %v4592 = vadd.f32 %v4384, %v4498
        %v4593 = vadd.f32 %v4385, %v4503
        %v4594 = vadd.f32 %v4386, %v4506
        %v4595 = vadd.f32 %v4387, %v4511
        %v4596 = vadd.f32 %v4388, %v4514
        %v4597 = vadd.f32 %v4389, %v4519
        %v4598 = vadd.f32 %v4390, %v4522
        %v4599 = vadd.f32 %v4391, %v4527
        %v4600 = vadd.f32 %v4392, %v4530
        %v4601 = vadd.f32 %v4393, %v4535
        %v4602 = vadd.f32 %v4394, %v4538
        %v4603 = vadd.f32 %v4395, %v4543
        %v4604 = vadd.f32 %v4396, %v4546
        %v4605 = vadd.f32 %v4397, %v4551
        %v4606 = vadd.f32 %v4398, %v4554
        %v4607 = vadd.f32 %v4399, %v4559
        %v4608 = vadd.f32 %v4400, %v4562
        %v4609 = vadd.f32 %v4401, %v4567
        %v4610 = vadd.f32 %v4402, %v4570
        %v4611 = vadd.f32 %v4403, %v4575
        %v4612 = vadd.f32 %v4404, %v4578
        %v4613 = vshrl.u32 %v3477, 16
        %v4615 = vshll.u32 %v3477, 16
        %v4617 = vrot.slane %v4615, 1
        %v4618 = vor.u32 %v4613, %v4617
        %v4620 = vshll.u32 %v3478, 16
        %v4622 = vrot.slane %v4620, 1
        %v4623 = vsel %vm714, %v4618, %v4622
        %v4628 = vunpack.c.l.b16 %v3261
        %v4629 = vunpack.c.l.b16 %v3262
        %v4630 = vunpack.c.l.b16 %v3263
        %v4631 = vunpack.c.l.b16 %v3264
        %v4632 = vpack.c.b16 %v4629, %v4628
        %v4633 = vpack.c.b16 %v4631, %v4630
        %v4637 = vsel %vm915, %v4623, 0
        %4639 = vmatprep.subr.bf16.mxu0 0
        %4640 = vmatpush1.bf16.msra.mxu0 %v4632
        %4641 = vmatprep.subr.bf16.mxu0 0
        %4642 = vmatpush1.bf16.msra.mxu0 %v4633
        %4643 = vmatprep.subr.bf16.mxu0 0
        %4644 = vmatpush1.bf16.msra.mxu0 0
        %4645 = vmatprep.subr.bf16.mxu0 0
        %4646 = vmatpush1.bf16.msra.mxu0 0
        %4647 = vmatprep.subr.bf16.mxu0 0
        %4648 = vmatpush1.bf16.msra.mxu0 0
        %4649 = vmatprep.subr.bf16.mxu0 0
        %4650 = vmatpush1.bf16.msra.mxu0 0
        %4651 = vmatprep.subr.bf16.mxu0 0
        %4652 = vmatpush1.bf16.msra.mxu0 0
        %4653 = vmatprep.subr.bf16.mxu0 0
        %4654 = vmatpush1.bf16.msra.mxu0 0
        %4655 = vmatprep.subr.bf16.mxu0 0
        %4656 = vmatpush1.bf16.msra.mxu0 0
        %4657 = vmatprep.subr.bf16.mxu0 0
        %4658 = vmatpush1.bf16.msra.mxu0 0
        %4659 = vmatprep.subr.bf16.mxu0 0
        %4660 = vmatpush1.bf16.msra.mxu0 0
        %4661 = vmatprep.subr.bf16.mxu0 0
        %4662 = vmatpush1.bf16.msra.mxu0 0
        %4663 = vmatprep.subr.bf16.mxu0 0
        %4664 = vmatpush1.bf16.msra.mxu0 0
        %4665 = vmatprep.subr.bf16.mxu0 0
        %4666 = vmatpush1.bf16.msra.mxu0 0
        %4667 = vmatprep.subr.bf16.mxu0 0
        %4668 = vmatpush1.bf16.msra.mxu0 0
        %4669 = vmatprep.subr.bf16.mxu0 0
        %4670 = vmatpush1.bf16.msra.mxu0 0
        %4671 = vmatprep.mubr.bf16.mxu0 0
        %4672 = vmatmul.mubr.bf16.gmra.mrb[0].mxu0 %v3672
        %v4673 = vpop.f32.mrb[0].mxu0
        %v4674 = vadd.f32 0.0, %v4673
        %v4675 = vpop.f32.mrb[0].mxu0
        %v4676 = vpop.f32.mrb[0].mxu0
        %v4677 = vadd.f32 0.0, %v4676
        %v4678 = vpop.f32.mrb[0].mxu0
        %4679 = vmatprep.mubr.bf16.mxu0 0
        %4680 = vmatmul.mubr.bf16.gmra.mrb[0].mxu0 %v3675
        %v4681 = vpop.f32.mrb[0].mxu0
        %v4682 = vadd.f32 0.0, %v4681
        %v4683 = vpop.f32.mrb[0].mxu0
        %v4684 = vpop.f32.mrb[0].mxu0
        %v4685 = vadd.f32 0.0, %v4684
        %v4686 = vpop.f32.mrb[0].mxu0
        %4687 = vmatprep.mubr.bf16.mxu0 0
        %4688 = vmatmul.mubr.bf16.gmra.mrb[0].mxu0 %v3678
        %v4689 = vpop.f32.mrb[0].mxu0
        %v4690 = vadd.f32 0.0, %v4689
        %v4691 = vpop.f32.mrb[0].mxu0
        %v4692 = vpop.f32.mrb[0].mxu0
        %v4693 = vadd.f32 0.0, %v4692
        %v4694 = vpop.f32.mrb[0].mxu0
        %4695 = vmatprep.mubr.bf16.mxu0 0
        %4696 = vmatmul.mubr.bf16.gmra.mrb[0].mxu0 %v3681
        %v4697 = vpop.f32.mrb[0].mxu0
        %v4698 = vadd.f32 0.0, %v4697
        %v4699 = vpop.f32.mrb[0].mxu0
        %v4700 = vpop.f32.mrb[0].mxu0
        %v4701 = vadd.f32 0.0, %v4700
        %v4702 = vpop.f32.mrb[0].mxu0
        %4703 = vmatprep.mubr.bf16.mxu0 0
        %4704 = vmatmul.mubr.bf16.gmra.mrb[0].mxu0 %v3684
        %v4705 = vpop.f32.mrb[0].mxu0
        %v4706 = vadd.f32 0.0, %v4705
        %v4707 = vpop.f32.mrb[0].mxu0
        %v4708 = vpop.f32.mrb[0].mxu0
        %v4709 = vadd.f32 0.0, %v4708
        %v4710 = vpop.f32.mrb[0].mxu0
        %4711 = vmatprep.mubr.bf16.mxu0 0
        %4712 = vmatmul.mubr.bf16.gmra.mrb[0].mxu0 %v3687
        %v4713 = vpop.f32.mrb[0].mxu0
        %v4714 = vadd.f32 0.0, %v4713
        %v4715 = vpop.f32.mrb[0].mxu0
        %v4716 = vpop.f32.mrb[0].mxu0
        %v4717 = vadd.f32 0.0, %v4716
        %v4718 = vpop.f32.mrb[0].mxu0
        %4719 = vmatprep.mubr.bf16.mxu0 0
        %4720 = vmatmul.mubr.bf16.gmra.mrb[0].mxu0 %v3690
        %v4721 = vpop.f32.mrb[0].mxu0
        %v4722 = vadd.f32 0.0, %v4721
        %v4723 = vpop.f32.mrb[0].mxu0
        %v4724 = vpop.f32.mrb[0].mxu0
        %v4725 = vadd.f32 0.0, %v4724
        %v4726 = vpop.f32.mrb[0].mxu0
        %4727 = vmatprep.mubr.bf16.mxu0 0
        %4728 = vmatmul.mubr.bf16.gmra.mrb[0].mxu0 %v3693
        %v4729 = vpop.f32.mrb[0].mxu0
        %v4730 = vadd.f32 0.0, %v4729
        %v4731 = vpop.f32.mrb[0].mxu0
        %v4732 = vpop.f32.mrb[0].mxu0
        %v4733 = vadd.f32 0.0, %v4732
        %v4734 = vpop.f32.mrb[0].mxu0
        %4735 = vmatprep.mubr.bf16.mxu0 0
        %4736 = vmatmul.mubr.bf16.gmra.mrb[0].mxu0 %v3696
        %v4737 = vpop.f32.mrb[0].mxu0
        %v4738 = vadd.f32 0.0, %v4737
        %v4739 = vpop.f32.mrb[0].mxu0
        %v4740 = vpop.f32.mrb[0].mxu0
        %v4741 = vadd.f32 0.0, %v4740
        %v4742 = vpop.f32.mrb[0].mxu0
        %4743 = vmatprep.mubr.bf16.mxu0 0
        %4744 = vmatmul.mubr.bf16.gmra.mrb[0].mxu0 %v3699
        %v4745 = vpop.f32.mrb[0].mxu0
        %v4746 = vadd.f32 0.0, %v4745
        %v4747 = vpop.f32.mrb[0].mxu0
        %v4748 = vpop.f32.mrb[0].mxu0
        %v4749 = vadd.f32 0.0, %v4748
        %v4750 = vpop.f32.mrb[0].mxu0
        %4751 = vmatprep.mubr.bf16.mxu0 0
        %4752 = vmatmul.mubr.bf16.gmra.mrb[0].mxu0 %v3702
        %v4753 = vpop.f32.mrb[0].mxu0
        %v4754 = vadd.f32 0.0, %v4753
        %v4755 = vpop.f32.mrb[0].mxu0
        %v4756 = vpop.f32.mrb[0].mxu0
        %v4757 = vadd.f32 0.0, %v4756
        %v4758 = vpop.f32.mrb[0].mxu0
        %4759 = vmatprep.mubr.bf16.mxu0 0
        %4760 = vmatmul.mubr.bf16.gmra.mrb[0].mxu0 %v3705
        %v4761 = vpop.f32.mrb[0].mxu0
        %v4762 = vadd.f32 0.0, %v4761
        %v4763 = vpop.f32.mrb[0].mxu0
        %v4764 = vpop.f32.mrb[0].mxu0
        %v4765 = vadd.f32 0.0, %v4764
        %v4766 = vpop.f32.mrb[0].mxu0
        %4767 = vmatprep.mubr.bf16.mxu0 0
        %4768 = vmatmul.mubr.bf16.gmra.mrb[0].mxu0 %v3708
        %v4769 = vpop.f32.mrb[0].mxu0
        %v4770 = vadd.f32 0.0, %v4769
        %v4771 = vpop.f32.mrb[0].mxu0
        %v4772 = vpop.f32.mrb[0].mxu0
        %v4773 = vadd.f32 0.0, %v4772
        %v4774 = vpop.f32.mrb[0].mxu0
        %4775 = vmatprep.mubr.bf16.mxu0 0
        %4776 = vmatmul.mubr.bf16.gmra.mrb[0].mxu0 %v3711
        %v4777 = vpop.f32.mrb[0].mxu0
        %v4778 = vadd.f32 0.0, %v4777
        %v4779 = vpop.f32.mrb[0].mxu0
        %v4780 = vpop.f32.mrb[0].mxu0
        %v4781 = vadd.f32 0.0, %v4780
        %v4782 = vpop.f32.mrb[0].mxu0
        %4783 = vmatprep.mubr.bf16.mxu0 0
        %4784 = vmatmul.mubr.bf16.gmra.mrb[0].mxu0 %v3714
        %v4785 = vpop.f32.mrb[0].mxu0
        %v4786 = vadd.f32 0.0, %v4785
        %v4787 = vpop.f32.mrb[0].mxu0
        %v4788 = vpop.f32.mrb[0].mxu0
        %v4789 = vadd.f32 0.0, %v4788
        %v4790 = vpop.f32.mrb[0].mxu0
        %4791 = vmatprep.mubr.bf16.mxu0 0
        %4792 = vmatmul.mubr.bf16.gmra.mrb[0].mxu0 %v4637
        %v4793 = vpop.f32.mrb[0].mxu0
        %v4794 = vadd.f32 0.0, %v4793
        %v4795 = vpop.f32.mrb[0].mxu0
        %v4796 = vpop.f32.mrb[0].mxu0
        %v4797 = vadd.f32 0.0, %v4796
        %v4798 = vpop.f32.mrb[0].mxu0
        %4799 = vdwg.mxu0
        %v4800 = vadd.f32 %v4581, %v4674
        %v4801 = vadd.f32 %v4582, %v4677
        %v4802 = vadd.f32 %v4583, %v4682
        %v4803 = vadd.f32 %v4584, %v4685
        %v4804 = vadd.f32 %v4585, %v4690
        %v4805 = vadd.f32 %v4586, %v4693
        %v4806 = vadd.f32 %v4587, %v4698
        %v4807 = vadd.f32 %v4588, %v4701
        %v4808 = vadd.f32 %v4589, %v4706
        %v4809 = vadd.f32 %v4590, %v4709
        %v4810 = vadd.f32 %v4591, %v4714
        %v4811 = vadd.f32 %v4592, %v4717
        %v4812 = vadd.f32 %v4593, %v4722
        %v4813 = vadd.f32 %v4594, %v4725
        %v4814 = vadd.f32 %v4595, %v4730
        %v4815 = vadd.f32 %v4596, %v4733
        %v4816 = vadd.f32 %v4597, %v4738
        %v4817 = vadd.f32 %v4598, %v4741
        %v4818 = vadd.f32 %v4599, %v4746
        %v4819 = vadd.f32 %v4600, %v4749
        %v4820 = vadd.f32 %v4601, %v4754
        %v4821 = vadd.f32 %v4602, %v4757
        %v4822 = vadd.f32 %v4603, %v4762
        %v4823 = vadd.f32 %v4604, %v4765
        %v4824 = vadd.f32 %v4605, %v4770
        %v4825 = vadd.f32 %v4606, %v4773
        %v4826 = vadd.f32 %v4607, %v4778
        %v4827 = vadd.f32 %v4608, %v4781
        %v4828 = vadd.f32 %v4609, %v4786
        %v4829 = vadd.f32 %v4610, %v4789
        %v4830 = vadd.f32 %v4611, %v4794
        %v4831 = vadd.f32 %v4612, %v4797
        %v4834 = vrot.slane %v3477, 1
        %v4835 = vrot.slane %v3478, 1
        %v4836 = vsel %vm1361, %v4834, %v4835
        %v4841 = vunpack.c.l.b16 %v3265
        %v4842 = vunpack.c.l.b16 %v3266
        %v4843 = vunpack.c.l.b16 %v3267
        %v4844 = vunpack.c.l.b16 %v3268
        %v4845 = vpack.c.b16 %v4842, %v4841
        %v4846 = vpack.c.b16 %v4844, %v4843
        %v4850 = vsel %vm915, %v4836, 0
        %4852 = vmatprep.subr.bf16.mxu0 0
        %4853 = vmatpush1.bf16.msra.mxu0 %v4845
        %4854 = vmatprep.subr.bf16.mxu0 0
        %4855 = vmatpush1.bf16.msra.mxu0 %v4846
        %4856 = vmatprep.subr.bf16.mxu0 0
        %4857 = vmatpush1.bf16.msra.mxu0 0
        %4858 = vmatprep.subr.bf16.mxu0 0
        %4859 = vmatpush1.bf16.msra.mxu0 0
        %4860 = vmatprep.subr.bf16.mxu0 0
        %4861 = vmatpush1.bf16.msra.mxu0 0
        %4862 = vmatprep.subr.bf16.mxu0 0
        %4863 = vmatpush1.bf16.msra.mxu0 0
        %4864 = vmatprep.subr.bf16.mxu0 0
        %4865 = vmatpush1.bf16.msra.mxu0 0
        %4866 = vmatprep.subr.bf16.mxu0 0
        %4867 = vmatpush1.bf16.msra.mxu0 0
        %4868 = vmatprep.subr.bf16.mxu0 0
        %4869 = vmatpush1.bf16.msra.mxu0 0
        %4870 = vmatprep.subr.bf16.mxu0 0
        %4871 = vmatpush1.bf16.msra.mxu0 0
        %4872 = vmatprep.subr.bf16.mxu0 0
        %4873 = vmatpush1.bf16.msra.mxu0 0
        %4874 = vmatprep.subr.bf16.mxu0 0
        %4875 = vmatpush1.bf16.msra.mxu0 0
        %4876 = vmatprep.subr.bf16.mxu0 0
        %4877 = vmatpush1.bf16.msra.mxu0 0
        %4878 = vmatprep.subr.bf16.mxu0 0
        %4879 = vmatpush1.bf16.msra.mxu0 0
        %4880 = vmatprep.subr.bf16.mxu0 0
        %4881 = vmatpush1.bf16.msra.mxu0 0
        %4882 = vmatprep.subr.bf16.mxu0 0
        %4883 = vmatpush1.bf16.msra.mxu0 0
        %4884 = vmatprep.mubr.bf16.mxu0 0
        %4885 = vmatmul.mubr.bf16.gmra.mrb[0].mxu0 %v4168
        %v4886 = vpop.f32.mrb[0].mxu0
        %v4887 = vadd.f32 0.0, %v4886
        %v4888 = vpop.f32.mrb[0].mxu0
        %v4889 = vpop.f32.mrb[0].mxu0
        %v4890 = vadd.f32 0.0, %v4889
        %v4891 = vpop.f32.mrb[0].mxu0
        %4892 = vmatprep.mubr.bf16.mxu0 0
        %4893 = vmatmul.mubr.bf16.gmra.mrb[0].mxu0 %v4171
        %v4894 = vpop.f32.mrb[0].mxu0
        %v4895 = vadd.f32 0.0, %v4894
        %v4896 = vpop.f32.mrb[0].mxu0
        %v4897 = vpop.f32.mrb[0].mxu0
        %v4898 = vadd.f32 0.0, %v4897
        %v4899 = vpop.f32.mrb[0].mxu0
        %4900 = vmatprep.mubr.bf16.mxu0 0
        %4901 = vmatmul.mubr.bf16.gmra.mrb[0].mxu0 %v4174
        %v4902 = vpop.f32.mrb[0].mxu0
        %v4903 = vadd.f32 0.0, %v4902
        %v4904 = vpop.f32.mrb[0].mxu0
        %v4905 = vpop.f32.mrb[0].mxu0
        %v4906 = vadd.f32 0.0, %v4905
        %v4907 = vpop.f32.mrb[0].mxu0
        %4908 = vmatprep.mubr.bf16.mxu0 0
        %4909 = vmatmul.mubr.bf16.gmra.mrb[0].mxu0 %v4177
        %v4910 = vpop.f32.mrb[0].mxu0
        %v4911 = vadd.f32 0.0, %v4910
        %v4912 = vpop.f32.mrb[0].mxu0
        %v4913 = vpop.f32.mrb[0].mxu0
        %v4914 = vadd.f32 0.0, %v4913
        %v4915 = vpop.f32.mrb[0].mxu0
        %4916 = vmatprep.mubr.bf16.mxu0 0
        %4917 = vmatmul.mubr.bf16.gmra.mrb[0].mxu0 %v4180
        %v4918 = vpop.f32.mrb[0].mxu0
        %v4919 = vadd.f32 0.0, %v4918
        %v4920 = vpop.f32.mrb[0].mxu0
        %v4921 = vpop.f32.mrb[0].mxu0
        %v4922 = vadd.f32 0.0, %v4921
        %v4923 = vpop.f32.mrb[0].mxu0
        %4924 = vmatprep.mubr.bf16.mxu0 0
        %4925 = vmatmul.mubr.bf16.gmra.mrb[0].mxu0 %v4183
        %v4926 = vpop.f32.mrb[0].mxu0
        %v4927 = vadd.f32 0.0, %v4926
        %v4928 = vpop.f32.mrb[0].mxu0
        %v4929 = vpop.f32.mrb[0].mxu0
        %v4930 = vadd.f32 0.0, %v4929
        %v4931 = vpop.f32.mrb[0].mxu0
        %4932 = vmatprep.mubr.bf16.mxu0 0
        %4933 = vmatmul.mubr.bf16.gmra.mrb[0].mxu0 %v4186
        %v4934 = vpop.f32.mrb[0].mxu0
        %v4935 = vadd.f32 0.0, %v4934
        %v4936 = vpop.f32.mrb[0].mxu0
        %v4937 = vpop.f32.mrb[0].mxu0
        %v4938 = vadd.f32 0.0, %v4937
        %v4939 = vpop.f32.mrb[0].mxu0
        %4940 = vmatprep.mubr.bf16.mxu0 0
        %4941 = vmatmul.mubr.bf16.gmra.mrb[0].mxu0 %v4189
        %v4942 = vpop.f32.mrb[0].mxu0
        %v4943 = vadd.f32 0.0, %v4942
        %v4944 = vpop.f32.mrb[0].mxu0
        %v4945 = vpop.f32.mrb[0].mxu0
        %v4946 = vadd.f32 0.0, %v4945
        %v4947 = vpop.f32.mrb[0].mxu0
        %4948 = vmatprep.mubr.bf16.mxu0 0
        %4949 = vmatmul.mubr.bf16.gmra.mrb[0].mxu0 %v4192
        %v4950 = vpop.f32.mrb[0].mxu0
        %v4951 = vadd.f32 0.0, %v4950
        %v4952 = vpop.f32.mrb[0].mxu0
        %v4953 = vpop.f32.mrb[0].mxu0
        %v4954 = vadd.f32 0.0, %v4953
        %v4955 = vpop.f32.mrb[0].mxu0
        %4956 = vmatprep.mubr.bf16.mxu0 0
        %4957 = vmatmul.mubr.bf16.gmra.mrb[0].mxu0 %v4195
        %v4958 = vpop.f32.mrb[0].mxu0
        %v4959 = vadd.f32 0.0, %v4958
        %v4960 = vpop.f32.mrb[0].mxu0
        %v4961 = vpop.f32.mrb[0].mxu0
        %v4962 = vadd.f32 0.0, %v4961
        %v4963 = vpop.f32.mrb[0].mxu0
        %4964 = vmatprep.mubr.bf16.mxu0 0
        %4965 = vmatmul.mubr.bf16.gmra.mrb[0].mxu0 %v4198
        %v4966 = vpop.f32.mrb[0].mxu0
        %v4967 = vadd.f32 0.0, %v4966
        %v4968 = vpop.f32.mrb[0].mxu0
        %v4969 = vpop.f32.mrb[0].mxu0
        %v4970 = vadd.f32 0.0, %v4969
        %v4971 = vpop.f32.mrb[0].mxu0
        %4972 = vmatprep.mubr.bf16.mxu0 0
        %4973 = vmatmul.mubr.bf16.gmra.mrb[0].mxu0 %v4201
        %v4974 = vpop.f32.mrb[0].mxu0
        %v4975 = vadd.f32 0.0, %v4974
        %v4976 = vpop.f32.mrb[0].mxu0
        %v4977 = vpop.f32.mrb[0].mxu0
        %v4978 = vadd.f32 0.0, %v4977
        %v4979 = vpop.f32.mrb[0].mxu0
        %4980 = vmatprep.mubr.bf16.mxu0 0
        %4981 = vmatmul.mubr.bf16.gmra.mrb[0].mxu0 %v4204
        %v4982 = vpop.f32.mrb[0].mxu0
        %v4983 = vadd.f32 0.0, %v4982
        %v4984 = vpop.f32.mrb[0].mxu0
        %v4985 = vpop.f32.mrb[0].mxu0
        %v4986 = vadd.f32 0.0, %v4985
        %v4987 = vpop.f32.mrb[0].mxu0
        %4988 = vmatprep.mubr.bf16.mxu0 0
        %4989 = vmatmul.mubr.bf16.gmra.mrb[0].mxu0 %v4207
        %v4990 = vpop.f32.mrb[0].mxu0
        %v4991 = vadd.f32 0.0, %v4990
        %v4992 = vpop.f32.mrb[0].mxu0
        %v4993 = vpop.f32.mrb[0].mxu0
        %v4994 = vadd.f32 0.0, %v4993
        %v4995 = vpop.f32.mrb[0].mxu0
        %4996 = vmatprep.mubr.bf16.mxu0 0
        %4997 = vmatmul.mubr.bf16.gmra.mrb[0].mxu0 %v4210
        %v4998 = vpop.f32.mrb[0].mxu0
        %v4999 = vadd.f32 0.0, %v4998
        %v5000 = vpop.f32.mrb[0].mxu0
        %v5001 = vpop.f32.mrb[0].mxu0
        %v5002 = vadd.f32 0.0, %v5001
        %v5003 = vpop.f32.mrb[0].mxu0
        %5004 = vmatprep.mubr.bf16.mxu0 0
        %5005 = vmatmul.mubr.bf16.gmra.mrb[0].mxu0 %v4850
        %v5006 = vpop.f32.mrb[0].mxu0
        %v5007 = vadd.f32 0.0, %v5006
        %v5008 = vpop.f32.mrb[0].mxu0
        %v5009 = vpop.f32.mrb[0].mxu0
        %v5010 = vadd.f32 0.0, %v5009
        %v5011 = vpop.f32.mrb[0].mxu0
        %5012 = vdwg.mxu0
        %v5013 = vadd.f32 %v4800, %v4887
        %v5014 = vadd.f32 %v4801, %v4890
        %v5015 = vadd.f32 %v4802, %v4895
        %v5016 = vadd.f32 %v4803, %v4898
        %v5017 = vadd.f32 %v4804, %v4903
        %v5018 = vadd.f32 %v4805, %v4906
        %v5019 = vadd.f32 %v4806, %v4911
        %v5020 = vadd.f32 %v4807, %v4914
        %v5021 = vadd.f32 %v4808, %v4919
        %v5022 = vadd.f32 %v4809, %v4922
        %v5023 = vadd.f32 %v4810, %v4927
        %v5024 = vadd.f32 %v4811, %v4930
        %v5025 = vadd.f32 %v4812, %v4935
        %v5026 = vadd.f32 %v4813, %v4938
        %v5027 = vadd.f32 %v4814, %v4943
        %v5028 = vadd.f32 %v4815, %v4946
        %v5029 = vadd.f32 %v4816, %v4951
        %v5030 = vadd.f32 %v4817, %v4954
        %v5031 = vadd.f32 %v4818, %v4959
        %v5032 = vadd.f32 %v4819, %v4962
        %v5033 = vadd.f32 %v4820, %v4967
        %v5034 = vadd.f32 %v4821, %v4970
        %v5035 = vadd.f32 %v4822, %v4975
        %v5036 = vadd.f32 %v4823, %v4978
        %v5037 = vadd.f32 %v4824, %v4983
        %v5038 = vadd.f32 %v4825, %v4986
        %v5039 = vadd.f32 %v4826, %v4991
        %v5040 = vadd.f32 %v4827, %v4994
        %v5041 = vadd.f32 %v4828, %v4999
        %v5042 = vadd.f32 %v4829, %v5002
        %v5043 = vadd.f32 %v4830, %v5007
        %v5044 = vadd.f32 %v4831, %v5010
        %v5049 = vunpack.c.l.b16 %v3269
        %v5050 = vunpack.c.l.b16 %v3270
        %v5051 = vunpack.c.l.b16 %v3271
        %v5052 = vunpack.c.l.b16 %v3272
        %v5053 = vpack.c.b16 %v5050, %v5049
        %v5054 = vpack.c.b16 %v5052, %v5051
        %5057 = vmatprep.subr.bf16.mxu0 0
        %5058 = vmatpush1.bf16.msra.mxu0 %v5053
        %5059 = vmatprep.subr.bf16.mxu0 0
        %5060 = vmatpush1.bf16.msra.mxu0 %v5054
        %5061 = vmatprep.subr.bf16.mxu0 0
        %5062 = vmatpush1.bf16.msra.mxu0 0
        %5063 = vmatprep.subr.bf16.mxu0 0
        %5064 = vmatpush1.bf16.msra.mxu0 0
        %5065 = vmatprep.subr.bf16.mxu0 0
        %5066 = vmatpush1.bf16.msra.mxu0 0
        %5067 = vmatprep.subr.bf16.mxu0 0
        %5068 = vmatpush1.bf16.msra.mxu0 0
        %5069 = vmatprep.subr.bf16.mxu0 0
        %5070 = vmatpush1.bf16.msra.mxu0 0
        %5071 = vmatprep.subr.bf16.mxu0 0
        %5072 = vmatpush1.bf16.msra.mxu0 0
        %5073 = vmatprep.subr.bf16.mxu0 0
        %5074 = vmatpush1.bf16.msra.mxu0 0
        %5075 = vmatprep.subr.bf16.mxu0 0
        %5076 = vmatpush1.bf16.msra.mxu0 0
        %5077 = vmatprep.subr.bf16.mxu0 0
        %5078 = vmatpush1.bf16.msra.mxu0 0
        %5079 = vmatprep.subr.bf16.mxu0 0
        %5080 = vmatpush1.bf16.msra.mxu0 0
        %5081 = vmatprep.subr.bf16.mxu0 0
        %5082 = vmatpush1.bf16.msra.mxu0 0
        %5083 = vmatprep.subr.bf16.mxu0 0
        %5084 = vmatpush1.bf16.msra.mxu0 0
        %5085 = vmatprep.subr.bf16.mxu0 0
        %5086 = vmatpush1.bf16.msra.mxu0 0
        %5087 = vmatprep.subr.bf16.mxu0 0
        %5088 = vmatpush1.bf16.msra.mxu0 0
        %5089 = vmatprep.mubr.bf16.mxu0 0
        %5090 = vmatmul.mubr.bf16.gmra.mrb[0].mxu0 %v3891
        %v5091 = vpop.f32.mrb[0].mxu0
        %v5092 = vadd.f32 0.0, %v5091
        %v5093 = vpop.f32.mrb[0].mxu0
        %v5094 = vpop.f32.mrb[0].mxu0
        %v5095 = vadd.f32 0.0, %v5094
        %v5096 = vpop.f32.mrb[0].mxu0
        %5097 = vmatprep.mubr.bf16.mxu0 0
        %5098 = vmatmul.mubr.bf16.gmra.mrb[0].mxu0 %v3893
        %v5099 = vpop.f32.mrb[0].mxu0
        %v5100 = vadd.f32 0.0, %v5099
        %v5101 = vpop.f32.mrb[0].mxu0
        %v5102 = vpop.f32.mrb[0].mxu0
        %v5103 = vadd.f32 0.0, %v5102
        %v5104 = vpop.f32.mrb[0].mxu0
        %5105 = vmatprep.mubr.bf16.mxu0 0
        %5106 = vmatmul.mubr.bf16.gmra.mrb[0].mxu0 %v3895
        %v5107 = vpop.f32.mrb[0].mxu0
        %v5108 = vadd.f32 0.0, %v5107
        %v5109 = vpop.f32.mrb[0].mxu0
        %v5110 = vpop.f32.mrb[0].mxu0
        %v5111 = vadd.f32 0.0, %v5110
        %v5112 = vpop.f32.mrb[0].mxu0
        %5113 = vmatprep.mubr.bf16.mxu0 0
        %5114 = vmatmul.mubr.bf16.gmra.mrb[0].mxu0 %v3897
        %v5115 = vpop.f32.mrb[0].mxu0
        %v5116 = vadd.f32 0.0, %v5115
        %v5117 = vpop.f32.mrb[0].mxu0
        %v5118 = vpop.f32.mrb[0].mxu0
        %v5119 = vadd.f32 0.0, %v5118
        %v5120 = vpop.f32.mrb[0].mxu0
        %5121 = vmatprep.mubr.bf16.mxu0 0
        %5122 = vmatmul.mubr.bf16.gmra.mrb[0].mxu0 %v3899
        %v5123 = vpop.f32.mrb[0].mxu0
        %v5124 = vadd.f32 0.0, %v5123
        %v5125 = vpop.f32.mrb[0].mxu0
        %v5126 = vpop.f32.mrb[0].mxu0
        %v5127 = vadd.f32 0.0, %v5126
        %v5128 = vpop.f32.mrb[0].mxu0
        %5129 = vmatprep.mubr.bf16.mxu0 0
        %5130 = vmatmul.mubr.bf16.gmra.mrb[0].mxu0 %v3901
        %v5131 = vpop.f32.mrb[0].mxu0
        %v5132 = vadd.f32 0.0, %v5131
        %v5133 = vpop.f32.mrb[0].mxu0
        %v5134 = vpop.f32.mrb[0].mxu0
        %v5135 = vadd.f32 0.0, %v5134
        %v5136 = vpop.f32.mrb[0].mxu0
        %5137 = vmatprep.mubr.bf16.mxu0 0
        %5138 = vmatmul.mubr.bf16.gmra.mrb[0].mxu0 %v3903
        %v5139 = vpop.f32.mrb[0].mxu0
        %v5140 = vadd.f32 0.0, %v5139
        %v5141 = vpop.f32.mrb[0].mxu0
        %v5142 = vpop.f32.mrb[0].mxu0
        %v5143 = vadd.f32 0.0, %v5142
        %v5144 = vpop.f32.mrb[0].mxu0
        %5145 = vmatprep.mubr.bf16.mxu0 0
        %5146 = vmatmul.mubr.bf16.gmra.mrb[0].mxu0 %v3905
        %v5147 = vpop.f32.mrb[0].mxu0
        %v5148 = vadd.f32 0.0, %v5147
        %v5149 = vpop.f32.mrb[0].mxu0
        %v5150 = vpop.f32.mrb[0].mxu0
        %v5151 = vadd.f32 0.0, %v5150
        %v5152 = vpop.f32.mrb[0].mxu0
        %5153 = vmatprep.mubr.bf16.mxu0 0
        %5154 = vmatmul.mubr.bf16.gmra.mrb[0].mxu0 %v3907
        %v5155 = vpop.f32.mrb[0].mxu0
        %v5156 = vadd.f32 0.0, %v5155
        %v5157 = vpop.f32.mrb[0].mxu0
        %v5158 = vpop.f32.mrb[0].mxu0
        %v5159 = vadd.f32 0.0, %v5158
        %v5160 = vpop.f32.mrb[0].mxu0
        %5161 = vmatprep.mubr.bf16.mxu0 0
        %5162 = vmatmul.mubr.bf16.gmra.mrb[0].mxu0 %v3909
        %v5163 = vpop.f32.mrb[0].mxu0
        %v5164 = vadd.f32 0.0, %v5163
        %v5165 = vpop.f32.mrb[0].mxu0
        %v5166 = vpop.f32.mrb[0].mxu0
        %v5167 = vadd.f32 0.0, %v5166
        %v5168 = vpop.f32.mrb[0].mxu0
        %5169 = vmatprep.mubr.bf16.mxu0 0
        %5170 = vmatmul.mubr.bf16.gmra.mrb[0].mxu0 %v3911
        %v5171 = vpop.f32.mrb[0].mxu0
        %v5172 = vadd.f32 0.0, %v5171
        %v5173 = vpop.f32.mrb[0].mxu0
        %v5174 = vpop.f32.mrb[0].mxu0
        %v5175 = vadd.f32 0.0, %v5174
        %v5176 = vpop.f32.mrb[0].mxu0
        %5177 = vmatprep.mubr.bf16.mxu0 0
        %5178 = vmatmul.mubr.bf16.gmra.mrb[0].mxu0 %v3913
        %v5179 = vpop.f32.mrb[0].mxu0
        %v5180 = vadd.f32 0.0, %v5179
        %v5181 = vpop.f32.mrb[0].mxu0
        %v5182 = vpop.f32.mrb[0].mxu0
        %v5183 = vadd.f32 0.0, %v5182
        %v5184 = vpop.f32.mrb[0].mxu0
        %5185 = vmatprep.mubr.bf16.mxu0 0
        %5186 = vmatmul.mubr.bf16.gmra.mrb[0].mxu0 %v3915
        %v5187 = vpop.f32.mrb[0].mxu0
        %v5188 = vadd.f32 0.0, %v5187
        %v5189 = vpop.f32.mrb[0].mxu0
        %v5190 = vpop.f32.mrb[0].mxu0
        %v5191 = vadd.f32 0.0, %v5190
        %v5192 = vpop.f32.mrb[0].mxu0
        %5193 = vmatprep.mubr.bf16.mxu0 0
        %5194 = vmatmul.mubr.bf16.gmra.mrb[0].mxu0 %v3917
        %v5195 = vpop.f32.mrb[0].mxu0
        %v5196 = vadd.f32 0.0, %v5195
        %v5197 = vpop.f32.mrb[0].mxu0
        %v5198 = vpop.f32.mrb[0].mxu0
        %v5199 = vadd.f32 0.0, %v5198
        %v5200 = vpop.f32.mrb[0].mxu0
        %5201 = vmatprep.mubr.bf16.mxu0 0
        %5202 = vmatmul.mubr.bf16.gmra.mrb[0].mxu0 %v4418
        %v5203 = vpop.f32.mrb[0].mxu0
        %v5204 = vadd.f32 0.0, %v5203
        %v5205 = vpop.f32.mrb[0].mxu0
        %v5206 = vpop.f32.mrb[0].mxu0
        %v5207 = vadd.f32 0.0, %v5206
        %v5208 = vpop.f32.mrb[0].mxu0
        %5209 = vmatprep.mubr.bf16.mxu0 0
        %5210 = vmatmul.mubr.bf16.gmra.mrb[0].mxu0 %v1137
        %v5211 = vpop.f32.mrb[0].mxu0
        %v5212 = vadd.f32 0.0, %v5211
        %v5213 = vpop.f32.mrb[0].mxu0
        %v5214 = vpop.f32.mrb[0].mxu0
        %v5215 = vadd.f32 0.0, %v5214
        %v5216 = vpop.f32.mrb[0].mxu0
        %5217 = vdwg.mxu0
        %v5218 = vadd.f32 %v5013, %v5092
        %v5219 = vadd.f32 %v5014, %v5095
        %v5220 = vadd.f32 %v5015, %v5100
        %v5221 = vadd.f32 %v5016, %v5103
        %v5222 = vadd.f32 %v5017, %v5108
        %v5223 = vadd.f32 %v5018, %v5111
        %v5224 = vadd.f32 %v5019, %v5116
        %v5225 = vadd.f32 %v5020, %v5119
        %v5226 = vadd.f32 %v5021, %v5124
        %v5227 = vadd.f32 %v5022, %v5127
        %v5228 = vadd.f32 %v5023, %v5132
        %v5229 = vadd.f32 %v5024, %v5135
        %v5230 = vadd.f32 %v5025, %v5140
        %v5231 = vadd.f32 %v5026, %v5143
        %v5232 = vadd.f32 %v5027, %v5148
        %v5233 = vadd.f32 %v5028, %v5151
        %v5234 = vadd.f32 %v5029, %v5156
        %v5235 = vadd.f32 %v5030, %v5159
        %v5236 = vadd.f32 %v5031, %v5164
        %v5237 = vadd.f32 %v5032, %v5167
        %v5238 = vadd.f32 %v5033, %v5172
        %v5239 = vadd.f32 %v5034, %v5175
        %v5240 = vadd.f32 %v5035, %v5180
        %v5241 = vadd.f32 %v5036, %v5183
        %v5242 = vadd.f32 %v5037, %v5188
        %v5243 = vadd.f32 %v5038, %v5191
        %v5244 = vadd.f32 %v5039, %v5196
        %v5245 = vadd.f32 %v5040, %v5199
        %v5246 = vadd.f32 %v5041, %v5204
        %v5247 = vadd.f32 %v5042, %v5207
        %v5248 = vadd.f32 %v5043, %v5212
        %v5249 = vadd.f32 %v5044, %v5215
        %v5254 = vunpack.c.l.b16 %v3273
        %v5255 = vunpack.c.l.b16 %v3274
        %v5256 = vunpack.c.l.b16 %v3275
        %v5257 = vunpack.c.l.b16 %v3276
        %v5258 = vpack.c.b16 %v5255, %v5254
        %v5259 = vpack.c.b16 %v5257, %v5256
        %5262 = vmatprep.subr.bf16.mxu0 0
        %5263 = vmatpush1.bf16.msra.mxu0 %v5258
        %5264 = vmatprep.subr.bf16.mxu0 0
        %5265 = vmatpush1.bf16.msra.mxu0 %v5259
        %5266 = vmatprep.subr.bf16.mxu0 0
        %5267 = vmatpush1.bf16.msra.mxu0 0
        %5268 = vmatprep.subr.bf16.mxu0 0
        %5269 = vmatpush1.bf16.msra.mxu0 0
        %5270 = vmatprep.subr.bf16.mxu0 0
        %5271 = vmatpush1.bf16.msra.mxu0 0
        %5272 = vmatprep.subr.bf16.mxu0 0
        %5273 = vmatpush1.bf16.msra.mxu0 0
        %5274 = vmatprep.subr.bf16.mxu0 0
        %5275 = vmatpush1.bf16.msra.mxu0 0
        %5276 = vmatprep.subr.bf16.mxu0 0
        %5277 = vmatpush1.bf16.msra.mxu0 0
        %5278 = vmatprep.subr.bf16.mxu0 0
        %5279 = vmatpush1.bf16.msra.mxu0 0
        %5280 = vmatprep.subr.bf16.mxu0 0
        %5281 = vmatpush1.bf16.msra.mxu0 0
        %5282 = vmatprep.subr.bf16.mxu0 0
        %5283 = vmatpush1.bf16.msra.mxu0 0
        %5284 = vmatprep.subr.bf16.mxu0 0
        %5285 = vmatpush1.bf16.msra.mxu0 0
        %5286 = vmatprep.subr.bf16.mxu0 0
        %5287 = vmatpush1.bf16.msra.mxu0 0
        %5288 = vmatprep.subr.bf16.mxu0 0
        %5289 = vmatpush1.bf16.msra.mxu0 0
        %5290 = vmatprep.subr.bf16.mxu0 0
        %5291 = vmatpush1.bf16.msra.mxu0 0
        %5292 = vmatprep.subr.bf16.mxu0 0
        %5293 = vmatpush1.bf16.msra.mxu0 0
        %5294 = vmatprep.mubr.bf16.mxu0 0
        %5295 = vmatmul.mubr.bf16.gmra.mrb[0].mxu0 %v3675
        %v5296 = vpop.f32.mrb[0].mxu0
        %v5297 = vadd.f32 0.0, %v5296
        %v5298 = vpop.f32.mrb[0].mxu0
        %v5299 = vpop.f32.mrb[0].mxu0
        %v5300 = vadd.f32 0.0, %v5299
        %v5301 = vpop.f32.mrb[0].mxu0
        %5302 = vmatprep.mubr.bf16.mxu0 0
        %5303 = vmatmul.mubr.bf16.gmra.mrb[0].mxu0 %v3678
        %v5304 = vpop.f32.mrb[0].mxu0
        %v5305 = vadd.f32 0.0, %v5304
        %v5306 = vpop.f32.mrb[0].mxu0
        %v5307 = vpop.f32.mrb[0].mxu0
        %v5308 = vadd.f32 0.0, %v5307
        %v5309 = vpop.f32.mrb[0].mxu0
        %5310 = vmatprep.mubr.bf16.mxu0 0
        %5311 = vmatmul.mubr.bf16.gmra.mrb[0].mxu0 %v3681
        %v5312 = vpop.f32.mrb[0].mxu0
        %v5313 = vadd.f32 0.0, %v5312
        %v5314 = vpop.f32.mrb[0].mxu0
        %v5315 = vpop.f32.mrb[0].mxu0
        %v5316 = vadd.f32 0.0, %v5315
        %v5317 = vpop.f32.mrb[0].mxu0
        %5318 = vmatprep.mubr.bf16.mxu0 0
        %5319 = vmatmul.mubr.bf16.gmra.mrb[0].mxu0 %v3684
        %v5320 = vpop.f32.mrb[0].mxu0
        %v5321 = vadd.f32 0.0, %v5320
        %v5322 = vpop.f32.mrb[0].mxu0
        %v5323 = vpop.f32.mrb[0].mxu0
        %v5324 = vadd.f32 0.0, %v5323
        %v5325 = vpop.f32.mrb[0].mxu0
        %5326 = vmatprep.mubr.bf16.mxu0 0
        %5327 = vmatmul.mubr.bf16.gmra.mrb[0].mxu0 %v3687
        %v5328 = vpop.f32.mrb[0].mxu0
        %v5329 = vadd.f32 0.0, %v5328
        %v5330 = vpop.f32.mrb[0].mxu0
        %v5331 = vpop.f32.mrb[0].mxu0
        %v5332 = vadd.f32 0.0, %v5331
        %v5333 = vpop.f32.mrb[0].mxu0
        %5334 = vmatprep.mubr.bf16.mxu0 0
        %5335 = vmatmul.mubr.bf16.gmra.mrb[0].mxu0 %v3690
        %v5336 = vpop.f32.mrb[0].mxu0
        %v5337 = vadd.f32 0.0, %v5336
        %v5338 = vpop.f32.mrb[0].mxu0
        %v5339 = vpop.f32.mrb[0].mxu0
        %v5340 = vadd.f32 0.0, %v5339
        %v5341 = vpop.f32.mrb[0].mxu0
        %5342 = vmatprep.mubr.bf16.mxu0 0
        %5343 = vmatmul.mubr.bf16.gmra.mrb[0].mxu0 %v3693
        %v5344 = vpop.f32.mrb[0].mxu0
        %v5345 = vadd.f32 0.0, %v5344
        %v5346 = vpop.f32.mrb[0].mxu0
        %v5347 = vpop.f32.mrb[0].mxu0
        %v5348 = vadd.f32 0.0, %v5347
        %v5349 = vpop.f32.mrb[0].mxu0
        %5350 = vmatprep.mubr.bf16.mxu0 0
        %5351 = vmatmul.mubr.bf16.gmra.mrb[0].mxu0 %v3696
        %v5352 = vpop.f32.mrb[0].mxu0
        %v5353 = vadd.f32 0.0, %v5352
        %v5354 = vpop.f32.mrb[0].mxu0
        %v5355 = vpop.f32.mrb[0].mxu0
        %v5356 = vadd.f32 0.0, %v5355
        %v5357 = vpop.f32.mrb[0].mxu0
        %5358 = vmatprep.mubr.bf16.mxu0 0
        %5359 = vmatmul.mubr.bf16.gmra.mrb[0].mxu0 %v3699
        %v5360 = vpop.f32.mrb[0].mxu0
        %v5361 = vadd.f32 0.0, %v5360
        %v5362 = vpop.f32.mrb[0].mxu0
        %v5363 = vpop.f32.mrb[0].mxu0
        %v5364 = vadd.f32 0.0, %v5363
        %v5365 = vpop.f32.mrb[0].mxu0
        %5366 = vmatprep.mubr.bf16.mxu0 0
        %5367 = vmatmul.mubr.bf16.gmra.mrb[0].mxu0 %v3702
        %v5368 = vpop.f32.mrb[0].mxu0
        %v5369 = vadd.f32 0.0, %v5368
        %v5370 = vpop.f32.mrb[0].mxu0
        %v5371 = vpop.f32.mrb[0].mxu0
        %v5372 = vadd.f32 0.0, %v5371
        %v5373 = vpop.f32.mrb[0].mxu0
        %5374 = vmatprep.mubr.bf16.mxu0 0
        %5375 = vmatmul.mubr.bf16.gmra.mrb[0].mxu0 %v3705
        %v5376 = vpop.f32.mrb[0].mxu0
        %v5377 = vadd.f32 0.0, %v5376
        %v5378 = vpop.f32.mrb[0].mxu0
        %v5379 = vpop.f32.mrb[0].mxu0
        %v5380 = vadd.f32 0.0, %v5379
        %v5381 = vpop.f32.mrb[0].mxu0
        %5382 = vmatprep.mubr.bf16.mxu0 0
        %5383 = vmatmul.mubr.bf16.gmra.mrb[0].mxu0 %v3708
        %v5384 = vpop.f32.mrb[0].mxu0
        %v5385 = vadd.f32 0.0, %v5384
        %v5386 = vpop.f32.mrb[0].mxu0
        %v5387 = vpop.f32.mrb[0].mxu0
        %v5388 = vadd.f32 0.0, %v5387
        %v5389 = vpop.f32.mrb[0].mxu0
        %5390 = vmatprep.mubr.bf16.mxu0 0
        %5391 = vmatmul.mubr.bf16.gmra.mrb[0].mxu0 %v3711
        %v5392 = vpop.f32.mrb[0].mxu0
        %v5393 = vadd.f32 0.0, %v5392
        %v5394 = vpop.f32.mrb[0].mxu0
        %v5395 = vpop.f32.mrb[0].mxu0
        %v5396 = vadd.f32 0.0, %v5395
        %v5397 = vpop.f32.mrb[0].mxu0
        %5398 = vmatprep.mubr.bf16.mxu0 0
        %5399 = vmatmul.mubr.bf16.gmra.mrb[0].mxu0 %v3714
        %v5400 = vpop.f32.mrb[0].mxu0
        %v5401 = vadd.f32 0.0, %v5400
        %v5402 = vpop.f32.mrb[0].mxu0
        %v5403 = vpop.f32.mrb[0].mxu0
        %v5404 = vadd.f32 0.0, %v5403
        %v5405 = vpop.f32.mrb[0].mxu0
        %5406 = vmatprep.mubr.bf16.mxu0 0
        %5407 = vmatmul.mubr.bf16.gmra.mrb[0].mxu0 %v4637
        %v5408 = vpop.f32.mrb[0].mxu0
        %v5409 = vadd.f32 0.0, %v5408
        %v5410 = vpop.f32.mrb[0].mxu0
        %v5411 = vpop.f32.mrb[0].mxu0
        %v5412 = vadd.f32 0.0, %v5411
        %v5413 = vpop.f32.mrb[0].mxu0
        %5414 = vmatprep.mubr.bf16.mxu0 0
        %5415 = vmatmul.mubr.bf16.gmra.mrb[0].mxu0 %v917
        %v5416 = vpop.f32.mrb[0].mxu0
        %v5417 = vadd.f32 0.0, %v5416
        %v5418 = vpop.f32.mrb[0].mxu0
        %v5419 = vpop.f32.mrb[0].mxu0
        %v5420 = vadd.f32 0.0, %v5419
        %v5421 = vpop.f32.mrb[0].mxu0
        %5422 = vdwg.mxu0
        %v5423 = vadd.f32 %v5218, %v5297
        %v5424 = vadd.f32 %v5219, %v5300
        %v5425 = vadd.f32 %v5220, %v5305
        %v5426 = vadd.f32 %v5221, %v5308
        %v5427 = vadd.f32 %v5222, %v5313
        %v5428 = vadd.f32 %v5223, %v5316
        %v5429 = vadd.f32 %v5224, %v5321
        %v5430 = vadd.f32 %v5225, %v5324
        %v5431 = vadd.f32 %v5226, %v5329
        %v5432 = vadd.f32 %v5227, %v5332
        %v5433 = vadd.f32 %v5228, %v5337
        %v5434 = vadd.f32 %v5229, %v5340
        %v5435 = vadd.f32 %v5230, %v5345
        %v5436 = vadd.f32 %v5231, %v5348
        %v5437 = vadd.f32 %v5232, %v5353
        %v5438 = vadd.f32 %v5233, %v5356
        %v5439 = vadd.f32 %v5234, %v5361
        %v5440 = vadd.f32 %v5235, %v5364
        %v5441 = vadd.f32 %v5236, %v5369
        %v5442 = vadd.f32 %v5237, %v5372
        %v5443 = vadd.f32 %v5238, %v5377
        %v5444 = vadd.f32 %v5239, %v5380
        %v5445 = vadd.f32 %v5240, %v5385
        %v5446 = vadd.f32 %v5241, %v5388
        %v5447 = vadd.f32 %v5242, %v5393
        %v5448 = vadd.f32 %v5243, %v5396
        %v5449 = vadd.f32 %v5244, %v5401
        %v5450 = vadd.f32 %v5245, %v5404
        %v5451 = vadd.f32 %v5246, %v5409
        %v5452 = vadd.f32 %v5247, %v5412
        %v5453 = vadd.f32 %v5248, %v5417
        %v5454 = vadd.f32 %v5249, %v5420
        %v5459 = vunpack.c.l.b16 %v3277
        %v5460 = vunpack.c.l.b16 %v3278
        %v5461 = vunpack.c.l.b16 %v3279
        %v5462 = vunpack.c.l.b16 %v3280
        %v5463 = vpack.c.b16 %v5460, %v5459
        %v5464 = vpack.c.b16 %v5462, %v5461
        %5467 = vmatprep.subr.bf16.mxu0 0
        %5468 = vmatpush1.bf16.msra.mxu0 %v5463
        %5469 = vmatprep.subr.bf16.mxu0 0
        %5470 = vmatpush1.bf16.msra.mxu0 %v5464
        %5471 = vmatprep.subr.bf16.mxu0 0
        %5472 = vmatpush1.bf16.msra.mxu0 0
        %5473 = vmatprep.subr.bf16.mxu0 0
        %5474 = vmatpush1.bf16.msra.mxu0 0
        %5475 = vmatprep.subr.bf16.mxu0 0
        %5476 = vmatpush1.bf16.msra.mxu0 0
        %5477 = vmatprep.subr.bf16.mxu0 0
        %5478 = vmatpush1.bf16.msra.mxu0 0
        %5479 = vmatprep.subr.bf16.mxu0 0
        %5480 = vmatpush1.bf16.msra.mxu0 0
        %5481 = vmatprep.subr.bf16.mxu0 0
        %5482 = vmatpush1.bf16.msra.mxu0 0
        %5483 = vmatprep.subr.bf16.mxu0 0
        %5484 = vmatpush1.bf16.msra.mxu0 0
        %5485 = vmatprep.subr.bf16.mxu0 0
        %5486 = vmatpush1.bf16.msra.mxu0 0
        %5487 = vmatprep.subr.bf16.mxu0 0
        %5488 = vmatpush1.bf16.msra.mxu0 0
        %5489 = vmatprep.subr.bf16.mxu0 0
        %5490 = vmatpush1.bf16.msra.mxu0 0
        %5491 = vmatprep.subr.bf16.mxu0 0
        %5492 = vmatpush1.bf16.msra.mxu0 0
        %5493 = vmatprep.subr.bf16.mxu0 0
        %5494 = vmatpush1.bf16.msra.mxu0 0
        %5495 = vmatprep.subr.bf16.mxu0 0
        %5496 = vmatpush1.bf16.msra.mxu0 0
        %5497 = vmatprep.subr.bf16.mxu0 0
        %5498 = vmatpush1.bf16.msra.mxu0 0
        %5499 = vmatprep.mubr.bf16.mxu0 0
        %5500 = vmatmul.mubr.bf16.gmra.mrb[0].mxu0 %v4171
        %v5501 = vpop.f32.mrb[0].mxu0
        %v5502 = vadd.f32 0.0, %v5501
        %v5503 = vpop.f32.mrb[0].mxu0
        %v5504 = vpop.f32.mrb[0].mxu0
        %v5505 = vadd.f32 0.0, %v5504
        %v5506 = vpop.f32.mrb[0].mxu0
        %5507 = vmatprep.mubr.bf16.mxu0 0
        %5508 = vmatmul.mubr.bf16.gmra.mrb[0].mxu0 %v4174
        %v5509 = vpop.f32.mrb[0].mxu0
        %v5510 = vadd.f32 0.0, %v5509
        %v5511 = vpop.f32.mrb[0].mxu0
        %v5512 = vpop.f32.mrb[0].mxu0
        %v5513 = vadd.f32 0.0, %v5512
        %v5514 = vpop.f32.mrb[0].mxu0
        %5515 = vmatprep.mubr.bf16.mxu0 0
        %5516 = vmatmul.mubr.bf16.gmra.mrb[0].mxu0 %v4177
        %v5517 = vpop.f32.mrb[0].mxu0
        %v5518 = vadd.f32 0.0, %v5517
        %v5519 = vpop.f32.mrb[0].mxu0
        %v5520 = vpop.f32.mrb[0].mxu0
        %v5521 = vadd.f32 0.0, %v5520
        %v5522 = vpop.f32.mrb[0].mxu0
        %5523 = vmatprep.mubr.bf16.mxu0 0
        %5524 = vmatmul.mubr.bf16.gmra.mrb[0].mxu0 %v4180
        %v5525 = vpop.f32.mrb[0].mxu0
        %v5526 = vadd.f32 0.0, %v5525
        %v5527 = vpop.f32.mrb[0].mxu0
        %v5528 = vpop.f32.mrb[0].mxu0
        %v5529 = vadd.f32 0.0, %v5528
        %v5530 = vpop.f32.mrb[0].mxu0
        %5531 = vmatprep.mubr.bf16.mxu0 0
        %5532 = vmatmul.mubr.bf16.gmra.mrb[0].mxu0 %v4183
        %v5533 = vpop.f32.mrb[0].mxu0
        %v5534 = vadd.f32 0.0, %v5533
        %v5535 = vpop.f32.mrb[0].mxu0
        %v5536 = vpop.f32.mrb[0].mxu0
        %v5537 = vadd.f32 0.0, %v5536
        %v5538 = vpop.f32.mrb[0].mxu0
        %5539 = vmatprep.mubr.bf16.mxu0 0
        %5540 = vmatmul.mubr.bf16.gmra.mrb[0].mxu0 %v4186
        %v5541 = vpop.f32.mrb[0].mxu0
        %v5542 = vadd.f32 0.0, %v5541
        %v5543 = vpop.f32.mrb[0].mxu0
        %v5544 = vpop.f32.mrb[0].mxu0
        %v5545 = vadd.f32 0.0, %v5544
        %v5546 = vpop.f32.mrb[0].mxu0
        %5547 = vmatprep.mubr.bf16.mxu0 0
        %5548 = vmatmul.mubr.bf16.gmra.mrb[0].mxu0 %v4189
        %v5549 = vpop.f32.mrb[0].mxu0
        %v5550 = vadd.f32 0.0, %v5549
        %v5551 = vpop.f32.mrb[0].mxu0
        %v5552 = vpop.f32.mrb[0].mxu0
        %v5553 = vadd.f32 0.0, %v5552
        %v5554 = vpop.f32.mrb[0].mxu0
        %5555 = vmatprep.mubr.bf16.mxu0 0
        %5556 = vmatmul.mubr.bf16.gmra.mrb[0].mxu0 %v4192
        %v5557 = vpop.f32.mrb[0].mxu0
        %v5558 = vadd.f32 0.0, %v5557
        %v5559 = vpop.f32.mrb[0].mxu0
        %v5560 = vpop.f32.mrb[0].mxu0
        %v5561 = vadd.f32 0.0, %v5560
        %v5562 = vpop.f32.mrb[0].mxu0
        %5563 = vmatprep.mubr.bf16.mxu0 0
        %5564 = vmatmul.mubr.bf16.gmra.mrb[0].mxu0 %v4195
        %v5565 = vpop.f32.mrb[0].mxu0
        %v5566 = vadd.f32 0.0, %v5565
        %v5567 = vpop.f32.mrb[0].mxu0
        %v5568 = vpop.f32.mrb[0].mxu0
        %v5569 = vadd.f32 0.0, %v5568
        %v5570 = vpop.f32.mrb[0].mxu0
        %5571 = vmatprep.mubr.bf16.mxu0 0
        %5572 = vmatmul.mubr.bf16.gmra.mrb[0].mxu0 %v4198
        %v5573 = vpop.f32.mrb[0].mxu0
        %v5574 = vadd.f32 0.0, %v5573
        %v5575 = vpop.f32.mrb[0].mxu0
        %v5576 = vpop.f32.mrb[0].mxu0
        %v5577 = vadd.f32 0.0, %v5576
        %v5578 = vpop.f32.mrb[0].mxu0
        %5579 = vmatprep.mubr.bf16.mxu0 0
        %5580 = vmatmul.mubr.bf16.gmra.mrb[0].mxu0 %v4201
        %v5581 = vpop.f32.mrb[0].mxu0
        %v5582 = vadd.f32 0.0, %v5581
        %v5583 = vpop.f32.mrb[0].mxu0
        %v5584 = vpop.f32.mrb[0].mxu0
        %v5585 = vadd.f32 0.0, %v5584
        %v5586 = vpop.f32.mrb[0].mxu0
        %5587 = vmatprep.mubr.bf16.mxu0 0
        %5588 = vmatmul.mubr.bf16.gmra.mrb[0].mxu0 %v4204
        %v5589 = vpop.f32.mrb[0].mxu0
        %v5590 = vadd.f32 0.0, %v5589
        %v5591 = vpop.f32.mrb[0].mxu0
        %v5592 = vpop.f32.mrb[0].mxu0
        %v5593 = vadd.f32 0.0, %v5592
        %v5594 = vpop.f32.mrb[0].mxu0
        %5595 = vmatprep.mubr.bf16.mxu0 0
        %5596 = vmatmul.mubr.bf16.gmra.mrb[0].mxu0 %v4207
        %v5597 = vpop.f32.mrb[0].mxu0
        %v5598 = vadd.f32 0.0, %v5597
        %v5599 = vpop.f32.mrb[0].mxu0
        %v5600 = vpop.f32.mrb[0].mxu0
        %v5601 = vadd.f32 0.0, %v5600
        %v5602 = vpop.f32.mrb[0].mxu0
        %5603 = vmatprep.mubr.bf16.mxu0 0
        %5604 = vmatmul.mubr.bf16.gmra.mrb[0].mxu0 %v4210
        %v5605 = vpop.f32.mrb[0].mxu0
        %v5606 = vadd.f32 0.0, %v5605
        %v5607 = vpop.f32.mrb[0].mxu0
        %v5608 = vpop.f32.mrb[0].mxu0
        %v5609 = vadd.f32 0.0, %v5608
        %v5610 = vpop.f32.mrb[0].mxu0
        %5611 = vmatprep.mubr.bf16.mxu0 0
        %5612 = vmatmul.mubr.bf16.gmra.mrb[0].mxu0 %v4850
        %v5613 = vpop.f32.mrb[0].mxu0
        %v5614 = vadd.f32 0.0, %v5613
        %v5615 = vpop.f32.mrb[0].mxu0
        %v5616 = vpop.f32.mrb[0].mxu0
        %v5617 = vadd.f32 0.0, %v5616
        %v5618 = vpop.f32.mrb[0].mxu0
        %5619 = vmatprep.mubr.bf16.mxu0 0
        %5620 = vmatmul.mubr.bf16.gmra.mrb[0].mxu0 %v1422
        %v5621 = vpop.f32.mrb[0].mxu0
        %v5622 = vadd.f32 0.0, %v5621
        %v5623 = vpop.f32.mrb[0].mxu0
        %v5624 = vpop.f32.mrb[0].mxu0
        %v5625 = vadd.f32 0.0, %v5624
        %v5626 = vpop.f32.mrb[0].mxu0
        %5627 = vdwg.mxu0
        %v5628 = vadd.f32 %v5423, %v5502
        %v5629 = vadd.f32 %v5424, %v5505
        %v5630 = vadd.f32 %v5425, %v5510
        %v5631 = vadd.f32 %v5426, %v5513
        %v5632 = vadd.f32 %v5427, %v5518
        %v5633 = vadd.f32 %v5428, %v5521
        %v5634 = vadd.f32 %v5429, %v5526
        %v5635 = vadd.f32 %v5430, %v5529
        %v5636 = vadd.f32 %v5431, %v5534
        %v5637 = vadd.f32 %v5432, %v5537
        %v5638 = vadd.f32 %v5433, %v5542
        %v5639 = vadd.f32 %v5434, %v5545
        %v5640 = vadd.f32 %v5435, %v5550
        %v5641 = vadd.f32 %v5436, %v5553
        %v5642 = vadd.f32 %v5437, %v5558
        %v5643 = vadd.f32 %v5438, %v5561
        %v5644 = vadd.f32 %v5439, %v5566
        %v5645 = vadd.f32 %v5440, %v5569
        %v5646 = vadd.f32 %v5441, %v5574
        %v5647 = vadd.f32 %v5442, %v5577
        %v5648 = vadd.f32 %v5443, %v5582
        %v5649 = vadd.f32 %v5444, %v5585
        %v5650 = vadd.f32 %v5445, %v5590
        %v5651 = vadd.f32 %v5446, %v5593
        %v5652 = vadd.f32 %v5447, %v5598
        %v5653 = vadd.f32 %v5448, %v5601
        %v5654 = vadd.f32 %v5449, %v5606
        %v5655 = vadd.f32 %v5450, %v5609
        %v5656 = vadd.f32 %v5451, %v5614
        %v5657 = vadd.f32 %v5452, %v5617
        %v5658 = vadd.f32 %v5453, %v5622
        %v5659 = vadd.f32 %v5454, %v5625
        %v5661 = vlaneseq
        %v5662 = vshrl.u32 %v5661, 7
        %v5663 = vsub.s32 0, %v5662
        %v5664 = vrot.slane %v3282, %v5663
        %v5666 = vadd.f32 %v5628, %v5664
        %v5667 = vadd.f32 %v5629, %v5664
        %v5668 = vadd.f32 %v5630, %v5664
        %v5669 = vadd.f32 %v5631, %v5664
        %v5670 = vadd.f32 %v5632, %v5664
        %v5671 = vadd.f32 %v5633, %v5664
        %v5672 = vadd.f32 %v5634, %v5664
        %v5673 = vadd.f32 %v5635, %v5664
        %v5674 = vadd.f32 %v5636, %v5664
        %v5675 = vadd.f32 %v5637, %v5664
        %v5676 = vadd.f32 %v5638, %v5664
        %v5677 = vadd.f32 %v5639, %v5664
        %v5678 = vadd.f32 %v5640, %v5664
        %v5679 = vadd.f32 %v5641, %v5664
        %v5680 = vadd.f32 %v5642, %v5664
        %v5681 = vadd.f32 %v5643, %v5664
        %v5682 = vadd.f32 %v5644, %v5664
        %v5683 = vadd.f32 %v5645, %v5664
        %v5684 = vadd.f32 %v5646, %v5664
        %v5685 = vadd.f32 %v5647, %v5664
        %v5686 = vadd.f32 %v5648, %v5664
        %v5687 = vadd.f32 %v5649, %v5664
        %v5688 = vadd.f32 %v5650, %v5664
        %v5689 = vadd.f32 %v5651, %v5664
        %v5690 = vadd.f32 %v5652, %v5664
        %v5691 = vadd.f32 %v5653, %v5664
        %v5692 = vadd.f32 %v5654, %v5664
        %v5693 = vadd.f32 %v5655, %v5664
        %v5694 = vadd.f32 %v5656, %v5664
        %v5695 = vadd.f32 %v5657, %v5664
        %v5696 = vadd.f32 %v5658, %v5664
        %v5697 = vadd.f32 %v5659, %v5664
        %v5698 = vsel %vm915, %v5666, 0.0
        %v5699 = vsel %vm915, %v5667, 0.0
        %v5700 = vadd.f32 %v5698, %v5699
        %v5701 = vsel %vm915, %v5668, 0.0
        %v5702 = vadd.f32 %v5700, %v5701
        %v5703 = vsel %vm915, %v5669, 0.0
        %v5704 = vadd.f32 %v5702, %v5703
        %v5705 = vsel %vm915, %v5670, 0.0
        %v5706 = vadd.f32 %v5704, %v5705
        %v5707 = vsel %vm915, %v5671, 0.0
        %v5708 = vadd.f32 %v5706, %v5707
        %v5709 = vsel %vm915, %v5672, 0.0
        %v5710 = vadd.f32 %v5708, %v5709
        %v5711 = vsel %vm915, %v5673, 0.0
        %v5712 = vadd.f32 %v5710, %v5711
        %v5713 = vsel %vm915, %v5674, 0.0
        %v5714 = vadd.f32 %v5712, %v5713
        %v5715 = vsel %vm915, %v5675, 0.0
        %v5716 = vadd.f32 %v5714, %v5715
        %v5717 = vsel %vm915, %v5676, 0.0
        %v5718 = vadd.f32 %v5716, %v5717
        %v5719 = vsel %vm915, %v5677, 0.0
        %v5720 = vadd.f32 %v5718, %v5719
        %v5721 = vsel %vm915, %v5678, 0.0
        %v5722 = vadd.f32 %v5720, %v5721
        %v5723 = vsel %vm915, %v5679, 0.0
        %v5724 = vadd.f32 %v5722, %v5723
        %v5725 = vsel %vm915, %v5680, 0.0
        %v5726 = vadd.f32 %v5724, %v5725
        %v5727 = vsel %vm915, %v5681, 0.0
        %v5728 = vadd.f32 %v5726, %v5727
        %v5729 = vsel %vm915, %v5682, 0.0
        %v5730 = vadd.f32 %v5728, %v5729
        %v5731 = vsel %vm915, %v5683, 0.0
        %v5732 = vadd.f32 %v5730, %v5731
        %v5733 = vsel %vm915, %v5684, 0.0
        %v5734 = vadd.f32 %v5732, %v5733
        %v5735 = vsel %vm915, %v5685, 0.0
        %v5736 = vadd.f32 %v5734, %v5735
        %v5737 = vsel %vm915, %v5686, 0.0
        %v5738 = vadd.f32 %v5736, %v5737
        %v5739 = vsel %vm915, %v5687, 0.0
        %v5740 = vadd.f32 %v5738, %v5739
        %v5741 = vsel %vm915, %v5688, 0.0
        %v5742 = vadd.f32 %v5740, %v5741
        %v5743 = vsel %vm915, %v5689, 0.0
        %v5744 = vadd.f32 %v5742, %v5743
        %v5745 = vsel %vm915, %v5690, 0.0
        %v5746 = vadd.f32 %v5744, %v5745
        %v5747 = vsel %vm915, %v5691, 0.0
        %v5748 = vadd.f32 %v5746, %v5747
        %v5749 = vsel %vm915, %v5692, 0.0
        %v5750 = vadd.f32 %v5748, %v5749
        %v5751 = vsel %vm915, %v5693, 0.0
        %v5752 = vadd.f32 %v5750, %v5751
        %v5753 = vsel %vm915, %v5694, 0.0
        %v5754 = vadd.f32 %v5752, %v5753
        %v5755 = vsel %vm915, %v5695, 0.0
        %v5756 = vadd.f32 %v5754, %v5755
        %v5757 = vsel %vm915, %v5696, 0.0
        %v5758 = vadd.f32 %v5756, %v5757
        %v5759 = vsel %vm915, %v5697, 0.0
        %v5760 = vadd.f32 %v5758, %v5759
        %v5761 = vrot.slane %v5760, 4
        %v5762 = vadd.f32 %v5760, %v5761
        %v5763 = vrot.slane %v5762, 2
        %v5764 = vadd.f32 %v5762, %v5763
        %v5765 = vrot.slane %v5764, 1
        %v5766 = vadd.f32 %v5764, %v5765
        %v5767 = vmul.f32 %v5766, %v3025
        %v5768 = vmul.f32 %v5666, %v5666
        %v5769 = vmul.f32 %v5667, %v5667
        %v5770 = vmul.f32 %v5668, %v5668
        %v5771 = vmul.f32 %v5669, %v5669
        %v5772 = vmul.f32 %v5670, %v5670
        %v5773 = vmul.f32 %v5671, %v5671
        %v5774 = vmul.f32 %v5672, %v5672
        %v5775 = vmul.f32 %v5673, %v5673
        %v5776 = vmul.f32 %v5674, %v5674
        %v5777 = vmul.f32 %v5675, %v5675
        %v5778 = vmul.f32 %v5676, %v5676
        %v5779 = vmul.f32 %v5677, %v5677
        %v5780 = vmul.f32 %v5678, %v5678
        %v5781 = vmul.f32 %v5679, %v5679
        %v5782 = vmul.f32 %v5680, %v5680
        %v5783 = vmul.f32 %v5681, %v5681
        %v5784 = vmul.f32 %v5682, %v5682
        %v5785 = vmul.f32 %v5683, %v5683
        %v5786 = vmul.f32 %v5684, %v5684
        %v5787 = vmul.f32 %v5685, %v5685
        %v5788 = vmul.f32 %v5686, %v5686
        %v5789 = vmul.f32 %v5687, %v5687
        %v5790 = vmul.f32 %v5688, %v5688
        %v5791 = vmul.f32 %v5689, %v5689
        %v5792 = vmul.f32 %v5690, %v5690
        %v5793 = vmul.f32 %v5691, %v5691
        %v5794 = vmul.f32 %v5692, %v5692
        %v5795 = vmul.f32 %v5693, %v5693
        %v5796 = vmul.f32 %v5694, %v5694
        %v5797 = vmul.f32 %v5695, %v5695
        %v5798 = vmul.f32 %v5696, %v5696
        %v5799 = vmul.f32 %v5697, %v5697
        %v5800 = vsel %vm915, %v5768, 0.0
        %v5801 = vsel %vm915, %v5769, 0.0
        %v5802 = vadd.f32 %v5800, %v5801
        %v5803 = vsel %vm915, %v5770, 0.0
        %v5804 = vadd.f32 %v5802, %v5803
        %v5805 = vsel %vm915, %v5771, 0.0
        %v5806 = vadd.f32 %v5804, %v5805
        %v5807 = vsel %vm915, %v5772, 0.0
        %v5808 = vadd.f32 %v5806, %v5807
        %v5809 = vsel %vm915, %v5773, 0.0
        %v5810 = vadd.f32 %v5808, %v5809
        %v5811 = vsel %vm915, %v5774, 0.0
        %v5812 = vadd.f32 %v5810, %v5811
        %v5813 = vsel %vm915, %v5775, 0.0
        %v5814 = vadd.f32 %v5812, %v5813
        %v5815 = vsel %vm915, %v5776, 0.0
        %v5816 = vadd.f32 %v5814, %v5815
        %v5817 = vsel %vm915, %v5777, 0.0
        %v5818 = vadd.f32 %v5816, %v5817
        %v5819 = vsel %vm915, %v5778, 0.0
        %v5820 = vadd.f32 %v5818, %v5819
        %v5821 = vsel %vm915, %v5779, 0.0
        %v5822 = vadd.f32 %v5820, %v5821
        %v5823 = vsel %vm915, %v5780, 0.0
        %v5824 = vadd.f32 %v5822, %v5823
        %v5825 = vsel %vm915, %v5781, 0.0
        %v5826 = vadd.f32 %v5824, %v5825
        %v5827 = vsel %vm915, %v5782, 0.0
        %v5828 = vadd.f32 %v5826, %v5827
        %v5829 = vsel %vm915, %v5783, 0.0
        %v5830 = vadd.f32 %v5828, %v5829
        %v5831 = vsel %vm915, %v5784, 0.0
        %v5832 = vadd.f32 %v5830, %v5831
        %v5833 = vsel %vm915, %v5785, 0.0
        %v5834 = vadd.f32 %v5832, %v5833
        %v5835 = vsel %vm915, %v5786, 0.0
        %v5836 = vadd.f32 %v5834, %v5835
        %v5837 = vsel %vm915, %v5787, 0.0
        %v5838 = vadd.f32 %v5836, %v5837
        %v5839 = vsel %vm915, %v5788, 0.0
        %v5840 = vadd.f32 %v5838, %v5839
        %v5841 = vsel %vm915, %v5789, 0.0
        %v5842 = vadd.f32 %v5840, %v5841
        %v5843 = vsel %vm915, %v5790, 0.0
        %v5844 = vadd.f32 %v5842, %v5843
        %v5845 = vsel %vm915, %v5791, 0.0
        %v5846 = vadd.f32 %v5844, %v5845
        %v5847 = vsel %vm915, %v5792, 0.0
        %v5848 = vadd.f32 %v5846, %v5847
        %v5849 = vsel %vm915, %v5793, 0.0
        %v5850 = vadd.f32 %v5848, %v5849
        %v5851 = vsel %vm915, %v5794, 0.0
        %v5852 = vadd.f32 %v5850, %v5851
        %v5853 = vsel %vm915, %v5795, 0.0
        %v5854 = vadd.f32 %v5852, %v5853
        %v5855 = vsel %vm915, %v5796, 0.0
        %v5856 = vadd.f32 %v5854, %v5855
        %v5857 = vsel %vm915, %v5797, 0.0
        %v5858 = vadd.f32 %v5856, %v5857
        %v5859 = vsel %vm915, %v5798, 0.0
        %v5860 = vadd.f32 %v5858, %v5859
        %v5861 = vsel %vm915, %v5799, 0.0
        %v5862 = vadd.f32 %v5860, %v5861
        %v5863 = vrot.slane %v5862, 4
        %v5864 = vadd.f32 %v5862, %v5863
        %v5865 = vrot.slane %v5864, 2
        %v5866 = vadd.f32 %v5864, %v5865
        %v5867 = vrot.slane %v5866, 1
        %v5868 = vadd.f32 %v5866, %v5867
        %v5869 = vmul.f32 %v5868, %v3025
        %v5870 = vmul.f32 %v5767, %v5767
        %v5871 = vsub.f32 %v5869, %v5870
        %v5872 = vadd.f32 %v5871, 1e-05
        %v5873 = vrsqrt.pop %v5872
        %v5874 = vmul.f32 %v3284, %v5873
        %v5875 = vmul.f32 %v5767, %v5874
        %v5876 = vsub.f32 %v3286, %v5875
        %v5878 = vlaneseq
        %v5879 = vshrl.u32 %v5878, 7
        %v5880 = vsub.s32 0, %v5879
        %v5881 = vrot.slane %v5874, %v5880
        %v5883 = vmul.f32 %v5666, %v5881
        %v5884 = vmul.f32 %v5667, %v5881
        %v5885 = vmul.f32 %v5668, %v5881
        %v5886 = vmul.f32 %v5669, %v5881
        %v5887 = vmul.f32 %v5670, %v5881
        %v5888 = vmul.f32 %v5671, %v5881
        %v5889 = vmul.f32 %v5672, %v5881
        %v5890 = vmul.f32 %v5673, %v5881
        %v5891 = vmul.f32 %v5674, %v5881
        %v5892 = vmul.f32 %v5675, %v5881
        %v5893 = vmul.f32 %v5676, %v5881
        %v5894 = vmul.f32 %v5677, %v5881
        %v5895 = vmul.f32 %v5678, %v5881
        %v5896 = vmul.f32 %v5679, %v5881
        %v5897 = vmul.f32 %v5680, %v5881
        %v5898 = vmul.f32 %v5681, %v5881
        %v5899 = vmul.f32 %v5682, %v5881
        %v5900 = vmul.f32 %v5683, %v5881
        %v5901 = vmul.f32 %v5684, %v5881
        %v5902 = vmul.f32 %v5685, %v5881
        %v5903 = vmul.f32 %v5686, %v5881
        %v5904 = vmul.f32 %v5687, %v5881
        %v5905 = vmul.f32 %v5688, %v5881
        %v5906 = vmul.f32 %v5689, %v5881
        %v5907 = vmul.f32 %v5690, %v5881
        %v5908 = vmul.f32 %v5691, %v5881
        %v5909 = vmul.f32 %v5692, %v5881
        %v5910 = vmul.f32 %v5693, %v5881
        %v5911 = vmul.f32 %v5694, %v5881
        %v5912 = vmul.f32 %v5695, %v5881
        %v5913 = vmul.f32 %v5696, %v5881
        %v5914 = vmul.f32 %v5697, %v5881
        %v5916 = vlaneseq
        %v5917 = vshrl.u32 %v5916, 7
        %v5918 = vsub.s32 0, %v5917
        %v5919 = vrot.slane %v5876, %v5918
        %v5921 = vadd.f32 %v5883, %v5919
        %v5922 = vadd.f32 %v5884, %v5919
        %v5923 = vadd.f32 %v5885, %v5919
        %v5924 = vadd.f32 %v5886, %v5919
        %v5925 = vadd.f32 %v5887, %v5919
        %v5926 = vadd.f32 %v5888, %v5919
        %v5927 = vadd.f32 %v5889, %v5919
        %v5928 = vadd.f32 %v5890, %v5919
        %v5929 = vadd.f32 %v5891, %v5919
        %v5930 = vadd.f32 %v5892, %v5919
        %v5931 = vadd.f32 %v5893, %v5919
        %v5932 = vadd.f32 %v5894, %v5919
        %v5933 = vadd.f32 %v5895, %v5919
        %v5934 = vadd.f32 %v5896, %v5919
        %v5935 = vadd.f32 %v5897, %v5919
        %v5936 = vadd.f32 %v5898, %v5919
        %v5937 = vadd.f32 %v5899, %v5919
        %v5938 = vadd.f32 %v5900, %v5919
        %v5939 = vadd.f32 %v5901, %v5919
        %v5940 = vadd.f32 %v5902, %v5919
        %v5941 = vadd.f32 %v5903, %v5919
        %v5942 = vadd.f32 %v5904, %v5919
        %v5943 = vadd.f32 %v5905, %v5919
        %v5944 = vadd.f32 %v5906, %v5919
        %v5945 = vadd.f32 %v5907, %v5919
        %v5946 = vadd.f32 %v5908, %v5919
        %v5947 = vadd.f32 %v5909, %v5919
        %v5948 = vadd.f32 %v5910, %v5919
        %v5949 = vadd.f32 %v5911, %v5919
        %v5950 = vadd.f32 %v5912, %v5919
        %v5951 = vadd.f32 %v5913, %v5919
        %v5952 = vadd.f32 %v5914, %v5919
        %v5953 = vmax.f32 %v5921, 0.0
        %v5954 = vmax.f32 %v5922, 0.0
        %v5955 = vmax.f32 %v5923, 0.0
        %v5956 = vmax.f32 %v5924, 0.0
        %v5957 = vmax.f32 %v5925, 0.0
        %v5958 = vmax.f32 %v5926, 0.0
        %v5959 = vmax.f32 %v5927, 0.0
        %v5960 = vmax.f32 %v5928, 0.0
        %v5961 = vmax.f32 %v5929, 0.0
        %v5962 = vmax.f32 %v5930, 0.0
        %v5963 = vmax.f32 %v5931, 0.0
        %v5964 = vmax.f32 %v5932, 0.0
        %v5965 = vmax.f32 %v5933, 0.0
        %v5966 = vmax.f32 %v5934, 0.0
        %v5967 = vmax.f32 %v5935, 0.0
        %v5968 = vmax.f32 %v5936, 0.0
        %v5969 = vmax.f32 %v5937, 0.0
        %v5970 = vmax.f32 %v5938, 0.0
        %v5971 = vmax.f32 %v5939, 0.0
        %v5972 = vmax.f32 %v5940, 0.0
        %v5973 = vmax.f32 %v5941, 0.0
        %v5974 = vmax.f32 %v5942, 0.0
        %v5975 = vmax.f32 %v5943, 0.0
        %v5976 = vmax.f32 %v5944, 0.0
        %v5977 = vmax.f32 %v5945, 0.0
        %v5978 = vmax.f32 %v5946, 0.0
        %v5979 = vmax.f32 %v5947, 0.0
        %v5980 = vmax.f32 %v5948, 0.0
        %v5981 = vmax.f32 %v5949, 0.0
        %v5982 = vmax.f32 %v5950, 0.0
        %v5983 = vmax.f32 %v5951, 0.0
        %v5984 = vmax.f32 %v5952, 0.0
        %5985 = vrot.lane.b32.xlu0 %v3319, 96
        %v5986 = vpop.permute.xlu0 %5985
        %5987 = vrot.lane.b32.xlu0 %v3321, 96
        %v5988 = vpop.permute.xlu0 %5987
        %5989 = vrot.lane.b32.xlu0 %v3320, 96
        %v5990 = vpop.permute.xlu0 %5989
        %5991 = vrot.lane.b32.xlu0 %v3322, 96
        %v5992 = vpop.permute.xlu0 %5991
        %5993 = vrot.lane.b32.xlu0 %v3324, 96
        %v5994 = vpop.permute.xlu0 %5993
        %5995 = vrot.lane.b32.xlu0 %v3323, 96
        %v5996 = vpop.permute.xlu0 %5995
        %5997 = vrot.lane.b32.xlu0 %v3325, 96
        %v5998 = vpop.permute.xlu0 %5997
        %5999 = vrot.lane.b32.xlu0 %v3327, 96
        %v6000 = vpop.permute.xlu0 %5999
        %6001 = vrot.lane.b32.xlu0 %v3326, 96
        %v6002 = vpop.permute.xlu0 %6001
        %6003 = vrot.lane.b32.xlu0 %v3328, 96
        %v6004 = vpop.permute.xlu0 %6003
        %6005 = vrot.lane.b32.xlu0 %v3330, 96
        %v6006 = vpop.permute.xlu0 %6005
        %6007 = vrot.lane.b32.xlu0 %v3329, 96
        %v6008 = vpop.permute.xlu0 %6007
        %6009 = vrot.lane.b32.xlu0 %v3331, 96
        %v6010 = vpop.permute.xlu0 %6009
        %6011 = vrot.lane.b32.xlu0 %v3333, 96
        %v6012 = vpop.permute.xlu0 %6011
        %6013 = vrot.lane.b32.xlu0 %v3332, 96
        %v6014 = vpop.permute.xlu0 %6013
        %6015 = vrot.lane.b32.xlu0 %v3334, 96
        %v6016 = vpop.permute.xlu0 %6015
        %6017 = vrot.lane.b32.xlu0 %v3336, 96
        %v6018 = vpop.permute.xlu0 %6017
        %6019 = vrot.lane.b32.xlu0 %v3335, 96
        %v6020 = vpop.permute.xlu0 %6019
        %6021 = vrot.lane.b32.xlu0 %v3337, 96
        %v6022 = vpop.permute.xlu0 %6021
        %6023 = vrot.lane.b32.xlu0 %v3339, 96
        %v6024 = vpop.permute.xlu0 %6023
        %6025 = vrot.lane.b32.xlu0 %v3338, 96
        %v6026 = vpop.permute.xlu0 %6025
        %6027 = vrot.lane.b32.xlu0 %v3340, 96
        %v6028 = vpop.permute.xlu0 %6027
        %6029 = vrot.lane.b32.xlu0 %v3342, 96
        %v6030 = vpop.permute.xlu0 %6029
        %6031 = vrot.lane.b32.xlu0 %v3341, 96
        %v6032 = vpop.permute.xlu0 %6031
        %6033 = vrot.lane.b32.xlu0 %v3343, 96
        %v6034 = vpop.permute.xlu0 %6033
        %6035 = vrot.lane.b32.xlu0 %v3345, 96
        %v6036 = vpop.permute.xlu0 %6035
        %6037 = vrot.lane.b32.xlu0 %v3344, 96
        %v6038 = vpop.permute.xlu0 %6037
        %6039 = vrot.lane.b32.xlu0 %v3346, 96
        %v6040 = vpop.permute.xlu0 %6039
        %6041 = vrot.lane.b32.xlu0 %v3348, 96
        %v6042 = vpop.permute.xlu0 %6041
        %6043 = vrot.lane.b32.xlu0 %v3347, 96
        %v6044 = vpop.permute.xlu0 %6043
        %6045 = vrot.lane.b32.xlu0 %v3349, 96
        %v6046 = vpop.permute.xlu0 %6045
        %6047 = vrot.lane.b32.xlu0 %v3351, 96
        %v6048 = vpop.permute.xlu0 %6047
        %6049 = vrot.lane.b32.xlu0 %v3350, 96
        %v6050 = vpop.permute.xlu0 %6049
        %6051 = vrot.lane.b32.xlu0 %v3352, 96
        %v6052 = vpop.permute.xlu0 %6051
        %6053 = vrot.lane.b32.xlu0 %v3354, 96
        %v6054 = vpop.permute.xlu0 %6053
        %6055 = vrot.lane.b32.xlu0 %v3353, 96
        %v6056 = vpop.permute.xlu0 %6055
        %6057 = vrot.lane.b32.xlu0 %v3355, 96
        %v6058 = vpop.permute.xlu0 %6057
        %6059 = vrot.lane.b32.xlu0 %v3357, 96
        %v6060 = vpop.permute.xlu0 %6059
        %6061 = vrot.lane.b32.xlu0 %v3356, 96
        %v6062 = vpop.permute.xlu0 %6061
        %6063 = vrot.lane.b32.xlu0 %v3358, 96
        %v6064 = vpop.permute.xlu0 %6063
        %6065 = vrot.lane.b32.xlu0 %v3360, 96
        %v6066 = vpop.permute.xlu0 %6065
        %6067 = vrot.lane.b32.xlu0 %v3359, 96
        %v6068 = vpop.permute.xlu0 %6067
        %6069 = vrot.lane.b32.xlu0 %v3361, 96
        %v6070 = vpop.permute.xlu0 %6069
        %6071 = vrot.lane.b32.xlu0 %v3363, 96
        %v6072 = vpop.permute.xlu0 %6071
        %6073 = vrot.lane.b32.xlu0 %v3362, 96
        %v6074 = vpop.permute.xlu0 %6073
        %6075 = vrot.lane.b32.xlu0 %v3364, 96
        %v6076 = vpop.permute.xlu0 %6075
        %6077 = vrot.lane.b32.xlu0 %v3366, 96
        %v6078 = vpop.permute.xlu0 %6077
        %6079 = vrot.lane.b32.xlu0 %v3365, 96
        %v6080 = vpop.permute.xlu0 %6079
        %v6129 = vsel %vm552, 0.0, %v5986
        %v6130 = vsel %vm552, 0.0, %v5992
        %v6131 = vsel %vm552, 0.0, %v5998
        %v6132 = vsel %vm552, 0.0, %v6004
        %v6133 = vsel %vm552, 0.0, %v6010
        %v6134 = vsel %vm552, 0.0, %v6016
        %v6135 = vsel %vm552, 0.0, %v6022
        %v6136 = vsel %vm552, 0.0, %v6028
        %v6137 = vsel %vm552, 0.0, %v6034
        %v6138 = vsel %vm552, 0.0, %v6040
        %v6139 = vsel %vm552, 0.0, %v6046
        %v6140 = vsel %vm552, 0.0, %v6052
        %v6141 = vsel %vm552, 0.0, %v6058
        %v6142 = vsel %vm552, 0.0, %v6064
        %v6143 = vsel %vm552, 0.0, %v6070
        %v6144 = vsel %vm552, 0.0, %v6076
        %v6145 = vsel %vm552, %v5990, 0.0
        %v6146 = vsel %vm552, %v5996, 0.0
        %v6147 = vsel %vm552, %v6002, 0.0
        %v6148 = vsel %vm552, %v6008, 0.0
        %v6149 = vsel %vm552, %v6014, 0.0
        %v6150 = vsel %vm552, %v6020, 0.0
        %v6151 = vsel %vm552, %v6026, 0.0
        %v6152 = vsel %vm552, %v6032, 0.0
        %v6153 = vsel %vm552, %v6038, 0.0
        %v6154 = vsel %vm552, %v6044, 0.0
        %v6155 = vsel %vm552, %v6050, 0.0
        %v6156 = vsel %vm552, %v6056, 0.0
        %v6157 = vsel %vm552, %v6062, 0.0
        %v6158 = vsel %vm552, %v6068, 0.0
        %v6159 = vsel %vm552, %v6074, 0.0
        %v6160 = vsel %vm552, %v6080, 0.0
        %v6161 = vpack.c.bf16 %v5988, %v6129
        %v6162 = vpack.c.bf16 %v6145, %v6145
        %v6163 = vpack.c.bf16 %v5994, %v6130
        %v6164 = vpack.c.bf16 %v6146, %v6146
        %v6165 = vpack.c.bf16 %v6000, %v6131
        %v6166 = vpack.c.bf16 %v6147, %v6147
        %v6167 = vpack.c.bf16 %v6006, %v6132
        %v6168 = vpack.c.bf16 %v6148, %v6148
        %v6169 = vpack.c.bf16 %v6012, %v6133
        %v6170 = vpack.c.bf16 %v6149, %v6149
        %v6171 = vpack.c.bf16 %v6018, %v6134
        %v6172 = vpack.c.bf16 %v6150, %v6150
        %v6173 = vpack.c.bf16 %v6024, %v6135
        %v6174 = vpack.c.bf16 %v6151, %v6151
        %v6175 = vpack.c.bf16 %v6030, %v6136
        %v6176 = vpack.c.bf16 %v6152, %v6152
        %v6177 = vpack.c.bf16 %v6036, %v6137
        %v6178 = vpack.c.bf16 %v6153, %v6153
        %v6179 = vpack.c.bf16 %v6042, %v6138
        %v6180 = vpack.c.bf16 %v6154, %v6154
        %v6181 = vpack.c.bf16 %v6048, %v6139
        %v6182 = vpack.c.bf16 %v6155, %v6155
        %v6183 = vpack.c.bf16 %v6054, %v6140
        %v6184 = vpack.c.bf16 %v6156, %v6156
        %v6185 = vpack.c.bf16 %v6060, %v6141
        %v6186 = vpack.c.bf16 %v6157, %v6157
        %v6187 = vpack.c.bf16 %v6066, %v6142
        %v6188 = vpack.c.bf16 %v6158, %v6158
        %v6189 = vpack.c.bf16 %v6072, %v6143
        %v6190 = vpack.c.bf16 %v6159, %v6159
        %v6191 = vpack.c.bf16 %v6078, %v6144
        %v6192 = vpack.c.bf16 %v6160, %v6160
        %v6194 = vshrl.u32 %v6161, 16
        %v6196 = vshll.u32 %v6161, 16
        %v6198 = vrot.slane %v6196, 1
        %v6199 = vor.u32 %v6194, %v6198
        %v6201 = vshll.u32 %v6162, 16
        %v6203 = vrot.slane %v6201, 1
        %v6204 = vsel %vm714, %v6199, %v6203
        %v6206 = vshrl.u32 %v6163, 16
        %v6208 = vshll.u32 %v6163, 16
        %v6210 = vrot.slane %v6208, 1
        %v6211 = vor.u32 %v6206, %v6210
        %v6213 = vshll.u32 %v6164, 16
        %v6215 = vrot.slane %v6213, 1
        %v6216 = vsel %vm714, %v6211, %v6215
        %v6218 = vshrl.u32 %v6165, 16
        %v6220 = vshll.u32 %v6165, 16
        %v6222 = vrot.slane %v6220, 1
        %v6223 = vor.u32 %v6218, %v6222
        %v6225 = vshll.u32 %v6166, 16
        %v6227 = vrot.slane %v6225, 1
        %v6228 = vsel %vm714, %v6223, %v6227
        %v6230 = vshrl.u32 %v6167, 16
        %v6232 = vshll.u32 %v6167, 16
        %v6234 = vrot.slane %v6232, 1
        %v6235 = vor.u32 %v6230, %v6234
        %v6237 = vshll.u32 %v6168, 16
        %v6239 = vrot.slane %v6237, 1
        %v6240 = vsel %vm714, %v6235, %v6239
        %v6242 = vshrl.u32 %v6169, 16
        %v6244 = vshll.u32 %v6169, 16
        %v6246 = vrot.slane %v6244, 1
        %v6247 = vor.u32 %v6242, %v6246
        %v6249 = vshll.u32 %v6170, 16
        %v6251 = vrot.slane %v6249, 1
        %v6252 = vsel %vm714, %v6247, %v6251
        %v6254 = vshrl.u32 %v6171, 16
        %v6256 = vshll.u32 %v6171, 16
        %v6258 = vrot.slane %v6256, 1
        %v6259 = vor.u32 %v6254, %v6258
        %v6261 = vshll.u32 %v6172, 16
        %v6263 = vrot.slane %v6261, 1
        %v6264 = vsel %vm714, %v6259, %v6263
        %v6266 = vshrl.u32 %v6173, 16
        %v6268 = vshll.u32 %v6173, 16
        %v6270 = vrot.slane %v6268, 1
        %v6271 = vor.u32 %v6266, %v6270
        %v6273 = vshll.u32 %v6174, 16
        %v6275 = vrot.slane %v6273, 1
        %v6276 = vsel %vm714, %v6271, %v6275
        %v6278 = vshrl.u32 %v6175, 16
        %v6280 = vshll.u32 %v6175, 16
        %v6282 = vrot.slane %v6280, 1
        %v6283 = vor.u32 %v6278, %v6282
        %v6285 = vshll.u32 %v6176, 16
        %v6287 = vrot.slane %v6285, 1
        %v6288 = vsel %vm714, %v6283, %v6287
        %v6290 = vshrl.u32 %v6177, 16
        %v6292 = vshll.u32 %v6177, 16
        %v6294 = vrot.slane %v6292, 1
        %v6295 = vor.u32 %v6290, %v6294
        %v6297 = vshll.u32 %v6178, 16
        %v6299 = vrot.slane %v6297, 1
        %v6300 = vsel %vm714, %v6295, %v6299
        %v6302 = vshrl.u32 %v6179, 16
        %v6304 = vshll.u32 %v6179, 16
        %v6306 = vrot.slane %v6304, 1
        %v6307 = vor.u32 %v6302, %v6306
        %v6309 = vshll.u32 %v6180, 16
        %v6311 = vrot.slane %v6309, 1
        %v6312 = vsel %vm714, %v6307, %v6311
        %v6314 = vshrl.u32 %v6181, 16
        %v6316 = vshll.u32 %v6181, 16
        %v6318 = vrot.slane %v6316, 1
        %v6319 = vor.u32 %v6314, %v6318
        %v6321 = vshll.u32 %v6182, 16
        %v6323 = vrot.slane %v6321, 1
        %v6324 = vsel %vm714, %v6319, %v6323
        %v6326 = vshrl.u32 %v6183, 16
        %v6328 = vshll.u32 %v6183, 16
        %v6330 = vrot.slane %v6328, 1
        %v6331 = vor.u32 %v6326, %v6330
        %v6333 = vshll.u32 %v6184, 16
        %v6335 = vrot.slane %v6333, 1
        %v6336 = vsel %vm714, %v6331, %v6335
        %v6338 = vshrl.u32 %v6185, 16
        %v6340 = vshll.u32 %v6185, 16
        %v6342 = vrot.slane %v6340, 1
        %v6343 = vor.u32 %v6338, %v6342
        %v6345 = vshll.u32 %v6186, 16
        %v6347 = vrot.slane %v6345, 1
        %v6348 = vsel %vm714, %v6343, %v6347
        %v6350 = vshrl.u32 %v6187, 16
        %v6352 = vshll.u32 %v6187, 16
        %v6354 = vrot.slane %v6352, 1
        %v6355 = vor.u32 %v6350, %v6354
        %v6357 = vshll.u32 %v6188, 16
        %v6359 = vrot.slane %v6357, 1
        %v6360 = vsel %vm714, %v6355, %v6359
        %v6362 = vshrl.u32 %v6189, 16
        %v6364 = vshll.u32 %v6189, 16
        %v6366 = vrot.slane %v6364, 1
        %v6367 = vor.u32 %v6362, %v6366
        %v6369 = vshll.u32 %v6190, 16
        %v6371 = vrot.slane %v6369, 1
        %v6372 = vsel %vm714, %v6367, %v6371
        %6373 = vrot.lane.b32.xlu0 %v3667, 96
        %v6374 = vpop.permute.xlu0 %6373
        %6375 = vrot.lane.b32.xlu0 %v3668, 96
        %v6376 = vpop.permute.xlu0 %6375
        %v6380 = vsel %vm915, %v6204, 0
        %v6383 = vsel %vm915, %v6216, 0
        %v6386 = vsel %vm915, %v6228, 0
        %v6389 = vsel %vm915, %v6240, 0
        %v6392 = vsel %vm915, %v6252, 0
        %v6395 = vsel %vm915, %v6264, 0
        %v6398 = vsel %vm915, %v6276, 0
        %v6401 = vsel %vm915, %v6288, 0
        %v6404 = vsel %vm915, %v6300, 0
        %v6407 = vsel %vm915, %v6312, 0
        %v6410 = vsel %vm915, %v6324, 0
        %v6413 = vsel %vm915, %v6336, 0
        %v6416 = vsel %vm915, %v6348, 0
        %v6419 = vsel %vm915, %v6360, 0
        %v6422 = vsel %vm915, %v6372, 0
        %6424 = vmatprep.subr.bf16.mxu0 0
        %6425 = vmatpush1.bf16.msra.mxu0 %v6374
        %6426 = vmatprep.subr.bf16.mxu0 0
        %6427 = vmatpush1.bf16.msra.mxu0 %v6376
        %6428 = vmatprep.subr.bf16.mxu0 0
        %6429 = vmatpush1.bf16.msra.mxu0 0
        %6430 = vmatprep.subr.bf16.mxu0 0
        %6431 = vmatpush1.bf16.msra.mxu0 0
        %6432 = vmatprep.subr.bf16.mxu0 0
        %6433 = vmatpush1.bf16.msra.mxu0 0
        %6434 = vmatprep.subr.bf16.mxu0 0
        %6435 = vmatpush1.bf16.msra.mxu0 0
        %6436 = vmatprep.subr.bf16.mxu0 0
        %6437 = vmatpush1.bf16.msra.mxu0 0
        %6438 = vmatprep.subr.bf16.mxu0 0
        %6439 = vmatpush1.bf16.msra.mxu0 0
        %6440 = vmatprep.subr.bf16.mxu0 0
        %6441 = vmatpush1.bf16.msra.mxu0 0
        %6442 = vmatprep.subr.bf16.mxu0 0
        %6443 = vmatpush1.bf16.msra.mxu0 0
        %6444 = vmatprep.subr.bf16.mxu0 0
        %6445 = vmatpush1.bf16.msra.mxu0 0
        %6446 = vmatprep.subr.bf16.mxu0 0
        %6447 = vmatpush1.bf16.msra.mxu0 0
        %6448 = vmatprep.subr.bf16.mxu0 0
        %6449 = vmatpush1.bf16.msra.mxu0 0
        %6450 = vmatprep.subr.bf16.mxu0 0
        %6451 = vmatpush1.bf16.msra.mxu0 0
        %6452 = vmatprep.subr.bf16.mxu0 0
        %6453 = vmatpush1.bf16.msra.mxu0 0
        %6454 = vmatprep.subr.bf16.mxu0 0
        %6455 = vmatpush1.bf16.msra.mxu0 0
        %6456 = vmatprep.mubr.bf16.mxu0 0
        %6457 = vmatmul.mubr.bf16.gmra.mrb[0].mxu0 %v917
        %v6458 = vpop.f32.mrb[0].mxu0
        %v6459 = vadd.f32 0.0, %v6458
        %v6460 = vpop.f32.mrb[0].mxu0
        %v6461 = vpop.f32.mrb[0].mxu0
        %v6462 = vadd.f32 0.0, %v6461
        %v6463 = vpop.f32.mrb[0].mxu0
        %6464 = vmatprep.mubr.bf16.mxu0 0
        %6465 = vmatmul.mubr.bf16.gmra.mrb[0].mxu0 %v6380
        %v6466 = vpop.f32.mrb[0].mxu0
        %v6467 = vadd.f32 0.0, %v6466
        %v6468 = vpop.f32.mrb[0].mxu0
        %v6469 = vpop.f32.mrb[0].mxu0
        %v6470 = vadd.f32 0.0, %v6469
        %v6471 = vpop.f32.mrb[0].mxu0
        %6472 = vmatprep.mubr.bf16.mxu0 0
        %6473 = vmatmul.mubr.bf16.gmra.mrb[0].mxu0 %v6383
        %v6474 = vpop.f32.mrb[0].mxu0
        %v6475 = vadd.f32 0.0, %v6474
        %v6476 = vpop.f32.mrb[0].mxu0
        %v6477 = vpop.f32.mrb[0].mxu0
        %v6478 = vadd.f32 0.0, %v6477
        %v6479 = vpop.f32.mrb[0].mxu0
        %6480 = vmatprep.mubr.bf16.mxu0 0
        %6481 = vmatmul.mubr.bf16.gmra.mrb[0].mxu0 %v6386
        %v6482 = vpop.f32.mrb[0].mxu0
        %v6483 = vadd.f32 0.0, %v6482
        %v6484 = vpop.f32.mrb[0].mxu0
        %v6485 = vpop.f32.mrb[0].mxu0
        %v6486 = vadd.f32 0.0, %v6485
        %v6487 = vpop.f32.mrb[0].mxu0
        %6488 = vmatprep.mubr.bf16.mxu0 0
        %6489 = vmatmul.mubr.bf16.gmra.mrb[0].mxu0 %v6389
        %v6490 = vpop.f32.mrb[0].mxu0
        %v6491 = vadd.f32 0.0, %v6490
        %v6492 = vpop.f32.mrb[0].mxu0
        %v6493 = vpop.f32.mrb[0].mxu0
        %v6494 = vadd.f32 0.0, %v6493
        %v6495 = vpop.f32.mrb[0].mxu0
        %6496 = vmatprep.mubr.bf16.mxu0 0
        %6497 = vmatmul.mubr.bf16.gmra.mrb[0].mxu0 %v6392
        %v6498 = vpop.f32.mrb[0].mxu0
        %v6499 = vadd.f32 0.0, %v6498
        %v6500 = vpop.f32.mrb[0].mxu0
        %v6501 = vpop.f32.mrb[0].mxu0
        %v6502 = vadd.f32 0.0, %v6501
        %v6503 = vpop.f32.mrb[0].mxu0
        %6504 = vmatprep.mubr.bf16.mxu0 0
        %6505 = vmatmul.mubr.bf16.gmra.mrb[0].mxu0 %v6395
        %v6506 = vpop.f32.mrb[0].mxu0
        %v6507 = vadd.f32 0.0, %v6506
        %v6508 = vpop.f32.mrb[0].mxu0
        %v6509 = vpop.f32.mrb[0].mxu0
        %v6510 = vadd.f32 0.0, %v6509
        %v6511 = vpop.f32.mrb[0].mxu0
        %6512 = vmatprep.mubr.bf16.mxu0 0
        %6513 = vmatmul.mubr.bf16.gmra.mrb[0].mxu0 %v6398
        %v6514 = vpop.f32.mrb[0].mxu0
        %v6515 = vadd.f32 0.0, %v6514
        %v6516 = vpop.f32.mrb[0].mxu0
        %v6517 = vpop.f32.mrb[0].mxu0
        %v6518 = vadd.f32 0.0, %v6517
        %v6519 = vpop.f32.mrb[0].mxu0
        %6520 = vmatprep.mubr.bf16.mxu0 0
        %6521 = vmatmul.mubr.bf16.gmra.mrb[0].mxu0 %v6401
        %v6522 = vpop.f32.mrb[0].mxu0
        %v6523 = vadd.f32 0.0, %v6522
        %v6524 = vpop.f32.mrb[0].mxu0
        %v6525 = vpop.f32.mrb[0].mxu0
        %v6526 = vadd.f32 0.0, %v6525
        %v6527 = vpop.f32.mrb[0].mxu0
        %6528 = vmatprep.mubr.bf16.mxu0 0
        %6529 = vmatmul.mubr.bf16.gmra.mrb[0].mxu0 %v6404
        %v6530 = vpop.f32.mrb[0].mxu0
        %v6531 = vadd.f32 0.0, %v6530
        %v6532 = vpop.f32.mrb[0].mxu0
        %v6533 = vpop.f32.mrb[0].mxu0
        %v6534 = vadd.f32 0.0, %v6533
        %v6535 = vpop.f32.mrb[0].mxu0
        %6536 = vmatprep.mubr.bf16.mxu0 0
        %6537 = vmatmul.mubr.bf16.gmra.mrb[0].mxu0 %v6407
        %v6538 = vpop.f32.mrb[0].mxu0
        %v6539 = vadd.f32 0.0, %v6538
        %v6540 = vpop.f32.mrb[0].mxu0
        %v6541 = vpop.f32.mrb[0].mxu0
        %v6542 = vadd.f32 0.0, %v6541
        %v6543 = vpop.f32.mrb[0].mxu0
        %6544 = vmatprep.mubr.bf16.mxu0 0
        %6545 = vmatmul.mubr.bf16.gmra.mrb[0].mxu0 %v6410
        %v6546 = vpop.f32.mrb[0].mxu0
        %v6547 = vadd.f32 0.0, %v6546
        %v6548 = vpop.f32.mrb[0].mxu0
        %v6549 = vpop.f32.mrb[0].mxu0
        %v6550 = vadd.f32 0.0, %v6549
        %v6551 = vpop.f32.mrb[0].mxu0
        %6552 = vmatprep.mubr.bf16.mxu0 0
        %6553 = vmatmul.mubr.bf16.gmra.mrb[0].mxu0 %v6413
        %v6554 = vpop.f32.mrb[0].mxu0
        %v6555 = vadd.f32 0.0, %v6554
        %v6556 = vpop.f32.mrb[0].mxu0
        %v6557 = vpop.f32.mrb[0].mxu0
        %v6558 = vadd.f32 0.0, %v6557
        %v6559 = vpop.f32.mrb[0].mxu0
        %6560 = vmatprep.mubr.bf16.mxu0 0
        %6561 = vmatmul.mubr.bf16.gmra.mrb[0].mxu0 %v6416
        %v6562 = vpop.f32.mrb[0].mxu0
        %v6563 = vadd.f32 0.0, %v6562
        %v6564 = vpop.f32.mrb[0].mxu0
        %v6565 = vpop.f32.mrb[0].mxu0
        %v6566 = vadd.f32 0.0, %v6565
        %v6567 = vpop.f32.mrb[0].mxu0
        %6568 = vmatprep.mubr.bf16.mxu0 0
        %6569 = vmatmul.mubr.bf16.gmra.mrb[0].mxu0 %v6419
        %v6570 = vpop.f32.mrb[0].mxu0
        %v6571 = vadd.f32 0.0, %v6570
        %v6572 = vpop.f32.mrb[0].mxu0
        %v6573 = vpop.f32.mrb[0].mxu0
        %v6574 = vadd.f32 0.0, %v6573
        %v6575 = vpop.f32.mrb[0].mxu0
        %6576 = vmatprep.mubr.bf16.mxu0 0
        %6577 = vmatmul.mubr.bf16.gmra.mrb[0].mxu0 %v6422
        %v6578 = vpop.f32.mrb[0].mxu0
        %v6579 = vadd.f32 0.0, %v6578
        %v6580 = vpop.f32.mrb[0].mxu0
        %v6581 = vpop.f32.mrb[0].mxu0
        %v6582 = vadd.f32 0.0, %v6581
        %v6583 = vpop.f32.mrb[0].mxu0
        %6584 = vdwg.mxu0
        %6585 = vrot.lane.b32.xlu0 %v3885, 96
        %v6586 = vpop.permute.xlu0 %6585
        %6587 = vrot.lane.b32.xlu0 %v3886, 96
        %v6588 = vpop.permute.xlu0 %6587
        %v6591 = vsel %vm915, %v6161, 0
        %v6593 = vsel %vm915, %v6163, 0
        %v6595 = vsel %vm915, %v6165, 0
        %v6597 = vsel %vm915, %v6167, 0
        %v6599 = vsel %vm915, %v6169, 0
        %v6601 = vsel %vm915, %v6171, 0
        %v6603 = vsel %vm915, %v6173, 0
        %v6605 = vsel %vm915, %v6175, 0
        %v6607 = vsel %vm915, %v6177, 0
        %v6609 = vsel %vm915, %v6179, 0
        %v6611 = vsel %vm915, %v6181, 0
        %v6613 = vsel %vm915, %v6183, 0
        %v6615 = vsel %vm915, %v6185, 0
        %v6617 = vsel %vm915, %v6187, 0
        %v6619 = vsel %vm915, %v6189, 0
        %6621 = vmatprep.subr.bf16.mxu0 0
        %6622 = vmatpush1.bf16.msra.mxu0 %v6586
        %6623 = vmatprep.subr.bf16.mxu0 0
        %6624 = vmatpush1.bf16.msra.mxu0 %v6588
        %6625 = vmatprep.subr.bf16.mxu0 0
        %6626 = vmatpush1.bf16.msra.mxu0 0
        %6627 = vmatprep.subr.bf16.mxu0 0
        %6628 = vmatpush1.bf16.msra.mxu0 0
        %6629 = vmatprep.subr.bf16.mxu0 0
        %6630 = vmatpush1.bf16.msra.mxu0 0
        %6631 = vmatprep.subr.bf16.mxu0 0
        %6632 = vmatpush1.bf16.msra.mxu0 0
        %6633 = vmatprep.subr.bf16.mxu0 0
        %6634 = vmatpush1.bf16.msra.mxu0 0
        %6635 = vmatprep.subr.bf16.mxu0 0
        %6636 = vmatpush1.bf16.msra.mxu0 0
        %6637 = vmatprep.subr.bf16.mxu0 0
        %6638 = vmatpush1.bf16.msra.mxu0 0
        %6639 = vmatprep.subr.bf16.mxu0 0
        %6640 = vmatpush1.bf16.msra.mxu0 0
        %6641 = vmatprep.subr.bf16.mxu0 0
        %6642 = vmatpush1.bf16.msra.mxu0 0
        %6643 = vmatprep.subr.bf16.mxu0 0
        %6644 = vmatpush1.bf16.msra.mxu0 0
        %6645 = vmatprep.subr.bf16.mxu0 0
        %6646 = vmatpush1.bf16.msra.mxu0 0
        %6647 = vmatprep.subr.bf16.mxu0 0
        %6648 = vmatpush1.bf16.msra.mxu0 0
        %6649 = vmatprep.subr.bf16.mxu0 0
        %6650 = vmatpush1.bf16.msra.mxu0 0
        %6651 = vmatprep.subr.bf16.mxu0 0
        %6652 = vmatpush1.bf16.msra.mxu0 0
        %6653 = vmatprep.mubr.bf16.mxu0 0
        %6654 = vmatmul.mubr.bf16.gmra.mrb[0].mxu0 %v1137
        %v6655 = vpop.f32.mrb[0].mxu0
        %v6656 = vadd.f32 %v6459, %v6655
        %v6657 = vpop.f32.mrb[0].mxu0
        %v6658 = vpop.f32.mrb[0].mxu0
        %v6659 = vadd.f32 %v6462, %v6658
        %v6660 = vpop.f32.mrb[0].mxu0
        %6661 = vmatprep.mubr.bf16.mxu0 0
        %6662 = vmatmul.mubr.bf16.gmra.mrb[0].mxu0 %v6591
        %v6663 = vpop.f32.mrb[0].mxu0
        %v6664 = vadd.f32 %v6467, %v6663
        %v6665 = vpop.f32.mrb[0].mxu0
        %v6666 = vpop.f32.mrb[0].mxu0
        %v6667 = vadd.f32 %v6470, %v6666
        %v6668 = vpop.f32.mrb[0].mxu0
        %6669 = vmatprep.mubr.bf16.mxu0 0
        %6670 = vmatmul.mubr.bf16.gmra.mrb[0].mxu0 %v6593
        %v6671 = vpop.f32.mrb[0].mxu0
        %v6672 = vadd.f32 %v6475, %v6671
        %v6673 = vpop.f32.mrb[0].mxu0
        %v6674 = vpop.f32.mrb[0].mxu0
        %v6675 = vadd.f32 %v6478, %v6674
        %v6676 = vpop.f32.mrb[0].mxu0
        %6677 = vmatprep.mubr.bf16.mxu0 0
        %6678 = vmatmul.mubr.bf16.gmra.mrb[0].mxu0 %v6595
        %v6679 = vpop.f32.mrb[0].mxu0
        %v6680 = vadd.f32 %v6483, %v6679
        %v6681 = vpop.f32.mrb[0].mxu0
        %v6682 = vpop.f32.mrb[0].mxu0
        %v6683 = vadd.f32 %v6486, %v6682
        %v6684 = vpop.f32.mrb[0].mxu0
        %6685 = vmatprep.mubr.bf16.mxu0 0
        %6686 = vmatmul.mubr.bf16.gmra.mrb[0].mxu0 %v6597
        %v6687 = vpop.f32.mrb[0].mxu0
        %v6688 = vadd.f32 %v6491, %v6687
        %v6689 = vpop.f32.mrb[0].mxu0
        %v6690 = vpop.f32.mrb[0].mxu0
        %v6691 = vadd.f32 %v6494, %v6690
        %v6692 = vpop.f32.mrb[0].mxu0
        %6693 = vmatprep.mubr.bf16.mxu0 0
        %6694 = vmatmul.mubr.bf16.gmra.mrb[0].mxu0 %v6599
        %v6695 = vpop.f32.mrb[0].mxu0
        %v6696 = vadd.f32 %v6499, %v6695
        %v6697 = vpop.f32.mrb[0].mxu0
        %v6698 = vpop.f32.mrb[0].mxu0
        %v6699 = vadd.f32 %v6502, %v6698
        %v6700 = vpop.f32.mrb[0].mxu0
        %6701 = vmatprep.mubr.bf16.mxu0 0
        %6702 = vmatmul.mubr.bf16.gmra.mrb[0].mxu0 %v6601
        %v6703 = vpop.f32.mrb[0].mxu0
        %v6704 = vadd.f32 %v6507, %v6703
        %v6705 = vpop.f32.mrb[0].mxu0
        %v6706 = vpop.f32.mrb[0].mxu0
        %v6707 = vadd.f32 %v6510, %v6706
        %v6708 = vpop.f32.mrb[0].mxu0
        %6709 = vmatprep.mubr.bf16.mxu0 0
        %6710 = vmatmul.mubr.bf16.gmra.mrb[0].mxu0 %v6603
        %v6711 = vpop.f32.mrb[0].mxu0
        %v6712 = vadd.f32 %v6515, %v6711
        %v6713 = vpop.f32.mrb[0].mxu0
        %v6714 = vpop.f32.mrb[0].mxu0
        %v6715 = vadd.f32 %v6518, %v6714
        %v6716 = vpop.f32.mrb[0].mxu0
        %6717 = vmatprep.mubr.bf16.mxu0 0
        %6718 = vmatmul.mubr.bf16.gmra.mrb[0].mxu0 %v6605
        %v6719 = vpop.f32.mrb[0].mxu0
        %v6720 = vadd.f32 %v6523, %v6719
        %v6721 = vpop.f32.mrb[0].mxu0
        %v6722 = vpop.f32.mrb[0].mxu0
        %v6723 = vadd.f32 %v6526, %v6722
        %v6724 = vpop.f32.mrb[0].mxu0
        %6725 = vmatprep.mubr.bf16.mxu0 0
        %6726 = vmatmul.mubr.bf16.gmra.mrb[0].mxu0 %v6607
        %v6727 = vpop.f32.mrb[0].mxu0
        %v6728 = vadd.f32 %v6531, %v6727
        %v6729 = vpop.f32.mrb[0].mxu0
        %v6730 = vpop.f32.mrb[0].mxu0
        %v6731 = vadd.f32 %v6534, %v6730
        %v6732 = vpop.f32.mrb[0].mxu0
        %6733 = vmatprep.mubr.bf16.mxu0 0
        %6734 = vmatmul.mubr.bf16.gmra.mrb[0].mxu0 %v6609
        %v6735 = vpop.f32.mrb[0].mxu0
        %v6736 = vadd.f32 %v6539, %v6735
        %v6737 = vpop.f32.mrb[0].mxu0
        %v6738 = vpop.f32.mrb[0].mxu0
        %v6739 = vadd.f32 %v6542, %v6738
        %v6740 = vpop.f32.mrb[0].mxu0
        %6741 = vmatprep.mubr.bf16.mxu0 0
        %6742 = vmatmul.mubr.bf16.gmra.mrb[0].mxu0 %v6611
        %v6743 = vpop.f32.mrb[0].mxu0
        %v6744 = vadd.f32 %v6547, %v6743
        %v6745 = vpop.f32.mrb[0].mxu0
        %v6746 = vpop.f32.mrb[0].mxu0
        %v6747 = vadd.f32 %v6550, %v6746
        %v6748 = vpop.f32.mrb[0].mxu0
        %6749 = vmatprep.mubr.bf16.mxu0 0
        %6750 = vmatmul.mubr.bf16.gmra.mrb[0].mxu0 %v6613
        %v6751 = vpop.f32.mrb[0].mxu0
        %v6752 = vadd.f32 %v6555, %v6751
        %v6753 = vpop.f32.mrb[0].mxu0
        %v6754 = vpop.f32.mrb[0].mxu0
        %v6755 = vadd.f32 %v6558, %v6754
        %v6756 = vpop.f32.mrb[0].mxu0
        %6757 = vmatprep.mubr.bf16.mxu0 0
        %6758 = vmatmul.mubr.bf16.gmra.mrb[0].mxu0 %v6615
        %v6759 = vpop.f32.mrb[0].mxu0
        %v6760 = vadd.f32 %v6563, %v6759
        %v6761 = vpop.f32.mrb[0].mxu0
        %v6762 = vpop.f32.mrb[0].mxu0
        %v6763 = vadd.f32 %v6566, %v6762
        %v6764 = vpop.f32.mrb[0].mxu0
        %6765 = vmatprep.mubr.bf16.mxu0 0
        %6766 = vmatmul.mubr.bf16.gmra.mrb[0].mxu0 %v6617
        %v6767 = vpop.f32.mrb[0].mxu0
        %v6768 = vadd.f32 %v6571, %v6767
        %v6769 = vpop.f32.mrb[0].mxu0
        %v6770 = vpop.f32.mrb[0].mxu0
        %v6771 = vadd.f32 %v6574, %v6770
        %v6772 = vpop.f32.mrb[0].mxu0
        %6773 = vmatprep.mubr.bf16.mxu0 0
        %6774 = vmatmul.mubr.bf16.gmra.mrb[0].mxu0 %v6619
        %v6775 = vpop.f32.mrb[0].mxu0
        %v6776 = vadd.f32 %v6579, %v6775
        %v6777 = vpop.f32.mrb[0].mxu0
        %v6778 = vpop.f32.mrb[0].mxu0
        %v6779 = vadd.f32 %v6582, %v6778
        %v6780 = vpop.f32.mrb[0].mxu0
        %6781 = vdwg.mxu0
        %v6812 = vrot.slane %v6161, 1
        %v6813 = vrot.slane %v6162, 1
        %v6814 = vsel %vm1361, %v6812, %v6813
        %v6815 = vrot.slane %v6163, 1
        %v6816 = vrot.slane %v6164, 1
        %v6817 = vsel %vm1361, %v6815, %v6816
        %v6818 = vrot.slane %v6165, 1
        %v6819 = vrot.slane %v6166, 1
        %v6820 = vsel %vm1361, %v6818, %v6819
        %v6821 = vrot.slane %v6167, 1
        %v6822 = vrot.slane %v6168, 1
        %v6823 = vsel %vm1361, %v6821, %v6822
        %v6824 = vrot.slane %v6169, 1
        %v6825 = vrot.slane %v6170, 1
        %v6826 = vsel %vm1361, %v6824, %v6825
        %v6827 = vrot.slane %v6171, 1
        %v6828 = vrot.slane %v6172, 1
        %v6829 = vsel %vm1361, %v6827, %v6828
        %v6830 = vrot.slane %v6173, 1
        %v6831 = vrot.slane %v6174, 1
        %v6832 = vsel %vm1361, %v6830, %v6831
        %v6833 = vrot.slane %v6175, 1
        %v6834 = vrot.slane %v6176, 1
        %v6835 = vsel %vm1361, %v6833, %v6834
        %v6836 = vrot.slane %v6177, 1
        %v6837 = vrot.slane %v6178, 1
        %v6838 = vsel %vm1361, %v6836, %v6837
        %v6839 = vrot.slane %v6179, 1
        %v6840 = vrot.slane %v6180, 1
        %v6841 = vsel %vm1361, %v6839, %v6840
        %v6842 = vrot.slane %v6181, 1
        %v6843 = vrot.slane %v6182, 1
        %v6844 = vsel %vm1361, %v6842, %v6843
        %v6845 = vrot.slane %v6183, 1
        %v6846 = vrot.slane %v6184, 1
        %v6847 = vsel %vm1361, %v6845, %v6846
        %v6848 = vrot.slane %v6185, 1
        %v6849 = vrot.slane %v6186, 1
        %v6850 = vsel %vm1361, %v6848, %v6849
        %v6851 = vrot.slane %v6187, 1
        %v6852 = vrot.slane %v6188, 1
        %v6853 = vsel %vm1361, %v6851, %v6852
        %v6854 = vrot.slane %v6189, 1
        %v6855 = vrot.slane %v6190, 1
        %v6856 = vsel %vm1361, %v6854, %v6855
        %6857 = vrot.lane.b32.xlu0 %v4163, 96
        %v6858 = vpop.permute.xlu0 %6857
        %6859 = vrot.lane.b32.xlu0 %v4164, 96
        %v6860 = vpop.permute.xlu0 %6859
        %v6864 = vsel %vm915, %v6814, 0
        %v6867 = vsel %vm915, %v6817, 0
        %v6870 = vsel %vm915, %v6820, 0
        %v6873 = vsel %vm915, %v6823, 0
        %v6876 = vsel %vm915, %v6826, 0
        %v6879 = vsel %vm915, %v6829, 0
        %v6882 = vsel %vm915, %v6832, 0
        %v6885 = vsel %vm915, %v6835, 0
        %v6888 = vsel %vm915, %v6838, 0
        %v6891 = vsel %vm915, %v6841, 0
        %v6894 = vsel %vm915, %v6844, 0
        %v6897 = vsel %vm915, %v6847, 0
        %v6900 = vsel %vm915, %v6850, 0
        %v6903 = vsel %vm915, %v6853, 0
        %v6906 = vsel %vm915, %v6856, 0
        %6908 = vmatprep.subr.bf16.mxu0 0
        %6909 = vmatpush1.bf16.msra.mxu0 %v6858
        %6910 = vmatprep.subr.bf16.mxu0 0
        %6911 = vmatpush1.bf16.msra.mxu0 %v6860
        %6912 = vmatprep.subr.bf16.mxu0 0
        %6913 = vmatpush1.bf16.msra.mxu0 0
        %6914 = vmatprep.subr.bf16.mxu0 0
        %6915 = vmatpush1.bf16.msra.mxu0 0
        %6916 = vmatprep.subr.bf16.mxu0 0
        %6917 = vmatpush1.bf16.msra.mxu0 0
        %6918 = vmatprep.subr.bf16.mxu0 0
        %6919 = vmatpush1.bf16.msra.mxu0 0
        %6920 = vmatprep.subr.bf16.mxu0 0
        %6921 = vmatpush1.bf16.msra.mxu0 0
        %6922 = vmatprep.subr.bf16.mxu0 0
        %6923 = vmatpush1.bf16.msra.mxu0 0
        %6924 = vmatprep.subr.bf16.mxu0 0
        %6925 = vmatpush1.bf16.msra.mxu0 0
        %6926 = vmatprep.subr.bf16.mxu0 0
        %6927 = vmatpush1.bf16.msra.mxu0 0
        %6928 = vmatprep.subr.bf16.mxu0 0
        %6929 = vmatpush1.bf16.msra.mxu0 0
        %6930 = vmatprep.subr.bf16.mxu0 0
        %6931 = vmatpush1.bf16.msra.mxu0 0
        %6932 = vmatprep.subr.bf16.mxu0 0
        %6933 = vmatpush1.bf16.msra.mxu0 0
        %6934 = vmatprep.subr.bf16.mxu0 0
        %6935 = vmatpush1.bf16.msra.mxu0 0
        %6936 = vmatprep.subr.bf16.mxu0 0
        %6937 = vmatpush1.bf16.msra.mxu0 0
        %6938 = vmatprep.subr.bf16.mxu0 0
        %6939 = vmatpush1.bf16.msra.mxu0 0
        %6940 = vmatprep.mubr.bf16.mxu0 0
        %6941 = vmatmul.mubr.bf16.gmra.mrb[0].mxu0 %v1422
        %v6942 = vpop.f32.mrb[0].mxu0
        %v6943 = vadd.f32 0.0, %v6942
        %v6944 = vpop.f32.mrb[0].mxu0
        %v6945 = vpop.f32.mrb[0].mxu0
        %v6946 = vadd.f32 0.0, %v6945
        %v6947 = vpop.f32.mrb[0].mxu0
        %6948 = vmatprep.mubr.bf16.mxu0 0
        %6949 = vmatmul.mubr.bf16.gmra.mrb[0].mxu0 %v6864
        %v6950 = vpop.f32.mrb[0].mxu0
        %v6951 = vadd.f32 0.0, %v6950
        %v6952 = vpop.f32.mrb[0].mxu0
        %v6953 = vpop.f32.mrb[0].mxu0
        %v6954 = vadd.f32 0.0, %v6953
        %v6955 = vpop.f32.mrb[0].mxu0
        %6956 = vmatprep.mubr.bf16.mxu0 0
        %6957 = vmatmul.mubr.bf16.gmra.mrb[0].mxu0 %v6867
        %v6958 = vpop.f32.mrb[0].mxu0
        %v6959 = vadd.f32 0.0, %v6958
        %v6960 = vpop.f32.mrb[0].mxu0
        %v6961 = vpop.f32.mrb[0].mxu0
        %v6962 = vadd.f32 0.0, %v6961
        %v6963 = vpop.f32.mrb[0].mxu0
        %6964 = vmatprep.mubr.bf16.mxu0 0
        %6965 = vmatmul.mubr.bf16.gmra.mrb[0].mxu0 %v6870
        %v6966 = vpop.f32.mrb[0].mxu0
        %v6967 = vadd.f32 0.0, %v6966
        %v6968 = vpop.f32.mrb[0].mxu0
        %v6969 = vpop.f32.mrb[0].mxu0
        %v6970 = vadd.f32 0.0, %v6969
        %v6971 = vpop.f32.mrb[0].mxu0
        %6972 = vmatprep.mubr.bf16.mxu0 0
        %6973 = vmatmul.mubr.bf16.gmra.mrb[0].mxu0 %v6873
        %v6974 = vpop.f32.mrb[0].mxu0
        %v6975 = vadd.f32 0.0, %v6974
        %v6976 = vpop.f32.mrb[0].mxu0
        %v6977 = vpop.f32.mrb[0].mxu0
        %v6978 = vadd.f32 0.0, %v6977
        %v6979 = vpop.f32.mrb[0].mxu0
        %6980 = vmatprep.mubr.bf16.mxu0 0
        %6981 = vmatmul.mubr.bf16.gmra.mrb[0].mxu0 %v6876
        %v6982 = vpop.f32.mrb[0].mxu0
        %v6983 = vadd.f32 0.0, %v6982
        %v6984 = vpop.f32.mrb[0].mxu0
        %v6985 = vpop.f32.mrb[0].mxu0
        %v6986 = vadd.f32 0.0, %v6985
        %v6987 = vpop.f32.mrb[0].mxu0
        %6988 = vmatprep.mubr.bf16.mxu0 0
        %6989 = vmatmul.mubr.bf16.gmra.mrb[0].mxu0 %v6879
        %v6990 = vpop.f32.mrb[0].mxu0
        %v6991 = vadd.f32 0.0, %v6990
        %v6992 = vpop.f32.mrb[0].mxu0
        %v6993 = vpop.f32.mrb[0].mxu0
        %v6994 = vadd.f32 0.0, %v6993
        %v6995 = vpop.f32.mrb[0].mxu0
        %6996 = vmatprep.mubr.bf16.mxu0 0
        %6997 = vmatmul.mubr.bf16.gmra.mrb[0].mxu0 %v6882
        %v6998 = vpop.f32.mrb[0].mxu0
        %v6999 = vadd.f32 0.0, %v6998
        %v7000 = vpop.f32.mrb[0].mxu0
        %v7001 = vpop.f32.mrb[0].mxu0
        %v7002 = vadd.f32 0.0, %v7001
        %v7003 = vpop.f32.mrb[0].mxu0
        %7004 = vmatprep.mubr.bf16.mxu0 0
        %7005 = vmatmul.mubr.bf16.gmra.mrb[0].mxu0 %v6885
        %v7006 = vpop.f32.mrb[0].mxu0
        %v7007 = vadd.f32 0.0, %v7006
        %v7008 = vpop.f32.mrb[0].mxu0
        %v7009 = vpop.f32.mrb[0].mxu0
        %v7010 = vadd.f32 0.0, %v7009
        %v7011 = vpop.f32.mrb[0].mxu0
        %7012 = vmatprep.mubr.bf16.mxu0 0
        %7013 = vmatmul.mubr.bf16.gmra.mrb[0].mxu0 %v6888
        %v7014 = vpop.f32.mrb[0].mxu0
        %v7015 = vadd.f32 0.0, %v7014
        %v7016 = vpop.f32.mrb[0].mxu0
        %v7017 = vpop.f32.mrb[0].mxu0
        %v7018 = vadd.f32 0.0, %v7017
        %v7019 = vpop.f32.mrb[0].mxu0
        %7020 = vmatprep.mubr.bf16.mxu0 0
        %7021 = vmatmul.mubr.bf16.gmra.mrb[0].mxu0 %v6891
        %v7022 = vpop.f32.mrb[0].mxu0
        %v7023 = vadd.f32 0.0, %v7022
        %v7024 = vpop.f32.mrb[0].mxu0
        %v7025 = vpop.f32.mrb[0].mxu0
        %v7026 = vadd.f32 0.0, %v7025
        %v7027 = vpop.f32.mrb[0].mxu0
        %7028 = vmatprep.mubr.bf16.mxu0 0
        %7029 = vmatmul.mubr.bf16.gmra.mrb[0].mxu0 %v6894
        %v7030 = vpop.f32.mrb[0].mxu0
        %v7031 = vadd.f32 0.0, %v7030
        %v7032 = vpop.f32.mrb[0].mxu0
        %v7033 = vpop.f32.mrb[0].mxu0
        %v7034 = vadd.f32 0.0, %v7033
        %v7035 = vpop.f32.mrb[0].mxu0
        %7036 = vmatprep.mubr.bf16.mxu0 0
        %7037 = vmatmul.mubr.bf16.gmra.mrb[0].mxu0 %v6897
        %v7038 = vpop.f32.mrb[0].mxu0
        %v7039 = vadd.f32 0.0, %v7038
        %v7040 = vpop.f32.mrb[0].mxu0
        %v7041 = vpop.f32.mrb[0].mxu0
        %v7042 = vadd.f32 0.0, %v7041
        %v7043 = vpop.f32.mrb[0].mxu0
        %7044 = vmatprep.mubr.bf16.mxu0 0
        %7045 = vmatmul.mubr.bf16.gmra.mrb[0].mxu0 %v6900
        %v7046 = vpop.f32.mrb[0].mxu0
        %v7047 = vadd.f32 0.0, %v7046
        %v7048 = vpop.f32.mrb[0].mxu0
        %v7049 = vpop.f32.mrb[0].mxu0
        %v7050 = vadd.f32 0.0, %v7049
        %v7051 = vpop.f32.mrb[0].mxu0
        %7052 = vmatprep.mubr.bf16.mxu0 0
        %7053 = vmatmul.mubr.bf16.gmra.mrb[0].mxu0 %v6903
        %v7054 = vpop.f32.mrb[0].mxu0
        %v7055 = vadd.f32 0.0, %v7054
        %v7056 = vpop.f32.mrb[0].mxu0
        %v7057 = vpop.f32.mrb[0].mxu0
        %v7058 = vadd.f32 0.0, %v7057
        %v7059 = vpop.f32.mrb[0].mxu0
        %7060 = vmatprep.mubr.bf16.mxu0 0
        %7061 = vmatmul.mubr.bf16.gmra.mrb[0].mxu0 %v6906
        %v7062 = vpop.f32.mrb[0].mxu0
        %v7063 = vadd.f32 0.0, %v7062
        %v7064 = vpop.f32.mrb[0].mxu0
        %v7065 = vpop.f32.mrb[0].mxu0
        %v7066 = vadd.f32 0.0, %v7065
        %v7067 = vpop.f32.mrb[0].mxu0
        %7068 = vdwg.mxu0
        %v7069 = vadd.f32 %v6656, %v6943
        %v7070 = vadd.f32 %v6659, %v6946
        %v7071 = vadd.f32 %v6664, %v6951
        %v7072 = vadd.f32 %v6667, %v6954
        %v7073 = vadd.f32 %v6672, %v6959
        %v7074 = vadd.f32 %v6675, %v6962
        %v7075 = vadd.f32 %v6680, %v6967
        %v7076 = vadd.f32 %v6683, %v6970
        %v7077 = vadd.f32 %v6688, %v6975
        %v7078 = vadd.f32 %v6691, %v6978
        %v7079 = vadd.f32 %v6696, %v6983
        %v7080 = vadd.f32 %v6699, %v6986
        %v7081 = vadd.f32 %v6704, %v6991
        %v7082 = vadd.f32 %v6707, %v6994
        %v7083 = vadd.f32 %v6712, %v6999
        %v7084 = vadd.f32 %v6715, %v7002
        %v7085 = vadd.f32 %v6720, %v7007
        %v7086 = vadd.f32 %v6723, %v7010
        %v7087 = vadd.f32 %v6728, %v7015
        %v7088 = vadd.f32 %v6731, %v7018
        %v7089 = vadd.f32 %v6736, %v7023
        %v7090 = vadd.f32 %v6739, %v7026
        %v7091 = vadd.f32 %v6744, %v7031
        %v7092 = vadd.f32 %v6747, %v7034
        %v7093 = vadd.f32 %v6752, %v7039
        %v7094 = vadd.f32 %v6755, %v7042
        %v7095 = vadd.f32 %v6760, %v7047
        %v7096 = vadd.f32 %v6763, %v7050
        %v7097 = vadd.f32 %v6768, %v7055
        %v7098 = vadd.f32 %v6771, %v7058
        %v7099 = vadd.f32 %v6776, %v7063
        %v7100 = vadd.f32 %v6779, %v7066
        %7101 = vrot.lane.b32.xlu0 %v4413, 96
        %v7102 = vpop.permute.xlu0 %7101
        %7103 = vrot.lane.b32.xlu0 %v4414, 96
        %v7104 = vpop.permute.xlu0 %7103
        %v7108 = vsel %vm915, %v6191, 0
        %7110 = vmatprep.subr.bf16.mxu0 0
        %7111 = vmatpush1.bf16.msra.mxu0 %v7102
        %7112 = vmatprep.subr.bf16.mxu0 0
        %7113 = vmatpush1.bf16.msra.mxu0 %v7104
        %7114 = vmatprep.subr.bf16.mxu0 0
        %7115 = vmatpush1.bf16.msra.mxu0 0
        %7116 = vmatprep.subr.bf16.mxu0 0
        %7117 = vmatpush1.bf16.msra.mxu0 0
        %7118 = vmatprep.subr.bf16.mxu0 0
        %7119 = vmatpush1.bf16.msra.mxu0 0
        %7120 = vmatprep.subr.bf16.mxu0 0
        %7121 = vmatpush1.bf16.msra.mxu0 0
        %7122 = vmatprep.subr.bf16.mxu0 0
        %7123 = vmatpush1.bf16.msra.mxu0 0
        %7124 = vmatprep.subr.bf16.mxu0 0
        %7125 = vmatpush1.bf16.msra.mxu0 0
        %7126 = vmatprep.subr.bf16.mxu0 0
        %7127 = vmatpush1.bf16.msra.mxu0 0
        %7128 = vmatprep.subr.bf16.mxu0 0
        %7129 = vmatpush1.bf16.msra.mxu0 0
        %7130 = vmatprep.subr.bf16.mxu0 0
        %7131 = vmatpush1.bf16.msra.mxu0 0
        %7132 = vmatprep.subr.bf16.mxu0 0
        %7133 = vmatpush1.bf16.msra.mxu0 0
        %7134 = vmatprep.subr.bf16.mxu0 0
        %7135 = vmatpush1.bf16.msra.mxu0 0
        %7136 = vmatprep.subr.bf16.mxu0 0
        %7137 = vmatpush1.bf16.msra.mxu0 0
        %7138 = vmatprep.subr.bf16.mxu0 0
        %7139 = vmatpush1.bf16.msra.mxu0 0
        %7140 = vmatprep.subr.bf16.mxu0 0
        %7141 = vmatpush1.bf16.msra.mxu0 0
        %7142 = vmatprep.mubr.bf16.mxu0 0
        %7143 = vmatmul.mubr.bf16.gmra.mrb[0].mxu0 %v6591
        %v7144 = vpop.f32.mrb[0].mxu0
        %v7145 = vadd.f32 0.0, %v7144
        %v7146 = vpop.f32.mrb[0].mxu0
        %v7147 = vpop.f32.mrb[0].mxu0
        %v7148 = vadd.f32 0.0, %v7147
        %v7149 = vpop.f32.mrb[0].mxu0
        %7150 = vmatprep.mubr.bf16.mxu0 0
        %7151 = vmatmul.mubr.bf16.gmra.mrb[0].mxu0 %v6593
        %v7152 = vpop.f32.mrb[0].mxu0
        %v7153 = vadd.f32 0.0, %v7152
        %v7154 = vpop.f32.mrb[0].mxu0
        %v7155 = vpop.f32.mrb[0].mxu0
        %v7156 = vadd.f32 0.0, %v7155
        %v7157 = vpop.f32.mrb[0].mxu0
        %7158 = vmatprep.mubr.bf16.mxu0 0
        %7159 = vmatmul.mubr.bf16.gmra.mrb[0].mxu0 %v6595
        %v7160 = vpop.f32.mrb[0].mxu0
        %v7161 = vadd.f32 0.0, %v7160
        %v7162 = vpop.f32.mrb[0].mxu0
        %v7163 = vpop.f32.mrb[0].mxu0
        %v7164 = vadd.f32 0.0, %v7163
        %v7165 = vpop.f32.mrb[0].mxu0
        %7166 = vmatprep.mubr.bf16.mxu0 0
        %7167 = vmatmul.mubr.bf16.gmra.mrb[0].mxu0 %v6597
        %v7168 = vpop.f32.mrb[0].mxu0
        %v7169 = vadd.f32 0.0, %v7168
        %v7170 = vpop.f32.mrb[0].mxu0
        %v7171 = vpop.f32.mrb[0].mxu0
        %v7172 = vadd.f32 0.0, %v7171
        %v7173 = vpop.f32.mrb[0].mxu0
        %7174 = vmatprep.mubr.bf16.mxu0 0
        %7175 = vmatmul.mubr.bf16.gmra.mrb[0].mxu0 %v6599
        %v7176 = vpop.f32.mrb[0].mxu0
        %v7177 = vadd.f32 0.0, %v7176
        %v7178 = vpop.f32.mrb[0].mxu0
        %v7179 = vpop.f32.mrb[0].mxu0
        %v7180 = vadd.f32 0.0, %v7179
        %v7181 = vpop.f32.mrb[0].mxu0
        %7182 = vmatprep.mubr.bf16.mxu0 0
        %7183 = vmatmul.mubr.bf16.gmra.mrb[0].mxu0 %v6601
        %v7184 = vpop.f32.mrb[0].mxu0
        %v7185 = vadd.f32 0.0, %v7184
        %v7186 = vpop.f32.mrb[0].mxu0
        %v7187 = vpop.f32.mrb[0].mxu0
        %v7188 = vadd.f32 0.0, %v7187
        %v7189 = vpop.f32.mrb[0].mxu0
        %7190 = vmatprep.mubr.bf16.mxu0 0
        %7191 = vmatmul.mubr.bf16.gmra.mrb[0].mxu0 %v6603
        %v7192 = vpop.f32.mrb[0].mxu0
        %v7193 = vadd.f32 0.0, %v7192
        %v7194 = vpop.f32.mrb[0].mxu0
        %v7195 = vpop.f32.mrb[0].mxu0
        %v7196 = vadd.f32 0.0, %v7195
        %v7197 = vpop.f32.mrb[0].mxu0
        %7198 = vmatprep.mubr.bf16.mxu0 0
        %7199 = vmatmul.mubr.bf16.gmra.mrb[0].mxu0 %v6605
        %v7200 = vpop.f32.mrb[0].mxu0
        %v7201 = vadd.f32 0.0, %v7200
        %v7202 = vpop.f32.mrb[0].mxu0
        %v7203 = vpop.f32.mrb[0].mxu0
        %v7204 = vadd.f32 0.0, %v7203
        %v7205 = vpop.f32.mrb[0].mxu0
        %7206 = vmatprep.mubr.bf16.mxu0 0
        %7207 = vmatmul.mubr.bf16.gmra.mrb[0].mxu0 %v6607
        %v7208 = vpop.f32.mrb[0].mxu0
        %v7209 = vadd.f32 0.0, %v7208
        %v7210 = vpop.f32.mrb[0].mxu0
        %v7211 = vpop.f32.mrb[0].mxu0
        %v7212 = vadd.f32 0.0, %v7211
        %v7213 = vpop.f32.mrb[0].mxu0
        %7214 = vmatprep.mubr.bf16.mxu0 0
        %7215 = vmatmul.mubr.bf16.gmra.mrb[0].mxu0 %v6609
        %v7216 = vpop.f32.mrb[0].mxu0
        %v7217 = vadd.f32 0.0, %v7216
        %v7218 = vpop.f32.mrb[0].mxu0
        %v7219 = vpop.f32.mrb[0].mxu0
        %v7220 = vadd.f32 0.0, %v7219
        %v7221 = vpop.f32.mrb[0].mxu0
        %7222 = vmatprep.mubr.bf16.mxu0 0
        %7223 = vmatmul.mubr.bf16.gmra.mrb[0].mxu0 %v6611
        %v7224 = vpop.f32.mrb[0].mxu0
        %v7225 = vadd.f32 0.0, %v7224
        %v7226 = vpop.f32.mrb[0].mxu0
        %v7227 = vpop.f32.mrb[0].mxu0
        %v7228 = vadd.f32 0.0, %v7227
        %v7229 = vpop.f32.mrb[0].mxu0
        %7230 = vmatprep.mubr.bf16.mxu0 0
        %7231 = vmatmul.mubr.bf16.gmra.mrb[0].mxu0 %v6613
        %v7232 = vpop.f32.mrb[0].mxu0
        %v7233 = vadd.f32 0.0, %v7232
        %v7234 = vpop.f32.mrb[0].mxu0
        %v7235 = vpop.f32.mrb[0].mxu0
        %v7236 = vadd.f32 0.0, %v7235
        %v7237 = vpop.f32.mrb[0].mxu0
        %7238 = vmatprep.mubr.bf16.mxu0 0
        %7239 = vmatmul.mubr.bf16.gmra.mrb[0].mxu0 %v6615
        %v7240 = vpop.f32.mrb[0].mxu0
        %v7241 = vadd.f32 0.0, %v7240
        %v7242 = vpop.f32.mrb[0].mxu0
        %v7243 = vpop.f32.mrb[0].mxu0
        %v7244 = vadd.f32 0.0, %v7243
        %v7245 = vpop.f32.mrb[0].mxu0
        %7246 = vmatprep.mubr.bf16.mxu0 0
        %7247 = vmatmul.mubr.bf16.gmra.mrb[0].mxu0 %v6617
        %v7248 = vpop.f32.mrb[0].mxu0
        %v7249 = vadd.f32 0.0, %v7248
        %v7250 = vpop.f32.mrb[0].mxu0
        %v7251 = vpop.f32.mrb[0].mxu0
        %v7252 = vadd.f32 0.0, %v7251
        %v7253 = vpop.f32.mrb[0].mxu0
        %7254 = vmatprep.mubr.bf16.mxu0 0
        %7255 = vmatmul.mubr.bf16.gmra.mrb[0].mxu0 %v6619
        %v7256 = vpop.f32.mrb[0].mxu0
        %v7257 = vadd.f32 0.0, %v7256
        %v7258 = vpop.f32.mrb[0].mxu0
        %v7259 = vpop.f32.mrb[0].mxu0
        %v7260 = vadd.f32 0.0, %v7259
        %v7261 = vpop.f32.mrb[0].mxu0
        %7262 = vmatprep.mubr.bf16.mxu0 0
        %7263 = vmatmul.mubr.bf16.gmra.mrb[0].mxu0 %v7108
        %v7264 = vpop.f32.mrb[0].mxu0
        %v7265 = vadd.f32 0.0, %v7264
        %v7266 = vpop.f32.mrb[0].mxu0
        %v7267 = vpop.f32.mrb[0].mxu0
        %v7268 = vadd.f32 0.0, %v7267
        %v7269 = vpop.f32.mrb[0].mxu0
        %7270 = vdwg.mxu0
        %v7271 = vadd.f32 %v7069, %v7145
        %v7272 = vadd.f32 %v7070, %v7148
        %v7273 = vadd.f32 %v7071, %v7153
        %v7274 = vadd.f32 %v7072, %v7156
        %v7275 = vadd.f32 %v7073, %v7161
        %v7276 = vadd.f32 %v7074, %v7164
        %v7277 = vadd.f32 %v7075, %v7169
        %v7278 = vadd.f32 %v7076, %v7172
        %v7279 = vadd.f32 %v7077, %v7177
        %v7280 = vadd.f32 %v7078, %v7180
        %v7281 = vadd.f32 %v7079, %v7185
        %v7282 = vadd.f32 %v7080, %v7188
        %v7283 = vadd.f32 %v7081, %v7193
        %v7284 = vadd.f32 %v7082, %v7196
        %v7285 = vadd.f32 %v7083, %v7201
        %v7286 = vadd.f32 %v7084, %v7204
        %v7287 = vadd.f32 %v7085, %v7209
        %v7288 = vadd.f32 %v7086, %v7212
        %v7289 = vadd.f32 %v7087, %v7217
        %v7290 = vadd.f32 %v7088, %v7220
        %v7291 = vadd.f32 %v7089, %v7225
        %v7292 = vadd.f32 %v7090, %v7228
        %v7293 = vadd.f32 %v7091, %v7233
        %v7294 = vadd.f32 %v7092, %v7236
        %v7295 = vadd.f32 %v7093, %v7241
        %v7296 = vadd.f32 %v7094, %v7244
        %v7297 = vadd.f32 %v7095, %v7249
        %v7298 = vadd.f32 %v7096, %v7252
        %v7299 = vadd.f32 %v7097, %v7257
        %v7300 = vadd.f32 %v7098, %v7260
        %v7301 = vadd.f32 %v7099, %v7265
        %v7302 = vadd.f32 %v7100, %v7268
        %v7303 = vshrl.u32 %v6191, 16
        %v7305 = vshll.u32 %v6191, 16
        %v7307 = vrot.slane %v7305, 1
        %v7308 = vor.u32 %v7303, %v7307
        %v7310 = vshll.u32 %v6192, 16
        %v7312 = vrot.slane %v7310, 1
        %v7313 = vsel %vm714, %v7308, %v7312
        %7314 = vrot.lane.b32.xlu0 %v4632, 96
        %v7315 = vpop.permute.xlu0 %7314
        %7316 = vrot.lane.b32.xlu0 %v4633, 96
        %v7317 = vpop.permute.xlu0 %7316
        %v7321 = vsel %vm915, %v7313, 0
        %7323 = vmatprep.subr.bf16.mxu0 0
        %7324 = vmatpush1.bf16.msra.mxu0 %v7315
        %7325 = vmatprep.subr.bf16.mxu0 0
        %7326 = vmatpush1.bf16.msra.mxu0 %v7317
        %7327 = vmatprep.subr.bf16.mxu0 0
        %7328 = vmatpush1.bf16.msra.mxu0 0
        %7329 = vmatprep.subr.bf16.mxu0 0
        %7330 = vmatpush1.bf16.msra.mxu0 0
        %7331 = vmatprep.subr.bf16.mxu0 0
        %7332 = vmatpush1.bf16.msra.mxu0 0
        %7333 = vmatprep.subr.bf16.mxu0 0
        %7334 = vmatpush1.bf16.msra.mxu0 0
        %7335 = vmatprep.subr.bf16.mxu0 0
        %7336 = vmatpush1.bf16.msra.mxu0 0
        %7337 = vmatprep.subr.bf16.mxu0 0
        %7338 = vmatpush1.bf16.msra.mxu0 0
        %7339 = vmatprep.subr.bf16.mxu0 0
        %7340 = vmatpush1.bf16.msra.mxu0 0
        %7341 = vmatprep.subr.bf16.mxu0 0
        %7342 = vmatpush1.bf16.msra.mxu0 0
        %7343 = vmatprep.subr.bf16.mxu0 0
        %7344 = vmatpush1.bf16.msra.mxu0 0
        %7345 = vmatprep.subr.bf16.mxu0 0
        %7346 = vmatpush1.bf16.msra.mxu0 0
        %7347 = vmatprep.subr.bf16.mxu0 0
        %7348 = vmatpush1.bf16.msra.mxu0 0
        %7349 = vmatprep.subr.bf16.mxu0 0
        %7350 = vmatpush1.bf16.msra.mxu0 0
        %7351 = vmatprep.subr.bf16.mxu0 0
        %7352 = vmatpush1.bf16.msra.mxu0 0
        %7353 = vmatprep.subr.bf16.mxu0 0
        %7354 = vmatpush1.bf16.msra.mxu0 0
        %7355 = vmatprep.mubr.bf16.mxu0 0
        %7356 = vmatmul.mubr.bf16.gmra.mrb[0].mxu0 %v6380
        %v7357 = vpop.f32.mrb[0].mxu0
        %v7358 = vadd.f32 0.0, %v7357
        %v7359 = vpop.f32.mrb[0].mxu0
        %v7360 = vpop.f32.mrb[0].mxu0
        %v7361 = vadd.f32 0.0, %v7360
        %v7362 = vpop.f32.mrb[0].mxu0
        %7363 = vmatprep.mubr.bf16.mxu0 0
        %7364 = vmatmul.mubr.bf16.gmra.mrb[0].mxu0 %v6383
        %v7365 = vpop.f32.mrb[0].mxu0
        %v7366 = vadd.f32 0.0, %v7365
        %v7367 = vpop.f32.mrb[0].mxu0
        %v7368 = vpop.f32.mrb[0].mxu0
        %v7369 = vadd.f32 0.0, %v7368
        %v7370 = vpop.f32.mrb[0].mxu0
        %7371 = vmatprep.mubr.bf16.mxu0 0
        %7372 = vmatmul.mubr.bf16.gmra.mrb[0].mxu0 %v6386
        %v7373 = vpop.f32.mrb[0].mxu0
        %v7374 = vadd.f32 0.0, %v7373
        %v7375 = vpop.f32.mrb[0].mxu0
        %v7376 = vpop.f32.mrb[0].mxu0
        %v7377 = vadd.f32 0.0, %v7376
        %v7378 = vpop.f32.mrb[0].mxu0
        %7379 = vmatprep.mubr.bf16.mxu0 0
        %7380 = vmatmul.mubr.bf16.gmra.mrb[0].mxu0 %v6389
        %v7381 = vpop.f32.mrb[0].mxu0
        %v7382 = vadd.f32 0.0, %v7381
        %v7383 = vpop.f32.mrb[0].mxu0
        %v7384 = vpop.f32.mrb[0].mxu0
        %v7385 = vadd.f32 0.0, %v7384
        %v7386 = vpop.f32.mrb[0].mxu0
        %7387 = vmatprep.mubr.bf16.mxu0 0
        %7388 = vmatmul.mubr.bf16.gmra.mrb[0].mxu0 %v6392
        %v7389 = vpop.f32.mrb[0].mxu0
        %v7390 = vadd.f32 0.0, %v7389
        %v7391 = vpop.f32.mrb[0].mxu0
        %v7392 = vpop.f32.mrb[0].mxu0
        %v7393 = vadd.f32 0.0, %v7392
        %v7394 = vpop.f32.mrb[0].mxu0
        %7395 = vmatprep.mubr.bf16.mxu0 0
        %7396 = vmatmul.mubr.bf16.gmra.mrb[0].mxu0 %v6395
        %v7397 = vpop.f32.mrb[0].mxu0
        %v7398 = vadd.f32 0.0, %v7397
        %v7399 = vpop.f32.mrb[0].mxu0
        %v7400 = vpop.f32.mrb[0].mxu0
        %v7401 = vadd.f32 0.0, %v7400
        %v7402 = vpop.f32.mrb[0].mxu0
        %7403 = vmatprep.mubr.bf16.mxu0 0
        %7404 = vmatmul.mubr.bf16.gmra.mrb[0].mxu0 %v6398
        %v7405 = vpop.f32.mrb[0].mxu0
        %v7406 = vadd.f32 0.0, %v7405
        %v7407 = vpop.f32.mrb[0].mxu0
        %v7408 = vpop.f32.mrb[0].mxu0
        %v7409 = vadd.f32 0.0, %v7408
        %v7410 = vpop.f32.mrb[0].mxu0
        %7411 = vmatprep.mubr.bf16.mxu0 0
        %7412 = vmatmul.mubr.bf16.gmra.mrb[0].mxu0 %v6401
        %v7413 = vpop.f32.mrb[0].mxu0
        %v7414 = vadd.f32 0.0, %v7413
        %v7415 = vpop.f32.mrb[0].mxu0
        %v7416 = vpop.f32.mrb[0].mxu0
        %v7417 = vadd.f32 0.0, %v7416
        %v7418 = vpop.f32.mrb[0].mxu0
        %7419 = vmatprep.mubr.bf16.mxu0 0
        %7420 = vmatmul.mubr.bf16.gmra.mrb[0].mxu0 %v6404
        %v7421 = vpop.f32.mrb[0].mxu0
        %v7422 = vadd.f32 0.0, %v7421
        %v7423 = vpop.f32.mrb[0].mxu0
        %v7424 = vpop.f32.mrb[0].mxu0
        %v7425 = vadd.f32 0.0, %v7424
        %v7426 = vpop.f32.mrb[0].mxu0
        %7427 = vmatprep.mubr.bf16.mxu0 0
        %7428 = vmatmul.mubr.bf16.gmra.mrb[0].mxu0 %v6407
        %v7429 = vpop.f32.mrb[0].mxu0
        %v7430 = vadd.f32 0.0, %v7429
        %v7431 = vpop.f32.mrb[0].mxu0
        %v7432 = vpop.f32.mrb[0].mxu0
        %v7433 = vadd.f32 0.0, %v7432
        %v7434 = vpop.f32.mrb[0].mxu0
        %7435 = vmatprep.mubr.bf16.mxu0 0
        %7436 = vmatmul.mubr.bf16.gmra.mrb[0].mxu0 %v6410
        %v7437 = vpop.f32.mrb[0].mxu0
        %v7438 = vadd.f32 0.0, %v7437
        %v7439 = vpop.f32.mrb[0].mxu0
        %v7440 = vpop.f32.mrb[0].mxu0
        %v7441 = vadd.f32 0.0, %v7440
        %v7442 = vpop.f32.mrb[0].mxu0
        %7443 = vmatprep.mubr.bf16.mxu0 0
        %7444 = vmatmul.mubr.bf16.gmra.mrb[0].mxu0 %v6413
        %v7445 = vpop.f32.mrb[0].mxu0
        %v7446 = vadd.f32 0.0, %v7445
        %v7447 = vpop.f32.mrb[0].mxu0
        %v7448 = vpop.f32.mrb[0].mxu0
        %v7449 = vadd.f32 0.0, %v7448
        %v7450 = vpop.f32.mrb[0].mxu0
        %7451 = vmatprep.mubr.bf16.mxu0 0
        %7452 = vmatmul.mubr.bf16.gmra.mrb[0].mxu0 %v6416
        %v7453 = vpop.f32.mrb[0].mxu0
        %v7454 = vadd.f32 0.0, %v7453
        %v7455 = vpop.f32.mrb[0].mxu0
        %v7456 = vpop.f32.mrb[0].mxu0
        %v7457 = vadd.f32 0.0, %v7456
        %v7458 = vpop.f32.mrb[0].mxu0
        %7459 = vmatprep.mubr.bf16.mxu0 0
        %7460 = vmatmul.mubr.bf16.gmra.mrb[0].mxu0 %v6419
        %v7461 = vpop.f32.mrb[0].mxu0
        %v7462 = vadd.f32 0.0, %v7461
        %v7463 = vpop.f32.mrb[0].mxu0
        %v7464 = vpop.f32.mrb[0].mxu0
        %v7465 = vadd.f32 0.0, %v7464
        %v7466 = vpop.f32.mrb[0].mxu0
        %7467 = vmatprep.mubr.bf16.mxu0 0
        %7468 = vmatmul.mubr.bf16.gmra.mrb[0].mxu0 %v6422
        %v7469 = vpop.f32.mrb[0].mxu0
        %v7470 = vadd.f32 0.0, %v7469
        %v7471 = vpop.f32.mrb[0].mxu0
        %v7472 = vpop.f32.mrb[0].mxu0
        %v7473 = vadd.f32 0.0, %v7472
        %v7474 = vpop.f32.mrb[0].mxu0
        %7475 = vmatprep.mubr.bf16.mxu0 0
        %7476 = vmatmul.mubr.bf16.gmra.mrb[0].mxu0 %v7321
        %v7477 = vpop.f32.mrb[0].mxu0
        %v7478 = vadd.f32 0.0, %v7477
        %v7479 = vpop.f32.mrb[0].mxu0
        %v7480 = vpop.f32.mrb[0].mxu0
        %v7481 = vadd.f32 0.0, %v7480
        %v7482 = vpop.f32.mrb[0].mxu0
        %7483 = vdwg.mxu0
        %v7484 = vadd.f32 %v7271, %v7358
        %v7485 = vadd.f32 %v7272, %v7361
        %v7486 = vadd.f32 %v7273, %v7366
        %v7487 = vadd.f32 %v7274, %v7369
        %v7488 = vadd.f32 %v7275, %v7374
        %v7489 = vadd.f32 %v7276, %v7377
        %v7490 = vadd.f32 %v7277, %v7382
        %v7491 = vadd.f32 %v7278, %v7385
        %v7492 = vadd.f32 %v7279, %v7390
        %v7493 = vadd.f32 %v7280, %v7393
        %v7494 = vadd.f32 %v7281, %v7398
        %v7495 = vadd.f32 %v7282, %v7401
        %v7496 = vadd.f32 %v7283, %v7406
        %v7497 = vadd.f32 %v7284, %v7409
        %v7498 = vadd.f32 %v7285, %v7414
        %v7499 = vadd.f32 %v7286, %v7417
        %v7500 = vadd.f32 %v7287, %v7422
        %v7501 = vadd.f32 %v7288, %v7425
        %v7502 = vadd.f32 %v7289, %v7430
        %v7503 = vadd.f32 %v7290, %v7433
        %v7504 = vadd.f32 %v7291, %v7438
        %v7505 = vadd.f32 %v7292, %v7441
        %v7506 = vadd.f32 %v7293, %v7446
        %v7507 = vadd.f32 %v7294, %v7449
        %v7508 = vadd.f32 %v7295, %v7454
        %v7509 = vadd.f32 %v7296, %v7457
        %v7510 = vadd.f32 %v7297, %v7462
        %v7511 = vadd.f32 %v7298, %v7465
        %v7512 = vadd.f32 %v7299, %v7470
        %v7513 = vadd.f32 %v7300, %v7473
        %v7514 = vadd.f32 %v7301, %v7478
        %v7515 = vadd.f32 %v7302, %v7481
        %v7518 = vrot.slane %v6191, 1
        %v7519 = vrot.slane %v6192, 1
        %v7520 = vsel %vm1361, %v7518, %v7519
        %7521 = vrot.lane.b32.xlu0 %v4845, 96
        %v7522 = vpop.permute.xlu0 %7521
        %7523 = vrot.lane.b32.xlu0 %v4846, 96
        %v7524 = vpop.permute.xlu0 %7523
        %v7528 = vsel %vm915, %v7520, 0
        %7530 = vmatprep.subr.bf16.mxu0 0
        %7531 = vmatpush1.bf16.msra.mxu0 %v7522
        %7532 = vmatprep.subr.bf16.mxu0 0
        %7533 = vmatpush1.bf16.msra.mxu0 %v7524
        %7534 = vmatprep.subr.bf16.mxu0 0
        %7535 = vmatpush1.bf16.msra.mxu0 0
        %7536 = vmatprep.subr.bf16.mxu0 0
        %7537 = vmatpush1.bf16.msra.mxu0 0
        %7538 = vmatprep.subr.bf16.mxu0 0
        %7539 = vmatpush1.bf16.msra.mxu0 0
        %7540 = vmatprep.subr.bf16.mxu0 0
        %7541 = vmatpush1.bf16.msra.mxu0 0
        %7542 = vmatprep.subr.bf16.mxu0 0
        %7543 = vmatpush1.bf16.msra.mxu0 0
        %7544 = vmatprep.subr.bf16.mxu0 0
        %7545 = vmatpush1.bf16.msra.mxu0 0
        %7546 = vmatprep.subr.bf16.mxu0 0
        %7547 = vmatpush1.bf16.msra.mxu0 0
        %7548 = vmatprep.subr.bf16.mxu0 0
        %7549 = vmatpush1.bf16.msra.mxu0 0
        %7550 = vmatprep.subr.bf16.mxu0 0
        %7551 = vmatpush1.bf16.msra.mxu0 0
        %7552 = vmatprep.subr.bf16.mxu0 0
        %7553 = vmatpush1.bf16.msra.mxu0 0
        %7554 = vmatprep.subr.bf16.mxu0 0
        %7555 = vmatpush1.bf16.msra.mxu0 0
        %7556 = vmatprep.subr.bf16.mxu0 0
        %7557 = vmatpush1.bf16.msra.mxu0 0
        %7558 = vmatprep.subr.bf16.mxu0 0
        %7559 = vmatpush1.bf16.msra.mxu0 0
        %7560 = vmatprep.subr.bf16.mxu0 0
        %7561 = vmatpush1.bf16.msra.mxu0 0
        %7562 = vmatprep.mubr.bf16.mxu0 0
        %7563 = vmatmul.mubr.bf16.gmra.mrb[0].mxu0 %v6864
        %v7564 = vpop.f32.mrb[0].mxu0
        %v7565 = vadd.f32 0.0, %v7564
        %v7566 = vpop.f32.mrb[0].mxu0
        %v7567 = vpop.f32.mrb[0].mxu0
        %v7568 = vadd.f32 0.0, %v7567
        %v7569 = vpop.f32.mrb[0].mxu0
        %7570 = vmatprep.mubr.bf16.mxu0 0
        %7571 = vmatmul.mubr.bf16.gmra.mrb[0].mxu0 %v6867
        %v7572 = vpop.f32.mrb[0].mxu0
        %v7573 = vadd.f32 0.0, %v7572
        %v7574 = vpop.f32.mrb[0].mxu0
        %v7575 = vpop.f32.mrb[0].mxu0
        %v7576 = vadd.f32 0.0, %v7575
        %v7577 = vpop.f32.mrb[0].mxu0
        %7578 = vmatprep.mubr.bf16.mxu0 0
        %7579 = vmatmul.mubr.bf16.gmra.mrb[0].mxu0 %v6870
        %v7580 = vpop.f32.mrb[0].mxu0
        %v7581 = vadd.f32 0.0, %v7580
        %v7582 = vpop.f32.mrb[0].mxu0
        %v7583 = vpop.f32.mrb[0].mxu0
        %v7584 = vadd.f32 0.0, %v7583
        %v7585 = vpop.f32.mrb[0].mxu0
        %7586 = vmatprep.mubr.bf16.mxu0 0
        %7587 = vmatmul.mubr.bf16.gmra.mrb[0].mxu0 %v6873
        %v7588 = vpop.f32.mrb[0].mxu0
        %v7589 = vadd.f32 0.0, %v7588
        %v7590 = vpop.f32.mrb[0].mxu0
        %v7591 = vpop.f32.mrb[0].mxu0
        %v7592 = vadd.f32 0.0, %v7591
        %v7593 = vpop.f32.mrb[0].mxu0
        %7594 = vmatprep.mubr.bf16.mxu0 0
        %7595 = vmatmul.mubr.bf16.gmra.mrb[0].mxu0 %v6876
        %v7596 = vpop.f32.mrb[0].mxu0
        %v7597 = vadd.f32 0.0, %v7596
        %v7598 = vpop.f32.mrb[0].mxu0
        %v7599 = vpop.f32.mrb[0].mxu0
        %v7600 = vadd.f32 0.0, %v7599
        %v7601 = vpop.f32.mrb[0].mxu0
        %7602 = vmatprep.mubr.bf16.mxu0 0
        %7603 = vmatmul.mubr.bf16.gmra.mrb[0].mxu0 %v6879
        %v7604 = vpop.f32.mrb[0].mxu0
        %v7605 = vadd.f32 0.0, %v7604
        %v7606 = vpop.f32.mrb[0].mxu0
        %v7607 = vpop.f32.mrb[0].mxu0
        %v7608 = vadd.f32 0.0, %v7607
        %v7609 = vpop.f32.mrb[0].mxu0
        %7610 = vmatprep.mubr.bf16.mxu0 0
        %7611 = vmatmul.mubr.bf16.gmra.mrb[0].mxu0 %v6882
        %v7612 = vpop.f32.mrb[0].mxu0
        %v7613 = vadd.f32 0.0, %v7612
        %v7614 = vpop.f32.mrb[0].mxu0
        %v7615 = vpop.f32.mrb[0].mxu0
        %v7616 = vadd.f32 0.0, %v7615
        %v7617 = vpop.f32.mrb[0].mxu0
        %7618 = vmatprep.mubr.bf16.mxu0 0
        %7619 = vmatmul.mubr.bf16.gmra.mrb[0].mxu0 %v6885
        %v7620 = vpop.f32.mrb[0].mxu0
        %v7621 = vadd.f32 0.0, %v7620
        %v7622 = vpop.f32.mrb[0].mxu0
        %v7623 = vpop.f32.mrb[0].mxu0
        %v7624 = vadd.f32 0.0, %v7623
        %v7625 = vpop.f32.mrb[0].mxu0
        %7626 = vmatprep.mubr.bf16.mxu0 0
        %7627 = vmatmul.mubr.bf16.gmra.mrb[0].mxu0 %v6888
        %v7628 = vpop.f32.mrb[0].mxu0
        %v7629 = vadd.f32 0.0, %v7628
        %v7630 = vpop.f32.mrb[0].mxu0
        %v7631 = vpop.f32.mrb[0].mxu0
        %v7632 = vadd.f32 0.0, %v7631
        %v7633 = vpop.f32.mrb[0].mxu0
        %7634 = vmatprep.mubr.bf16.mxu0 0
        %7635 = vmatmul.mubr.bf16.gmra.mrb[0].mxu0 %v6891
        %v7636 = vpop.f32.mrb[0].mxu0
        %v7637 = vadd.f32 0.0, %v7636
        %v7638 = vpop.f32.mrb[0].mxu0
        %v7639 = vpop.f32.mrb[0].mxu0
        %v7640 = vadd.f32 0.0, %v7639
        %v7641 = vpop.f32.mrb[0].mxu0
        %7642 = vmatprep.mubr.bf16.mxu0 0
        %7643 = vmatmul.mubr.bf16.gmra.mrb[0].mxu0 %v6894
        %v7644 = vpop.f32.mrb[0].mxu0
        %v7645 = vadd.f32 0.0, %v7644
        %v7646 = vpop.f32.mrb[0].mxu0
        %v7647 = vpop.f32.mrb[0].mxu0
        %v7648 = vadd.f32 0.0, %v7647
        %v7649 = vpop.f32.mrb[0].mxu0
        %7650 = vmatprep.mubr.bf16.mxu0 0
        %7651 = vmatmul.mubr.bf16.gmra.mrb[0].mxu0 %v6897
        %v7652 = vpop.f32.mrb[0].mxu0
        %v7653 = vadd.f32 0.0, %v7652
        %v7654 = vpop.f32.mrb[0].mxu0
        %v7655 = vpop.f32.mrb[0].mxu0
        %v7656 = vadd.f32 0.0, %v7655
        %v7657 = vpop.f32.mrb[0].mxu0
        %7658 = vmatprep.mubr.bf16.mxu0 0
        %7659 = vmatmul.mubr.bf16.gmra.mrb[0].mxu0 %v6900
        %v7660 = vpop.f32.mrb[0].mxu0
        %v7661 = vadd.f32 0.0, %v7660
        %v7662 = vpop.f32.mrb[0].mxu0
        %v7663 = vpop.f32.mrb[0].mxu0
        %v7664 = vadd.f32 0.0, %v7663
        %v7665 = vpop.f32.mrb[0].mxu0
        %7666 = vmatprep.mubr.bf16.mxu0 0
        %7667 = vmatmul.mubr.bf16.gmra.mrb[0].mxu0 %v6903
        %v7668 = vpop.f32.mrb[0].mxu0
        %v7669 = vadd.f32 0.0, %v7668
        %v7670 = vpop.f32.mrb[0].mxu0
        %v7671 = vpop.f32.mrb[0].mxu0
        %v7672 = vadd.f32 0.0, %v7671
        %v7673 = vpop.f32.mrb[0].mxu0
        %7674 = vmatprep.mubr.bf16.mxu0 0
        %7675 = vmatmul.mubr.bf16.gmra.mrb[0].mxu0 %v6906
        %v7676 = vpop.f32.mrb[0].mxu0
        %v7677 = vadd.f32 0.0, %v7676
        %v7678 = vpop.f32.mrb[0].mxu0
        %v7679 = vpop.f32.mrb[0].mxu0
        %v7680 = vadd.f32 0.0, %v7679
        %v7681 = vpop.f32.mrb[0].mxu0
        %7682 = vmatprep.mubr.bf16.mxu0 0
        %7683 = vmatmul.mubr.bf16.gmra.mrb[0].mxu0 %v7528
        %v7684 = vpop.f32.mrb[0].mxu0
        %v7685 = vadd.f32 0.0, %v7684
        %v7686 = vpop.f32.mrb[0].mxu0
        %v7687 = vpop.f32.mrb[0].mxu0
        %v7688 = vadd.f32 0.0, %v7687
        %v7689 = vpop.f32.mrb[0].mxu0
        %7690 = vdwg.mxu0
        %v7691 = vadd.f32 %v7484, %v7565
        %v7692 = vadd.f32 %v7485, %v7568
        %v7693 = vadd.f32 %v7486, %v7573
        %v7694 = vadd.f32 %v7487, %v7576
        %v7695 = vadd.f32 %v7488, %v7581
        %v7696 = vadd.f32 %v7489, %v7584
        %v7697 = vadd.f32 %v7490, %v7589
        %v7698 = vadd.f32 %v7491, %v7592
        %v7699 = vadd.f32 %v7492, %v7597
        %v7700 = vadd.f32 %v7493, %v7600
        %v7701 = vadd.f32 %v7494, %v7605
        %v7702 = vadd.f32 %v7495, %v7608
        %v7703 = vadd.f32 %v7496, %v7613
        %v7704 = vadd.f32 %v7497, %v7616
        %v7705 = vadd.f32 %v7498, %v7621
        %v7706 = vadd.f32 %v7499, %v7624
        %v7707 = vadd.f32 %v7500, %v7629
        %v7708 = vadd.f32 %v7501, %v7632
        %v7709 = vadd.f32 %v7502, %v7637
        %v7710 = vadd.f32 %v7503, %v7640
        %v7711 = vadd.f32 %v7504, %v7645
        %v7712 = vadd.f32 %v7505, %v7648
        %v7713 = vadd.f32 %v7506, %v7653
        %v7714 = vadd.f32 %v7507, %v7656
        %v7715 = vadd.f32 %v7508, %v7661
        %v7716 = vadd.f32 %v7509, %v7664
        %v7717 = vadd.f32 %v7510, %v7669
        %v7718 = vadd.f32 %v7511, %v7672
        %v7719 = vadd.f32 %v7512, %v7677
        %v7720 = vadd.f32 %v7513, %v7680
        %v7721 = vadd.f32 %v7514, %v7685
        %v7722 = vadd.f32 %v7515, %v7688
        %7723 = vrot.lane.b32.xlu0 %v5053, 96
        %v7724 = vpop.permute.xlu0 %7723
        %7725 = vrot.lane.b32.xlu0 %v5054, 96
        %v7726 = vpop.permute.xlu0 %7725
        %7729 = vmatprep.subr.bf16.mxu0 0
        %7730 = vmatpush1.bf16.msra.mxu0 %v7724
        %7731 = vmatprep.subr.bf16.mxu0 0
        %7732 = vmatpush1.bf16.msra.mxu0 %v7726
        %7733 = vmatprep.subr.bf16.mxu0 0
        %7734 = vmatpush1.bf16.msra.mxu0 0
        %7735 = vmatprep.subr.bf16.mxu0 0
        %7736 = vmatpush1.bf16.msra.mxu0 0
        %7737 = vmatprep.subr.bf16.mxu0 0
        %7738 = vmatpush1.bf16.msra.mxu0 0
        %7739 = vmatprep.subr.bf16.mxu0 0
        %7740 = vmatpush1.bf16.msra.mxu0 0
        %7741 = vmatprep.subr.bf16.mxu0 0
        %7742 = vmatpush1.bf16.msra.mxu0 0
        %7743 = vmatprep.subr.bf16.mxu0 0
        %7744 = vmatpush1.bf16.msra.mxu0 0
        %7745 = vmatprep.subr.bf16.mxu0 0
        %7746 = vmatpush1.bf16.msra.mxu0 0
        %7747 = vmatprep.subr.bf16.mxu0 0
        %7748 = vmatpush1.bf16.msra.mxu0 0
        %7749 = vmatprep.subr.bf16.mxu0 0
        %7750 = vmatpush1.bf16.msra.mxu0 0
        %7751 = vmatprep.subr.bf16.mxu0 0
        %7752 = vmatpush1.bf16.msra.mxu0 0
        %7753 = vmatprep.subr.bf16.mxu0 0
        %7754 = vmatpush1.bf16.msra.mxu0 0
        %7755 = vmatprep.subr.bf16.mxu0 0
        %7756 = vmatpush1.bf16.msra.mxu0 0
        %7757 = vmatprep.subr.bf16.mxu0 0
        %7758 = vmatpush1.bf16.msra.mxu0 0
        %7759 = vmatprep.subr.bf16.mxu0 0
        %7760 = vmatpush1.bf16.msra.mxu0 0
        %7761 = vmatprep.mubr.bf16.mxu0 0
        %7762 = vmatmul.mubr.bf16.gmra.mrb[0].mxu0 %v6593
        %v7763 = vpop.f32.mrb[0].mxu0
        %v7764 = vadd.f32 0.0, %v7763
        %v7765 = vpop.f32.mrb[0].mxu0
        %v7766 = vpop.f32.mrb[0].mxu0
        %v7767 = vadd.f32 0.0, %v7766
        %v7768 = vpop.f32.mrb[0].mxu0
        %7769 = vmatprep.mubr.bf16.mxu0 0
        %7770 = vmatmul.mubr.bf16.gmra.mrb[0].mxu0 %v6595
        %v7771 = vpop.f32.mrb[0].mxu0
        %v7772 = vadd.f32 0.0, %v7771
        %v7773 = vpop.f32.mrb[0].mxu0
        %v7774 = vpop.f32.mrb[0].mxu0
        %v7775 = vadd.f32 0.0, %v7774
        %v7776 = vpop.f32.mrb[0].mxu0
        %7777 = vmatprep.mubr.bf16.mxu0 0
        %7778 = vmatmul.mubr.bf16.gmra.mrb[0].mxu0 %v6597
        %v7779 = vpop.f32.mrb[0].mxu0
        %v7780 = vadd.f32 0.0, %v7779
        %v7781 = vpop.f32.mrb[0].mxu0
        %v7782 = vpop.f32.mrb[0].mxu0
        %v7783 = vadd.f32 0.0, %v7782
        %v7784 = vpop.f32.mrb[0].mxu0
        %7785 = vmatprep.mubr.bf16.mxu0 0
        %7786 = vmatmul.mubr.bf16.gmra.mrb[0].mxu0 %v6599
        %v7787 = vpop.f32.mrb[0].mxu0
        %v7788 = vadd.f32 0.0, %v7787
        %v7789 = vpop.f32.mrb[0].mxu0
        %v7790 = vpop.f32.mrb[0].mxu0
        %v7791 = vadd.f32 0.0, %v7790
        %v7792 = vpop.f32.mrb[0].mxu0
        %7793 = vmatprep.mubr.bf16.mxu0 0
        %7794 = vmatmul.mubr.bf16.gmra.mrb[0].mxu0 %v6601
        %v7795 = vpop.f32.mrb[0].mxu0
        %v7796 = vadd.f32 0.0, %v7795
        %v7797 = vpop.f32.mrb[0].mxu0
        %v7798 = vpop.f32.mrb[0].mxu0
        %v7799 = vadd.f32 0.0, %v7798
        %v7800 = vpop.f32.mrb[0].mxu0
        %7801 = vmatprep.mubr.bf16.mxu0 0
        %7802 = vmatmul.mubr.bf16.gmra.mrb[0].mxu0 %v6603
        %v7803 = vpop.f32.mrb[0].mxu0
        %v7804 = vadd.f32 0.0, %v7803
        %v7805 = vpop.f32.mrb[0].mxu0
        %v7806 = vpop.f32.mrb[0].mxu0
        %v7807 = vadd.f32 0.0, %v7806
        %v7808 = vpop.f32.mrb[0].mxu0
        %7809 = vmatprep.mubr.bf16.mxu0 0
        %7810 = vmatmul.mubr.bf16.gmra.mrb[0].mxu0 %v6605
        %v7811 = vpop.f32.mrb[0].mxu0
        %v7812 = vadd.f32 0.0, %v7811
        %v7813 = vpop.f32.mrb[0].mxu0
        %v7814 = vpop.f32.mrb[0].mxu0
        %v7815 = vadd.f32 0.0, %v7814
        %v7816 = vpop.f32.mrb[0].mxu0
        %7817 = vmatprep.mubr.bf16.mxu0 0
        %7818 = vmatmul.mubr.bf16.gmra.mrb[0].mxu0 %v6607
        %v7819 = vpop.f32.mrb[0].mxu0
        %v7820 = vadd.f32 0.0, %v7819
        %v7821 = vpop.f32.mrb[0].mxu0
        %v7822 = vpop.f32.mrb[0].mxu0
        %v7823 = vadd.f32 0.0, %v7822
        %v7824 = vpop.f32.mrb[0].mxu0
        %7825 = vmatprep.mubr.bf16.mxu0 0
        %7826 = vmatmul.mubr.bf16.gmra.mrb[0].mxu0 %v6609
        %v7827 = vpop.f32.mrb[0].mxu0
        %v7828 = vadd.f32 0.0, %v7827
        %v7829 = vpop.f32.mrb[0].mxu0
        %v7830 = vpop.f32.mrb[0].mxu0
        %v7831 = vadd.f32 0.0, %v7830
        %v7832 = vpop.f32.mrb[0].mxu0
        %7833 = vmatprep.mubr.bf16.mxu0 0
        %7834 = vmatmul.mubr.bf16.gmra.mrb[0].mxu0 %v6611
        %v7835 = vpop.f32.mrb[0].mxu0
        %v7836 = vadd.f32 0.0, %v7835
        %v7837 = vpop.f32.mrb[0].mxu0
        %v7838 = vpop.f32.mrb[0].mxu0
        %v7839 = vadd.f32 0.0, %v7838
        %v7840 = vpop.f32.mrb[0].mxu0
        %7841 = vmatprep.mubr.bf16.mxu0 0
        %7842 = vmatmul.mubr.bf16.gmra.mrb[0].mxu0 %v6613
        %v7843 = vpop.f32.mrb[0].mxu0
        %v7844 = vadd.f32 0.0, %v7843
        %v7845 = vpop.f32.mrb[0].mxu0
        %v7846 = vpop.f32.mrb[0].mxu0
        %v7847 = vadd.f32 0.0, %v7846
        %v7848 = vpop.f32.mrb[0].mxu0
        %7849 = vmatprep.mubr.bf16.mxu0 0
        %7850 = vmatmul.mubr.bf16.gmra.mrb[0].mxu0 %v6615
        %v7851 = vpop.f32.mrb[0].mxu0
        %v7852 = vadd.f32 0.0, %v7851
        %v7853 = vpop.f32.mrb[0].mxu0
        %v7854 = vpop.f32.mrb[0].mxu0
        %v7855 = vadd.f32 0.0, %v7854
        %v7856 = vpop.f32.mrb[0].mxu0
        %7857 = vmatprep.mubr.bf16.mxu0 0
        %7858 = vmatmul.mubr.bf16.gmra.mrb[0].mxu0 %v6617
        %v7859 = vpop.f32.mrb[0].mxu0
        %v7860 = vadd.f32 0.0, %v7859
        %v7861 = vpop.f32.mrb[0].mxu0
        %v7862 = vpop.f32.mrb[0].mxu0
        %v7863 = vadd.f32 0.0, %v7862
        %v7864 = vpop.f32.mrb[0].mxu0
        %7865 = vmatprep.mubr.bf16.mxu0 0
        %7866 = vmatmul.mubr.bf16.gmra.mrb[0].mxu0 %v6619
        %v7867 = vpop.f32.mrb[0].mxu0
        %v7868 = vadd.f32 0.0, %v7867
        %v7869 = vpop.f32.mrb[0].mxu0
        %v7870 = vpop.f32.mrb[0].mxu0
        %v7871 = vadd.f32 0.0, %v7870
        %v7872 = vpop.f32.mrb[0].mxu0
        %7873 = vmatprep.mubr.bf16.mxu0 0
        %7874 = vmatmul.mubr.bf16.gmra.mrb[0].mxu0 %v7108
        %v7875 = vpop.f32.mrb[0].mxu0
        %v7876 = vadd.f32 0.0, %v7875
        %v7877 = vpop.f32.mrb[0].mxu0
        %v7878 = vpop.f32.mrb[0].mxu0
        %v7879 = vadd.f32 0.0, %v7878
        %v7880 = vpop.f32.mrb[0].mxu0
        %7881 = vmatprep.mubr.bf16.mxu0 0
        %7882 = vmatmul.mubr.bf16.gmra.mrb[0].mxu0 %v1137
        %v7883 = vpop.f32.mrb[0].mxu0
        %v7884 = vadd.f32 0.0, %v7883
        %v7885 = vpop.f32.mrb[0].mxu0
        %v7886 = vpop.f32.mrb[0].mxu0
        %v7887 = vadd.f32 0.0, %v7886
        %v7888 = vpop.f32.mrb[0].mxu0
        %7889 = vdwg.mxu0
        %v7890 = vadd.f32 %v7691, %v7764
        %v7891 = vadd.f32 %v7692, %v7767
        %v7892 = vadd.f32 %v7693, %v7772
        %v7893 = vadd.f32 %v7694, %v7775
        %v7894 = vadd.f32 %v7695, %v7780
        %v7895 = vadd.f32 %v7696, %v7783
        %v7896 = vadd.f32 %v7697, %v7788
        %v7897 = vadd.f32 %v7698, %v7791
        %v7898 = vadd.f32 %v7699, %v7796
        %v7899 = vadd.f32 %v7700, %v7799
        %v7900 = vadd.f32 %v7701, %v7804
        %v7901 = vadd.f32 %v7702, %v7807
        %v7902 = vadd.f32 %v7703, %v7812
        %v7903 = vadd.f32 %v7704, %v7815
        %v7904 = vadd.f32 %v7705, %v7820
        %v7905 = vadd.f32 %v7706, %v7823
        %v7906 = vadd.f32 %v7707, %v7828
        %v7907 = vadd.f32 %v7708, %v7831
        %v7908 = vadd.f32 %v7709, %v7836
        %v7909 = vadd.f32 %v7710, %v7839
        %v7910 = vadd.f32 %v7711, %v7844
        %v7911 = vadd.f32 %v7712, %v7847
        %v7912 = vadd.f32 %v7713, %v7852
        %v7913 = vadd.f32 %v7714, %v7855
        %v7914 = vadd.f32 %v7715, %v7860
        %v7915 = vadd.f32 %v7716, %v7863
        %v7916 = vadd.f32 %v7717, %v7868
        %v7917 = vadd.f32 %v7718, %v7871
        %v7918 = vadd.f32 %v7719, %v7876
        %v7919 = vadd.f32 %v7720, %v7879
        %v7920 = vadd.f32 %v7721, %v7884
        %v7921 = vadd.f32 %v7722, %v7887
        %7922 = vrot.lane.b32.xlu0 %v5258, 96
        %v7923 = vpop.permute.xlu0 %7922
        %7924 = vrot.lane.b32.xlu0 %v5259, 96
        %v7925 = vpop.permute.xlu0 %7924
        %7928 = vmatprep.subr.bf16.mxu0 0
        %7929 = vmatpush1.bf16.msra.mxu0 %v7923
        %7930 = vmatprep.subr.bf16.mxu0 0
        %7931 = vmatpush1.bf16.msra.mxu0 %v7925
        %7932 = vmatprep.subr.bf16.mxu0 0
        %7933 = vmatpush1.bf16.msra.mxu0 0
        %7934 = vmatprep.subr.bf16.mxu0 0
        %7935 = vmatpush1.bf16.msra.mxu0 0
        %7936 = vmatprep.subr.bf16.mxu0 0
        %7937 = vmatpush1.bf16.msra.mxu0 0
        %7938 = vmatprep.subr.bf16.mxu0 0
        %7939 = vmatpush1.bf16.msra.mxu0 0
        %7940 = vmatprep.subr.bf16.mxu0 0
        %7941 = vmatpush1.bf16.msra.mxu0 0
        %7942 = vmatprep.subr.bf16.mxu0 0
        %7943 = vmatpush1.bf16.msra.mxu0 0
        %7944 = vmatprep.subr.bf16.mxu0 0
        %7945 = vmatpush1.bf16.msra.mxu0 0
        %7946 = vmatprep.subr.bf16.mxu0 0
        %7947 = vmatpush1.bf16.msra.mxu0 0
        %7948 = vmatprep.subr.bf16.mxu0 0
        %7949 = vmatpush1.bf16.msra.mxu0 0
        %7950 = vmatprep.subr.bf16.mxu0 0
        %7951 = vmatpush1.bf16.msra.mxu0 0
        %7952 = vmatprep.subr.bf16.mxu0 0
        %7953 = vmatpush1.bf16.msra.mxu0 0
        %7954 = vmatprep.subr.bf16.mxu0 0
        %7955 = vmatpush1.bf16.msra.mxu0 0
        %7956 = vmatprep.subr.bf16.mxu0 0
        %7957 = vmatpush1.bf16.msra.mxu0 0
        %7958 = vmatprep.subr.bf16.mxu0 0
        %7959 = vmatpush1.bf16.msra.mxu0 0
        %7960 = vmatprep.mubr.bf16.mxu0 0
        %7961 = vmatmul.mubr.bf16.gmra.mrb[0].mxu0 %v6383
        %v7962 = vpop.f32.mrb[0].mxu0
        %v7963 = vadd.f32 0.0, %v7962
        %v7964 = vpop.f32.mrb[0].mxu0
        %v7965 = vpop.f32.mrb[0].mxu0
        %v7966 = vadd.f32 0.0, %v7965
        %v7967 = vpop.f32.mrb[0].mxu0
        %7968 = vmatprep.mubr.bf16.mxu0 0
        %7969 = vmatmul.mubr.bf16.gmra.mrb[0].mxu0 %v6386
        %v7970 = vpop.f32.mrb[0].mxu0
        %v7971 = vadd.f32 0.0, %v7970
        %v7972 = vpop.f32.mrb[0].mxu0
        %v7973 = vpop.f32.mrb[0].mxu0
        %v7974 = vadd.f32 0.0, %v7973
        %v7975 = vpop.f32.mrb[0].mxu0
        %7976 = vmatprep.mubr.bf16.mxu0 0
        %7977 = vmatmul.mubr.bf16.gmra.mrb[0].mxu0 %v6389
        %v7978 = vpop.f32.mrb[0].mxu0
        %v7979 = vadd.f32 0.0, %v7978
        %v7980 = vpop.f32.mrb[0].mxu0
        %v7981 = vpop.f32.mrb[0].mxu0
        %v7982 = vadd.f32 0.0, %v7981
        %v7983 = vpop.f32.mrb[0].mxu0
        %7984 = vmatprep.mubr.bf16.mxu0 0
        %7985 = vmatmul.mubr.bf16.gmra.mrb[0].mxu0 %v6392
        %v7986 = vpop.f32.mrb[0].mxu0
        %v7987 = vadd.f32 0.0, %v7986
        %v7988 = vpop.f32.mrb[0].mxu0
        %v7989 = vpop.f32.mrb[0].mxu0
        %v7990 = vadd.f32 0.0, %v7989
        %v7991 = vpop.f32.mrb[0].mxu0
        %7992 = vmatprep.mubr.bf16.mxu0 0
        %7993 = vmatmul.mubr.bf16.gmra.mrb[0].mxu0 %v6395
        %v7994 = vpop.f32.mrb[0].mxu0
        %v7995 = vadd.f32 0.0, %v7994
        %v7996 = vpop.f32.mrb[0].mxu0
        %v7997 = vpop.f32.mrb[0].mxu0
        %v7998 = vadd.f32 0.0, %v7997
        %v7999 = vpop.f32.mrb[0].mxu0
        %8000 = vmatprep.mubr.bf16.mxu0 0
        %8001 = vmatmul.mubr.bf16.gmra.mrb[0].mxu0 %v6398
        %v8002 = vpop.f32.mrb[0].mxu0
        %v8003 = vadd.f32 0.0, %v8002
        %v8004 = vpop.f32.mrb[0].mxu0
        %v8005 = vpop.f32.mrb[0].mxu0
        %v8006 = vadd.f32 0.0, %v8005
        %v8007 = vpop.f32.mrb[0].mxu0
        %8008 = vmatprep.mubr.bf16.mxu0 0
        %8009 = vmatmul.mubr.bf16.gmra.mrb[0].mxu0 %v6401
        %v8010 = vpop.f32.mrb[0].mxu0
        %v8011 = vadd.f32 0.0, %v8010
        %v8012 = vpop.f32.mrb[0].mxu0
        %v8013 = vpop.f32.mrb[0].mxu0
        %v8014 = vadd.f32 0.0, %v8013
        %v8015 = vpop.f32.mrb[0].mxu0
        %8016 = vmatprep.mubr.bf16.mxu0 0
        %8017 = vmatmul.mubr.bf16.gmra.mrb[0].mxu0 %v6404
        %v8018 = vpop.f32.mrb[0].mxu0
        %v8019 = vadd.f32 0.0, %v8018
        %v8020 = vpop.f32.mrb[0].mxu0
        %v8021 = vpop.f32.mrb[0].mxu0
        %v8022 = vadd.f32 0.0, %v8021
        %v8023 = vpop.f32.mrb[0].mxu0
        %8024 = vmatprep.mubr.bf16.mxu0 0
        %8025 = vmatmul.mubr.bf16.gmra.mrb[0].mxu0 %v6407
        %v8026 = vpop.f32.mrb[0].mxu0
        %v8027 = vadd.f32 0.0, %v8026
        %v8028 = vpop.f32.mrb[0].mxu0
        %v8029 = vpop.f32.mrb[0].mxu0
        %v8030 = vadd.f32 0.0, %v8029
        %v8031 = vpop.f32.mrb[0].mxu0
        %8032 = vmatprep.mubr.bf16.mxu0 0
        %8033 = vmatmul.mubr.bf16.gmra.mrb[0].mxu0 %v6410
        %v8034 = vpop.f32.mrb[0].mxu0
        %v8035 = vadd.f32 0.0, %v8034
        %v8036 = vpop.f32.mrb[0].mxu0
        %v8037 = vpop.f32.mrb[0].mxu0
        %v8038 = vadd.f32 0.0, %v8037
        %v8039 = vpop.f32.mrb[0].mxu0
        %8040 = vmatprep.mubr.bf16.mxu0 0
        %8041 = vmatmul.mubr.bf16.gmra.mrb[0].mxu0 %v6413
        %v8042 = vpop.f32.mrb[0].mxu0
        %v8043 = vadd.f32 0.0, %v8042
        %v8044 = vpop.f32.mrb[0].mxu0
        %v8045 = vpop.f32.mrb[0].mxu0
        %v8046 = vadd.f32 0.0, %v8045
        %v8047 = vpop.f32.mrb[0].mxu0
        %8048 = vmatprep.mubr.bf16.mxu0 0
        %8049 = vmatmul.mubr.bf16.gmra.mrb[0].mxu0 %v6416
        %v8050 = vpop.f32.mrb[0].mxu0
        %v8051 = vadd.f32 0.0, %v8050
        %v8052 = vpop.f32.mrb[0].mxu0
        %v8053 = vpop.f32.mrb[0].mxu0
        %v8054 = vadd.f32 0.0, %v8053
        %v8055 = vpop.f32.mrb[0].mxu0
        %8056 = vmatprep.mubr.bf16.mxu0 0
        %8057 = vmatmul.mubr.bf16.gmra.mrb[0].mxu0 %v6419
        %v8058 = vpop.f32.mrb[0].mxu0
        %v8059 = vadd.f32 0.0, %v8058
        %v8060 = vpop.f32.mrb[0].mxu0
        %v8061 = vpop.f32.mrb[0].mxu0
        %v8062 = vadd.f32 0.0, %v8061
        %v8063 = vpop.f32.mrb[0].mxu0
        %8064 = vmatprep.mubr.bf16.mxu0 0
        %8065 = vmatmul.mubr.bf16.gmra.mrb[0].mxu0 %v6422
        %v8066 = vpop.f32.mrb[0].mxu0
        %v8067 = vadd.f32 0.0, %v8066
        %v8068 = vpop.f32.mrb[0].mxu0
        %v8069 = vpop.f32.mrb[0].mxu0
        %v8070 = vadd.f32 0.0, %v8069
        %v8071 = vpop.f32.mrb[0].mxu0
        %8072 = vmatprep.mubr.bf16.mxu0 0
        %8073 = vmatmul.mubr.bf16.gmra.mrb[0].mxu0 %v7321
        %v8074 = vpop.f32.mrb[0].mxu0
        %v8075 = vadd.f32 0.0, %v8074
        %v8076 = vpop.f32.mrb[0].mxu0
        %v8077 = vpop.f32.mrb[0].mxu0
        %v8078 = vadd.f32 0.0, %v8077
        %v8079 = vpop.f32.mrb[0].mxu0
        %8080 = vmatprep.mubr.bf16.mxu0 0
        %8081 = vmatmul.mubr.bf16.gmra.mrb[0].mxu0 %v917
        %v8082 = vpop.f32.mrb[0].mxu0
        %v8083 = vadd.f32 0.0, %v8082
        %v8084 = vpop.f32.mrb[0].mxu0
        %v8085 = vpop.f32.mrb[0].mxu0
        %v8086 = vadd.f32 0.0, %v8085
        %v8087 = vpop.f32.mrb[0].mxu0
        %8088 = vdwg.mxu0
        %v8089 = vadd.f32 %v7890, %v7963
        %v8090 = vadd.f32 %v7891, %v7966
        %v8091 = vadd.f32 %v7892, %v7971
        %v8092 = vadd.f32 %v7893, %v7974
        %v8093 = vadd.f32 %v7894, %v7979
        %v8094 = vadd.f32 %v7895, %v7982
        %v8095 = vadd.f32 %v7896, %v7987
        %v8096 = vadd.f32 %v7897, %v7990
        %v8097 = vadd.f32 %v7898, %v7995
        %v8098 = vadd.f32 %v7899, %v7998
        %v8099 = vadd.f32 %v7900, %v8003
        %v8100 = vadd.f32 %v7901, %v8006
        %v8101 = vadd.f32 %v7902, %v8011
        %v8102 = vadd.f32 %v7903, %v8014
        %v8103 = vadd.f32 %v7904, %v8019
        %v8104 = vadd.f32 %v7905, %v8022
        %v8105 = vadd.f32 %v7906, %v8027
        %v8106 = vadd.f32 %v7907, %v8030
        %v8107 = vadd.f32 %v7908, %v8035
        %v8108 = vadd.f32 %v7909, %v8038
        %v8109 = vadd.f32 %v7910, %v8043
        %v8110 = vadd.f32 %v7911, %v8046
        %v8111 = vadd.f32 %v7912, %v8051
        %v8112 = vadd.f32 %v7913, %v8054
        %v8113 = vadd.f32 %v7914, %v8059
        %v8114 = vadd.f32 %v7915, %v8062
        %v8115 = vadd.f32 %v7916, %v8067
        %v8116 = vadd.f32 %v7917, %v8070
        %v8117 = vadd.f32 %v7918, %v8075
        %v8118 = vadd.f32 %v7919, %v8078
        %v8119 = vadd.f32 %v7920, %v8083
        %v8120 = vadd.f32 %v7921, %v8086
        %8121 = vrot.lane.b32.xlu0 %v5463, 96
        %v8122 = vpop.permute.xlu0 %8121
        %8123 = vrot.lane.b32.xlu0 %v5464, 96
        %v8124 = vpop.permute.xlu0 %8123
        %8127 = vmatprep.subr.bf16.mxu0 0
        %8128 = vmatpush1.bf16.msra.mxu0 %v8122
        %8129 = vmatprep.subr.bf16.mxu0 0
        %8130 = vmatpush1.bf16.msra.mxu0 %v8124
        %8131 = vmatprep.subr.bf16.mxu0 0
        %8132 = vmatpush1.bf16.msra.mxu0 0
        %8133 = vmatprep.subr.bf16.mxu0 0
        %8134 = vmatpush1.bf16.msra.mxu0 0
        %8135 = vmatprep.subr.bf16.mxu0 0
        %8136 = vmatpush1.bf16.msra.mxu0 0
        %8137 = vmatprep.subr.bf16.mxu0 0
        %8138 = vmatpush1.bf16.msra.mxu0 0
        %8139 = vmatprep.subr.bf16.mxu0 0
        %8140 = vmatpush1.bf16.msra.mxu0 0
        %8141 = vmatprep.subr.bf16.mxu0 0
        %8142 = vmatpush1.bf16.msra.mxu0 0
        %8143 = vmatprep.subr.bf16.mxu0 0
        %8144 = vmatpush1.bf16.msra.mxu0 0
        %8145 = vmatprep.subr.bf16.mxu0 0
        %8146 = vmatpush1.bf16.msra.mxu0 0
        %8147 = vmatprep.subr.bf16.mxu0 0
        %8148 = vmatpush1.bf16.msra.mxu0 0
        %8149 = vmatprep.subr.bf16.mxu0 0
        %8150 = vmatpush1.bf16.msra.mxu0 0
        %8151 = vmatprep.subr.bf16.mxu0 0
        %8152 = vmatpush1.bf16.msra.mxu0 0
        %8153 = vmatprep.subr.bf16.mxu0 0
        %8154 = vmatpush1.bf16.msra.mxu0 0
        %8155 = vmatprep.subr.bf16.mxu0 0
        %8156 = vmatpush1.bf16.msra.mxu0 0
        %8157 = vmatprep.subr.bf16.mxu0 0
        %8158 = vmatpush1.bf16.msra.mxu0 0
        %8159 = vmatprep.mubr.bf16.mxu0 0
        %8160 = vmatmul.mubr.bf16.gmra.mrb[0].mxu0 %v6867
        %v8161 = vpop.f32.mrb[0].mxu0
        %v8162 = vadd.f32 0.0, %v8161
        %v8163 = vpop.f32.mrb[0].mxu0
        %v8164 = vpop.f32.mrb[0].mxu0
        %v8165 = vadd.f32 0.0, %v8164
        %v8166 = vpop.f32.mrb[0].mxu0
        %8167 = vmatprep.mubr.bf16.mxu0 0
        %8168 = vmatmul.mubr.bf16.gmra.mrb[0].mxu0 %v6870
        %v8169 = vpop.f32.mrb[0].mxu0
        %v8170 = vadd.f32 0.0, %v8169
        %v8171 = vpop.f32.mrb[0].mxu0
        %v8172 = vpop.f32.mrb[0].mxu0
        %v8173 = vadd.f32 0.0, %v8172
        %v8174 = vpop.f32.mrb[0].mxu0
        %8175 = vmatprep.mubr.bf16.mxu0 0
        %8176 = vmatmul.mubr.bf16.gmra.mrb[0].mxu0 %v6873
        %v8177 = vpop.f32.mrb[0].mxu0
        %v8178 = vadd.f32 0.0, %v8177
        %v8179 = vpop.f32.mrb[0].mxu0
        %v8180 = vpop.f32.mrb[0].mxu0
        %v8181 = vadd.f32 0.0, %v8180
        %v8182 = vpop.f32.mrb[0].mxu0
        %8183 = vmatprep.mubr.bf16.mxu0 0
        %8184 = vmatmul.mubr.bf16.gmra.mrb[0].mxu0 %v6876
        %v8185 = vpop.f32.mrb[0].mxu0
        %v8186 = vadd.f32 0.0, %v8185
        %v8187 = vpop.f32.mrb[0].mxu0
        %v8188 = vpop.f32.mrb[0].mxu0
        %v8189 = vadd.f32 0.0, %v8188
        %v8190 = vpop.f32.mrb[0].mxu0
        %8191 = vmatprep.mubr.bf16.mxu0 0
        %8192 = vmatmul.mubr.bf16.gmra.mrb[0].mxu0 %v6879
        %v8193 = vpop.f32.mrb[0].mxu0
        %v8194 = vadd.f32 0.0, %v8193
        %v8195 = vpop.f32.mrb[0].mxu0
        %v8196 = vpop.f32.mrb[0].mxu0
        %v8197 = vadd.f32 0.0, %v8196
        %v8198 = vpop.f32.mrb[0].mxu0
        %8199 = vmatprep.mubr.bf16.mxu0 0
        %8200 = vmatmul.mubr.bf16.gmra.mrb[0].mxu0 %v6882
        %v8201 = vpop.f32.mrb[0].mxu0
        %v8202 = vadd.f32 0.0, %v8201
        %v8203 = vpop.f32.mrb[0].mxu0
        %v8204 = vpop.f32.mrb[0].mxu0
        %v8205 = vadd.f32 0.0, %v8204
        %v8206 = vpop.f32.mrb[0].mxu0
        %8207 = vmatprep.mubr.bf16.mxu0 0
        %8208 = vmatmul.mubr.bf16.gmra.mrb[0].mxu0 %v6885
        %v8209 = vpop.f32.mrb[0].mxu0
        %v8210 = vadd.f32 0.0, %v8209
        %v8211 = vpop.f32.mrb[0].mxu0
        %v8212 = vpop.f32.mrb[0].mxu0
        %v8213 = vadd.f32 0.0, %v8212
        %v8214 = vpop.f32.mrb[0].mxu0
        %8215 = vmatprep.mubr.bf16.mxu0 0
        %8216 = vmatmul.mubr.bf16.gmra.mrb[0].mxu0 %v6888
        %v8217 = vpop.f32.mrb[0].mxu0
        %v8218 = vadd.f32 0.0, %v8217
        %v8219 = vpop.f32.mrb[0].mxu0
        %v8220 = vpop.f32.mrb[0].mxu0
        %v8221 = vadd.f32 0.0, %v8220
        %v8222 = vpop.f32.mrb[0].mxu0
        %8223 = vmatprep.mubr.bf16.mxu0 0
        %8224 = vmatmul.mubr.bf16.gmra.mrb[0].mxu0 %v6891
        %v8225 = vpop.f32.mrb[0].mxu0
        %v8226 = vadd.f32 0.0, %v8225
        %v8227 = vpop.f32.mrb[0].mxu0
        %v8228 = vpop.f32.mrb[0].mxu0
        %v8229 = vadd.f32 0.0, %v8228
        %v8230 = vpop.f32.mrb[0].mxu0
        %8231 = vmatprep.mubr.bf16.mxu0 0
        %8232 = vmatmul.mubr.bf16.gmra.mrb[0].mxu0 %v6894
        %v8233 = vpop.f32.mrb[0].mxu0
        %v8234 = vadd.f32 0.0, %v8233
        %v8235 = vpop.f32.mrb[0].mxu0
        %v8236 = vpop.f32.mrb[0].mxu0
        %v8237 = vadd.f32 0.0, %v8236
        %v8238 = vpop.f32.mrb[0].mxu0
        %8239 = vmatprep.mubr.bf16.mxu0 0
        %8240 = vmatmul.mubr.bf16.gmra.mrb[0].mxu0 %v6897
        %v8241 = vpop.f32.mrb[0].mxu0
        %v8242 = vadd.f32 0.0, %v8241
        %v8243 = vpop.f32.mrb[0].mxu0
        %v8244 = vpop.f32.mrb[0].mxu0
        %v8245 = vadd.f32 0.0, %v8244
        %v8246 = vpop.f32.mrb[0].mxu0
        %8247 = vmatprep.mubr.bf16.mxu0 0
        %8248 = vmatmul.mubr.bf16.gmra.mrb[0].mxu0 %v6900
        %v8249 = vpop.f32.mrb[0].mxu0
        %v8250 = vadd.f32 0.0, %v8249
        %v8251 = vpop.f32.mrb[0].mxu0
        %v8252 = vpop.f32.mrb[0].mxu0
        %v8253 = vadd.f32 0.0, %v8252
        %v8254 = vpop.f32.mrb[0].mxu0
        %8255 = vmatprep.mubr.bf16.mxu0 0
        %8256 = vmatmul.mubr.bf16.gmra.mrb[0].mxu0 %v6903
        %v8257 = vpop.f32.mrb[0].mxu0
        %v8258 = vadd.f32 0.0, %v8257
        %v8259 = vpop.f32.mrb[0].mxu0
        %v8260 = vpop.f32.mrb[0].mxu0
        %v8261 = vadd.f32 0.0, %v8260
        %v8262 = vpop.f32.mrb[0].mxu0
        %8263 = vmatprep.mubr.bf16.mxu0 0
        %8264 = vmatmul.mubr.bf16.gmra.mrb[0].mxu0 %v6906
        %v8265 = vpop.f32.mrb[0].mxu0
        %v8266 = vadd.f32 0.0, %v8265
        %v8267 = vpop.f32.mrb[0].mxu0
        %v8268 = vpop.f32.mrb[0].mxu0
        %v8269 = vadd.f32 0.0, %v8268
        %v8270 = vpop.f32.mrb[0].mxu0
        %8271 = vmatprep.mubr.bf16.mxu0 0
        %8272 = vmatmul.mubr.bf16.gmra.mrb[0].mxu0 %v7528
        %v8273 = vpop.f32.mrb[0].mxu0
        %v8274 = vadd.f32 0.0, %v8273
        %v8275 = vpop.f32.mrb[0].mxu0
        %v8276 = vpop.f32.mrb[0].mxu0
        %v8277 = vadd.f32 0.0, %v8276
        %v8278 = vpop.f32.mrb[0].mxu0
        %8279 = vmatprep.mubr.bf16.mxu0 0
        %8280 = vmatmul.mubr.bf16.gmra.mrb[0].mxu0 %v1422
        %v8281 = vpop.f32.mrb[0].mxu0
        %v8282 = vadd.f32 0.0, %v8281
        %v8283 = vpop.f32.mrb[0].mxu0
        %v8284 = vpop.f32.mrb[0].mxu0
        %v8285 = vadd.f32 0.0, %v8284
        %v8286 = vpop.f32.mrb[0].mxu0
        %8287 = vdwg.mxu0
        %v8288 = vadd.f32 %v8089, %v8162
        %v8289 = vadd.f32 %v8090, %v8165
        %v8290 = vadd.f32 %v8091, %v8170
        %v8291 = vadd.f32 %v8092, %v8173
        %v8292 = vadd.f32 %v8093, %v8178
        %v8293 = vadd.f32 %v8094, %v8181
        %v8294 = vadd.f32 %v8095, %v8186
        %v8295 = vadd.f32 %v8096, %v8189
        %v8296 = vadd.f32 %v8097, %v8194
        %v8297 = vadd.f32 %v8098, %v8197
        %v8298 = vadd.f32 %v8099, %v8202
        %v8299 = vadd.f32 %v8100, %v8205
        %v8300 = vadd.f32 %v8101, %v8210
        %v8301 = vadd.f32 %v8102, %v8213
        %v8302 = vadd.f32 %v8103, %v8218
        %v8303 = vadd.f32 %v8104, %v8221
        %v8304 = vadd.f32 %v8105, %v8226
        %v8305 = vadd.f32 %v8106, %v8229
        %v8306 = vadd.f32 %v8107, %v8234
        %v8307 = vadd.f32 %v8108, %v8237
        %v8308 = vadd.f32 %v8109, %v8242
        %v8309 = vadd.f32 %v8110, %v8245
        %v8310 = vadd.f32 %v8111, %v8250
        %v8311 = vadd.f32 %v8112, %v8253
        %v8312 = vadd.f32 %v8113, %v8258
        %v8313 = vadd.f32 %v8114, %v8261
        %v8314 = vadd.f32 %v8115, %v8266
        %v8315 = vadd.f32 %v8116, %v8269
        %v8316 = vadd.f32 %v8117, %v8274
        %v8317 = vadd.f32 %v8118, %v8277
        %v8318 = vadd.f32 %v8119, %v8282
        %v8319 = vadd.f32 %v8120, %v8285
        %8320 = vrot.lane.b32.xlu0 %v5664, 96
        %v8321 = vpop.permute.xlu0 %8320
        %v8323 = vadd.f32 %v8288, %v8321
        %v8324 = vadd.f32 %v8289, %v8321
        %v8325 = vadd.f32 %v8290, %v8321
        %v8326 = vadd.f32 %v8291, %v8321
        %v8327 = vadd.f32 %v8292, %v8321
        %v8328 = vadd.f32 %v8293, %v8321
        %v8329 = vadd.f32 %v8294, %v8321
        %v8330 = vadd.f32 %v8295, %v8321
        %v8331 = vadd.f32 %v8296, %v8321
        %v8332 = vadd.f32 %v8297, %v8321
        %v8333 = vadd.f32 %v8298, %v8321
        %v8334 = vadd.f32 %v8299, %v8321
        %v8335 = vadd.f32 %v8300, %v8321
        %v8336 = vadd.f32 %v8301, %v8321
        %v8337 = vadd.f32 %v8302, %v8321
        %v8338 = vadd.f32 %v8303, %v8321
        %v8339 = vadd.f32 %v8304, %v8321
        %v8340 = vadd.f32 %v8305, %v8321
        %v8341 = vadd.f32 %v8306, %v8321
        %v8342 = vadd.f32 %v8307, %v8321
        %v8343 = vadd.f32 %v8308, %v8321
        %v8344 = vadd.f32 %v8309, %v8321
        %v8345 = vadd.f32 %v8310, %v8321
        %v8346 = vadd.f32 %v8311, %v8321
        %v8347 = vadd.f32 %v8312, %v8321
        %v8348 = vadd.f32 %v8313, %v8321
        %v8349 = vadd.f32 %v8314, %v8321
        %v8350 = vadd.f32 %v8315, %v8321
        %v8351 = vadd.f32 %v8316, %v8321
        %v8352 = vadd.f32 %v8317, %v8321
        %v8353 = vadd.f32 %v8318, %v8321
        %v8354 = vadd.f32 %v8319, %v8321
        %v8355 = vsel %vm915, %v8323, 0.0
        %v8356 = vsel %vm915, %v8324, 0.0
        %v8357 = vadd.f32 %v8355, %v8356
        %v8358 = vsel %vm915, %v8325, 0.0
        %v8359 = vadd.f32 %v8357, %v8358
        %v8360 = vsel %vm915, %v8326, 0.0
        %v8361 = vadd.f32 %v8359, %v8360
        %v8362 = vsel %vm915, %v8327, 0.0
        %v8363 = vadd.f32 %v8361, %v8362
        %v8364 = vsel %vm915, %v8328, 0.0
        %v8365 = vadd.f32 %v8363, %v8364
        %v8366 = vsel %vm915, %v8329, 0.0
        %v8367 = vadd.f32 %v8365, %v8366
        %v8368 = vsel %vm915, %v8330, 0.0
        %v8369 = vadd.f32 %v8367, %v8368
        %v8370 = vsel %vm915, %v8331, 0.0
        %v8371 = vadd.f32 %v8369, %v8370
        %v8372 = vsel %vm915, %v8332, 0.0
        %v8373 = vadd.f32 %v8371, %v8372
        %v8374 = vsel %vm915, %v8333, 0.0
        %v8375 = vadd.f32 %v8373, %v8374
        %v8376 = vsel %vm915, %v8334, 0.0
        %v8377 = vadd.f32 %v8375, %v8376
        %v8378 = vsel %vm915, %v8335, 0.0
        %v8379 = vadd.f32 %v8377, %v8378
        %v8380 = vsel %vm915, %v8336, 0.0
        %v8381 = vadd.f32 %v8379, %v8380
        %v8382 = vsel %vm915, %v8337, 0.0
        %v8383 = vadd.f32 %v8381, %v8382
        %v8384 = vsel %vm915, %v8338, 0.0
        %v8385 = vadd.f32 %v8383, %v8384
        %v8386 = vsel %vm915, %v8339, 0.0
        %v8387 = vadd.f32 %v8385, %v8386
        %v8388 = vsel %vm915, %v8340, 0.0
        %v8389 = vadd.f32 %v8387, %v8388
        %v8390 = vsel %vm915, %v8341, 0.0
        %v8391 = vadd.f32 %v8389, %v8390
        %v8392 = vsel %vm915, %v8342, 0.0
        %v8393 = vadd.f32 %v8391, %v8392
        %v8394 = vsel %vm915, %v8343, 0.0
        %v8395 = vadd.f32 %v8393, %v8394
        %v8396 = vsel %vm915, %v8344, 0.0
        %v8397 = vadd.f32 %v8395, %v8396
        %v8398 = vsel %vm915, %v8345, 0.0
        %v8399 = vadd.f32 %v8397, %v8398
        %v8400 = vsel %vm915, %v8346, 0.0
        %v8401 = vadd.f32 %v8399, %v8400
        %v8402 = vsel %vm915, %v8347, 0.0
        %v8403 = vadd.f32 %v8401, %v8402
        %v8404 = vsel %vm915, %v8348, 0.0
        %v8405 = vadd.f32 %v8403, %v8404
        %v8406 = vsel %vm915, %v8349, 0.0
        %v8407 = vadd.f32 %v8405, %v8406
        %v8408 = vsel %vm915, %v8350, 0.0
        %v8409 = vadd.f32 %v8407, %v8408
        %v8410 = vsel %vm915, %v8351, 0.0
        %v8411 = vadd.f32 %v8409, %v8410
        %v8412 = vsel %vm915, %v8352, 0.0
        %v8413 = vadd.f32 %v8411, %v8412
        %v8414 = vsel %vm915, %v8353, 0.0
        %v8415 = vadd.f32 %v8413, %v8414
        %v8416 = vsel %vm915, %v8354, 0.0
        %v8417 = vadd.f32 %v8415, %v8416
        %v8418 = vrot.slane %v8417, 4
        %v8419 = vadd.f32 %v8417, %v8418
        %v8420 = vrot.slane %v8419, 2
        %v8421 = vadd.f32 %v8419, %v8420
        %v8422 = vrot.slane %v8421, 1
        %v8423 = vadd.f32 %v8421, %v8422
        %v8424 = vmul.f32 %v8423, %v3025
        %v8425 = vmul.f32 %v8323, %v8323
        %v8426 = vmul.f32 %v8324, %v8324
        %v8427 = vmul.f32 %v8325, %v8325
        %v8428 = vmul.f32 %v8326, %v8326
        %v8429 = vmul.f32 %v8327, %v8327
        %v8430 = vmul.f32 %v8328, %v8328
        %v8431 = vmul.f32 %v8329, %v8329
        %v8432 = vmul.f32 %v8330, %v8330
        %v8433 = vmul.f32 %v8331, %v8331
        %v8434 = vmul.f32 %v8332, %v8332
        %v8435 = vmul.f32 %v8333, %v8333
        %v8436 = vmul.f32 %v8334, %v8334
        %v8437 = vmul.f32 %v8335, %v8335
        %v8438 = vmul.f32 %v8336, %v8336
        %v8439 = vmul.f32 %v8337, %v8337
        %v8440 = vmul.f32 %v8338, %v8338
        %v8441 = vmul.f32 %v8339, %v8339
        %v8442 = vmul.f32 %v8340, %v8340
        %v8443 = vmul.f32 %v8341, %v8341
        %v8444 = vmul.f32 %v8342, %v8342
        %v8445 = vmul.f32 %v8343, %v8343
        %v8446 = vmul.f32 %v8344, %v8344
        %v8447 = vmul.f32 %v8345, %v8345
        %v8448 = vmul.f32 %v8346, %v8346
        %v8449 = vmul.f32 %v8347, %v8347
        %v8450 = vmul.f32 %v8348, %v8348
        %v8451 = vmul.f32 %v8349, %v8349
        %v8452 = vmul.f32 %v8350, %v8350
        %v8453 = vmul.f32 %v8351, %v8351
        %v8454 = vmul.f32 %v8352, %v8352
        %v8455 = vmul.f32 %v8353, %v8353
        %v8456 = vmul.f32 %v8354, %v8354
        %v8457 = vsel %vm915, %v8425, 0.0
        %v8458 = vsel %vm915, %v8426, 0.0
        %v8459 = vadd.f32 %v8457, %v8458
        %v8460 = vsel %vm915, %v8427, 0.0
        %v8461 = vadd.f32 %v8459, %v8460
        %v8462 = vsel %vm915, %v8428, 0.0
        %v8463 = vadd.f32 %v8461, %v8462
        %v8464 = vsel %vm915, %v8429, 0.0
        %v8465 = vadd.f32 %v8463, %v8464
        %v8466 = vsel %vm915, %v8430, 0.0
        %v8467 = vadd.f32 %v8465, %v8466
        %v8468 = vsel %vm915, %v8431, 0.0
        %v8469 = vadd.f32 %v8467, %v8468
        %v8470 = vsel %vm915, %v8432, 0.0
        %v8471 = vadd.f32 %v8469, %v8470
        %v8472 = vsel %vm915, %v8433, 0.0
        %v8473 = vadd.f32 %v8471, %v8472
        %v8474 = vsel %vm915, %v8434, 0.0
        %v8475 = vadd.f32 %v8473, %v8474
        %v8476 = vsel %vm915, %v8435, 0.0
        %v8477 = vadd.f32 %v8475, %v8476
        %v8478 = vsel %vm915, %v8436, 0.0
        %v8479 = vadd.f32 %v8477, %v8478
        %v8480 = vsel %vm915, %v8437, 0.0
        %v8481 = vadd.f32 %v8479, %v8480
        %v8482 = vsel %vm915, %v8438, 0.0
        %v8483 = vadd.f32 %v8481, %v8482
        %v8484 = vsel %vm915, %v8439, 0.0
        %v8485 = vadd.f32 %v8483, %v8484
        %v8486 = vsel %vm915, %v8440, 0.0
        %v8487 = vadd.f32 %v8485, %v8486
        %v8488 = vsel %vm915, %v8441, 0.0
        %v8489 = vadd.f32 %v8487, %v8488
        %v8490 = vsel %vm915, %v8442, 0.0
        %v8491 = vadd.f32 %v8489, %v8490
        %v8492 = vsel %vm915, %v8443, 0.0
        %v8493 = vadd.f32 %v8491, %v8492
        %v8494 = vsel %vm915, %v8444, 0.0
        %v8495 = vadd.f32 %v8493, %v8494
        %v8496 = vsel %vm915, %v8445, 0.0
        %v8497 = vadd.f32 %v8495, %v8496
        %v8498 = vsel %vm915, %v8446, 0.0
        %v8499 = vadd.f32 %v8497, %v8498
        %v8500 = vsel %vm915, %v8447, 0.0
        %v8501 = vadd.f32 %v8499, %v8500
        %v8502 = vsel %vm915, %v8448, 0.0
        %v8503 = vadd.f32 %v8501, %v8502
        %v8504 = vsel %vm915, %v8449, 0.0
        %v8505 = vadd.f32 %v8503, %v8504
        %v8506 = vsel %vm915, %v8450, 0.0
        %v8507 = vadd.f32 %v8505, %v8506
        %v8508 = vsel %vm915, %v8451, 0.0
        %v8509 = vadd.f32 %v8507, %v8508
        %v8510 = vsel %vm915, %v8452, 0.0
        %v8511 = vadd.f32 %v8509, %v8510
        %v8512 = vsel %vm915, %v8453, 0.0
        %v8513 = vadd.f32 %v8511, %v8512
        %v8514 = vsel %vm915, %v8454, 0.0
        %v8515 = vadd.f32 %v8513, %v8514
        %v8516 = vsel %vm915, %v8455, 0.0
        %v8517 = vadd.f32 %v8515, %v8516
        %v8518 = vsel %vm915, %v8456, 0.0
        %v8519 = vadd.f32 %v8517, %v8518
        %v8520 = vrot.slane %v8519, 4
        %v8521 = vadd.f32 %v8519, %v8520
        %v8522 = vrot.slane %v8521, 2
        %v8523 = vadd.f32 %v8521, %v8522
        %v8524 = vrot.slane %v8523, 1
        %v8525 = vadd.f32 %v8523, %v8524
        %v8526 = vmul.f32 %v8525, %v3025
        %v8527 = vmul.f32 %v8424, %v8424
        %v8528 = vsub.f32 %v8526, %v8527
        %v8529 = vadd.f32 %v8528, 1e-05
        %v8530 = vrsqrt.pop %v8529
        %v8533 = vunpack.c.l.s4 1966171168
        %v8534 = vunpack.c.0.s8 %v8533
        %v8535 = vlaneseq
        %v8536 = vshrl.u32 %v8535, 7
        %v8537 = vsub.s32 %v8534, %v8536
        %v8538 = vrot.slane %v8530, %v8537
        %v8540 = vunpack.c.l.s4 1966171168
        %v8541 = vunpack.c.0.s8 %v8540
        %v8542 = vlaneseq
        %v8543 = vshrl.u32 %v8542, 7
        %v8544 = vsub.s32 %v8541, %v8543
        %v8545 = vrot.slane %v8538, %v8544
        %8546 = vrot.lane.b32.xlu0 %v8545, 32
        %v8547 = vpop.permute.xlu0 %8546
        %v8549 = vmul.f32 %v3284, %v8547
        %v8551 = vlaneseq
        %v8552 = vshrl.u32 %v8551, 7
        %v8553 = vsub.s32 0, %v8552
        %v8554 = vrot.slane %v8549, %v8553
        %8555 = vrot.lane.b32.xlu0 %v8554, 96
        %v8556 = vpop.permute.xlu0 %8555
        %v8558 = vmul.f32 %v8424, %v8556
        %v8561 = vunpack.c.l.s4 1966171168
        %v8562 = vunpack.c.0.s8 %v8561
        %v8563 = vlaneseq
        %v8564 = vshrl.u32 %v8563, 7
        %v8565 = vsub.s32 %v8562, %v8564
        %v8566 = vrot.slane %v8558, %v8565
        %v8568 = vunpack.c.l.s4 1966171168
        %v8569 = vunpack.c.0.s8 %v8568
        %v8570 = vlaneseq
        %v8571 = vshrl.u32 %v8570, 7
        %v8572 = vsub.s32 %v8569, %v8571
        %v8573 = vrot.slane %v8566, %v8572
        %8574 = vrot.lane.b32.xlu0 %v8573, 32
        %v8575 = vpop.permute.xlu0 %8574
        %v8577 = vsub.f32 %v3286, %v8575
        %v8578 = vmul.f32 %v8323, %v8556
        %v8579 = vmul.f32 %v8324, %v8556
        %v8580 = vmul.f32 %v8325, %v8556
        %v8581 = vmul.f32 %v8326, %v8556
        %v8582 = vmul.f32 %v8327, %v8556
        %v8583 = vmul.f32 %v8328, %v8556
        %v8584 = vmul.f32 %v8329, %v8556
        %v8585 = vmul.f32 %v8330, %v8556
        %v8586 = vmul.f32 %v8331, %v8556
        %v8587 = vmul.f32 %v8332, %v8556
        %v8588 = vmul.f32 %v8333, %v8556
        %v8589 = vmul.f32 %v8334, %v8556
        %v8590 = vmul.f32 %v8335, %v8556
        %v8591 = vmul.f32 %v8336, %v8556
        %v8592 = vmul.f32 %v8337, %v8556
        %v8593 = vmul.f32 %v8338, %v8556
        %v8594 = vmul.f32 %v8339, %v8556
        %v8595 = vmul.f32 %v8340, %v8556
        %v8596 = vmul.f32 %v8341, %v8556
        %v8597 = vmul.f32 %v8342, %v8556
        %v8598 = vmul.f32 %v8343, %v8556
        %v8599 = vmul.f32 %v8344, %v8556
        %v8600 = vmul.f32 %v8345, %v8556
        %v8601 = vmul.f32 %v8346, %v8556
        %v8602 = vmul.f32 %v8347, %v8556
        %v8603 = vmul.f32 %v8348, %v8556
        %v8604 = vmul.f32 %v8349, %v8556
        %v8605 = vmul.f32 %v8350, %v8556
        %v8606 = vmul.f32 %v8351, %v8556
        %v8607 = vmul.f32 %v8352, %v8556
        %v8608 = vmul.f32 %v8353, %v8556
        %v8609 = vmul.f32 %v8354, %v8556
        %v8611 = vlaneseq
        %v8612 = vshrl.u32 %v8611, 7
        %v8613 = vsub.s32 0, %v8612
        %v8614 = vrot.slane %v8577, %v8613
        %8615 = vrot.lane.b32.xlu0 %v8614, 96
        %v8616 = vpop.permute.xlu0 %8615
        %v8618 = vadd.f32 %v8578, %v8616
        %v8619 = vadd.f32 %v8579, %v8616
        %v8620 = vadd.f32 %v8580, %v8616
        %v8621 = vadd.f32 %v8581, %v8616
        %v8622 = vadd.f32 %v8582, %v8616
        %v8623 = vadd.f32 %v8583, %v8616
        %v8624 = vadd.f32 %v8584, %v8616
        %v8625 = vadd.f32 %v8585, %v8616
        %v8626 = vadd.f32 %v8586, %v8616
        %v8627 = vadd.f32 %v8587, %v8616
        %v8628 = vadd.f32 %v8588, %v8616
        %v8629 = vadd.f32 %v8589, %v8616
        %v8630 = vadd.f32 %v8590, %v8616
        %v8631 = vadd.f32 %v8591, %v8616
        %v8632 = vadd.f32 %v8592, %v8616
        %v8633 = vadd.f32 %v8593, %v8616
        %v8634 = vadd.f32 %v8594, %v8616
        %v8635 = vadd.f32 %v8595, %v8616
        %v8636 = vadd.f32 %v8596, %v8616
        %v8637 = vadd.f32 %v8597, %v8616
        %v8638 = vadd.f32 %v8598, %v8616
        %v8639 = vadd.f32 %v8599, %v8616
        %v8640 = vadd.f32 %v8600, %v8616
        %v8641 = vadd.f32 %v8601, %v8616
        %v8642 = vadd.f32 %v8602, %v8616
        %v8643 = vadd.f32 %v8603, %v8616
        %v8644 = vadd.f32 %v8604, %v8616
        %v8645 = vadd.f32 %v8605, %v8616
        %v8646 = vadd.f32 %v8606, %v8616
        %v8647 = vadd.f32 %v8607, %v8616
        %v8648 = vadd.f32 %v8608, %v8616
        %v8649 = vadd.f32 %v8609, %v8616
        %v8650 = vmax.f32 %v8618, 0.0
        %v8651 = vmax.f32 %v8619, 0.0
        %v8652 = vmax.f32 %v8620, 0.0
        %v8653 = vmax.f32 %v8621, 0.0
        %v8654 = vmax.f32 %v8622, 0.0
        %v8655 = vmax.f32 %v8623, 0.0
        %v8656 = vmax.f32 %v8624, 0.0
        %v8657 = vmax.f32 %v8625, 0.0
        %v8658 = vmax.f32 %v8626, 0.0
        %v8659 = vmax.f32 %v8627, 0.0
        %v8660 = vmax.f32 %v8628, 0.0
        %v8661 = vmax.f32 %v8629, 0.0
        %v8662 = vmax.f32 %v8630, 0.0
        %v8663 = vmax.f32 %v8631, 0.0
        %v8664 = vmax.f32 %v8632, 0.0
        %v8665 = vmax.f32 %v8633, 0.0
        %v8666 = vmax.f32 %v8634, 0.0
        %v8667 = vmax.f32 %v8635, 0.0
        %v8668 = vmax.f32 %v8636, 0.0
        %v8669 = vmax.f32 %v8637, 0.0
        %v8670 = vmax.f32 %v8638, 0.0
        %v8671 = vmax.f32 %v8639, 0.0
        %v8672 = vmax.f32 %v8640, 0.0
        %v8673 = vmax.f32 %v8641, 0.0
        %v8674 = vmax.f32 %v8642, 0.0
        %v8675 = vmax.f32 %v8643, 0.0
        %v8676 = vmax.f32 %v8644, 0.0
        %v8677 = vmax.f32 %v8645, 0.0
        %v8678 = vmax.f32 %v8646, 0.0
        %v8679 = vmax.f32 %v8647, 0.0
        %v8680 = vmax.f32 %v8648, 0.0
        %v8681 = vmax.f32 %v8649, 0.0
        %v8714 = vrot.slane %v5953, 7
        %v8715 = vrot.slane %v5954, 7
        %v8716 = vsel %vm552, %v8714, %v8715
        %v8717 = vrot.slane %v5955, 7
        %v8718 = vrot.slane %v5956, 7
        %v8719 = vsel %vm552, %v8717, %v8718
        %v8720 = vrot.slane %v5957, 7
        %v8721 = vrot.slane %v5958, 7
        %v8722 = vsel %vm552, %v8720, %v8721
        %v8723 = vrot.slane %v5959, 7
        %v8724 = vrot.slane %v5960, 7
        %v8725 = vsel %vm552, %v8723, %v8724
        %v8726 = vrot.slane %v5961, 7
        %v8727 = vrot.slane %v5962, 7
        %v8728 = vsel %vm552, %v8726, %v8727
        %v8729 = vrot.slane %v5963, 7
        %v8730 = vrot.slane %v5964, 7
        %v8731 = vsel %vm552, %v8729, %v8730
        %v8732 = vrot.slane %v5965, 7
        %v8733 = vrot.slane %v5966, 7
        %v8734 = vsel %vm552, %v8732, %v8733
        %v8735 = vrot.slane %v5967, 7
        %v8736 = vrot.slane %v5968, 7
        %v8737 = vsel %vm552, %v8735, %v8736
        %v8738 = vrot.slane %v5969, 7
        %v8739 = vrot.slane %v5970, 7
        %v8740 = vsel %vm552, %v8738, %v8739
        %v8741 = vrot.slane %v5971, 7
        %v8742 = vrot.slane %v5972, 7
        %v8743 = vsel %vm552, %v8741, %v8742
        %v8744 = vrot.slane %v5973, 7
        %v8745 = vrot.slane %v5974, 7
        %v8746 = vsel %vm552, %v8744, %v8745
        %v8747 = vrot.slane %v5975, 7
        %v8748 = vrot.slane %v5976, 7
        %v8749 = vsel %vm552, %v8747, %v8748
        %v8750 = vrot.slane %v5977, 7
        %v8751 = vrot.slane %v5978, 7
        %v8752 = vsel %vm552, %v8750, %v8751
        %v8753 = vrot.slane %v5979, 7
        %v8754 = vrot.slane %v5980, 7
        %v8755 = vsel %vm552, %v8753, %v8754
        %v8756 = vrot.slane %v5981, 7
        %v8757 = vrot.slane %v5982, 7
        %v8758 = vsel %vm552, %v8756, %v8757
        %v8759 = vrot.slane %v5983, 7
        %v8760 = vrot.slane %v5984, 7
        %v8761 = vsel %vm552, %v8759, %v8760
        %v8810 = vsel %vm552, 0.0, %v8714
        %v8811 = vsel %vm552, 0.0, %v8717
        %v8812 = vsel %vm552, 0.0, %v8720
        %v8813 = vsel %vm552, 0.0, %v8723
        %v8814 = vsel %vm552, 0.0, %v8726
        %v8815 = vsel %vm552, 0.0, %v8729
        %v8816 = vsel %vm552, 0.0, %v8732
        %v8817 = vsel %vm552, 0.0, %v8735
        %v8818 = vsel %vm552, 0.0, %v8738
        %v8819 = vsel %vm552, 0.0, %v8741
        %v8820 = vsel %vm552, 0.0, %v8744
        %v8821 = vsel %vm552, 0.0, %v8747
        %v8822 = vsel %vm552, 0.0, %v8750
        %v8823 = vsel %vm552, 0.0, %v8753
        %v8824 = vsel %vm552, 0.0, %v8756
        %v8825 = vsel %vm552, 0.0, %v8759
        %v8826 = vsel %vm552, %v8715, 0.0
        %v8827 = vsel %vm552, %v8718, 0.0
        %v8828 = vsel %vm552, %v8721, 0.0
        %v8829 = vsel %vm552, %v8724, 0.0
        %v8830 = vsel %vm552, %v8727, 0.0
        %v8831 = vsel %vm552, %v8730, 0.0
        %v8832 = vsel %vm552, %v8733, 0.0
        %v8833 = vsel %vm552, %v8736, 0.0
        %v8834 = vsel %vm552, %v8739, 0.0
        %v8835 = vsel %vm552, %v8742, 0.0
        %v8836 = vsel %vm552, %v8745, 0.0
        %v8837 = vsel %vm552, %v8748, 0.0
        %v8838 = vsel %vm552, %v8751, 0.0
        %v8839 = vsel %vm552, %v8754, 0.0
        %v8840 = vsel %vm552, %v8757, 0.0
        %v8841 = vsel %vm552, %v8760, 0.0
        %v8842 = vpack.c.bf16 %v8716, %v8810
        %v8843 = vpack.c.bf16 %v8826, %v8826
        %v8844 = vpack.c.bf16 %v8719, %v8811
        %v8845 = vpack.c.bf16 %v8827, %v8827
        %v8846 = vpack.c.bf16 %v8722, %v8812
        %v8847 = vpack.c.bf16 %v8828, %v8828
        %v8848 = vpack.c.bf16 %v8725, %v8813
        %v8849 = vpack.c.bf16 %v8829, %v8829
        %v8850 = vpack.c.bf16 %v8728, %v8814
        %v8851 = vpack.c.bf16 %v8830, %v8830
        %v8852 = vpack.c.bf16 %v8731, %v8815
        %v8853 = vpack.c.bf16 %v8831, %v8831
        %v8854 = vpack.c.bf16 %v8734, %v8816
        %v8855 = vpack.c.bf16 %v8832, %v8832
        %v8856 = vpack.c.bf16 %v8737, %v8817
        %v8857 = vpack.c.bf16 %v8833, %v8833
        %v8858 = vpack.c.bf16 %v8740, %v8818
        %v8859 = vpack.c.bf16 %v8834, %v8834
        %v8860 = vpack.c.bf16 %v8743, %v8819
        %v8861 = vpack.c.bf16 %v8835, %v8835
        %v8862 = vpack.c.bf16 %v8746, %v8820
        %v8863 = vpack.c.bf16 %v8836, %v8836
        %v8864 = vpack.c.bf16 %v8749, %v8821
        %v8865 = vpack.c.bf16 %v8837, %v8837
        %v8866 = vpack.c.bf16 %v8752, %v8822
        %v8867 = vpack.c.bf16 %v8838, %v8838
        %v8868 = vpack.c.bf16 %v8755, %v8823
        %v8869 = vpack.c.bf16 %v8839, %v8839
        %v8870 = vpack.c.bf16 %v8758, %v8824
        %v8871 = vpack.c.bf16 %v8840, %v8840
        %v8872 = vpack.c.bf16 %v8761, %v8825
        %v8873 = vpack.c.bf16 %v8841, %v8841
        %v8874 = vld [vmem:[#allocation8] sm:$0xf]
        %v8875 = vld [vmem:[#allocation8 + $0x4] sm:$0x1]
        %v8876 = vld [vmem:[#allocation8 + $0x8] sm:$0xf]
        %v8877 = vld [vmem:[#allocation8 + $0xc] sm:$0x1]
        %v8878 = vld [vmem:[#allocation8 + $0x10] sm:$0xf]
        %v8879 = vld [vmem:[#allocation8 + $0x14] sm:$0x1]
        %v8880 = vld [vmem:[#allocation8 + $0x18] sm:$0xf]
        %v8881 = vld [vmem:[#allocation8 + $0x1c] sm:$0x1]
        %v8882 = vld [vmem:[#allocation8 + $0x20] sm:$0xf]
        %v8883 = vld [vmem:[#allocation8 + $0x24] sm:$0x1]
        %v8884 = vld [vmem:[#allocation8 + $0x28] sm:$0xf]
        %v8885 = vld [vmem:[#allocation8 + $0x2c] sm:$0x1]
        %v8886 = vld [vmem:[#allocation8 + $0x30] sm:$0xf]
        %v8887 = vld [vmem:[#allocation8 + $0x34] sm:$0x1]
        %v8888 = vld [vmem:[#allocation8 + $0x38] sm:$0xf]
        %v8889 = vld [vmem:[#allocation8 + $0x3c] sm:$0x1]
        %v8890 = vld [vmem:[#allocation8 + $0x40] sm:$0xf]
        %v8891 = vld [vmem:[#allocation8 + $0x44] sm:$0x1]
        %v8893 = vshrl.u32 %v8842, 16
        %v8895 = vshll.u32 %v8842, 16
        %v8897 = vrot.slane %v8895, 1
        %v8898 = vor.u32 %v8893, %v8897
        %v8900 = vshll.u32 %v8843, 16
        %v8902 = vrot.slane %v8900, 1
        %v8903 = vsel %vm714, %v8898, %v8902
        %v8905 = vshrl.u32 %v8844, 16
        %v8907 = vshll.u32 %v8844, 16
        %v8909 = vrot.slane %v8907, 1
        %v8910 = vor.u32 %v8905, %v8909
        %v8912 = vshll.u32 %v8845, 16
        %v8914 = vrot.slane %v8912, 1
        %v8915 = vsel %vm714, %v8910, %v8914
        %v8917 = vshrl.u32 %v8846, 16
        %v8919 = vshll.u32 %v8846, 16
        %v8921 = vrot.slane %v8919, 1
        %v8922 = vor.u32 %v8917, %v8921
        %v8924 = vshll.u32 %v8847, 16
        %v8926 = vrot.slane %v8924, 1
        %v8927 = vsel %vm714, %v8922, %v8926
        %v8929 = vshrl.u32 %v8848, 16
        %v8931 = vshll.u32 %v8848, 16
        %v8933 = vrot.slane %v8931, 1
        %v8934 = vor.u32 %v8929, %v8933
        %v8936 = vshll.u32 %v8849, 16
        %v8938 = vrot.slane %v8936, 1
        %v8939 = vsel %vm714, %v8934, %v8938
        %v8941 = vshrl.u32 %v8850, 16
        %v8943 = vshll.u32 %v8850, 16
        %v8945 = vrot.slane %v8943, 1
        %v8946 = vor.u32 %v8941, %v8945
        %v8948 = vshll.u32 %v8851, 16
        %v8950 = vrot.slane %v8948, 1
        %v8951 = vsel %vm714, %v8946, %v8950
        %v8953 = vshrl.u32 %v8852, 16
        %v8955 = vshll.u32 %v8852, 16
        %v8957 = vrot.slane %v8955, 1
        %v8958 = vor.u32 %v8953, %v8957
        %v8960 = vshll.u32 %v8853, 16
        %v8962 = vrot.slane %v8960, 1
        %v8963 = vsel %vm714, %v8958, %v8962
        %v8965 = vshrl.u32 %v8854, 16
        %v8967 = vshll.u32 %v8854, 16
        %v8969 = vrot.slane %v8967, 1
        %v8970 = vor.u32 %v8965, %v8969
        %v8972 = vshll.u32 %v8855, 16
        %v8974 = vrot.slane %v8972, 1
        %v8975 = vsel %vm714, %v8970, %v8974
        %v8977 = vshrl.u32 %v8856, 16
        %v8979 = vshll.u32 %v8856, 16
        %v8981 = vrot.slane %v8979, 1
        %v8982 = vor.u32 %v8977, %v8981
        %v8984 = vshll.u32 %v8857, 16
        %v8986 = vrot.slane %v8984, 1
        %v8987 = vsel %vm714, %v8982, %v8986
        %v8989 = vshrl.u32 %v8858, 16
        %v8991 = vshll.u32 %v8858, 16
        %v8993 = vrot.slane %v8991, 1
        %v8994 = vor.u32 %v8989, %v8993
        %v8996 = vshll.u32 %v8859, 16
        %v8998 = vrot.slane %v8996, 1
        %v8999 = vsel %vm714, %v8994, %v8998
        %v9001 = vshrl.u32 %v8860, 16
        %v9003 = vshll.u32 %v8860, 16
        %v9005 = vrot.slane %v9003, 1
        %v9006 = vor.u32 %v9001, %v9005
        %v9008 = vshll.u32 %v8861, 16
        %v9010 = vrot.slane %v9008, 1
        %v9011 = vsel %vm714, %v9006, %v9010
        %v9013 = vshrl.u32 %v8862, 16
        %v9015 = vshll.u32 %v8862, 16
        %v9017 = vrot.slane %v9015, 1
        %v9018 = vor.u32 %v9013, %v9017
        %v9020 = vshll.u32 %v8863, 16
        %v9022 = vrot.slane %v9020, 1
        %v9023 = vsel %vm714, %v9018, %v9022
        %v9025 = vshrl.u32 %v8864, 16
        %v9027 = vshll.u32 %v8864, 16
        %v9029 = vrot.slane %v9027, 1
        %v9030 = vor.u32 %v9025, %v9029
        %v9032 = vshll.u32 %v8865, 16
        %v9034 = vrot.slane %v9032, 1
        %v9035 = vsel %vm714, %v9030, %v9034
        %v9037 = vshrl.u32 %v8866, 16
        %v9039 = vshll.u32 %v8866, 16
        %v9041 = vrot.slane %v9039, 1
        %v9042 = vor.u32 %v9037, %v9041
        %v9044 = vshll.u32 %v8867, 16
        %v9046 = vrot.slane %v9044, 1
        %v9047 = vsel %vm714, %v9042, %v9046
        %v9049 = vshrl.u32 %v8868, 16
        %v9051 = vshll.u32 %v8868, 16
        %v9053 = vrot.slane %v9051, 1
        %v9054 = vor.u32 %v9049, %v9053
        %v9056 = vshll.u32 %v8869, 16
        %v9058 = vrot.slane %v9056, 1
        %v9059 = vsel %vm714, %v9054, %v9058
        %v9061 = vshrl.u32 %v8870, 16
        %v9063 = vshll.u32 %v8870, 16
        %v9065 = vrot.slane %v9063, 1
        %v9066 = vor.u32 %v9061, %v9065
        %v9068 = vshll.u32 %v8871, 16
        %v9070 = vrot.slane %v9068, 1
        %v9071 = vsel %vm714, %v9066, %v9070
        %v9074 = vunpack.c.l.b16 %v8876
        %v9075 = vunpack.c.l.b16 %v8877
        %v9076 = vpack.c.b16 %v9075, %v9074
        %v9078 = vsel %vm915, %v9076, 0
        %v9081 = vsel %vm915, %v8903, 0
        %v9084 = vsel %vm915, %v8915, 0
        %v9087 = vsel %vm915, %v8927, 0
        %v9090 = vsel %vm915, %v8939, 0
        %v9093 = vsel %vm915, %v8951, 0
        %v9096 = vsel %vm915, %v8963, 0
        %v9099 = vsel %vm915, %v8975, 0
        %v9102 = vsel %vm915, %v8987, 0
        %v9105 = vsel %vm915, %v8999, 0
        %v9108 = vsel %vm915, %v9011, 0
        %v9111 = vsel %vm915, %v9023, 0
        %v9114 = vsel %vm915, %v9035, 0
        %v9117 = vsel %vm915, %v9047, 0
        %v9120 = vsel %vm915, %v9059, 0
        %v9123 = vsel %vm915, %v9071, 0
        %9125 = vmatprep.subr.bf16.mxu0 0
        %9126 = vmatpush1.bf16.xpose.msra.mxu0 %v917
        %9127 = vmatprep.subr.bf16.mxu0 0
        %9128 = vmatpush1.bf16.xpose.msra.mxu0 %v9081
        %9129 = vmatprep.subr.bf16.mxu0 0
        %9130 = vmatpush1.bf16.xpose.msra.mxu0 %v9084
        %9131 = vmatprep.subr.bf16.mxu0 0
        %9132 = vmatpush1.bf16.xpose.msra.mxu0 %v9087
        %9133 = vmatprep.subr.bf16.mxu0 0
        %9134 = vmatpush1.bf16.xpose.msra.mxu0 %v9090
        %9135 = vmatprep.subr.bf16.mxu0 0
        %9136 = vmatpush1.bf16.xpose.msra.mxu0 %v9093
        %9137 = vmatprep.subr.bf16.mxu0 0
        %9138 = vmatpush1.bf16.xpose.msra.mxu0 %v9096
        %9139 = vmatprep.subr.bf16.mxu0 0
        %9140 = vmatpush1.bf16.xpose.msra.mxu0 %v9099
        %9141 = vmatprep.subr.bf16.mxu0 0
        %9142 = vmatpush1.bf16.xpose.msra.mxu0 %v9102
        %9143 = vmatprep.subr.bf16.mxu0 0
        %9144 = vmatpush1.bf16.xpose.msra.mxu0 %v9105
        %9145 = vmatprep.subr.bf16.mxu0 0
        %9146 = vmatpush1.bf16.xpose.msra.mxu0 %v9108
        %9147 = vmatprep.subr.bf16.mxu0 0
        %9148 = vmatpush1.bf16.xpose.msra.mxu0 %v9111
        %9149 = vmatprep.subr.bf16.mxu0 0
        %9150 = vmatpush1.bf16.xpose.msra.mxu0 %v9114
        %9151 = vmatprep.subr.bf16.mxu0 0
        %9152 = vmatpush1.bf16.xpose.msra.mxu0 %v9117
        %9153 = vmatprep.subr.bf16.mxu0 0
        %9154 = vmatpush1.bf16.xpose.msra.mxu0 %v9120
        %9155 = vmatprep.subr.bf16.mxu0 0
        %9156 = vmatpush1.bf16.xpose.msra.mxu0 %v9123
        %9157 = vmatprep.mubr.bf16.mxu0 0
        %9158 = vmatmul.mubr.bf16.gmra.mrb[0].mxu0 %v9078
        %v9159 = vpop.f32.mrb[0].mxu0
        %v9160 = vadd.f32 0.0, %v9159
        %v9161 = vpop.f32.mrb[0].mxu0
        %v9162 = vadd.f32 0.0, %v9161
        %v9163 = vpop.f32.mrb[0].mxu0
        %v9164 = vadd.f32 0.0, %v9163
        %v9165 = vpop.f32.mrb[0].mxu0
        %v9166 = vadd.f32 0.0, %v9165
        %9167 = vdwg.mxu0
        %v9170 = vunpack.c.l.b16 %v8874
        %v9171 = vunpack.c.l.b16 %v8875
        %v9172 = vpack.c.b16 %v9171, %v9170
        %v9174 = vsel %vm915, %v9172, 0
        %v9176 = vsel %vm915, %v8842, 0
        %v9178 = vsel %vm915, %v8844, 0
        %v9180 = vsel %vm915, %v8846, 0
        %v9182 = vsel %vm915, %v8848, 0
        %v9184 = vsel %vm915, %v8850, 0
        %v9186 = vsel %vm915, %v8852, 0
        %v9188 = vsel %vm915, %v8854, 0
        %v9190 = vsel %vm915, %v8856, 0
        %v9192 = vsel %vm915, %v8858, 0
        %v9194 = vsel %vm915, %v8860, 0
        %v9196 = vsel %vm915, %v8862, 0
        %v9198 = vsel %vm915, %v8864, 0
        %v9200 = vsel %vm915, %v8866, 0
        %v9202 = vsel %vm915, %v8868, 0
        %v9204 = vsel %vm915, %v8870, 0
        %9206 = vmatprep.subr.bf16.mxu0 0
        %9207 = vmatpush1.bf16.xpose.msra.mxu0 %v1137
        %9208 = vmatprep.subr.bf16.mxu0 0
        %9209 = vmatpush1.bf16.xpose.msra.mxu0 %v9176
        %9210 = vmatprep.subr.bf16.mxu0 0
        %9211 = vmatpush1.bf16.xpose.msra.mxu0 %v9178
        %9212 = vmatprep.subr.bf16.mxu0 0
        %9213 = vmatpush1.bf16.xpose.msra.mxu0 %v9180
        %9214 = vmatprep.subr.bf16.mxu0 0
        %9215 = vmatpush1.bf16.xpose.msra.mxu0 %v9182
        %9216 = vmatprep.subr.bf16.mxu0 0
        %9217 = vmatpush1.bf16.xpose.msra.mxu0 %v9184
        %9218 = vmatprep.subr.bf16.mxu0 0
        %9219 = vmatpush1.bf16.xpose.msra.mxu0 %v9186
        %9220 = vmatprep.subr.bf16.mxu0 0
        %9221 = vmatpush1.bf16.xpose.msra.mxu0 %v9188
        %9222 = vmatprep.subr.bf16.mxu0 0
        %9223 = vmatpush1.bf16.xpose.msra.mxu0 %v9190
        %9224 = vmatprep.subr.bf16.mxu0 0
        %9225 = vmatpush1.bf16.xpose.msra.mxu0 %v9192
        %9226 = vmatprep.subr.bf16.mxu0 0
        %9227 = vmatpush1.bf16.xpose.msra.mxu0 %v9194
        %9228 = vmatprep.subr.bf16.mxu0 0
        %9229 = vmatpush1.bf16.xpose.msra.mxu0 %v9196
        %9230 = vmatprep.subr.bf16.mxu0 0
        %9231 = vmatpush1.bf16.xpose.msra.mxu0 %v9198
        %9232 = vmatprep.subr.bf16.mxu0 0
        %9233 = vmatpush1.bf16.xpose.msra.mxu0 %v9200
        %9234 = vmatprep.subr.bf16.mxu0 0
        %9235 = vmatpush1.bf16.xpose.msra.mxu0 %v9202
        %9236 = vmatprep.subr.bf16.mxu0 0
        %9237 = vmatpush1.bf16.xpose.msra.mxu0 %v9204
        %9238 = vmatprep.mubr.bf16.mxu0 0
        %9239 = vmatmul.mubr.bf16.gmra.mrb[0].mxu0 %v9174
        %v9240 = vpop.f32.mrb[0].mxu0
        %v9241 = vadd.f32 %v9160, %v9240
        %v9242 = vpop.f32.mrb[0].mxu0
        %v9243 = vadd.f32 %v9162, %v9242
        %v9244 = vpop.f32.mrb[0].mxu0
        %v9245 = vadd.f32 %v9164, %v9244
        %v9246 = vpop.f32.mrb[0].mxu0
        %v9247 = vadd.f32 %v9166, %v9246
        %9248 = vdwg.mxu0
        %v9279 = vrot.slane %v8842, 1
        %v9280 = vrot.slane %v8843, 1
        %v9281 = vsel %vm1361, %v9279, %v9280
        %v9282 = vrot.slane %v8844, 1
        %v9283 = vrot.slane %v8845, 1
        %v9284 = vsel %vm1361, %v9282, %v9283
        %v9285 = vrot.slane %v8846, 1
        %v9286 = vrot.slane %v8847, 1
        %v9287 = vsel %vm1361, %v9285, %v9286
        %v9288 = vrot.slane %v8848, 1
        %v9289 = vrot.slane %v8849, 1
        %v9290 = vsel %vm1361, %v9288, %v9289
        %v9291 = vrot.slane %v8850, 1
        %v9292 = vrot.slane %v8851, 1
        %v9293 = vsel %vm1361, %v9291, %v9292
        %v9294 = vrot.slane %v8852, 1
        %v9295 = vrot.slane %v8853, 1
        %v9296 = vsel %vm1361, %v9294, %v9295
        %v9297 = vrot.slane %v8854, 1
        %v9298 = vrot.slane %v8855, 1
        %v9299 = vsel %vm1361, %v9297, %v9298
        %v9300 = vrot.slane %v8856, 1
        %v9301 = vrot.slane %v8857, 1
        %v9302 = vsel %vm1361, %v9300, %v9301
        %v9303 = vrot.slane %v8858, 1
        %v9304 = vrot.slane %v8859, 1
        %v9305 = vsel %vm1361, %v9303, %v9304
        %v9306 = vrot.slane %v8860, 1
        %v9307 = vrot.slane %v8861, 1
        %v9308 = vsel %vm1361, %v9306, %v9307
        %v9309 = vrot.slane %v8862, 1
        %v9310 = vrot.slane %v8863, 1
        %v9311 = vsel %vm1361, %v9309, %v9310
        %v9312 = vrot.slane %v8864, 1
        %v9313 = vrot.slane %v8865, 1
        %v9314 = vsel %vm1361, %v9312, %v9313
        %v9315 = vrot.slane %v8866, 1
        %v9316 = vrot.slane %v8867, 1
        %v9317 = vsel %vm1361, %v9315, %v9316
        %v9318 = vrot.slane %v8868, 1
        %v9319 = vrot.slane %v8869, 1
        %v9320 = vsel %vm1361, %v9318, %v9319
        %v9321 = vrot.slane %v8870, 1
        %v9322 = vrot.slane %v8871, 1
        %v9323 = vsel %vm1361, %v9321, %v9322
        %v9326 = vunpack.c.l.b16 %v8878
        %v9327 = vunpack.c.l.b16 %v8879
        %v9328 = vpack.c.b16 %v9327, %v9326
        %v9330 = vsel %vm915, %v9328, 0
        %v9333 = vsel %vm915, %v9281, 0
        %v9336 = vsel %vm915, %v9284, 0
        %v9339 = vsel %vm915, %v9287, 0
        %v9342 = vsel %vm915, %v9290, 0
        %v9345 = vsel %vm915, %v9293, 0
        %v9348 = vsel %vm915, %v9296, 0
        %v9351 = vsel %vm915, %v9299, 0
        %v9354 = vsel %vm915, %v9302, 0
        %v9357 = vsel %vm915, %v9305, 0
        %v9360 = vsel %vm915, %v9308, 0
        %v9363 = vsel %vm915, %v9311, 0
        %v9366 = vsel %vm915, %v9314, 0
        %v9369 = vsel %vm915, %v9317, 0
        %v9372 = vsel %vm915, %v9320, 0
        %v9375 = vsel %vm915, %v9323, 0
        %9377 = vmatprep.subr.bf16.mxu0 0
        %9378 = vmatpush1.bf16.xpose.msra.mxu0 %v1422
        %9379 = vmatprep.subr.bf16.mxu0 0
        %9380 = vmatpush1.bf16.xpose.msra.mxu0 %v9333
        %9381 = vmatprep.subr.bf16.mxu0 0
        %9382 = vmatpush1.bf16.xpose.msra.mxu0 %v9336
        %9383 = vmatprep.subr.bf16.mxu0 0
        %9384 = vmatpush1.bf16.xpose.msra.mxu0 %v9339
        %9385 = vmatprep.subr.bf16.mxu0 0
        %9386 = vmatpush1.bf16.xpose.msra.mxu0 %v9342
        %9387 = vmatprep.subr.bf16.mxu0 0
        %9388 = vmatpush1.bf16.xpose.msra.mxu0 %v9345
        %9389 = vmatprep.subr.bf16.mxu0 0
        %9390 = vmatpush1.bf16.xpose.msra.mxu0 %v9348
        %9391 = vmatprep.subr.bf16.mxu0 0
        %9392 = vmatpush1.bf16.xpose.msra.mxu0 %v9351
        %9393 = vmatprep.subr.bf16.mxu0 0
        %9394 = vmatpush1.bf16.xpose.msra.mxu0 %v9354
        %9395 = vmatprep.subr.bf16.mxu0 0
        %9396 = vmatpush1.bf16.xpose.msra.mxu0 %v9357
        %9397 = vmatprep.subr.bf16.mxu0 0
        %9398 = vmatpush1.bf16.xpose.msra.mxu0 %v9360
        %9399 = vmatprep.subr.bf16.mxu0 0
        %9400 = vmatpush1.bf16.xpose.msra.mxu0 %v9363
        %9401 = vmatprep.subr.bf16.mxu0 0
        %9402 = vmatpush1.bf16.xpose.msra.mxu0 %v9366
        %9403 = vmatprep.subr.bf16.mxu0 0
        %9404 = vmatpush1.bf16.xpose.msra.mxu0 %v9369
        %9405 = vmatprep.subr.bf16.mxu0 0
        %9406 = vmatpush1.bf16.xpose.msra.mxu0 %v9372
        %9407 = vmatprep.subr.bf16.mxu0 0
        %9408 = vmatpush1.bf16.xpose.msra.mxu0 %v9375
        %9409 = vmatprep.mubr.bf16.mxu0 0
        %9410 = vmatmul.mubr.bf16.gmra.mrb[0].mxu0 %v9330
        %v9411 = vpop.f32.mrb[0].mxu0
        %v9412 = vadd.f32 0.0, %v9411
        %v9413 = vpop.f32.mrb[0].mxu0
        %v9414 = vadd.f32 0.0, %v9413
        %v9415 = vpop.f32.mrb[0].mxu0
        %v9416 = vadd.f32 0.0, %v9415
        %v9417 = vpop.f32.mrb[0].mxu0
        %v9418 = vadd.f32 0.0, %v9417
        %9419 = vdwg.mxu0
        %v9420 = vadd.f32 %v9241, %v9412
        %v9421 = vadd.f32 %v9243, %v9414
        %v9422 = vadd.f32 %v9245, %v9416
        %v9423 = vadd.f32 %v9247, %v9418
        %v9426 = vunpack.c.l.b16 %v8880
        %v9427 = vunpack.c.l.b16 %v8881
        %v9428 = vpack.c.b16 %v9427, %v9426
        %v9430 = vsel %vm915, %v9428, 0
        %v9433 = vsel %vm915, %v8872, 0
        %9435 = vmatprep.subr.bf16.mxu0 0
        %9436 = vmatpush1.bf16.xpose.msra.mxu0 %v9176
        %9437 = vmatprep.subr.bf16.mxu0 0
        %9438 = vmatpush1.bf16.xpose.msra.mxu0 %v9178
        %9439 = vmatprep.subr.bf16.mxu0 0
        %9440 = vmatpush1.bf16.xpose.msra.mxu0 %v9180
        %9441 = vmatprep.subr.bf16.mxu0 0
        %9442 = vmatpush1.bf16.xpose.msra.mxu0 %v9182
        %9443 = vmatprep.subr.bf16.mxu0 0
        %9444 = vmatpush1.bf16.xpose.msra.mxu0 %v9184
        %9445 = vmatprep.subr.bf16.mxu0 0
        %9446 = vmatpush1.bf16.xpose.msra.mxu0 %v9186
        %9447 = vmatprep.subr.bf16.mxu0 0
        %9448 = vmatpush1.bf16.xpose.msra.mxu0 %v9188
        %9449 = vmatprep.subr.bf16.mxu0 0
        %9450 = vmatpush1.bf16.xpose.msra.mxu0 %v9190
        %9451 = vmatprep.subr.bf16.mxu0 0
        %9452 = vmatpush1.bf16.xpose.msra.mxu0 %v9192
        %9453 = vmatprep.subr.bf16.mxu0 0
        %9454 = vmatpush1.bf16.xpose.msra.mxu0 %v9194
        %9455 = vmatprep.subr.bf16.mxu0 0
        %9456 = vmatpush1.bf16.xpose.msra.mxu0 %v9196
        %9457 = vmatprep.subr.bf16.mxu0 0
        %9458 = vmatpush1.bf16.xpose.msra.mxu0 %v9198
        %9459 = vmatprep.subr.bf16.mxu0 0
        %9460 = vmatpush1.bf16.xpose.msra.mxu0 %v9200
        %9461 = vmatprep.subr.bf16.mxu0 0
        %9462 = vmatpush1.bf16.xpose.msra.mxu0 %v9202
        %9463 = vmatprep.subr.bf16.mxu0 0
        %9464 = vmatpush1.bf16.xpose.msra.mxu0 %v9204
        %9465 = vmatprep.subr.bf16.mxu0 0
        %9466 = vmatpush1.bf16.xpose.msra.mxu0 %v9433
        %9467 = vmatprep.mubr.bf16.mxu0 0
        %9468 = vmatmul.mubr.bf16.gmra.mrb[0].mxu0 %v9430
        %v9469 = vpop.f32.mrb[0].mxu0
        %v9470 = vadd.f32 0.0, %v9469
        %v9471 = vpop.f32.mrb[0].mxu0
        %v9472 = vadd.f32 0.0, %v9471
        %v9473 = vpop.f32.mrb[0].mxu0
        %v9474 = vadd.f32 0.0, %v9473
        %v9475 = vpop.f32.mrb[0].mxu0
        %v9476 = vadd.f32 0.0, %v9475
        %9477 = vdwg.mxu0
        %v9478 = vadd.f32 %v9420, %v9470
        %v9479 = vadd.f32 %v9421, %v9472
        %v9480 = vadd.f32 %v9422, %v9474
        %v9481 = vadd.f32 %v9423, %v9476
        %v9482 = vshrl.u32 %v8872, 16
        %v9484 = vshll.u32 %v8872, 16
        %v9486 = vrot.slane %v9484, 1
        %v9487 = vor.u32 %v9482, %v9486
        %v9489 = vshll.u32 %v8873, 16
        %v9491 = vrot.slane %v9489, 1
        %v9492 = vsel %vm714, %v9487, %v9491
        %v9495 = vunpack.c.l.b16 %v8882
        %v9496 = vunpack.c.l.b16 %v8883
        %v9497 = vpack.c.b16 %v9496, %v9495
        %v9499 = vsel %vm915, %v9497, 0
        %v9502 = vsel %vm915, %v9492, 0
        %9504 = vmatprep.subr.bf16.mxu0 0
        %9505 = vmatpush1.bf16.xpose.msra.mxu0 %v9081
        %9506 = vmatprep.subr.bf16.mxu0 0
        %9507 = vmatpush1.bf16.xpose.msra.mxu0 %v9084
        %9508 = vmatprep.subr.bf16.mxu0 0
        %9509 = vmatpush1.bf16.xpose.msra.mxu0 %v9087
        %9510 = vmatprep.subr.bf16.mxu0 0
        %9511 = vmatpush1.bf16.xpose.msra.mxu0 %v9090
        %9512 = vmatprep.subr.bf16.mxu0 0
        %9513 = vmatpush1.bf16.xpose.msra.mxu0 %v9093
        %9514 = vmatprep.subr.bf16.mxu0 0
        %9515 = vmatpush1.bf16.xpose.msra.mxu0 %v9096
        %9516 = vmatprep.subr.bf16.mxu0 0
        %9517 = vmatpush1.bf16.xpose.msra.mxu0 %v9099
        %9518 = vmatprep.subr.bf16.mxu0 0
        %9519 = vmatpush1.bf16.xpose.msra.mxu0 %v9102
        %9520 = vmatprep.subr.bf16.mxu0 0
        %9521 = vmatpush1.bf16.xpose.msra.mxu0 %v9105
        %9522 = vmatprep.subr.bf16.mxu0 0
        %9523 = vmatpush1.bf16.xpose.msra.mxu0 %v9108
        %9524 = vmatprep.subr.bf16.mxu0 0
        %9525 = vmatpush1.bf16.xpose.msra.mxu0 %v9111
        %9526 = vmatprep.subr.bf16.mxu0 0
        %9527 = vmatpush1.bf16.xpose.msra.mxu0 %v9114
        %9528 = vmatprep.subr.bf16.mxu0 0
        %9529 = vmatpush1.bf16.xpose.msra.mxu0 %v9117
        %9530 = vmatprep.subr.bf16.mxu0 0
        %9531 = vmatpush1.bf16.xpose.msra.mxu0 %v9120
        %9532 = vmatprep.subr.bf16.mxu0 0
        %9533 = vmatpush1.bf16.xpose.msra.mxu0 %v9123
        %9534 = vmatprep.subr.bf16.mxu0 0
        %9535 = vmatpush1.bf16.xpose.msra.mxu0 %v9502
        %9536 = vmatprep.mubr.bf16.mxu0 0
        %9537 = vmatmul.mubr.bf16.gmra.mrb[0].mxu0 %v9499
        %v9538 = vpop.f32.mrb[0].mxu0
        %v9539 = vadd.f32 0.0, %v9538
        %v9540 = vpop.f32.mrb[0].mxu0
        %v9541 = vadd.f32 0.0, %v9540
        %v9542 = vpop.f32.mrb[0].mxu0
        %v9543 = vadd.f32 0.0, %v9542
        %v9544 = vpop.f32.mrb[0].mxu0
        %v9545 = vadd.f32 0.0, %v9544
        %9546 = vdwg.mxu0
        %v9547 = vadd.f32 %v9478, %v9539
        %v9548 = vadd.f32 %v9479, %v9541
        %v9549 = vadd.f32 %v9480, %v9543
        %v9550 = vadd.f32 %v9481, %v9545
        %v9553 = vrot.slane %v8872, 1
        %v9554 = vrot.slane %v8873, 1
        %v9555 = vsel %vm1361, %v9553, %v9554
        %v9558 = vunpack.c.l.b16 %v8884
        %v9559 = vunpack.c.l.b16 %v8885
        %v9560 = vpack.c.b16 %v9559, %v9558
        %v9562 = vsel %vm915, %v9560, 0
        %v9565 = vsel %vm915, %v9555, 0
        %9567 = vmatprep.subr.bf16.mxu0 0
        %9568 = vmatpush1.bf16.xpose.msra.mxu0 %v9333
        %9569 = vmatprep.subr.bf16.mxu0 0
        %9570 = vmatpush1.bf16.xpose.msra.mxu0 %v9336
        %9571 = vmatprep.subr.bf16.mxu0 0
        %9572 = vmatpush1.bf16.xpose.msra.mxu0 %v9339
        %9573 = vmatprep.subr.bf16.mxu0 0
        %9574 = vmatpush1.bf16.xpose.msra.mxu0 %v9342
        %9575 = vmatprep.subr.bf16.mxu0 0
        %9576 = vmatpush1.bf16.xpose.msra.mxu0 %v9345
        %9577 = vmatprep.subr.bf16.mxu0 0
        %9578 = vmatpush1.bf16.xpose.msra.mxu0 %v9348
        %9579 = vmatprep.subr.bf16.mxu0 0
        %9580 = vmatpush1.bf16.xpose.msra.mxu0 %v9351
        %9581 = vmatprep.subr.bf16.mxu0 0
        %9582 = vmatpush1.bf16.xpose.msra.mxu0 %v9354
        %9583 = vmatprep.subr.bf16.mxu0 0
        %9584 = vmatpush1.bf16.xpose.msra.mxu0 %v9357
        %9585 = vmatprep.subr.bf16.mxu0 0
        %9586 = vmatpush1.bf16.xpose.msra.mxu0 %v9360
        %9587 = vmatprep.subr.bf16.mxu0 0
        %9588 = vmatpush1.bf16.xpose.msra.mxu0 %v9363
        %9589 = vmatprep.subr.bf16.mxu0 0
        %9590 = vmatpush1.bf16.xpose.msra.mxu0 %v9366
        %9591 = vmatprep.subr.bf16.mxu0 0
        %9592 = vmatpush1.bf16.xpose.msra.mxu0 %v9369
        %9593 = vmatprep.subr.bf16.mxu0 0
        %9594 = vmatpush1.bf16.xpose.msra.mxu0 %v9372
        %9595 = vmatprep.subr.bf16.mxu0 0
        %9596 = vmatpush1.bf16.xpose.msra.mxu0 %v9375
        %9597 = vmatprep.subr.bf16.mxu0 0
        %9598 = vmatpush1.bf16.xpose.msra.mxu0 %v9565
        %9599 = vmatprep.mubr.bf16.mxu0 0
        %9600 = vmatmul.mubr.bf16.gmra.mrb[0].mxu0 %v9562
        %v9601 = vpop.f32.mrb[0].mxu0
        %v9602 = vadd.f32 0.0, %v9601
        %v9603 = vpop.f32.mrb[0].mxu0
        %v9604 = vadd.f32 0.0, %v9603
        %v9605 = vpop.f32.mrb[0].mxu0
        %v9606 = vadd.f32 0.0, %v9605
        %v9607 = vpop.f32.mrb[0].mxu0
        %v9608 = vadd.f32 0.0, %v9607
        %9609 = vdwg.mxu0
        %v9610 = vadd.f32 %v9547, %v9602
        %v9611 = vadd.f32 %v9548, %v9604
        %v9612 = vadd.f32 %v9549, %v9606
        %v9613 = vadd.f32 %v9550, %v9608
        %v9616 = vunpack.c.l.b16 %v8886
        %v9617 = vunpack.c.l.b16 %v8887
        %v9618 = vpack.c.b16 %v9617, %v9616
        %v9620 = vsel %vm915, %v9618, 0
        %9622 = vmatprep.subr.bf16.mxu0 0
        %9623 = vmatpush1.bf16.xpose.msra.mxu0 %v9178
        %9624 = vmatprep.subr.bf16.mxu0 0
        %9625 = vmatpush1.bf16.xpose.msra.mxu0 %v9180
        %9626 = vmatprep.subr.bf16.mxu0 0
        %9627 = vmatpush1.bf16.xpose.msra.mxu0 %v9182
        %9628 = vmatprep.subr.bf16.mxu0 0
        %9629 = vmatpush1.bf16.xpose.msra.mxu0 %v9184
        %9630 = vmatprep.subr.bf16.mxu0 0
        %9631 = vmatpush1.bf16.xpose.msra.mxu0 %v9186
        %9632 = vmatprep.subr.bf16.mxu0 0
        %9633 = vmatpush1.bf16.xpose.msra.mxu0 %v9188
        %9634 = vmatprep.subr.bf16.mxu0 0
        %9635 = vmatpush1.bf16.xpose.msra.mxu0 %v9190
        %9636 = vmatprep.subr.bf16.mxu0 0
        %9637 = vmatpush1.bf16.xpose.msra.mxu0 %v9192
        %9638 = vmatprep.subr.bf16.mxu0 0
        %9639 = vmatpush1.bf16.xpose.msra.mxu0 %v9194
        %9640 = vmatprep.subr.bf16.mxu0 0
        %9641 = vmatpush1.bf16.xpose.msra.mxu0 %v9196
        %9642 = vmatprep.subr.bf16.mxu0 0
        %9643 = vmatpush1.bf16.xpose.msra.mxu0 %v9198
        %9644 = vmatprep.subr.bf16.mxu0 0
        %9645 = vmatpush1.bf16.xpose.msra.mxu0 %v9200
        %9646 = vmatprep.subr.bf16.mxu0 0
        %9647 = vmatpush1.bf16.xpose.msra.mxu0 %v9202
        %9648 = vmatprep.subr.bf16.mxu0 0
        %9649 = vmatpush1.bf16.xpose.msra.mxu0 %v9204
        %9650 = vmatprep.subr.bf16.mxu0 0
        %9651 = vmatpush1.bf16.xpose.msra.mxu0 %v9433
        %9652 = vmatprep.subr.bf16.mxu0 0
        %9653 = vmatpush1.bf16.xpose.msra.mxu0 %v1137
        %9654 = vmatprep.mubr.bf16.mxu0 0
        %9655 = vmatmul.mubr.bf16.gmra.mrb[0].mxu0 %v9620
        %v9656 = vpop.f32.mrb[0].mxu0
        %v9657 = vadd.f32 0.0, %v9656
        %v9658 = vpop.f32.mrb[0].mxu0
        %v9659 = vadd.f32 0.0, %v9658
        %v9660 = vpop.f32.mrb[0].mxu0
        %v9661 = vadd.f32 0.0, %v9660
        %v9662 = vpop.f32.mrb[0].mxu0
        %v9663 = vadd.f32 0.0, %v9662
        %9664 = vdwg.mxu0
        %v9665 = vadd.f32 %v9610, %v9657
        %v9666 = vadd.f32 %v9611, %v9659
        %v9667 = vadd.f32 %v9612, %v9661
        %v9668 = vadd.f32 %v9613, %v9663
        %v9671 = vunpack.c.l.b16 %v8888
        %v9672 = vunpack.c.l.b16 %v8889
        %v9673 = vpack.c.b16 %v9672, %v9671
        %v9675 = vsel %vm915, %v9673, 0
        %9677 = vmatprep.subr.bf16.mxu0 0
        %9678 = vmatpush1.bf16.xpose.msra.mxu0 %v9084
        %9679 = vmatprep.subr.bf16.mxu0 0
        %9680 = vmatpush1.bf16.xpose.msra.mxu0 %v9087
        %9681 = vmatprep.subr.bf16.mxu0 0
        %9682 = vmatpush1.bf16.xpose.msra.mxu0 %v9090
        %9683 = vmatprep.subr.bf16.mxu0 0
        %9684 = vmatpush1.bf16.xpose.msra.mxu0 %v9093
        %9685 = vmatprep.subr.bf16.mxu0 0
        %9686 = vmatpush1.bf16.xpose.msra.mxu0 %v9096
        %9687 = vmatprep.subr.bf16.mxu0 0
        %9688 = vmatpush1.bf16.xpose.msra.mxu0 %v9099
        %9689 = vmatprep.subr.bf16.mxu0 0
        %9690 = vmatpush1.bf16.xpose.msra.mxu0 %v9102
        %9691 = vmatprep.subr.bf16.mxu0 0
        %9692 = vmatpush1.bf16.xpose.msra.mxu0 %v9105
        %9693 = vmatprep.subr.bf16.mxu0 0
        %9694 = vmatpush1.bf16.xpose.msra.mxu0 %v9108
        %9695 = vmatprep.subr.bf16.mxu0 0
        %9696 = vmatpush1.bf16.xpose.msra.mxu0 %v9111
        %9697 = vmatprep.subr.bf16.mxu0 0
        %9698 = vmatpush1.bf16.xpose.msra.mxu0 %v9114
        %9699 = vmatprep.subr.bf16.mxu0 0
        %9700 = vmatpush1.bf16.xpose.msra.mxu0 %v9117
        %9701 = vmatprep.subr.bf16.mxu0 0
        %9702 = vmatpush1.bf16.xpose.msra.mxu0 %v9120
        %9703 = vmatprep.subr.bf16.mxu0 0
        %9704 = vmatpush1.bf16.xpose.msra.mxu0 %v9123
        %9705 = vmatprep.subr.bf16.mxu0 0
        %9706 = vmatpush1.bf16.xpose.msra.mxu0 %v9502
        %9707 = vmatprep.subr.bf16.mxu0 0
        %9708 = vmatpush1.bf16.xpose.msra.mxu0 %v917
        %9709 = vmatprep.mubr.bf16.mxu0 0
        %9710 = vmatmul.mubr.bf16.gmra.mrb[0].mxu0 %v9675
        %v9711 = vpop.f32.mrb[0].mxu0
        %v9712 = vadd.f32 0.0, %v9711
        %v9713 = vpop.f32.mrb[0].mxu0
        %v9714 = vadd.f32 0.0, %v9713
        %v9715 = vpop.f32.mrb[0].mxu0
        %v9716 = vadd.f32 0.0, %v9715
        %v9717 = vpop.f32.mrb[0].mxu0
        %v9718 = vadd.f32 0.0, %v9717
        %9719 = vdwg.mxu0
        %v9720 = vadd.f32 %v9665, %v9712
        %v9721 = vadd.f32 %v9666, %v9714
        %v9722 = vadd.f32 %v9667, %v9716
        %v9723 = vadd.f32 %v9668, %v9718
        %v9726 = vunpack.c.l.b16 %v8890
        %v9727 = vunpack.c.l.b16 %v8891
        %v9728 = vpack.c.b16 %v9727, %v9726
        %v9730 = vsel %vm915, %v9728, 0
        %9732 = vmatprep.subr.bf16.mxu0 0
        %9733 = vmatpush1.bf16.xpose.msra.mxu0 %v9336
        %9734 = vmatprep.subr.bf16.mxu0 0
        %9735 = vmatpush1.bf16.xpose.msra.mxu0 %v9339
        %9736 = vmatprep.subr.bf16.mxu0 0
        %9737 = vmatpush1.bf16.xpose.msra.mxu0 %v9342
        %9738 = vmatprep.subr.bf16.mxu0 0
        %9739 = vmatpush1.bf16.xpose.msra.mxu0 %v9345
        %9740 = vmatprep.subr.bf16.mxu0 0
        %9741 = vmatpush1.bf16.xpose.msra.mxu0 %v9348
        %9742 = vmatprep.subr.bf16.mxu0 0
        %9743 = vmatpush1.bf16.xpose.msra.mxu0 %v9351
        %9744 = vmatprep.subr.bf16.mxu0 0
        %9745 = vmatpush1.bf16.xpose.msra.mxu0 %v9354
        %9746 = vmatprep.subr.bf16.mxu0 0
        %9747 = vmatpush1.bf16.xpose.msra.mxu0 %v9357
        %9748 = vmatprep.subr.bf16.mxu0 0
        %9749 = vmatpush1.bf16.xpose.msra.mxu0 %v9360
        %9750 = vmatprep.subr.bf16.mxu0 0
        %9751 = vmatpush1.bf16.xpose.msra.mxu0 %v9363
        %9752 = vmatprep.subr.bf16.mxu0 0
        %9753 = vmatpush1.bf16.xpose.msra.mxu0 %v9366
        %9754 = vmatprep.subr.bf16.mxu0 0
        %9755 = vmatpush1.bf16.xpose.msra.mxu0 %v9369
        %9756 = vmatprep.subr.bf16.mxu0 0
        %9757 = vmatpush1.bf16.xpose.msra.mxu0 %v9372
        %9758 = vmatprep.subr.bf16.mxu0 0
        %9759 = vmatpush1.bf16.xpose.msra.mxu0 %v9375
        %9760 = vmatprep.subr.bf16.mxu0 0
        %9761 = vmatpush1.bf16.xpose.msra.mxu0 %v9565
        %9762 = vmatprep.subr.bf16.mxu0 0
        %9763 = vmatpush1.bf16.xpose.msra.mxu0 %v1422
        %9764 = vmatprep.mubr.bf16.mxu0 0
        %9765 = vmatmul.mubr.bf16.gmra.mrb[0].mxu0 %v9730
        %v9766 = vpop.f32.mrb[0].mxu0
        %v9767 = vadd.f32 0.0, %v9766
        %v9768 = vpop.f32.mrb[0].mxu0
        %v9769 = vadd.f32 0.0, %v9768
        %v9770 = vpop.f32.mrb[0].mxu0
        %v9771 = vadd.f32 0.0, %v9770
        %v9772 = vpop.f32.mrb[0].mxu0
        %v9773 = vadd.f32 0.0, %v9772
        %9774 = vdwg.mxu0
        %v9775 = vadd.f32 %v9720, %v9767
        %v9776 = vadd.f32 %v9721, %v9769
        %v9777 = vadd.f32 %v9722, %v9771
        %v9778 = vadd.f32 %v9723, %v9773
        %v9779 = vld [vmem:[%s7] sm:$0xff]
        %v9780 = vld [vmem:[%s7 + $0x8] sm:$0x1]
        %9782 = vset.pattern.permute.xlu0 0
        %9783 = vperm.xlu0 %9782, %v9779
        %v9784 = vpop.permute.xlu0 %9783
        %9787 = vset.pattern.permute.xlu0 0
        %9788 = vperm.xlu0 %9787, %v9780
        %v9789 = vpop.permute.xlu0 %9788
        %v9791 = vadd.f32 %v9775, %v9784
        %v9792 = vadd.f32 %v9776, %v9784
        %v9793 = vadd.f32 %v9777, %v9789
        %v9794 = vadd.f32 %v9778, %v9789
        %9795 = vst [vmem:[%s447] sm:$0xff] %v9791
        %9796 = vst [vmem:[%s447 + $0x8] sm:$0xff] %v9792
        %9797 = vst [vmem:[%s447 + $0x10] sm:$0x1] %v9793
        %9798 = vst [vmem:[%s447 + $0x18] sm:$0x1] %v9794
        %v9831 = vrot.slane %v8650, 7
        %v9832 = vrot.slane %v8651, 7
        %v9833 = vsel %vm552, %v9831, %v9832
        %v9834 = vrot.slane %v8652, 7
        %v9835 = vrot.slane %v8653, 7
        %v9836 = vsel %vm552, %v9834, %v9835
        %v9837 = vrot.slane %v8654, 7
        %v9838 = vrot.slane %v8655, 7
        %v9839 = vsel %vm552, %v9837, %v9838
        %v9840 = vrot.slane %v8656, 7
        %v9841 = vrot.slane %v8657, 7
        %v9842 = vsel %vm552, %v9840, %v9841
        %v9843 = vrot.slane %v8658, 7
        %v9844 = vrot.slane %v8659, 7
        %v9845 = vsel %vm552, %v9843, %v9844
        %v9846 = vrot.slane %v8660, 7
        %v9847 = vrot.slane %v8661, 7
        %v9848 = vsel %vm552, %v9846, %v9847
        %v9849 = vrot.slane %v8662, 7
        %v9850 = vrot.slane %v8663, 7
        %v9851 = vsel %vm552, %v9849, %v9850
        %v9852 = vrot.slane %v8664, 7
        %v9853 = vrot.slane %v8665, 7
        %v9854 = vsel %vm552, %v9852, %v9853
        %v9855 = vrot.slane %v8666, 7
        %v9856 = vrot.slane %v8667, 7
        %v9857 = vsel %vm552, %v9855, %v9856
        %v9858 = vrot.slane %v8668, 7
        %v9859 = vrot.slane %v8669, 7
        %v9860 = vsel %vm552, %v9858, %v9859
        %v9861 = vrot.slane %v8670, 7
        %v9862 = vrot.slane %v8671, 7
        %v9863 = vsel %vm552, %v9861, %v9862
        %v9864 = vrot.slane %v8672, 7
        %v9865 = vrot.slane %v8673, 7
        %v9866 = vsel %vm552, %v9864, %v9865
        %v9867 = vrot.slane %v8674, 7
        %v9868 = vrot.slane %v8675, 7
        %v9869 = vsel %vm552, %v9867, %v9868
        %v9870 = vrot.slane %v8676, 7
        %v9871 = vrot.slane %v8677, 7
        %v9872 = vsel %vm552, %v9870, %v9871
        %v9873 = vrot.slane %v8678, 7
        %v9874 = vrot.slane %v8679, 7
        %v9875 = vsel %vm552, %v9873, %v9874
        %v9876 = vrot.slane %v8680, 7
        %v9877 = vrot.slane %v8681, 7
        %v9878 = vsel %vm552, %v9876, %v9877
        %v9927 = vsel %vm552, 0.0, %v9831
        %v9928 = vsel %vm552, 0.0, %v9834
        %v9929 = vsel %vm552, 0.0, %v9837
        %v9930 = vsel %vm552, 0.0, %v9840
        %v9931 = vsel %vm552, 0.0, %v9843
        %v9932 = vsel %vm552, 0.0, %v9846
        %v9933 = vsel %vm552, 0.0, %v9849
        %v9934 = vsel %vm552, 0.0, %v9852
        %v9935 = vsel %vm552, 0.0, %v9855
        %v9936 = vsel %vm552, 0.0, %v9858
        %v9937 = vsel %vm552, 0.0, %v9861
        %v9938 = vsel %vm552, 0.0, %v9864
        %v9939 = vsel %vm552, 0.0, %v9867
        %v9940 = vsel %vm552, 0.0, %v9870
        %v9941 = vsel %vm552, 0.0, %v9873
        %v9942 = vsel %vm552, 0.0, %v9876
        %v9943 = vsel %vm552, %v9832, 0.0
        %v9944 = vsel %vm552, %v9835, 0.0
        %v9945 = vsel %vm552, %v9838, 0.0
        %v9946 = vsel %vm552, %v9841, 0.0
        %v9947 = vsel %vm552, %v9844, 0.0
        %v9948 = vsel %vm552, %v9847, 0.0
        %v9949 = vsel %vm552, %v9850, 0.0
        %v9950 = vsel %vm552, %v9853, 0.0
        %v9951 = vsel %vm552, %v9856, 0.0
        %v9952 = vsel %vm552, %v9859, 0.0
        %v9953 = vsel %vm552, %v9862, 0.0
        %v9954 = vsel %vm552, %v9865, 0.0
        %v9955 = vsel %vm552, %v9868, 0.0
        %v9956 = vsel %vm552, %v9871, 0.0
        %v9957 = vsel %vm552, %v9874, 0.0
        %v9958 = vsel %vm552, %v9877, 0.0
        %v9959 = vpack.c.bf16 %v9833, %v9927
        %v9960 = vpack.c.bf16 %v9943, %v9943
        %v9961 = vpack.c.bf16 %v9836, %v9928
        %v9962 = vpack.c.bf16 %v9944, %v9944
        %v9963 = vpack.c.bf16 %v9839, %v9929
        %v9964 = vpack.c.bf16 %v9945, %v9945
        %v9965 = vpack.c.bf16 %v9842, %v9930
        %v9966 = vpack.c.bf16 %v9946, %v9946
        %v9967 = vpack.c.bf16 %v9845, %v9931
        %v9968 = vpack.c.bf16 %v9947, %v9947
        %v9969 = vpack.c.bf16 %v9848, %v9932
        %v9970 = vpack.c.bf16 %v9948, %v9948
        %v9971 = vpack.c.bf16 %v9851, %v9933
        %v9972 = vpack.c.bf16 %v9949, %v9949
        %v9973 = vpack.c.bf16 %v9854, %v9934
        %v9974 = vpack.c.bf16 %v9950, %v9950
        %v9975 = vpack.c.bf16 %v9857, %v9935
        %v9976 = vpack.c.bf16 %v9951, %v9951
        %v9977 = vpack.c.bf16 %v9860, %v9936
        %v9978 = vpack.c.bf16 %v9952, %v9952
        %v9979 = vpack.c.bf16 %v9863, %v9937
        %v9980 = vpack.c.bf16 %v9953, %v9953
        %v9981 = vpack.c.bf16 %v9866, %v9938
        %v9982 = vpack.c.bf16 %v9954, %v9954
        %v9983 = vpack.c.bf16 %v9869, %v9939
        %v9984 = vpack.c.bf16 %v9955, %v9955
        %v9985 = vpack.c.bf16 %v9872, %v9940
        %v9986 = vpack.c.bf16 %v9956, %v9956
        %v9987 = vpack.c.bf16 %v9875, %v9941
        %v9988 = vpack.c.bf16 %v9957, %v9957
        %v9989 = vpack.c.bf16 %v9878, %v9942
        %v9990 = vpack.c.bf16 %v9958, %v9958
        %v9991 = vld [vmem:[%s8] sm:$0x3]
        %v9992 = vld [vmem:[%s8 + $0x2] sm:$0x3]
        %v9993 = vld [vmem:[%s8 + $0x4] sm:$0x3]
        %v9994 = vld [vmem:[%s8 + $0x6] sm:$0x3]
        %v9995 = vld [vmem:[%s8 + $0x8] sm:$0x3]
        %v9996 = vld [vmem:[%s8 + $0xa] sm:$0x3]
        %v9997 = vld [vmem:[%s8 + $0xc] sm:$0x3]
        %v9998 = vld [vmem:[%s8 + $0xe] sm:$0x3]
        %v9999 = vld [vmem:[%s8 + $0x10] sm:$0x3]
        %v10001 = vshrl.u32 %v9959, 16
        %v10003 = vshll.u32 %v9959, 16
        %v10005 = vrot.slane %v10003, 1
        %v10006 = vor.u32 %v10001, %v10005
        %v10008 = vshll.u32 %v9960, 16
        %v10010 = vrot.slane %v10008, 1
        %v10011 = vsel %vm714, %v10006, %v10010
        %v10013 = vshrl.u32 %v9961, 16
        %v10015 = vshll.u32 %v9961, 16
        %v10017 = vrot.slane %v10015, 1
        %v10018 = vor.u32 %v10013, %v10017
        %v10020 = vshll.u32 %v9962, 16
        %v10022 = vrot.slane %v10020, 1
        %v10023 = vsel %vm714, %v10018, %v10022
        %v10025 = vshrl.u32 %v9963, 16
        %v10027 = vshll.u32 %v9963, 16
        %v10029 = vrot.slane %v10027, 1
        %v10030 = vor.u32 %v10025, %v10029
        %v10032 = vshll.u32 %v9964, 16
        %v10034 = vrot.slane %v10032, 1
        %v10035 = vsel %vm714, %v10030, %v10034
        %v10037 = vshrl.u32 %v9965, 16
        %v10039 = vshll.u32 %v9965, 16
        %v10041 = vrot.slane %v10039, 1
        %v10042 = vor.u32 %v10037, %v10041
        %v10044 = vshll.u32 %v9966, 16
        %v10046 = vrot.slane %v10044, 1
        %v10047 = vsel %vm714, %v10042, %v10046
        %v10049 = vshrl.u32 %v9967, 16
        %v10051 = vshll.u32 %v9967, 16
        %v10053 = vrot.slane %v10051, 1
        %v10054 = vor.u32 %v10049, %v10053
        %v10056 = vshll.u32 %v9968, 16
        %v10058 = vrot.slane %v10056, 1
        %v10059 = vsel %vm714, %v10054, %v10058
        %v10061 = vshrl.u32 %v9969, 16
        %v10063 = vshll.u32 %v9969, 16
        %v10065 = vrot.slane %v10063, 1
        %v10066 = vor.u32 %v10061, %v10065
        %v10068 = vshll.u32 %v9970, 16
        %v10070 = vrot.slane %v10068, 1
        %v10071 = vsel %vm714, %v10066, %v10070
        %v10073 = vshrl.u32 %v9971, 16
        %v10075 = vshll.u32 %v9971, 16
        %v10077 = vrot.slane %v10075, 1
        %v10078 = vor.u32 %v10073, %v10077
        %v10080 = vshll.u32 %v9972, 16
        %v10082 = vrot.slane %v10080, 1
        %v10083 = vsel %vm714, %v10078, %v10082
        %v10085 = vshrl.u32 %v9973, 16
        %v10087 = vshll.u32 %v9973, 16
        %v10089 = vrot.slane %v10087, 1
        %v10090 = vor.u32 %v10085, %v10089
        %v10092 = vshll.u32 %v9974, 16
        %v10094 = vrot.slane %v10092, 1
        %v10095 = vsel %vm714, %v10090, %v10094
        %v10097 = vshrl.u32 %v9975, 16
        %v10099 = vshll.u32 %v9975, 16
        %v10101 = vrot.slane %v10099, 1
        %v10102 = vor.u32 %v10097, %v10101
        %v10104 = vshll.u32 %v9976, 16
        %v10106 = vrot.slane %v10104, 1
        %v10107 = vsel %vm714, %v10102, %v10106
        %v10109 = vshrl.u32 %v9977, 16
        %v10111 = vshll.u32 %v9977, 16
        %v10113 = vrot.slane %v10111, 1
        %v10114 = vor.u32 %v10109, %v10113
        %v10116 = vshll.u32 %v9978, 16
        %v10118 = vrot.slane %v10116, 1
        %v10119 = vsel %vm714, %v10114, %v10118
        %v10121 = vshrl.u32 %v9979, 16
        %v10123 = vshll.u32 %v9979, 16
        %v10125 = vrot.slane %v10123, 1
        %v10126 = vor.u32 %v10121, %v10125
        %v10128 = vshll.u32 %v9980, 16
        %v10130 = vrot.slane %v10128, 1
        %v10131 = vsel %vm714, %v10126, %v10130
        %v10133 = vshrl.u32 %v9981, 16
        %v10135 = vshll.u32 %v9981, 16
        %v10137 = vrot.slane %v10135, 1
        %v10138 = vor.u32 %v10133, %v10137
        %v10140 = vshll.u32 %v9982, 16
        %v10142 = vrot.slane %v10140, 1
        %v10143 = vsel %vm714, %v10138, %v10142
        %v10145 = vshrl.u32 %v9983, 16
        %v10147 = vshll.u32 %v9983, 16
        %v10149 = vrot.slane %v10147, 1
        %v10150 = vor.u32 %v10145, %v10149
        %v10152 = vshll.u32 %v9984, 16
        %v10154 = vrot.slane %v10152, 1
        %v10155 = vsel %vm714, %v10150, %v10154
        %v10157 = vshrl.u32 %v9985, 16
        %v10159 = vshll.u32 %v9985, 16
        %v10161 = vrot.slane %v10159, 1
        %v10162 = vor.u32 %v10157, %v10161
        %v10164 = vshll.u32 %v9986, 16
        %v10166 = vrot.slane %v10164, 1
        %v10167 = vsel %vm714, %v10162, %v10166
        %v10169 = vshrl.u32 %v9987, 16
        %v10171 = vshll.u32 %v9987, 16
        %v10173 = vrot.slane %v10171, 1
        %v10174 = vor.u32 %v10169, %v10173
        %v10176 = vshll.u32 %v9988, 16
        %v10178 = vrot.slane %v10176, 1
        %v10179 = vsel %vm714, %v10174, %v10178
        %v10181 = vsel %vm915, %v9992, 0
        %v10184 = vsel %vm915, %v10011, 0
        %v10187 = vsel %vm915, %v10023, 0
        %v10190 = vsel %vm915, %v10035, 0
        %v10193 = vsel %vm915, %v10047, 0
        %v10196 = vsel %vm915, %v10059, 0
        %v10199 = vsel %vm915, %v10071, 0
        %v10202 = vsel %vm915, %v10083, 0
        %v10205 = vsel %vm915, %v10095, 0
        %v10208 = vsel %vm915, %v10107, 0
        %v10211 = vsel %vm915, %v10119, 0
        %v10214 = vsel %vm915, %v10131, 0
        %v10217 = vsel %vm915, %v10143, 0
        %v10220 = vsel %vm915, %v10155, 0
        %v10223 = vsel %vm915, %v10167, 0
        %v10226 = vsel %vm915, %v10179, 0
        %10228 = vmatprep.subr.bf16.mxu0 0
        %10229 = vmatpush1.bf16.xpose.msra.mxu0 %v917
        %10230 = vmatprep.subr.bf16.mxu0 0
        %10231 = vmatpush1.bf16.xpose.msra.mxu0 %v10184
        %10232 = vmatprep.subr.bf16.mxu0 0
        %10233 = vmatpush1.bf16.xpose.msra.mxu0 %v10187
        %10234 = vmatprep.subr.bf16.mxu0 0
        %10235 = vmatpush1.bf16.xpose.msra.mxu0 %v10190
        %10236 = vmatprep.subr.bf16.mxu0 0
        %10237 = vmatpush1.bf16.xpose.msra.mxu0 %v10193
        %10238 = vmatprep.subr.bf16.mxu0 0
        %10239 = vmatpush1.bf16.xpose.msra.mxu0 %v10196
        %10240 = vmatprep.subr.bf16.mxu0 0
        %10241 = vmatpush1.bf16.xpose.msra.mxu0 %v10199
        %10242 = vmatprep.subr.bf16.mxu0 0
        %10243 = vmatpush1.bf16.xpose.msra.mxu0 %v10202
        %10244 = vmatprep.subr.bf16.mxu0 0
        %10245 = vmatpush1.bf16.xpose.msra.mxu0 %v10205
        %10246 = vmatprep.subr.bf16.mxu0 0
        %10247 = vmatpush1.bf16.xpose.msra.mxu0 %v10208
        %10248 = vmatprep.subr.bf16.mxu0 0
        %10249 = vmatpush1.bf16.xpose.msra.mxu0 %v10211
        %10250 = vmatprep.subr.bf16.mxu0 0
        %10251 = vmatpush1.bf16.xpose.msra.mxu0 %v10214
        %10252 = vmatprep.subr.bf16.mxu0 0
        %10253 = vmatpush1.bf16.xpose.msra.mxu0 %v10217
        %10254 = vmatprep.subr.bf16.mxu0 0
        %10255 = vmatpush1.bf16.xpose.msra.mxu0 %v10220
        %10256 = vmatprep.subr.bf16.mxu0 0
        %10257 = vmatpush1.bf16.xpose.msra.mxu0 %v10223
        %10258 = vmatprep.subr.bf16.mxu0 0
        %10259 = vmatpush1.bf16.xpose.msra.mxu0 %v10226
        %10260 = vmatprep.mubr.bf16.mxu0 0
        %10261 = vmatmul.mubr.bf16.gmra.mrb[0].mxu0 %v10181
        %v10262 = vpop.f32.mrb[0].mxu0
        %v10263 = vadd.f32 0.0, %v10262
        %v10264 = vpop.f32.mrb[0].mxu0
        %v10265 = vadd.f32 0.0, %v10264
        %v10266 = vpop.f32.mrb[0].mxu0
        %v10267 = vpop.f32.mrb[0].mxu0
        %10268 = vdwg.mxu0
        %v10270 = vsel %vm915, %v9991, 0
        %v10272 = vsel %vm915, %v9959, 0
        %v10274 = vsel %vm915, %v9961, 0
        %v10276 = vsel %vm915, %v9963, 0
        %v10278 = vsel %vm915, %v9965, 0
        %v10280 = vsel %vm915, %v9967, 0
        %v10282 = vsel %vm915, %v9969, 0
        %v10284 = vsel %vm915, %v9971, 0
        %v10286 = vsel %vm915, %v9973, 0
        %v10288 = vsel %vm915, %v9975, 0
        %v10290 = vsel %vm915, %v9977, 0
        %v10292 = vsel %vm915, %v9979, 0
        %v10294 = vsel %vm915, %v9981, 0
        %v10296 = vsel %vm915, %v9983, 0
        %v10298 = vsel %vm915, %v9985, 0
        %v10300 = vsel %vm915, %v9987, 0
        %10302 = vmatprep.subr.bf16.mxu0 0
        %10303 = vmatpush1.bf16.xpose.msra.mxu0 %v1137
        %10304 = vmatprep.subr.bf16.mxu0 0
        %10305 = vmatpush1.bf16.xpose.msra.mxu0 %v10272
        %10306 = vmatprep.subr.bf16.mxu0 0
        %10307 = vmatpush1.bf16.xpose.msra.mxu0 %v10274
        %10308 = vmatprep.subr.bf16.mxu0 0
        %10309 = vmatpush1.bf16.xpose.msra.mxu0 %v10276
        %10310 = vmatprep.subr.bf16.mxu0 0
        %10311 = vmatpush1.bf16.xpose.msra.mxu0 %v10278
        %10312 = vmatprep.subr.bf16.mxu0 0
        %10313 = vmatpush1.bf16.xpose.msra.mxu0 %v10280
        %10314 = vmatprep.subr.bf16.mxu0 0
        %10315 = vmatpush1.bf16.xpose.msra.mxu0 %v10282
        %10316 = vmatprep.subr.bf16.mxu0 0
        %10317 = vmatpush1.bf16.xpose.msra.mxu0 %v10284
        %10318 = vmatprep.subr.bf16.mxu0 0
        %10319 = vmatpush1.bf16.xpose.msra.mxu0 %v10286
        %10320 = vmatprep.subr.bf16.mxu0 0
        %10321 = vmatpush1.bf16.xpose.msra.mxu0 %v10288
        %10322 = vmatprep.subr.bf16.mxu0 0
        %10323 = vmatpush1.bf16.xpose.msra.mxu0 %v10290
        %10324 = vmatprep.subr.bf16.mxu0 0
        %10325 = vmatpush1.bf16.xpose.msra.mxu0 %v10292
        %10326 = vmatprep.subr.bf16.mxu0 0
        %10327 = vmatpush1.bf16.xpose.msra.mxu0 %v10294
        %10328 = vmatprep.subr.bf16.mxu0 0
        %10329 = vmatpush1.bf16.xpose.msra.mxu0 %v10296
        %10330 = vmatprep.subr.bf16.mxu0 0
        %10331 = vmatpush1.bf16.xpose.msra.mxu0 %v10298
        %10332 = vmatprep.subr.bf16.mxu0 0
        %10333 = vmatpush1.bf16.xpose.msra.mxu0 %v10300
        %10334 = vmatprep.mubr.bf16.mxu0 0
        %10335 = vmatmul.mubr.bf16.gmra.mrb[0].mxu0 %v10270
        %v10336 = vpop.f32.mrb[0].mxu0
        %v10337 = vadd.f32 %v10263, %v10336
        %v10338 = vpop.f32.mrb[0].mxu0
        %v10339 = vadd.f32 %v10265, %v10338
        %v10340 = vpop.f32.mrb[0].mxu0
        %v10341 = vpop.f32.mrb[0].mxu0
        %10342 = vdwg.mxu0
        %v10373 = vrot.slane %v9959, 1
        %v10374 = vrot.slane %v9960, 1
        %v10375 = vsel %vm1361, %v10373, %v10374
        %v10376 = vrot.slane %v9961, 1
        %v10377 = vrot.slane %v9962, 1
        %v10378 = vsel %vm1361, %v10376, %v10377
        %v10379 = vrot.slane %v9963, 1
        %v10380 = vrot.slane %v9964, 1
        %v10381 = vsel %vm1361, %v10379, %v10380
        %v10382 = vrot.slane %v9965, 1
        %v10383 = vrot.slane %v9966, 1
        %v10384 = vsel %vm1361, %v10382, %v10383
        %v10385 = vrot.slane %v9967, 1
        %v10386 = vrot.slane %v9968, 1
        %v10387 = vsel %vm1361, %v10385, %v10386
        %v10388 = vrot.slane %v9969, 1
        %v10389 = vrot.slane %v9970, 1
        %v10390 = vsel %vm1361, %v10388, %v10389
        %v10391 = vrot.slane %v9971, 1
        %v10392 = vrot.slane %v9972, 1
        %v10393 = vsel %vm1361, %v10391, %v10392
        %v10394 = vrot.slane %v9973, 1
        %v10395 = vrot.slane %v9974, 1
        %v10396 = vsel %vm1361, %v10394, %v10395
        %v10397 = vrot.slane %v9975, 1
        %v10398 = vrot.slane %v9976, 1
        %v10399 = vsel %vm1361, %v10397, %v10398
        %v10400 = vrot.slane %v9977, 1
        %v10401 = vrot.slane %v9978, 1
        %v10402 = vsel %vm1361, %v10400, %v10401
        %v10403 = vrot.slane %v9979, 1
        %v10404 = vrot.slane %v9980, 1
        %v10405 = vsel %vm1361, %v10403, %v10404
        %v10406 = vrot.slane %v9981, 1
        %v10407 = vrot.slane %v9982, 1
        %v10408 = vsel %vm1361, %v10406, %v10407
        %v10409 = vrot.slane %v9983, 1
        %v10410 = vrot.slane %v9984, 1
        %v10411 = vsel %vm1361, %v10409, %v10410
        %v10412 = vrot.slane %v9985, 1
        %v10413 = vrot.slane %v9986, 1
        %v10414 = vsel %vm1361, %v10412, %v10413
        %v10415 = vrot.slane %v9987, 1
        %v10416 = vrot.slane %v9988, 1
        %v10417 = vsel %vm1361, %v10415, %v10416
        %v10419 = vsel %vm915, %v9993, 0
        %v10422 = vsel %vm915, %v10375, 0
        %v10425 = vsel %vm915, %v10378, 0
        %v10428 = vsel %vm915, %v10381, 0
        %v10431 = vsel %vm915, %v10384, 0
        %v10434 = vsel %vm915, %v10387, 0
        %v10437 = vsel %vm915, %v10390, 0
        %v10440 = vsel %vm915, %v10393, 0
        %v10443 = vsel %vm915, %v10396, 0
        %v10446 = vsel %vm915, %v10399, 0
        %v10449 = vsel %vm915, %v10402, 0
        %v10452 = vsel %vm915, %v10405, 0
        %v10455 = vsel %vm915, %v10408, 0
        %v10458 = vsel %vm915, %v10411, 0
        %v10461 = vsel %vm915, %v10414, 0
        %v10464 = vsel %vm915, %v10417, 0
        %10466 = vmatprep.subr.bf16.mxu0 0
        %10467 = vmatpush1.bf16.xpose.msra.mxu0 %v1422
        %10468 = vmatprep.subr.bf16.mxu0 0
        %10469 = vmatpush1.bf16.xpose.msra.mxu0 %v10422
        %10470 = vmatprep.subr.bf16.mxu0 0
        %10471 = vmatpush1.bf16.xpose.msra.mxu0 %v10425
        %10472 = vmatprep.subr.bf16.mxu0 0
        %10473 = vmatpush1.bf16.xpose.msra.mxu0 %v10428
        %10474 = vmatprep.subr.bf16.mxu0 0
        %10475 = vmatpush1.bf16.xpose.msra.mxu0 %v10431
        %10476 = vmatprep.subr.bf16.mxu0 0
        %10477 = vmatpush1.bf16.xpose.msra.mxu0 %v10434
        %10478 = vmatprep.subr.bf16.mxu0 0
        %10479 = vmatpush1.bf16.xpose.msra.mxu0 %v10437
        %10480 = vmatprep.subr.bf16.mxu0 0
        %10481 = vmatpush1.bf16.xpose.msra.mxu0 %v10440
        %10482 = vmatprep.subr.bf16.mxu0 0
        %10483 = vmatpush1.bf16.xpose.msra.mxu0 %v10443
        %10484 = vmatprep.subr.bf16.mxu0 0
        %10485 = vmatpush1.bf16.xpose.msra.mxu0 %v10446
        %10486 = vmatprep.subr.bf16.mxu0 0
        %10487 = vmatpush1.bf16.xpose.msra.mxu0 %v10449
        %10488 = vmatprep.subr.bf16.mxu0 0
        %10489 = vmatpush1.bf16.xpose.msra.mxu0 %v10452
        %10490 = vmatprep.subr.bf16.mxu0 0
        %10491 = vmatpush1.bf16.xpose.msra.mxu0 %v10455
        %10492 = vmatprep.subr.bf16.mxu0 0
        %10493 = vmatpush1.bf16.xpose.msra.mxu0 %v10458
        %10494 = vmatprep.subr.bf16.mxu0 0
        %10495 = vmatpush1.bf16.xpose.msra.mxu0 %v10461
        %10496 = vmatprep.subr.bf16.mxu0 0
        %10497 = vmatpush1.bf16.xpose.msra.mxu0 %v10464
        %10498 = vmatprep.mubr.bf16.mxu0 0
        %10499 = vmatmul.mubr.bf16.gmra.mrb[0].mxu0 %v10419
        %v10500 = vpop.f32.mrb[0].mxu0
        %v10501 = vadd.f32 0.0, %v10500
        %v10502 = vpop.f32.mrb[0].mxu0
        %v10503 = vadd.f32 0.0, %v10502
        %v10504 = vpop.f32.mrb[0].mxu0
        %v10505 = vpop.f32.mrb[0].mxu0
        %10506 = vdwg.mxu0
        %v10507 = vadd.f32 %v10337, %v10501
        %v10508 = vadd.f32 %v10339, %v10503
        %v10510 = vsel %vm915, %v9994, 0
        %v10513 = vsel %vm915, %v9989, 0
        %10515 = vmatprep.subr.bf16.mxu0 0
        %10516 = vmatpush1.bf16.xpose.msra.mxu0 %v10272
        %10517 = vmatprep.subr.bf16.mxu0 0
        %10518 = vmatpush1.bf16.xpose.msra.mxu0 %v10274
        %10519 = vmatprep.subr.bf16.mxu0 0
        %10520 = vmatpush1.bf16.xpose.msra.mxu0 %v10276
        %10521 = vmatprep.subr.bf16.mxu0 0
        %10522 = vmatpush1.bf16.xpose.msra.mxu0 %v10278
        %10523 = vmatprep.subr.bf16.mxu0 0
        %10524 = vmatpush1.bf16.xpose.msra.mxu0 %v10280
        %10525 = vmatprep.subr.bf16.mxu0 0
        %10526 = vmatpush1.bf16.xpose.msra.mxu0 %v10282
        %10527 = vmatprep.subr.bf16.mxu0 0
        %10528 = vmatpush1.bf16.xpose.msra.mxu0 %v10284
        %10529 = vmatprep.subr.bf16.mxu0 0
        %10530 = vmatpush1.bf16.xpose.msra.mxu0 %v10286
        %10531 = vmatprep.subr.bf16.mxu0 0
        %10532 = vmatpush1.bf16.xpose.msra.mxu0 %v10288
        %10533 = vmatprep.subr.bf16.mxu0 0
        %10534 = vmatpush1.bf16.xpose.msra.mxu0 %v10290
        %10535 = vmatprep.subr.bf16.mxu0 0
        %10536 = vmatpush1.bf16.xpose.msra.mxu0 %v10292
        %10537 = vmatprep.subr.bf16.mxu0 0
        %10538 = vmatpush1.bf16.xpose.msra.mxu0 %v10294
        %10539 = vmatprep.subr.bf16.mxu0 0
        %10540 = vmatpush1.bf16.xpose.msra.mxu0 %v10296
        %10541 = vmatprep.subr.bf16.mxu0 0
        %10542 = vmatpush1.bf16.xpose.msra.mxu0 %v10298
        %10543 = vmatprep.subr.bf16.mxu0 0
        %10544 = vmatpush1.bf16.xpose.msra.mxu0 %v10300
        %10545 = vmatprep.subr.bf16.mxu0 0
        %10546 = vmatpush1.bf16.xpose.msra.mxu0 %v10513
        %10547 = vmatprep.mubr.bf16.mxu0 0
        %10548 = vmatmul.mubr.bf16.gmra.mrb[0].mxu0 %v10510
        %v10549 = vpop.f32.mrb[0].mxu0
        %v10550 = vadd.f32 0.0, %v10549
        %v10551 = vpop.f32.mrb[0].mxu0
        %v10552 = vadd.f32 0.0, %v10551
        %v10553 = vpop.f32.mrb[0].mxu0
        %v10554 = vpop.f32.mrb[0].mxu0
        %10555 = vdwg.mxu0
        %v10556 = vadd.f32 %v10507, %v10550
        %v10557 = vadd.f32 %v10508, %v10552
        %v10558 = vshrl.u32 %v9989, 16
        %v10560 = vshll.u32 %v9989, 16
        %v10562 = vrot.slane %v10560, 1
        %v10563 = vor.u32 %v10558, %v10562
        %v10565 = vshll.u32 %v9990, 16
        %v10567 = vrot.slane %v10565, 1
        %v10568 = vsel %vm714, %v10563, %v10567
        %v10570 = vsel %vm915, %v9995, 0
        %v10573 = vsel %vm915, %v10568, 0
        %10575 = vmatprep.subr.bf16.mxu0 0
        %10576 = vmatpush1.bf16.xpose.msra.mxu0 %v10184
        %10577 = vmatprep.subr.bf16.mxu0 0
        %10578 = vmatpush1.bf16.xpose.msra.mxu0 %v10187
        %10579 = vmatprep.subr.bf16.mxu0 0
        %10580 = vmatpush1.bf16.xpose.msra.mxu0 %v10190
        %10581 = vmatprep.subr.bf16.mxu0 0
        %10582 = vmatpush1.bf16.xpose.msra.mxu0 %v10193
        %10583 = vmatprep.subr.bf16.mxu0 0
        %10584 = vmatpush1.bf16.xpose.msra.mxu0 %v10196
        %10585 = vmatprep.subr.bf16.mxu0 0
        %10586 = vmatpush1.bf16.xpose.msra.mxu0 %v10199
        %10587 = vmatprep.subr.bf16.mxu0 0
        %10588 = vmatpush1.bf16.xpose.msra.mxu0 %v10202
        %10589 = vmatprep.subr.bf16.mxu0 0
        %10590 = vmatpush1.bf16.xpose.msra.mxu0 %v10205
        %10591 = vmatprep.subr.bf16.mxu0 0
        %10592 = vmatpush1.bf16.xpose.msra.mxu0 %v10208
        %10593 = vmatprep.subr.bf16.mxu0 0
        %10594 = vmatpush1.bf16.xpose.msra.mxu0 %v10211
        %10595 = vmatprep.subr.bf16.mxu0 0
        %10596 = vmatpush1.bf16.xpose.msra.mxu0 %v10214
        %10597 = vmatprep.subr.bf16.mxu0 0
        %10598 = vmatpush1.bf16.xpose.msra.mxu0 %v10217
        %10599 = vmatprep.subr.bf16.mxu0 0
        %10600 = vmatpush1.bf16.xpose.msra.mxu0 %v10220
        %10601 = vmatprep.subr.bf16.mxu0 0
        %10602 = vmatpush1.bf16.xpose.msra.mxu0 %v10223
        %10603 = vmatprep.subr.bf16.mxu0 0
        %10604 = vmatpush1.bf16.xpose.msra.mxu0 %v10226
        %10605 = vmatprep.subr.bf16.mxu0 0
        %10606 = vmatpush1.bf16.xpose.msra.mxu0 %v10573
        %10607 = vmatprep.mubr.bf16.mxu0 0
        %10608 = vmatmul.mubr.bf16.gmra.mrb[0].mxu0 %v10570
        %v10609 = vpop.f32.mrb[0].mxu0
        %v10610 = vadd.f32 0.0, %v10609
        %v10611 = vpop.f32.mrb[0].mxu0
        %v10612 = vadd.f32 0.0, %v10611
        %v10613 = vpop.f32.mrb[0].mxu0
        %v10614 = vpop.f32.mrb[0].mxu0
        %10615 = vdwg.mxu0
        %v10616 = vadd.f32 %v10556, %v10610
        %v10617 = vadd.f32 %v10557, %v10612
        %v10620 = vrot.slane %v9989, 1
        %v10621 = vrot.slane %v9990, 1
        %v10622 = vsel %vm1361, %v10620, %v10621
        %v10624 = vsel %vm915, %v9996, 0
        %v10627 = vsel %vm915, %v10622, 0
        %10629 = vmatprep.subr.bf16.mxu0 0
        %10630 = vmatpush1.bf16.xpose.msra.mxu0 %v10422
        %10631 = vmatprep.subr.bf16.mxu0 0
        %10632 = vmatpush1.bf16.xpose.msra.mxu0 %v10425
        %10633 = vmatprep.subr.bf16.mxu0 0
        %10634 = vmatpush1.bf16.xpose.msra.mxu0 %v10428
        %10635 = vmatprep.subr.bf16.mxu0 0
        %10636 = vmatpush1.bf16.xpose.msra.mxu0 %v10431
        %10637 = vmatprep.subr.bf16.mxu0 0
        %10638 = vmatpush1.bf16.xpose.msra.mxu0 %v10434
        %10639 = vmatprep.subr.bf16.mxu0 0
        %10640 = vmatpush1.bf16.xpose.msra.mxu0 %v10437
        %10641 = vmatprep.subr.bf16.mxu0 0
        %10642 = vmatpush1.bf16.xpose.msra.mxu0 %v10440
        %10643 = vmatprep.subr.bf16.mxu0 0
        %10644 = vmatpush1.bf16.xpose.msra.mxu0 %v10443
        %10645 = vmatprep.subr.bf16.mxu0 0
        %10646 = vmatpush1.bf16.xpose.msra.mxu0 %v10446
        %10647 = vmatprep.subr.bf16.mxu0 0
        %10648 = vmatpush1.bf16.xpose.msra.mxu0 %v10449
        %10649 = vmatprep.subr.bf16.mxu0 0
        %10650 = vmatpush1.bf16.xpose.msra.mxu0 %v10452
        %10651 = vmatprep.subr.bf16.mxu0 0
        %10652 = vmatpush1.bf16.xpose.msra.mxu0 %v10455
        %10653 = vmatprep.subr.bf16.mxu0 0
        %10654 = vmatpush1.bf16.xpose.msra.mxu0 %v10458
        %10655 = vmatprep.subr.bf16.mxu0 0
        %10656 = vmatpush1.bf16.xpose.msra.mxu0 %v10461
        %10657 = vmatprep.subr.bf16.mxu0 0
        %10658 = vmatpush1.bf16.xpose.msra.mxu0 %v10464
        %10659 = vmatprep.subr.bf16.mxu0 0
        %10660 = vmatpush1.bf16.xpose.msra.mxu0 %v10627
        %10661 = vmatprep.mubr.bf16.mxu0 0
        %10662 = vmatmul.mubr.bf16.gmra.mrb[0].mxu0 %v10624
        %v10663 = vpop.f32.mrb[0].mxu0
        %v10664 = vadd.f32 0.0, %v10663
        %v10665 = vpop.f32.mrb[0].mxu0
        %v10666 = vadd.f32 0.0, %v10665
        %v10667 = vpop.f32.mrb[0].mxu0
        %v10668 = vpop.f32.mrb[0].mxu0
        %10669 = vdwg.mxu0
        %v10670 = vadd.f32 %v10616, %v10664
        %v10671 = vadd.f32 %v10617, %v10666
        %v10673 = vsel %vm915, %v9997, 0
        %10675 = vmatprep.subr.bf16.mxu0 0
        %10676 = vmatpush1.bf16.xpose.msra.mxu0 %v10274
        %10677 = vmatprep.subr.bf16.mxu0 0
        %10678 = vmatpush1.bf16.xpose.msra.mxu0 %v10276
        %10679 = vmatprep.subr.bf16.mxu0 0
        %10680 = vmatpush1.bf16.xpose.msra.mxu0 %v10278
        %10681 = vmatprep.subr.bf16.mxu0 0
        %10682 = vmatpush1.bf16.xpose.msra.mxu0 %v10280
        %10683 = vmatprep.subr.bf16.mxu0 0
        %10684 = vmatpush1.bf16.xpose.msra.mxu0 %v10282
        %10685 = vmatprep.subr.bf16.mxu0 0
        %10686 = vmatpush1.bf16.xpose.msra.mxu0 %v10284
        %10687 = vmatprep.subr.bf16.mxu0 0
        %10688 = vmatpush1.bf16.xpose.msra.mxu0 %v10286
        %10689 = vmatprep.subr.bf16.mxu0 0
        %10690 = vmatpush1.bf16.xpose.msra.mxu0 %v10288
        %10691 = vmatprep.subr.bf16.mxu0 0
        %10692 = vmatpush1.bf16.xpose.msra.mxu0 %v10290
        %10693 = vmatprep.subr.bf16.mxu0 0
        %10694 = vmatpush1.bf16.xpose.msra.mxu0 %v10292
        %10695 = vmatprep.subr.bf16.mxu0 0
        %10696 = vmatpush1.bf16.xpose.msra.mxu0 %v10294
        %10697 = vmatprep.subr.bf16.mxu0 0
        %10698 = vmatpush1.bf16.xpose.msra.mxu0 %v10296
        %10699 = vmatprep.subr.bf16.mxu0 0
        %10700 = vmatpush1.bf16.xpose.msra.mxu0 %v10298
        %10701 = vmatprep.subr.bf16.mxu0 0
        %10702 = vmatpush1.bf16.xpose.msra.mxu0 %v10300
        %10703 = vmatprep.subr.bf16.mxu0 0
        %10704 = vmatpush1.bf16.xpose.msra.mxu0 %v10513
        %10705 = vmatprep.subr.bf16.mxu0 0
        %10706 = vmatpush1.bf16.xpose.msra.mxu0 %v1137
        %10707 = vmatprep.mubr.bf16.mxu0 0
        %10708 = vmatmul.mubr.bf16.gmra.mrb[0].mxu0 %v10673
        %v10709 = vpop.f32.mrb[0].mxu0
        %v10710 = vadd.f32 0.0, %v10709
        %v10711 = vpop.f32.mrb[0].mxu0
        %v10712 = vadd.f32 0.0, %v10711
        %v10713 = vpop.f32.mrb[0].mxu0
        %v10714 = vpop.f32.mrb[0].mxu0
        %10715 = vdwg.mxu0
        %v10716 = vadd.f32 %v10670, %v10710
        %v10717 = vadd.f32 %v10671, %v10712
        %v10719 = vsel %vm915, %v9998, 0
        %10721 = vmatprep.subr.bf16.mxu0 0
        %10722 = vmatpush1.bf16.xpose.msra.mxu0 %v10187
        %10723 = vmatprep.subr.bf16.mxu0 0
        %10724 = vmatpush1.bf16.xpose.msra.mxu0 %v10190
        %10725 = vmatprep.subr.bf16.mxu0 0
        %10726 = vmatpush1.bf16.xpose.msra.mxu0 %v10193
        %10727 = vmatprep.subr.bf16.mxu0 0
        %10728 = vmatpush1.bf16.xpose.msra.mxu0 %v10196
        %10729 = vmatprep.subr.bf16.mxu0 0
        %10730 = vmatpush1.bf16.xpose.msra.mxu0 %v10199
        %10731 = vmatprep.subr.bf16.mxu0 0
        %10732 = vmatpush1.bf16.xpose.msra.mxu0 %v10202
        %10733 = vmatprep.subr.bf16.mxu0 0
        %10734 = vmatpush1.bf16.xpose.msra.mxu0 %v10205
        %10735 = vmatprep.subr.bf16.mxu0 0
        %10736 = vmatpush1.bf16.xpose.msra.mxu0 %v10208
        %10737 = vmatprep.subr.bf16.mxu0 0
        %10738 = vmatpush1.bf16.xpose.msra.mxu0 %v10211
        %10739 = vmatprep.subr.bf16.mxu0 0
        %10740 = vmatpush1.bf16.xpose.msra.mxu0 %v10214
        %10741 = vmatprep.subr.bf16.mxu0 0
        %10742 = vmatpush1.bf16.xpose.msra.mxu0 %v10217
        %10743 = vmatprep.subr.bf16.mxu0 0
        %10744 = vmatpush1.bf16.xpose.msra.mxu0 %v10220
        %10745 = vmatprep.subr.bf16.mxu0 0
        %10746 = vmatpush1.bf16.xpose.msra.mxu0 %v10223
        %10747 = vmatprep.subr.bf16.mxu0 0
        %10748 = vmatpush1.bf16.xpose.msra.mxu0 %v10226
        %10749 = vmatprep.subr.bf16.mxu0 0
        %10750 = vmatpush1.bf16.xpose.msra.mxu0 %v10573
        %10751 = vmatprep.subr.bf16.mxu0 0
        %10752 = vmatpush1.bf16.xpose.msra.mxu0 %v917
        %10753 = vmatprep.mubr.bf16.mxu0 0
        %10754 = vmatmul.mubr.bf16.gmra.mrb[0].mxu0 %v10719
        %v10755 = vpop.f32.mrb[0].mxu0
        %v10756 = vadd.f32 0.0, %v10755
        %v10757 = vpop.f32.mrb[0].mxu0
        %v10758 = vadd.f32 0.0, %v10757
        %v10759 = vpop.f32.mrb[0].mxu0
        %v10760 = vpop.f32.mrb[0].mxu0
        %10761 = vdwg.mxu0
        %v10762 = vadd.f32 %v10716, %v10756
        %v10763 = vadd.f32 %v10717, %v10758
        %v10765 = vsel %vm915, %v9999, 0
        %10767 = vmatprep.subr.bf16.mxu0 0
        %10768 = vmatpush1.bf16.xpose.msra.mxu0 %v10425
        %10769 = vmatprep.subr.bf16.mxu0 0
        %10770 = vmatpush1.bf16.xpose.msra.mxu0 %v10428
        %10771 = vmatprep.subr.bf16.mxu0 0
        %10772 = vmatpush1.bf16.xpose.msra.mxu0 %v10431
        %10773 = vmatprep.subr.bf16.mxu0 0
        %10774 = vmatpush1.bf16.xpose.msra.mxu0 %v10434
        %10775 = vmatprep.subr.bf16.mxu0 0
        %10776 = vmatpush1.bf16.xpose.msra.mxu0 %v10437
        %10777 = vmatprep.subr.bf16.mxu0 0
        %10778 = vmatpush1.bf16.xpose.msra.mxu0 %v10440
        %10779 = vmatprep.subr.bf16.mxu0 0
        %10780 = vmatpush1.bf16.xpose.msra.mxu0 %v10443
        %10781 = vmatprep.subr.bf16.mxu0 0
        %10782 = vmatpush1.bf16.xpose.msra.mxu0 %v10446
        %10783 = vmatprep.subr.bf16.mxu0 0
        %10784 = vmatpush1.bf16.xpose.msra.mxu0 %v10449
        %10785 = vmatprep.subr.bf16.mxu0 0
        %10786 = vmatpush1.bf16.xpose.msra.mxu0 %v10452
        %10787 = vmatprep.subr.bf16.mxu0 0
        %10788 = vmatpush1.bf16.xpose.msra.mxu0 %v10455
        %10789 = vmatprep.subr.bf16.mxu0 0
        %10790 = vmatpush1.bf16.xpose.msra.mxu0 %v10458
        %10791 = vmatprep.subr.bf16.mxu0 0
        %10792 = vmatpush1.bf16.xpose.msra.mxu0 %v10461
        %10793 = vmatprep.subr.bf16.mxu0 0
        %10794 = vmatpush1.bf16.xpose.msra.mxu0 %v10464
        %10795 = vmatprep.subr.bf16.mxu0 0
        %10796 = vmatpush1.bf16.xpose.msra.mxu0 %v10627
        %10797 = vmatprep.subr.bf16.mxu0 0
        %10798 = vmatpush1.bf16.xpose.msra.mxu0 %v1422
        %10799 = vmatprep.mubr.bf16.mxu0 0
        %10800 = vmatmul.mubr.bf16.gmra.mrb[0].mxu0 %v10765
        %v10801 = vpop.f32.mrb[0].mxu0
        %v10802 = vadd.f32 0.0, %v10801
        %v10803 = vpop.f32.mrb[0].mxu0
        %v10804 = vadd.f32 0.0, %v10803
        %v10805 = vpop.f32.mrb[0].mxu0
        %v10806 = vpop.f32.mrb[0].mxu0
        %10807 = vdwg.mxu0
        %v10808 = vadd.f32 %v10762, %v10802
        %v10809 = vadd.f32 %v10763, %v10804
        %v10810 = vld [vmem:[%s9] sm:$0xf]
        %10812 = vset.pattern.permute.xlu0 0
        %10813 = vperm.xlu0 %10812, %v10810
        %v10814 = vpop.permute.xlu0 %10813
        %v10816 = vadd.f32 %v10808, %v10814
        %v10817 = vadd.f32 %v10809, %v10814
        %s10818 = sld [smem:[#allocation2]]
        %v10819 = vstv %s10818
        %v10820 = vmul.f32 %v10816, %v10819
        %v10821 = vmul.f32 %v10817, %v10819
        %v10822 = vmul.f32 %v10820, 1.442695
        %v10823 = vpow.pop %v10822
        %v10824 = vmul.f32 %v10821, 1.442695
        %v10825 = vpow.pop %v10824
        %v10828 = vcombine.low %v10823, %v10825
        %10830 = vst [vmem:[%s442] sm:$0xff] %v10828
        %p10831 = scmp.lt.s32.totalorder %s31, 1
        %s10832 = scalar_select %p10831, %s31, 1
        %s10833 = smul.addr %s10832, 4
        %s10834 = smul.addr %s10833, 8
        %s10835 = scalar_lea.vmem %s10, %s10834
        %s10836 = sand.u32 %s280, 1
        %s10837 = scalar_lea.sflag [#allocation5], %s10836
        %s10838 = sand.u32 %s280, 1
        %s10839 = smul.addr %s10838, 8
        %s10840 = scalar_lea.vmem [#allocation9], %s10839
        // Predicated region
        $region73: #{tpu_custom_call.1} parent=59 // pred_check
          %p10841 = pneg %p264
        $region74: #{tpu_custom_call.1} parent=59 // pred_check_branch
          %10843 = sbr.rel (%p10841) target = $region76
        $region75: #{tpu_custom_call.1} parent=59 // pred_region
          _
        $region76: #{tpu_custom_call.1} parent=59 // pred_fallthru
          _
        // Predicated region
        $region77: #{tpu_custom_call.1} parent=59 // pred_check
          %p10844 = pneg %p290
        $region78: #{tpu_custom_call.1} parent=59 // pred_check_branch
          %10846 = sbr.rel (%p10844) target = $region80
        $region79: #{tpu_custom_call.1} parent=59 // pred_region
          %s10848 = ssub.s32 128, 128
          %10849 = vsyncadd %s10837, %s10848
          %s10850 = smul.addr %s31, 2
          %s10851 = smul.addr %s10850, 64
          %s10852 = scalar_lea.hbm %s11, %s10851
          %s10854 = sshll.u32 %s10840, 4
          %s10855 = int_to_ptr.vmem [resolvable:$true] %s10854
          %10857 = dma.vmem_to_hbm [thread:$0]  %s10855, 128, %s10852, %s10837
        $region80: #{tpu_custom_call.1} parent=59 // pred_fallthru
          _
      $region60: #{tpu_custom_call.1} parent=5 // pred_fallthru
        _
      %p10858 = scmp.le.s32.totalorder 2, %s26
      // Predicated region
      $region81: #{tpu_custom_call.1} parent=5 // pred_check
        %p10859 = pneg %p10858
      $region82: #{tpu_custom_call.1} parent=5 // pred_check_branch
        %10861 = sbr.rel (%p10859) target = $region84
      $region83: #{tpu_custom_call.1} parent=5 // pred_region
        %s10862 = ssub.s32 %s26, 2
        // Predicated region
        $region85: #{tpu_custom_call.1} parent=83 // pred_check
          %p10863 = pneg %p270
        $region86: #{tpu_custom_call.1} parent=83 // pred_check_branch
          %10865 = sbr.rel (%p10863) target = $region88
        $region87: #{tpu_custom_call.1} parent=83 // pred_region
          %p10866 = scmp.lt.s32.totalorder %s32, 1
          %s10867 = scalar_select %p10866, %s32, 1
          %s10868 = smul.addr %s10867, 4
          %s10869 = smul.addr %s10868, 8
          %s10870 = scalar_lea.vmem %s10, %s10869
        $region88: #{tpu_custom_call.1} parent=83 // pred_fallthru
          _
        // Predicated region
        $region89: #{tpu_custom_call.1} parent=83 // pred_check
          %p10871 = pneg %p296
        $region90: #{tpu_custom_call.1} parent=83 // pred_check_branch
          %10873 = sbr.rel (%p10871) target = $region92
        $region91: #{tpu_custom_call.1} parent=83 // pred_region
          %s10874 = sand.u32 %s281, 1
          %s10875 = scalar_lea.sflag [#allocation5], %s10874
          %s10876 = sand.u32 %s281, 1
          %s10877 = smul.addr %s10876, 8
          %s10878 = scalar_lea.vmem [#allocation9], %s10877
          %10879 = dma.done %s10875, 128
        $region92: #{tpu_custom_call.1} parent=83 // pred_fallthru
          _
      $region84: #{tpu_custom_call.1} parent=5 // pred_fallthru
        _
    $region6: #{tpu_custom_call.1} parent=1 // loop_footer
      %s30 = sadd.s32 1, %s26
    $region7: #{tpu_custom_call.1} parent=1 // loop_footer_branch
      %25 = sbr.rel target = $region3
    $region8: #{tpu_custom_call.1} parent=1 // loop_exit
      _
    %10880 = vsyncpa [#allocation4], 1
    %s10881 = scalar_lea.sflag [#allocation4], 1
    %10882 = vsyncpa %s10881, 1
    %10883 = vsyncpa [#allocation7], 1
    %10884 = vsyncpa [#allocation5], 1
    %s10885 = scalar_lea.sflag [#allocation5], 1
    %10886 = vsyncpa %s10885, 1

</llo_original>
